<compile_context>
chip_gen: v7x
topology: tpu7x:2x2x1
jax: 0.10.0
libtpu: 0.0.40
codegen_flags: <defaults>
</compile_context>

<pallas_src>
import functools
import numpy as np
import jax
import jax.numpy as jnp
from jax.experimental import pallas as pl
from jax.experimental.pallas import tpu as pltpu

NUM_NODES = 18
IN_CH = 2
HID_CH = 24
OUT_CH = 2
SEQ_LEN = 24        # pose.reshape(-1, 24, 36)
LSTM_IN = NUM_NODES * OUT_CH   # 36
LSTM_HID = 128

NEIGHBOR_LINK = [(4, 3), (3, 2), (7, 6), (6, 5), (13, 12), (12, 11), (10, 9),
                 (9, 8), (11, 5), (8, 2), (5, 1), (2, 1), (0, 1), (15, 0),
                 (14, 0), (17, 15), (16, 14)]


def build_gcn_prop_matrix(num_nodes=NUM_NODES):
    """Dense P_hat = D^-1/2 (A + I) D^-1/2 exactly as PyG gcn_norm builds it
    (directed edges src->dst, degrees taken over the target index)."""
    src = np.array([i for i, j in NEIGHBOR_LINK], dtype=np.int64)
    dst = np.array([j for i, j in NEIGHBOR_LINK], dtype=np.int64)
    # add_remaining_self_loops
    src = np.concatenate([src, np.arange(num_nodes)])
    dst = np.concatenate([dst, np.arange(num_nodes)])
    deg = np.zeros(num_nodes, np.float64)
    np.add.at(deg, dst, 1.0)
    dinv = deg ** -0.5
    dinv[np.isinf(dinv)] = 0.0
    norm = dinv[src] * dinv[dst]
    P = np.zeros((num_nodes, num_nodes), np.float64)
    np.add.at(P, (dst, src), norm)          # out[dst] += norm * x[src]
    return P.astype(np.float32)


# ----------------------------- fused GCN + LSTM kernel ----------------------
def get_pose_kernel(x_ref, k1_ref, b1_ref, k2_ref, b2_ref,
                    wih_ref, whh_ref, bl_ref, o_ref, xw_ref):
    # x_ref:   (T*B, 36)   node-major/channel-minor graph features, rows time-major
    # k1_ref:  (36, 432)   P^T ⊗ W1   (conv1 propagation + channel mix, one matmul)
    # b1_ref:  (1, 432)    b1 tiled over nodes
    # k2_ref:  (432, 36)   P^T ⊗ W2   (conv2 propagation + channel mix, one matmul)
    # b2_ref:  (1, 36)     b2 tiled over nodes
    # wih_ref: (36, 512)   W_ih^T
    # whh_ref: (128, 512)  W_hh^T
    # bl_ref:  (1, 512)    b_ih + b_hh
    # o_ref:   (T, B, 128) LSTM hidden states (time-major)
    # xw_ref:  (T*B, 512)  VMEM scratch for the hoisted input projection
    T, B, H = o_ref.shape

    x = x_ref[...]                                                 # (T*B, 36)

    # --- GCN conv1: P @ (X W1) for all graphs == X_flat @ (P^T ⊗ W1), then ReLU.
    h1 = jnp.maximum(
        jnp.dot(x, k1_ref[...], preferred_element_type=jnp.float32) + b1_ref[...],
        0.0)                                                       # (T*B, 432)

    # --- GCN conv2: P @ (H1 W2) == H1 @ (P^T ⊗ W2); output feature index = 2*v + c,
    #     exactly the module's reshape(-1, 24, 36) ordering.
    g = jnp.dot(h1, k2_ref[...], preferred_element_type=jnp.float32) + b2_ref[...]

    # --- LSTM input projection hoisted out of the recurrence (lane-dense (T*B, 512)).
    xw_ref[...] = (jnp.dot(g, wih_ref[...], preferred_element_type=jnp.float32)
                   + bl_ref[...])

    whh = whh_ref[...]                                             # (H, 4H), loaded once

    # --- Recurrence, fully unrolled (T = 24 is static): gates = XW[t] + h @ W_hh^T
    h_state = jnp.zeros((B, H), jnp.float32)
    c_state = jnp.zeros((B, H), jnp.float32)
    for t in range(T):
        xw_t = xw_ref[pl.ds(t * B, B), :]                          # (B, 4H), contiguous rows
        gates = xw_t + jnp.dot(h_state, whh, preferred_element_type=jnp.float32)
        i_g = jax.nn.sigmoid(gates[:, 0:H])
        f_g = jax.nn.sigmoid(gates[:, H:2 * H])
        g_g = jnp.tanh(gates[:, 2 * H:3 * H])
        o_g = jax.nn.sigmoid(gates[:, 3 * H:4 * H])
        c_state = f_g * c_state + i_g * g_g
        h_state = o_g * jnp.tanh(c_state)
        o_ref[t] = h_state                                         # lane-dense (B, 128) store


def fused_forward(x_flat, k1, b1t, k2, b2t, wih_t, whh_t, b_lstm):
    tb = x_flat.shape[0]
    B = tb // SEQ_LEN
    vmem = functools.partial(pl.BlockSpec, memory_space=pltpu.MemorySpace.VMEM)
    return pl.pallas_call(
        get_pose_kernel,
        out_shape=jax.ShapeDtypeStruct((SEQ_LEN, B, LSTM_HID), jnp.float32),
        in_specs=[vmem(),            # x_flat (T*B, 36)
                  vmem(),            # k1     (36, 432)
                  vmem(),            # b1t    (1, 432)
                  vmem(),            # k2     (432, 36)
                  vmem(),            # b2t    (1, 36)
                  vmem(),            # wih_t  (36, 512)
                  vmem(),            # whh_t  (128, 512)
                  vmem()],           # b_lstm (1, 512)
        out_specs=vmem(),
        scratch_shapes=[pltpu.VMEM((tb, 4 * LSTM_HID), jnp.float32)],
    )(x_flat, k1, b1t, k2, b2t, wih_t, whh_t, b_lstm)


# ----------------------------- full forward --------------------------------
def get_pose_forward(pose, params):
    # pose: (n, C=2, T, V=18), matching the PyTorch module's input.
    n, c, t, v = pose.shape
    N = n * t
    assert N % SEQ_LEN == 0, "n * T must be divisible by 24 (reshape(-1, 24, 36))"
    B = N // SEQ_LEN
    # preprocess_data -> graph g = n_i*T + t; flatten features node-major/channel-minor
    # (index 2*node + channel), which is both the GCN input ordering and the LSTM
    # reshape(-1, 24, 36) ordering.
    x = jnp.transpose(pose, (0, 2, 3, 1)).reshape(N, v * c)        # (N, 36)
    # Regroup into LSTM sequences (b = g // 24, tau = g % 24) and lay the graph rows
    # out time-major (row = tau*B + b) so the recurrence reads contiguous rows.
    x = x.reshape(B, SEQ_LEN, v * c).transpose(1, 0, 2).reshape(SEQ_LEN * B, v * c)

    # Kronecker-product GCN weights: P @ (X W) over all graphs == X_flat @ (P^T ⊗ W).
    PT = params["PT"]
    k1 = jnp.kron(PT, params["w1"])                                # (36, 432)
    b1t = jnp.tile(params["b1"], (1, NUM_NODES))                   # (1, 432)
    k2 = jnp.kron(PT, params["w2"])                                # (432, 36)
    b2t = jnp.tile(params["b2"], (1, NUM_NODES))                   # (1, 36)

    out_tbh = fused_forward(x, k1, b1t, k2, b2t,
                            params["wih_t"], params["whh_t"],
                            params["b_lstm"])                      # (24, B, 128)
    return jnp.transpose(out_tbh, (1, 0, 2))                       # (B, 24, 128)


# ----------------------------- plain-JAX reference --------------------------
def reference_forward(pose, params):
    n, c, t, v = pose.shape
    x = jnp.transpose(pose, (0, 2, 1, 3)).reshape(n * t, c, v)
    x = jnp.transpose(x, (0, 2, 1))                                # (N, 18, 2)
    P = params["PT"].T
    h1 = jax.nn.relu(jnp.einsum('vu,nuh->nvh', P, x @ params["w1"]) + params["b1"])
    g = jnp.einsum('vu,nuh->nvh', P, h1 @ params["w2"]) + params["b2"]
    seq = g.reshape(-1, SEQ_LEN, LSTM_IN)                          # (B, 24, 36)
    H = LSTM_HID
    h = jnp.zeros((seq.shape[0], H), jnp.float32)
    cc = jnp.zeros((seq.shape[0], H), jnp.float32)
    outs = []
    for ti in range(SEQ_LEN):
        gates = seq[:, ti] @ params["wih_t"] + h @ params["whh_t"] + params["b_lstm"]
        i_g = jax.nn.sigmoid(gates[:, 0:H])
        f_g = jax.nn.sigmoid(gates[:, H:2 * H])
        g_g = jnp.tanh(gates[:, 2 * H:3 * H])
        o_g = jax.nn.sigmoid(gates[:, 3 * H:4 * H])
        cc = f_g * cc + i_g * g_g
        h = o_g * jnp.tanh(cc)
        outs.append(h)
    return jnp.stack(outs, axis=1)                                 # (B, 24, 128)


def init_params(key):
    ks = jax.random.split(key, 8)

    def u(k, shape, bound):
        return jax.random.uniform(k, shape, jnp.float32, -bound, bound)

    bg1 = 1.0 / np.sqrt(IN_CH)
    bg2 = 1.0 / np.sqrt(HID_CH)
    bl = 1.0 / np.sqrt(LSTM_HID)
    P = build_gcn_prop_matrix()
    return dict(
        PT=jnp.asarray(P.T),                                  # (18, 18)
        # GCNConv linear weights stored pre-transposed: (in, out)
        w1=u(ks[0], (IN_CH, HID_CH), bg1),
        b1=u(ks[1], (1, HID_CH), bg1),
        w2=u(ks[2], (HID_CH, OUT_CH), bg2),
        b2=u(ks[3], (1, OUT_CH), bg2),
        # nn.LSTM weights, pre-transposed: W_ih^T (36,512), W_hh^T (128,512); gates i,f,g,o
        wih_t=u(ks[4], (LSTM_IN, 4 * LSTM_HID), bl),
        whh_t=u(ks[5], (LSTM_HID, 4 * LSTM_HID), bl),
        b_lstm=u(ks[6], (1, 4 * LSTM_HID), bl) + u(ks[7], (1, 4 * LSTM_HID), bl),
    )


if __name__ == "__main__":
    key = jax.random.PRNGKey(0)
    pkey, xkey = jax.random.split(key)
    params = init_params(pkey)

    n, t = 2, 24   # n*t must be divisible by 24 (the module's reshape(-1, 24, 36))
    pose = jax.random.normal(xkey, (n, IN_CH, t, NUM_NODES), jnp.float32)

    fwd = jax.jit(functools.partial(get_pose_forward, params=params))
    out = jax.block_until_ready(fwd(pose))

    assert out.shape == (n * t // SEQ_LEN, SEQ_LEN, LSTM_HID), out.shape
    assert out.dtype == jnp.float32

    # Numerical self-check against a plain-JAX reference of the original module.
    with jax.default_matmul_precision("highest"):
        ref = jax.block_until_ready(reference_forward(pose, params))
    err = float(jnp.max(jnp.abs(out - ref)))
    assert err < 2e-2, f"max abs error vs reference: {err}"
    print("KERNEL_OK")
</pallas_src>

<mosaic_0001>
module attributes {stable_mosaic.version = 11 : i64} {
  func.func @get_pose_kernel(%arg0: memref<48x36xf32, #tpu.memory_space<vmem>>, %arg1: memref<36x432xf32, #tpu.memory_space<vmem>>, %arg2: memref<1x432xf32, #tpu.memory_space<vmem>>, %arg3: memref<432x36xf32, #tpu.memory_space<vmem>>, %arg4: memref<1x36xf32, #tpu.memory_space<vmem>>, %arg5: memref<36x512xf32, #tpu.memory_space<vmem>>, %arg6: memref<128x512xf32, #tpu.memory_space<vmem>>, %arg7: memref<1x512xf32, #tpu.memory_space<vmem>>, %arg8: memref<24x2x128xf32, #tpu.memory_space<vmem>>, %arg9: memref<48x512xf32, #tpu.memory_space<vmem>>) attributes {dimension_semantics = [], scalar_prefetch = 0 : i64, scratch_operands = 1 : i64, tpu.core_type = #tpu.core_type<tc>} {
    %c0 = arith.constant 0 : index
    %c0_0 = arith.constant 0 : index
    %0 = vector.load %arg0[%c0, %c0_0] : memref<48x36xf32, #tpu.memory_space<vmem>>, vector<48x36xf32>
    %c0_1 = arith.constant 0 : index
    %c0_2 = arith.constant 0 : index
    %1 = vector.load %arg1[%c0_1, %c0_2] : memref<36x432xf32, #tpu.memory_space<vmem>>, vector<36x432xf32>
    %cst = arith.constant dense<0.000000e+00> : vector<48x432xf32>
    %2 = tpu.matmul %0, %1, %cst {dimension_numbers = #tpu.dot_dimension_numbers<[1], [0], [0], [1], [0, 0, 1, 1], [], []>} : vector<48x36xf32>, vector<36x432xf32>, vector<48x432xf32> -> vector<48x432xf32>
    %c0_3 = arith.constant 0 : index
    %c0_4 = arith.constant 0 : index
    %3 = vector.load %arg2[%c0_3, %c0_4] : memref<1x432xf32, #tpu.memory_space<vmem>>, vector<1x432xf32>
    %4 = vector.broadcast %3 : vector<1x432xf32> to vector<48x432xf32>
    %5 = arith.addf %2, %4 : vector<48x432xf32>
    %cst_5 = arith.constant 0.000000e+00 : f32
    %6 = vector.broadcast %cst_5 : f32 to vector<48x432xf32>
    %7 = arith.maximumf %5, %6 : vector<48x432xf32>
    %c0_6 = arith.constant 0 : index
    %c0_7 = arith.constant 0 : index
    %8 = vector.load %arg3[%c0_6, %c0_7] : memref<432x36xf32, #tpu.memory_space<vmem>>, vector<432x36xf32>
    %cst_8 = arith.constant dense<0.000000e+00> : vector<48x36xf32>
    %9 = tpu.matmul %7, %8, %cst_8 {dimension_numbers = #tpu.dot_dimension_numbers<[1], [0], [0], [1], [0, 0, 1, 1], [], []>} : vector<48x432xf32>, vector<432x36xf32>, vector<48x36xf32> -> vector<48x36xf32>
    %c0_9 = arith.constant 0 : index
    %c0_10 = arith.constant 0 : index
    %10 = vector.load %arg4[%c0_9, %c0_10] : memref<1x36xf32, #tpu.memory_space<vmem>>, vector<1x36xf32>
    %11 = vector.broadcast %10 : vector<1x36xf32> to vector<48x36xf32>
    %12 = arith.addf %9, %11 : vector<48x36xf32>
    %c0_11 = arith.constant 0 : index
    %c0_12 = arith.constant 0 : index
    %13 = vector.load %arg5[%c0_11, %c0_12] : memref<36x512xf32, #tpu.memory_space<vmem>>, vector<36x512xf32>
    %cst_13 = arith.constant dense<0.000000e+00> : vector<48x512xf32>
    %14 = tpu.matmul %12, %13, %cst_13 {dimension_numbers = #tpu.dot_dimension_numbers<[1], [0], [0], [1], [0, 0, 1, 1], [], []>} : vector<48x36xf32>, vector<36x512xf32>, vector<48x512xf32> -> vector<48x512xf32>
    %c0_14 = arith.constant 0 : index
    %c0_15 = arith.constant 0 : index
    %15 = vector.load %arg7[%c0_14, %c0_15] : memref<1x512xf32, #tpu.memory_space<vmem>>, vector<1x512xf32>
    %16 = vector.broadcast %15 : vector<1x512xf32> to vector<48x512xf32>
    %17 = arith.addf %14, %16 : vector<48x512xf32>
    %c0_16 = arith.constant 0 : index
    %c0_17 = arith.constant 0 : index
    %18 = vector.load %arg9[%c0_16, %c0_17] : memref<48x512xf32, #tpu.memory_space<vmem>>, vector<48x512xf32>
    tpu.vector_store %arg9[%c0_16, %c0_17], %17 {strides = array<i32>} : memref<48x512xf32, #tpu.memory_space<vmem>>, vector<48x512xf32>,
    %c0_18 = arith.constant 0 : index
    %c0_19 = arith.constant 0 : index
    %19 = vector.load %arg6[%c0_18, %c0_19] : memref<128x512xf32, #tpu.memory_space<vmem>>, vector<128x512xf32>
    %cst_20 = arith.constant 0.000000e+00 : f32
    %20 = vector.broadcast %cst_20 : f32 to vector<2x128xf32>
    %cst_21 = arith.constant 0.000000e+00 : f32
    %21 = vector.broadcast %cst_21 : f32 to vector<2x128xf32>
    %c0_22 = arith.constant 0 : index
    %c0_23 = arith.constant 0 : index
    %22 = vector.load %arg9[%c0_22, %c0_23] : memref<48x512xf32, #tpu.memory_space<vmem>>, vector<2x512xf32>
    %cst_24 = arith.constant dense<0.000000e+00> : vector<2x512xf32>
    %23 = tpu.matmul %20, %19, %cst_24 {dimension_numbers = #tpu.dot_dimension_numbers<[1], [0], [0], [1], [0, 0, 1, 1], [], []>} : vector<2x128xf32>, vector<128x512xf32>, vector<2x512xf32> -> vector<2x512xf32>
    %24 = arith.addf %22, %23 : vector<2x512xf32>
    %25 = vector.extract_strided_slice %24 {offsets = [0, 0], sizes = [2, 128], strides = [1, 1]} : vector<2x512xf32> to vector<2x128xf32>
    %26 = arith.negf %25 : vector<2x128xf32>
    %27 = math.exp %26 : vector<2x128xf32>
    %cst_25 = arith.constant 1.000000e+00 : f32
    %28 = vector.broadcast %cst_25 : f32 to vector<2x128xf32>
    %29 = arith.addf %28, %27 : vector<2x128xf32>
    %30 = arith.divf %28, %29 : vector<2x128xf32>
    %31 = vector.extract_strided_slice %24 {offsets = [0, 128], sizes = [2, 128], strides = [1, 1]} : vector<2x512xf32> to vector<2x128xf32>
    %32 = arith.negf %31 : vector<2x128xf32>
    %33 = math.exp %32 : vector<2x128xf32>
    %cst_26 = arith.constant 1.000000e+00 : f32
    %34 = vector.broadcast %cst_26 : f32 to vector<2x128xf32>
    %35 = arith.addf %34, %33 : vector<2x128xf32>
    %36 = arith.divf %34, %35 : vector<2x128xf32>
    %37 = vector.extract_strided_slice %24 {offsets = [0, 256], sizes = [2, 128], strides = [1, 1]} : vector<2x512xf32> to vector<2x128xf32>
    %38 = math.tanh %37 : vector<2x128xf32>
    %39 = vector.extract_strided_slice %24 {offsets = [0, 384], sizes = [2, 128], strides = [1, 1]} : vector<2x512xf32> to vector<2x128xf32>
    %40 = arith.negf %39 : vector<2x128xf32>
    %41 = math.exp %40 : vector<2x128xf32>
    %cst_27 = arith.constant 1.000000e+00 : f32
    %42 = vector.broadcast %cst_27 : f32 to vector<2x128xf32>
    %43 = arith.addf %42, %41 : vector<2x128xf32>
    %44 = arith.divf %42, %43 : vector<2x128xf32>
    %45 = arith.mulf %36, %21 : vector<2x128xf32>
    %46 = arith.mulf %30, %38 : vector<2x128xf32>
    %47 = arith.addf %45, %46 : vector<2x128xf32>
    %48 = math.tanh %47 : vector<2x128xf32>
    %49 = arith.mulf %44, %48 : vector<2x128xf32>
    %c0_28 = arith.constant 0 : index
    %c0_29 = arith.constant 0 : index
    %c0_30 = arith.constant 0 : index
    %50 = vector.load %arg8[%c0_28, %c0_29, %c0_30] : memref<24x2x128xf32, #tpu.memory_space<vmem>>, vector<1x2x128xf32>
    %51 = vector.shape_cast %50 : vector<1x2x128xf32> to vector<2x128xf32>
    %52 = vector.shape_cast %49 : vector<2x128xf32> to vector<1x2x128xf32>
    tpu.vector_store %arg8[%c0_28, %c0_29, %c0_30], %52 {strides = array<i32>} : memref<24x2x128xf32, #tpu.memory_space<vmem>>, vector<1x2x128xf32>,
    %c2 = arith.constant 2 : index
    %c0_31 = arith.constant 0 : index
    %53 = vector.load %arg9[%c2, %c0_31] : memref<48x512xf32, #tpu.memory_space<vmem>>, vector<2x512xf32>
    %cst_32 = arith.constant dense<0.000000e+00> : vector<2x512xf32>
    %54 = tpu.matmul %49, %19, %cst_32 {dimension_numbers = #tpu.dot_dimension_numbers<[1], [0], [0], [1], [0, 0, 1, 1], [], []>} : vector<2x128xf32>, vector<128x512xf32>, vector<2x512xf32> -> vector<2x512xf32>
    %55 = arith.addf %53, %54 : vector<2x512xf32>
    %56 = vector.extract_strided_slice %55 {offsets = [0, 0], sizes = [2, 128], strides = [1, 1]} : vector<2x512xf32> to vector<2x128xf32>
    %57 = arith.negf %56 : vector<2x128xf32>
    %58 = math.exp %57 : vector<2x128xf32>
    %cst_33 = arith.constant 1.000000e+00 : f32
    %59 = vector.broadcast %cst_33 : f32 to vector<2x128xf32>
    %60 = arith.addf %59, %58 : vector<2x128xf32>
    %61 = arith.divf %59, %60 : vector<2x128xf32>
    %62 = vector.extract_strided_slice %55 {offsets = [0, 128], sizes = [2, 128], strides = [1, 1]} : vector<2x512xf32> to vector<2x128xf32>
    %63 = arith.negf %62 : vector<2x128xf32>
    %64 = math.exp %63 : vector<2x128xf32>
    %cst_34 = arith.constant 1.000000e+00 : f32
    %65 = vector.broadcast %cst_34 : f32 to vector<2x128xf32>
    %66 = arith.addf %65, %64 : vector<2x128xf32>
    %67 = arith.divf %65, %66 : vector<2x128xf32>
    %68 = vector.extract_strided_slice %55 {offsets = [0, 256], sizes = [2, 128], strides = [1, 1]} : vector<2x512xf32> to vector<2x128xf32>
    %69 = math.tanh %68 : vector<2x128xf32>
    %70 = vector.extract_strided_slice %55 {offsets = [0, 384], sizes = [2, 128], strides = [1, 1]} : vector<2x512xf32> to vector<2x128xf32>
    %71 = arith.negf %70 : vector<2x128xf32>
    %72 = math.exp %71 : vector<2x128xf32>
    %cst_35 = arith.constant 1.000000e+00 : f32
    %73 = vector.broadcast %cst_35 : f32 to vector<2x128xf32>
    %74 = arith.addf %73, %72 : vector<2x128xf32>
    %75 = arith.divf %73, %74 : vector<2x128xf32>
    %76 = arith.mulf %67, %47 : vector<2x128xf32>
    %77 = arith.mulf %61, %69 : vector<2x128xf32>
    %78 = arith.addf %76, %77 : vector<2x128xf32>
    %79 = math.tanh %78 : vector<2x128xf32>
    %80 = arith.mulf %75, %79 : vector<2x128xf32>
    %c1 = arith.constant 1 : index
    %c0_36 = arith.constant 0 : index
    %c0_37 = arith.constant 0 : index
    %81 = vector.load %arg8[%c1, %c0_36, %c0_37] : memref<24x2x128xf32, #tpu.memory_space<vmem>>, vector<1x2x128xf32>
    %82 = vector.shape_cast %81 : vector<1x2x128xf32> to vector<2x128xf32>
    %83 = vector.shape_cast %80 : vector<2x128xf32> to vector<1x2x128xf32>
    tpu.vector_store %arg8[%c1, %c0_36, %c0_37], %83 {strides = array<i32>} : memref<24x2x128xf32, #tpu.memory_space<vmem>>, vector<1x2x128xf32>,
    %c4 = arith.constant 4 : index
    %c0_38 = arith.constant 0 : index
    %84 = vector.load %arg9[%c4, %c0_38] : memref<48x512xf32, #tpu.memory_space<vmem>>, vector<2x512xf32>
    %cst_39 = arith.constant dense<0.000000e+00> : vector<2x512xf32>
    %85 = tpu.matmul %80, %19, %cst_39 {dimension_numbers = #tpu.dot_dimension_numbers<[1], [0], [0], [1], [0, 0, 1, 1], [], []>} : vector<2x128xf32>, vector<128x512xf32>, vector<2x512xf32> -> vector<2x512xf32>
    %86 = arith.addf %84, %85 : vector<2x512xf32>
    %87 = vector.extract_strided_slice %86 {offsets = [0, 0], sizes = [2, 128], strides = [1, 1]} : vector<2x512xf32> to vector<2x128xf32>
    %88 = arith.negf %87 : vector<2x128xf32>
    %89 = math.exp %88 : vector<2x128xf32>
    %cst_40 = arith.constant 1.000000e+00 : f32
    %90 = vector.broadcast %cst_40 : f32 to vector<2x128xf32>
    %91 = arith.addf %90, %89 : vector<2x128xf32>
    %92 = arith.divf %90, %91 : vector<2x128xf32>
    %93 = vector.extract_strided_slice %86 {offsets = [0, 128], sizes = [2, 128], strides = [1, 1]} : vector<2x512xf32> to vector<2x128xf32>
    %94 = arith.negf %93 : vector<2x128xf32>
    %95 = math.exp %94 : vector<2x128xf32>
    %cst_41 = arith.constant 1.000000e+00 : f32
    %96 = vector.broadcast %cst_41 : f32 to vector<2x128xf32>
    %97 = arith.addf %96, %95 : vector<2x128xf32>
    %98 = arith.divf %96, %97 : vector<2x128xf32>
    %99 = vector.extract_strided_slice %86 {offsets = [0, 256], sizes = [2, 128], strides = [1, 1]} : vector<2x512xf32> to vector<2x128xf32>
    %100 = math.tanh %99 : vector<2x128xf32>
    %101 = vector.extract_strided_slice %86 {offsets = [0, 384], sizes = [2, 128], strides = [1, 1]} : vector<2x512xf32> to vector<2x128xf32>
    %102 = arith.negf %101 : vector<2x128xf32>
    %103 = math.exp %102 : vector<2x128xf32>
    %cst_42 = arith.constant 1.000000e+00 : f32
    %104 = vector.broadcast %cst_42 : f32 to vector<2x128xf32>
    %105 = arith.addf %104, %103 : vector<2x128xf32>
    %106 = arith.divf %104, %105 : vector<2x128xf32>
    %107 = arith.mulf %98, %78 : vector<2x128xf32>
    %108 = arith.mulf %92, %100 : vector<2x128xf32>
    %109 = arith.addf %107, %108 : vector<2x128xf32>
    %110 = math.tanh %109 : vector<2x128xf32>
    %111 = arith.mulf %106, %110 : vector<2x128xf32>
    %c2_43 = arith.constant 2 : index
    %c0_44 = arith.constant 0 : index
    %c0_45 = arith.constant 0 : index
    %112 = vector.load %arg8[%c2_43, %c0_44, %c0_45] : memref<24x2x128xf32, #tpu.memory_space<vmem>>, vector<1x2x128xf32>
    %113 = vector.shape_cast %112 : vector<1x2x128xf32> to vector<2x128xf32>
    %114 = vector.shape_cast %111 : vector<2x128xf32> to vector<1x2x128xf32>
    tpu.vector_store %arg8[%c2_43, %c0_44, %c0_45], %114 {strides = array<i32>} : memref<24x2x128xf32, #tpu.memory_space<vmem>>, vector<1x2x128xf32>,
    %c6 = arith.constant 6 : index
    %c0_46 = arith.constant 0 : index
    %115 = vector.load %arg9[%c6, %c0_46] : memref<48x512xf32, #tpu.memory_space<vmem>>, vector<2x512xf32>
    %cst_47 = arith.constant dense<0.000000e+00> : vector<2x512xf32>
    %116 = tpu.matmul %111, %19, %cst_47 {dimension_numbers = #tpu.dot_dimension_numbers<[1], [0], [0], [1], [0, 0, 1, 1], [], []>} : vector<2x128xf32>, vector<128x512xf32>, vector<2x512xf32> -> vector<2x512xf32>
    %117 = arith.addf %115, %116 : vector<2x512xf32>
    %118 = vector.extract_strided_slice %117 {offsets = [0, 0], sizes = [2, 128], strides = [1, 1]} : vector<2x512xf32> to vector<2x128xf32>
    %119 = arith.negf %118 : vector<2x128xf32>
    %120 = math.exp %119 : vector<2x128xf32>
    %cst_48 = arith.constant 1.000000e+00 : f32
    %121 = vector.broadcast %cst_48 : f32 to vector<2x128xf32>
    %122 = arith.addf %121, %120 : vector<2x128xf32>
    %123 = arith.divf %121, %122 : vector<2x128xf32>
    %124 = vector.extract_strided_slice %117 {offsets = [0, 128], sizes = [2, 128], strides = [1, 1]} : vector<2x512xf32> to vector<2x128xf32>
    %125 = arith.negf %124 : vector<2x128xf32>
    %126 = math.exp %125 : vector<2x128xf32>
    %cst_49 = arith.constant 1.000000e+00 : f32
    %127 = vector.broadcast %cst_49 : f32 to vector<2x128xf32>
    %128 = arith.addf %127, %126 : vector<2x128xf32>
    %129 = arith.divf %127, %128 : vector<2x128xf32>
    %130 = vector.extract_strided_slice %117 {offsets = [0, 256], sizes = [2, 128], strides = [1, 1]} : vector<2x512xf32> to vector<2x128xf32>
    %131 = math.tanh %130 : vector<2x128xf32>
    %132 = vector.extract_strided_slice %117 {offsets = [0, 384], sizes = [2, 128], strides = [1, 1]} : vector<2x512xf32> to vector<2x128xf32>
    %133 = arith.negf %132 : vector<2x128xf32>
    %134 = math.exp %133 : vector<2x128xf32>
    %cst_50 = arith.constant 1.000000e+00 : f32
    %135 = vector.broadcast %cst_50 : f32 to vector<2x128xf32>
    %136 = arith.addf %135, %134 : vector<2x128xf32>
    %137 = arith.divf %135, %136 : vector<2x128xf32>
    %138 = arith.mulf %129, %109 : vector<2x128xf32>
    %139 = arith.mulf %123, %131 : vector<2x128xf32>
    %140 = arith.addf %138, %139 : vector<2x128xf32>
    %141 = math.tanh %140 : vector<2x128xf32>
    %142 = arith.mulf %137, %141 : vector<2x128xf32>
    %c3 = arith.constant 3 : index
    %c0_51 = arith.constant 0 : index
    %c0_52 = arith.constant 0 : index
    %143 = vector.load %arg8[%c3, %c0_51, %c0_52] : memref<24x2x128xf32, #tpu.memory_space<vmem>>, vector<1x2x128xf32>
    %144 = vector.shape_cast %143 : vector<1x2x128xf32> to vector<2x128xf32>
    %145 = vector.shape_cast %142 : vector<2x128xf32> to vector<1x2x128xf32>
    tpu.vector_store %arg8[%c3, %c0_51, %c0_52], %145 {strides = array<i32>} : memref<24x2x128xf32, #tpu.memory_space<vmem>>, vector<1x2x128xf32>,
    %c8 = arith.constant 8 : index
    %c0_53 = arith.constant 0 : index
    %146 = vector.load %arg9[%c8, %c0_53] : memref<48x512xf32, #tpu.memory_space<vmem>>, vector<2x512xf32>
    %cst_54 = arith.constant dense<0.000000e+00> : vector<2x512xf32>
    %147 = tpu.matmul %142, %19, %cst_54 {dimension_numbers = #tpu.dot_dimension_numbers<[1], [0], [0], [1], [0, 0, 1, 1], [], []>} : vector<2x128xf32>, vector<128x512xf32>, vector<2x512xf32> -> vector<2x512xf32>
    %148 = arith.addf %146, %147 : vector<2x512xf32>
    %149 = vector.extract_strided_slice %148 {offsets = [0, 0], sizes = [2, 128], strides = [1, 1]} : vector<2x512xf32> to vector<2x128xf32>
    %150 = arith.negf %149 : vector<2x128xf32>
    %151 = math.exp %150 : vector<2x128xf32>
    %cst_55 = arith.constant 1.000000e+00 : f32
    %152 = vector.broadcast %cst_55 : f32 to vector<2x128xf32>
    %153 = arith.addf %152, %151 : vector<2x128xf32>
    %154 = arith.divf %152, %153 : vector<2x128xf32>
    %155 = vector.extract_strided_slice %148 {offsets = [0, 128], sizes = [2, 128], strides = [1, 1]} : vector<2x512xf32> to vector<2x128xf32>
    %156 = arith.negf %155 : vector<2x128xf32>
    %157 = math.exp %156 : vector<2x128xf32>
    %cst_56 = arith.constant 1.000000e+00 : f32
    %158 = vector.broadcast %cst_56 : f32 to vector<2x128xf32>
    %159 = arith.addf %158, %157 : vector<2x128xf32>
    %160 = arith.divf %158, %159 : vector<2x128xf32>
    %161 = vector.extract_strided_slice %148 {offsets = [0, 256], sizes = [2, 128], strides = [1, 1]} : vector<2x512xf32> to vector<2x128xf32>
    %162 = math.tanh %161 : vector<2x128xf32>
    %163 = vector.extract_strided_slice %148 {offsets = [0, 384], sizes = [2, 128], strides = [1, 1]} : vector<2x512xf32> to vector<2x128xf32>
    %164 = arith.negf %163 : vector<2x128xf32>
    %165 = math.exp %164 : vector<2x128xf32>
    %cst_57 = arith.constant 1.000000e+00 : f32
    %166 = vector.broadcast %cst_57 : f32 to vector<2x128xf32>
    %167 = arith.addf %166, %165 : vector<2x128xf32>
    %168 = arith.divf %166, %167 : vector<2x128xf32>
    %169 = arith.mulf %160, %140 : vector<2x128xf32>
    %170 = arith.mulf %154, %162 : vector<2x128xf32>
    %171 = arith.addf %169, %170 : vector<2x128xf32>
    %172 = math.tanh %171 : vector<2x128xf32>
    %173 = arith.mulf %168, %172 : vector<2x128xf32>
    %c4_58 = arith.constant 4 : index
    %c0_59 = arith.constant 0 : index
    %c0_60 = arith.constant 0 : index
    %174 = vector.load %arg8[%c4_58, %c0_59, %c0_60] : memref<24x2x128xf32, #tpu.memory_space<vmem>>, vector<1x2x128xf32>
    %175 = vector.shape_cast %174 : vector<1x2x128xf32> to vector<2x128xf32>
    %176 = vector.shape_cast %173 : vector<2x128xf32> to vector<1x2x128xf32>
    tpu.vector_store %arg8[%c4_58, %c0_59, %c0_60], %176 {strides = array<i32>} : memref<24x2x128xf32, #tpu.memory_space<vmem>>, vector<1x2x128xf32>,
    %c10 = arith.constant 10 : index
    %c0_61 = arith.constant 0 : index
    %177 = vector.load %arg9[%c10, %c0_61] : memref<48x512xf32, #tpu.memory_space<vmem>>, vector<2x512xf32>
    %cst_62 = arith.constant dense<0.000000e+00> : vector<2x512xf32>
    %178 = tpu.matmul %173, %19, %cst_62 {dimension_numbers = #tpu.dot_dimension_numbers<[1], [0], [0], [1], [0, 0, 1, 1], [], []>} : vector<2x128xf32>, vector<128x512xf32>, vector<2x512xf32> -> vector<2x512xf32>
    %179 = arith.addf %177, %178 : vector<2x512xf32>
    %180 = vector.extract_strided_slice %179 {offsets = [0, 0], sizes = [2, 128], strides = [1, 1]} : vector<2x512xf32> to vector<2x128xf32>
    %181 = arith.negf %180 : vector<2x128xf32>
    %182 = math.exp %181 : vector<2x128xf32>
    %cst_63 = arith.constant 1.000000e+00 : f32
    %183 = vector.broadcast %cst_63 : f32 to vector<2x128xf32>
    %184 = arith.addf %183, %182 : vector<2x128xf32>
    %185 = arith.divf %183, %184 : vector<2x128xf32>
    %186 = vector.extract_strided_slice %179 {offsets = [0, 128], sizes = [2, 128], strides = [1, 1]} : vector<2x512xf32> to vector<2x128xf32>
    %187 = arith.negf %186 : vector<2x128xf32>
    %188 = math.exp %187 : vector<2x128xf32>
    %cst_64 = arith.constant 1.000000e+00 : f32
    %189 = vector.broadcast %cst_64 : f32 to vector<2x128xf32>
    %190 = arith.addf %189, %188 : vector<2x128xf32>
    %191 = arith.divf %189, %190 : vector<2x128xf32>
    %192 = vector.extract_strided_slice %179 {offsets = [0, 256], sizes = [2, 128], strides = [1, 1]} : vector<2x512xf32> to vector<2x128xf32>
    %193 = math.tanh %192 : vector<2x128xf32>
    %194 = vector.extract_strided_slice %179 {offsets = [0, 384], sizes = [2, 128], strides = [1, 1]} : vector<2x512xf32> to vector<2x128xf32>
    %195 = arith.negf %194 : vector<2x128xf32>
    %196 = math.exp %195 : vector<2x128xf32>
    %cst_65 = arith.constant 1.000000e+00 : f32
    %197 = vector.broadcast %cst_65 : f32 to vector<2x128xf32>
    %198 = arith.addf %197, %196 : vector<2x128xf32>
    %199 = arith.divf %197, %198 : vector<2x128xf32>
    %200 = arith.mulf %191, %171 : vector<2x128xf32>
    %201 = arith.mulf %185, %193 : vector<2x128xf32>
    %202 = arith.addf %200, %201 : vector<2x128xf32>
    %203 = math.tanh %202 : vector<2x128xf32>
    %204 = arith.mulf %199, %203 : vector<2x128xf32>
    %c5 = arith.constant 5 : index
    %c0_66 = arith.constant 0 : index
    %c0_67 = arith.constant 0 : index
    %205 = vector.load %arg8[%c5, %c0_66, %c0_67] : memref<24x2x128xf32, #tpu.memory_space<vmem>>, vector<1x2x128xf32>
    %206 = vector.shape_cast %205 : vector<1x2x128xf32> to vector<2x128xf32>
    %207 = vector.shape_cast %204 : vector<2x128xf32> to vector<1x2x128xf32>
    tpu.vector_store %arg8[%c5, %c0_66, %c0_67], %207 {strides = array<i32>} : memref<24x2x128xf32, #tpu.memory_space<vmem>>, vector<1x2x128xf32>,
    %c12 = arith.constant 12 : index
    %c0_68 = arith.constant 0 : index
    %208 = vector.load %arg9[%c12, %c0_68] : memref<48x512xf32, #tpu.memory_space<vmem>>, vector<2x512xf32>
    %cst_69 = arith.constant dense<0.000000e+00> : vector<2x512xf32>
    %209 = tpu.matmul %204, %19, %cst_69 {dimension_numbers = #tpu.dot_dimension_numbers<[1], [0], [0], [1], [0, 0, 1, 1], [], []>} : vector<2x128xf32>, vector<128x512xf32>, vector<2x512xf32> -> vector<2x512xf32>
    %210 = arith.addf %208, %209 : vector<2x512xf32>
    %211 = vector.extract_strided_slice %210 {offsets = [0, 0], sizes = [2, 128], strides = [1, 1]} : vector<2x512xf32> to vector<2x128xf32>
    %212 = arith.negf %211 : vector<2x128xf32>
    %213 = math.exp %212 : vector<2x128xf32>
    %cst_70 = arith.constant 1.000000e+00 : f32
    %214 = vector.broadcast %cst_70 : f32 to vector<2x128xf32>
    %215 = arith.addf %214, %213 : vector<2x128xf32>
    %216 = arith.divf %214, %215 : vector<2x128xf32>
    %217 = vector.extract_strided_slice %210 {offsets = [0, 128], sizes = [2, 128], strides = [1, 1]} : vector<2x512xf32> to vector<2x128xf32>
    %218 = arith.negf %217 : vector<2x128xf32>
    %219 = math.exp %218 : vector<2x128xf32>
    %cst_71 = arith.constant 1.000000e+00 : f32
    %220 = vector.broadcast %cst_71 : f32 to vector<2x128xf32>
    %221 = arith.addf %220, %219 : vector<2x128xf32>
    %222 = arith.divf %220, %221 : vector<2x128xf32>
    %223 = vector.extract_strided_slice %210 {offsets = [0, 256], sizes = [2, 128], strides = [1, 1]} : vector<2x512xf32> to vector<2x128xf32>
    %224 = math.tanh %223 : vector<2x128xf32>
    %225 = vector.extract_strided_slice %210 {offsets = [0, 384], sizes = [2, 128], strides = [1, 1]} : vector<2x512xf32> to vector<2x128xf32>
    %226 = arith.negf %225 : vector<2x128xf32>
    %227 = math.exp %226 : vector<2x128xf32>
    %cst_72 = arith.constant 1.000000e+00 : f32
    %228 = vector.broadcast %cst_72 : f32 to vector<2x128xf32>
    %229 = arith.addf %228, %227 : vector<2x128xf32>
    %230 = arith.divf %228, %229 : vector<2x128xf32>
    %231 = arith.mulf %222, %202 : vector<2x128xf32>
    %232 = arith.mulf %216, %224 : vector<2x128xf32>
    %233 = arith.addf %231, %232 : vector<2x128xf32>
    %234 = math.tanh %233 : vector<2x128xf32>
    %235 = arith.mulf %230, %234 : vector<2x128xf32>
    %c6_73 = arith.constant 6 : index
    %c0_74 = arith.constant 0 : index
    %c0_75 = arith.constant 0 : index
    %236 = vector.load %arg8[%c6_73, %c0_74, %c0_75] : memref<24x2x128xf32, #tpu.memory_space<vmem>>, vector<1x2x128xf32>
    %237 = vector.shape_cast %236 : vector<1x2x128xf32> to vector<2x128xf32>
    %238 = vector.shape_cast %235 : vector<2x128xf32> to vector<1x2x128xf32>
    tpu.vector_store %arg8[%c6_73, %c0_74, %c0_75], %238 {strides = array<i32>} : memref<24x2x128xf32, #tpu.memory_space<vmem>>, vector<1x2x128xf32>,
    %c14 = arith.constant 14 : index
    %c0_76 = arith.constant 0 : index
    %239 = vector.load %arg9[%c14, %c0_76] : memref<48x512xf32, #tpu.memory_space<vmem>>, vector<2x512xf32>
    %cst_77 = arith.constant dense<0.000000e+00> : vector<2x512xf32>
    %240 = tpu.matmul %235, %19, %cst_77 {dimension_numbers = #tpu.dot_dimension_numbers<[1], [0], [0], [1], [0, 0, 1, 1], [], []>} : vector<2x128xf32>, vector<128x512xf32>, vector<2x512xf32> -> vector<2x512xf32>
    %241 = arith.addf %239, %240 : vector<2x512xf32>
    %242 = vector.extract_strided_slice %241 {offsets = [0, 0], sizes = [2, 128], strides = [1, 1]} : vector<2x512xf32> to vector<2x128xf32>
    %243 = arith.negf %242 : vector<2x128xf32>
    %244 = math.exp %243 : vector<2x128xf32>
    %cst_78 = arith.constant 1.000000e+00 : f32
    %245 = vector.broadcast %cst_78 : f32 to vector<2x128xf32>
    %246 = arith.addf %245, %244 : vector<2x128xf32>
    %247 = arith.divf %245, %246 : vector<2x128xf32>
    %248 = vector.extract_strided_slice %241 {offsets = [0, 128], sizes = [2, 128], strides = [1, 1]} : vector<2x512xf32> to vector<2x128xf32>
    %249 = arith.negf %248 : vector<2x128xf32>
    %250 = math.exp %249 : vector<2x128xf32>
    %cst_79 = arith.constant 1.000000e+00 : f32
    %251 = vector.broadcast %cst_79 : f32 to vector<2x128xf32>
    %252 = arith.addf %251, %250 : vector<2x128xf32>
    %253 = arith.divf %251, %252 : vector<2x128xf32>
    %254 = vector.extract_strided_slice %241 {offsets = [0, 256], sizes = [2, 128], strides = [1, 1]} : vector<2x512xf32> to vector<2x128xf32>
    %255 = math.tanh %254 : vector<2x128xf32>
    %256 = vector.extract_strided_slice %241 {offsets = [0, 384], sizes = [2, 128], strides = [1, 1]} : vector<2x512xf32> to vector<2x128xf32>
    %257 = arith.negf %256 : vector<2x128xf32>
    %258 = math.exp %257 : vector<2x128xf32>
    %cst_80 = arith.constant 1.000000e+00 : f32
    %259 = vector.broadcast %cst_80 : f32 to vector<2x128xf32>
    %260 = arith.addf %259, %258 : vector<2x128xf32>
    %261 = arith.divf %259, %260 : vector<2x128xf32>
    %262 = arith.mulf %253, %233 : vector<2x128xf32>
    %263 = arith.mulf %247, %255 : vector<2x128xf32>
    %264 = arith.addf %262, %263 : vector<2x128xf32>
    %265 = math.tanh %264 : vector<2x128xf32>
    %266 = arith.mulf %261, %265 : vector<2x128xf32>
    %c7 = arith.constant 7 : index
    %c0_81 = arith.constant 0 : index
    %c0_82 = arith.constant 0 : index
    %267 = vector.load %arg8[%c7, %c0_81, %c0_82] : memref<24x2x128xf32, #tpu.memory_space<vmem>>, vector<1x2x128xf32>
    %268 = vector.shape_cast %267 : vector<1x2x128xf32> to vector<2x128xf32>
    %269 = vector.shape_cast %266 : vector<2x128xf32> to vector<1x2x128xf32>
    tpu.vector_store %arg8[%c7, %c0_81, %c0_82], %269 {strides = array<i32>} : memref<24x2x128xf32, #tpu.memory_space<vmem>>, vector<1x2x128xf32>,
    %c16 = arith.constant 16 : index
    %c0_83 = arith.constant 0 : index
    %270 = vector.load %arg9[%c16, %c0_83] : memref<48x512xf32, #tpu.memory_space<vmem>>, vector<2x512xf32>
    %cst_84 = arith.constant dense<0.000000e+00> : vector<2x512xf32>
    %271 = tpu.matmul %266, %19, %cst_84 {dimension_numbers = #tpu.dot_dimension_numbers<[1], [0], [0], [1], [0, 0, 1, 1], [], []>} : vector<2x128xf32>, vector<128x512xf32>, vector<2x512xf32> -> vector<2x512xf32>
    %272 = arith.addf %270, %271 : vector<2x512xf32>
    %273 = vector.extract_strided_slice %272 {offsets = [0, 0], sizes = [2, 128], strides = [1, 1]} : vector<2x512xf32> to vector<2x128xf32>
    %274 = arith.negf %273 : vector<2x128xf32>
    %275 = math.exp %274 : vector<2x128xf32>
    %cst_85 = arith.constant 1.000000e+00 : f32
    %276 = vector.broadcast %cst_85 : f32 to vector<2x128xf32>
    %277 = arith.addf %276, %275 : vector<2x128xf32>
    %278 = arith.divf %276, %277 : vector<2x128xf32>
    %279 = vector.extract_strided_slice %272 {offsets = [0, 128], sizes = [2, 128], strides = [1, 1]} : vector<2x512xf32> to vector<2x128xf32>
    %280 = arith.negf %279 : vector<2x128xf32>
    %281 = math.exp %280 : vector<2x128xf32>
    %cst_86 = arith.constant 1.000000e+00 : f32
    %282 = vector.broadcast %cst_86 : f32 to vector<2x128xf32>
    %283 = arith.addf %282, %281 : vector<2x128xf32>
    %284 = arith.divf %282, %283 : vector<2x128xf32>
    %285 = vector.extract_strided_slice %272 {offsets = [0, 256], sizes = [2, 128], strides = [1, 1]} : vector<2x512xf32> to vector<2x128xf32>
    %286 = math.tanh %285 : vector<2x128xf32>
    %287 = vector.extract_strided_slice %272 {offsets = [0, 384], sizes = [2, 128], strides = [1, 1]} : vector<2x512xf32> to vector<2x128xf32>
    %288 = arith.negf %287 : vector<2x128xf32>
    %289 = math.exp %288 : vector<2x128xf32>
    %cst_87 = arith.constant 1.000000e+00 : f32
    %290 = vector.broadcast %cst_87 : f32 to vector<2x128xf32>
    %291 = arith.addf %290, %289 : vector<2x128xf32>
    %292 = arith.divf %290, %291 : vector<2x128xf32>
    %293 = arith.mulf %284, %264 : vector<2x128xf32>
    %294 = arith.mulf %278, %286 : vector<2x128xf32>
    %295 = arith.addf %293, %294 : vector<2x128xf32>
    %296 = math.tanh %295 : vector<2x128xf32>
    %297 = arith.mulf %292, %296 : vector<2x128xf32>
    %c8_88 = arith.constant 8 : index
    %c0_89 = arith.constant 0 : index
    %c0_90 = arith.constant 0 : index
    %298 = vector.load %arg8[%c8_88, %c0_89, %c0_90] : memref<24x2x128xf32, #tpu.memory_space<vmem>>, vector<1x2x128xf32>
    %299 = vector.shape_cast %298 : vector<1x2x128xf32> to vector<2x128xf32>
    %300 = vector.shape_cast %297 : vector<2x128xf32> to vector<1x2x128xf32>
    tpu.vector_store %arg8[%c8_88, %c0_89, %c0_90], %300 {strides = array<i32>} : memref<24x2x128xf32, #tpu.memory_space<vmem>>, vector<1x2x128xf32>,
    %c18 = arith.constant 18 : index
    %c0_91 = arith.constant 0 : index
    %301 = vector.load %arg9[%c18, %c0_91] : memref<48x512xf32, #tpu.memory_space<vmem>>, vector<2x512xf32>
    %cst_92 = arith.constant dense<0.000000e+00> : vector<2x512xf32>
    %302 = tpu.matmul %297, %19, %cst_92 {dimension_numbers = #tpu.dot_dimension_numbers<[1], [0], [0], [1], [0, 0, 1, 1], [], []>} : vector<2x128xf32>, vector<128x512xf32>, vector<2x512xf32> -> vector<2x512xf32>
    %303 = arith.addf %301, %302 : vector<2x512xf32>
    %304 = vector.extract_strided_slice %303 {offsets = [0, 0], sizes = [2, 128], strides = [1, 1]} : vector<2x512xf32> to vector<2x128xf32>
    %305 = arith.negf %304 : vector<2x128xf32>
    %306 = math.exp %305 : vector<2x128xf32>
    %cst_93 = arith.constant 1.000000e+00 : f32
    %307 = vector.broadcast %cst_93 : f32 to vector<2x128xf32>
    %308 = arith.addf %307, %306 : vector<2x128xf32>
    %309 = arith.divf %307, %308 : vector<2x128xf32>
    %310 = vector.extract_strided_slice %303 {offsets = [0, 128], sizes = [2, 128], strides = [1, 1]} : vector<2x512xf32> to vector<2x128xf32>
    %311 = arith.negf %310 : vector<2x128xf32>
    %312 = math.exp %311 : vector<2x128xf32>
    %cst_94 = arith.constant 1.000000e+00 : f32
    %313 = vector.broadcast %cst_94 : f32 to vector<2x128xf32>
    %314 = arith.addf %313, %312 : vector<2x128xf32>
    %315 = arith.divf %313, %314 : vector<2x128xf32>
    %316 = vector.extract_strided_slice %303 {offsets = [0, 256], sizes = [2, 128], strides = [1, 1]} : vector<2x512xf32> to vector<2x128xf32>
    %317 = math.tanh %316 : vector<2x128xf32>
    %318 = vector.extract_strided_slice %303 {offsets = [0, 384], sizes = [2, 128], strides = [1, 1]} : vector<2x512xf32> to vector<2x128xf32>
    %319 = arith.negf %318 : vector<2x128xf32>
    %320 = math.exp %319 : vector<2x128xf32>
    %cst_95 = arith.constant 1.000000e+00 : f32
    %321 = vector.broadcast %cst_95 : f32 to vector<2x128xf32>
    %322 = arith.addf %321, %320 : vector<2x128xf32>
    %323 = arith.divf %321, %322 : vector<2x128xf32>
    %324 = arith.mulf %315, %295 : vector<2x128xf32>
    %325 = arith.mulf %309, %317 : vector<2x128xf32>
    %326 = arith.addf %324, %325 : vector<2x128xf32>
    %327 = math.tanh %326 : vector<2x128xf32>
    %328 = arith.mulf %323, %327 : vector<2x128xf32>
    %c9 = arith.constant 9 : index
    %c0_96 = arith.constant 0 : index
    %c0_97 = arith.constant 0 : index
    %329 = vector.load %arg8[%c9, %c0_96, %c0_97] : memref<24x2x128xf32, #tpu.memory_space<vmem>>, vector<1x2x128xf32>
    %330 = vector.shape_cast %329 : vector<1x2x128xf32> to vector<2x128xf32>
    %331 = vector.shape_cast %328 : vector<2x128xf32> to vector<1x2x128xf32>
    tpu.vector_store %arg8[%c9, %c0_96, %c0_97], %331 {strides = array<i32>} : memref<24x2x128xf32, #tpu.memory_space<vmem>>, vector<1x2x128xf32>,
    %c20 = arith.constant 20 : index
    %c0_98 = arith.constant 0 : index
    %332 = vector.load %arg9[%c20, %c0_98] : memref<48x512xf32, #tpu.memory_space<vmem>>, vector<2x512xf32>
    %cst_99 = arith.constant dense<0.000000e+00> : vector<2x512xf32>
    %333 = tpu.matmul %328, %19, %cst_99 {dimension_numbers = #tpu.dot_dimension_numbers<[1], [0], [0], [1], [0, 0, 1, 1], [], []>} : vector<2x128xf32>, vector<128x512xf32>, vector<2x512xf32> -> vector<2x512xf32>
    %334 = arith.addf %332, %333 : vector<2x512xf32>
    %335 = vector.extract_strided_slice %334 {offsets = [0, 0], sizes = [2, 128], strides = [1, 1]} : vector<2x512xf32> to vector<2x128xf32>
    %336 = arith.negf %335 : vector<2x128xf32>
    %337 = math.exp %336 : vector<2x128xf32>
    %cst_100 = arith.constant 1.000000e+00 : f32
    %338 = vector.broadcast %cst_100 : f32 to vector<2x128xf32>
    %339 = arith.addf %338, %337 : vector<2x128xf32>
    %340 = arith.divf %338, %339 : vector<2x128xf32>
    %341 = vector.extract_strided_slice %334 {offsets = [0, 128], sizes = [2, 128], strides = [1, 1]} : vector<2x512xf32> to vector<2x128xf32>
    %342 = arith.negf %341 : vector<2x128xf32>
    %343 = math.exp %342 : vector<2x128xf32>
    %cst_101 = arith.constant 1.000000e+00 : f32
    %344 = vector.broadcast %cst_101 : f32 to vector<2x128xf32>
    %345 = arith.addf %344, %343 : vector<2x128xf32>
    %346 = arith.divf %344, %345 : vector<2x128xf32>
    %347 = vector.extract_strided_slice %334 {offsets = [0, 256], sizes = [2, 128], strides = [1, 1]} : vector<2x512xf32> to vector<2x128xf32>
    %348 = math.tanh %347 : vector<2x128xf32>
    %349 = vector.extract_strided_slice %334 {offsets = [0, 384], sizes = [2, 128], strides = [1, 1]} : vector<2x512xf32> to vector<2x128xf32>
    %350 = arith.negf %349 : vector<2x128xf32>
    %351 = math.exp %350 : vector<2x128xf32>
    %cst_102 = arith.constant 1.000000e+00 : f32
    %352 = vector.broadcast %cst_102 : f32 to vector<2x128xf32>
    %353 = arith.addf %352, %351 : vector<2x128xf32>
    %354 = arith.divf %352, %353 : vector<2x128xf32>
    %355 = arith.mulf %346, %326 : vector<2x128xf32>
    %356 = arith.mulf %340, %348 : vector<2x128xf32>
    %357 = arith.addf %355, %356 : vector<2x128xf32>
    %358 = math.tanh %357 : vector<2x128xf32>
    %359 = arith.mulf %354, %358 : vector<2x128xf32>
    %c10_103 = arith.constant 10 : index
    %c0_104 = arith.constant 0 : index
    %c0_105 = arith.constant 0 : index
    %360 = vector.load %arg8[%c10_103, %c0_104, %c0_105] : memref<24x2x128xf32, #tpu.memory_space<vmem>>, vector<1x2x128xf32>
    %361 = vector.shape_cast %360 : vector<1x2x128xf32> to vector<2x128xf32>
    %362 = vector.shape_cast %359 : vector<2x128xf32> to vector<1x2x128xf32>
    tpu.vector_store %arg8[%c10_103, %c0_104, %c0_105], %362 {strides = array<i32>} : memref<24x2x128xf32, #tpu.memory_space<vmem>>, vector<1x2x128xf32>,
    %c22 = arith.constant 22 : index
    %c0_106 = arith.constant 0 : index
    %363 = vector.load %arg9[%c22, %c0_106] : memref<48x512xf32, #tpu.memory_space<vmem>>, vector<2x512xf32>
    %cst_107 = arith.constant dense<0.000000e+00> : vector<2x512xf32>
    %364 = tpu.matmul %359, %19, %cst_107 {dimension_numbers = #tpu.dot_dimension_numbers<[1], [0], [0], [1], [0, 0, 1, 1], [], []>} : vector<2x128xf32>, vector<128x512xf32>, vector<2x512xf32> -> vector<2x512xf32>
    %365 = arith.addf %363, %364 : vector<2x512xf32>
    %366 = vector.extract_strided_slice %365 {offsets = [0, 0], sizes = [2, 128], strides = [1, 1]} : vector<2x512xf32> to vector<2x128xf32>
    %367 = arith.negf %366 : vector<2x128xf32>
    %368 = math.exp %367 : vector<2x128xf32>
    %cst_108 = arith.constant 1.000000e+00 : f32
    %369 = vector.broadcast %cst_108 : f32 to vector<2x128xf32>
    %370 = arith.addf %369, %368 : vector<2x128xf32>
    %371 = arith.divf %369, %370 : vector<2x128xf32>
    %372 = vector.extract_strided_slice %365 {offsets = [0, 128], sizes = [2, 128], strides = [1, 1]} : vector<2x512xf32> to vector<2x128xf32>
    %373 = arith.negf %372 : vector<2x128xf32>
    %374 = math.exp %373 : vector<2x128xf32>
    %cst_109 = arith.constant 1.000000e+00 : f32
    %375 = vector.broadcast %cst_109 : f32 to vector<2x128xf32>
    %376 = arith.addf %375, %374 : vector<2x128xf32>
    %377 = arith.divf %375, %376 : vector<2x128xf32>
    %378 = vector.extract_strided_slice %365 {offsets = [0, 256], sizes = [2, 128], strides = [1, 1]} : vector<2x512xf32> to vector<2x128xf32>
    %379 = math.tanh %378 : vector<2x128xf32>
    %380 = vector.extract_strided_slice %365 {offsets = [0, 384], sizes = [2, 128], strides = [1, 1]} : vector<2x512xf32> to vector<2x128xf32>
    %381 = arith.negf %380 : vector<2x128xf32>
    %382 = math.exp %381 : vector<2x128xf32>
    %cst_110 = arith.constant 1.000000e+00 : f32
    %383 = vector.broadcast %cst_110 : f32 to vector<2x128xf32>
    %384 = arith.addf %383, %382 : vector<2x128xf32>
    %385 = arith.divf %383, %384 : vector<2x128xf32>
    %386 = arith.mulf %377, %357 : vector<2x128xf32>
    %387 = arith.mulf %371, %379 : vector<2x128xf32>
    %388 = arith.addf %386, %387 : vector<2x128xf32>
    %389 = math.tanh %388 : vector<2x128xf32>
    %390 = arith.mulf %385, %389 : vector<2x128xf32>
    %c11 = arith.constant 11 : index
    %c0_111 = arith.constant 0 : index
    %c0_112 = arith.constant 0 : index
    %391 = vector.load %arg8[%c11, %c0_111, %c0_112] : memref<24x2x128xf32, #tpu.memory_space<vmem>>, vector<1x2x128xf32>
    %392 = vector.shape_cast %391 : vector<1x2x128xf32> to vector<2x128xf32>
    %393 = vector.shape_cast %390 : vector<2x128xf32> to vector<1x2x128xf32>
    tpu.vector_store %arg8[%c11, %c0_111, %c0_112], %393 {strides = array<i32>} : memref<24x2x128xf32, #tpu.memory_space<vmem>>, vector<1x2x128xf32>,
    %c24 = arith.constant 24 : index
    %c0_113 = arith.constant 0 : index
    %394 = vector.load %arg9[%c24, %c0_113] : memref<48x512xf32, #tpu.memory_space<vmem>>, vector<2x512xf32>
    %cst_114 = arith.constant dense<0.000000e+00> : vector<2x512xf32>
    %395 = tpu.matmul %390, %19, %cst_114 {dimension_numbers = #tpu.dot_dimension_numbers<[1], [0], [0], [1], [0, 0, 1, 1], [], []>} : vector<2x128xf32>, vector<128x512xf32>, vector<2x512xf32> -> vector<2x512xf32>
    %396 = arith.addf %394, %395 : vector<2x512xf32>
    %397 = vector.extract_strided_slice %396 {offsets = [0, 0], sizes = [2, 128], strides = [1, 1]} : vector<2x512xf32> to vector<2x128xf32>
    %398 = arith.negf %397 : vector<2x128xf32>
    %399 = math.exp %398 : vector<2x128xf32>
    %cst_115 = arith.constant 1.000000e+00 : f32
    %400 = vector.broadcast %cst_115 : f32 to vector<2x128xf32>
    %401 = arith.addf %400, %399 : vector<2x128xf32>
    %402 = arith.divf %400, %401 : vector<2x128xf32>
    %403 = vector.extract_strided_slice %396 {offsets = [0, 128], sizes = [2, 128], strides = [1, 1]} : vector<2x512xf32> to vector<2x128xf32>
    %404 = arith.negf %403 : vector<2x128xf32>
    %405 = math.exp %404 : vector<2x128xf32>
    %cst_116 = arith.constant 1.000000e+00 : f32
    %406 = vector.broadcast %cst_116 : f32 to vector<2x128xf32>
    %407 = arith.addf %406, %405 : vector<2x128xf32>
    %408 = arith.divf %406, %407 : vector<2x128xf32>
    %409 = vector.extract_strided_slice %396 {offsets = [0, 256], sizes = [2, 128], strides = [1, 1]} : vector<2x512xf32> to vector<2x128xf32>
    %410 = math.tanh %409 : vector<2x128xf32>
    %411 = vector.extract_strided_slice %396 {offsets = [0, 384], sizes = [2, 128], strides = [1, 1]} : vector<2x512xf32> to vector<2x128xf32>
    %412 = arith.negf %411 : vector<2x128xf32>
    %413 = math.exp %412 : vector<2x128xf32>
    %cst_117 = arith.constant 1.000000e+00 : f32
    %414 = vector.broadcast %cst_117 : f32 to vector<2x128xf32>
    %415 = arith.addf %414, %413 : vector<2x128xf32>
    %416 = arith.divf %414, %415 : vector<2x128xf32>
    %417 = arith.mulf %408, %388 : vector<2x128xf32>
    %418 = arith.mulf %402, %410 : vector<2x128xf32>
    %419 = arith.addf %417, %418 : vector<2x128xf32>
    %420 = math.tanh %419 : vector<2x128xf32>
    %421 = arith.mulf %416, %420 : vector<2x128xf32>
    %c12_118 = arith.constant 12 : index
    %c0_119 = arith.constant 0 : index
    %c0_120 = arith.constant 0 : index
    %422 = vector.load %arg8[%c12_118, %c0_119, %c0_120] : memref<24x2x128xf32, #tpu.memory_space<vmem>>, vector<1x2x128xf32>
    %423 = vector.shape_cast %422 : vector<1x2x128xf32> to vector<2x128xf32>
    %424 = vector.shape_cast %421 : vector<2x128xf32> to vector<1x2x128xf32>
    tpu.vector_store %arg8[%c12_118, %c0_119, %c0_120], %424 {strides = array<i32>} : memref<24x2x128xf32, #tpu.memory_space<vmem>>, vector<1x2x128xf32>,
    %c26 = arith.constant 26 : index
    %c0_121 = arith.constant 0 : index
    %425 = vector.load %arg9[%c26, %c0_121] : memref<48x512xf32, #tpu.memory_space<vmem>>, vector<2x512xf32>
    %cst_122 = arith.constant dense<0.000000e+00> : vector<2x512xf32>
    %426 = tpu.matmul %421, %19, %cst_122 {dimension_numbers = #tpu.dot_dimension_numbers<[1], [0], [0], [1], [0, 0, 1, 1], [], []>} : vector<2x128xf32>, vector<128x512xf32>, vector<2x512xf32> -> vector<2x512xf32>
    %427 = arith.addf %425, %426 : vector<2x512xf32>
    %428 = vector.extract_strided_slice %427 {offsets = [0, 0], sizes = [2, 128], strides = [1, 1]} : vector<2x512xf32> to vector<2x128xf32>
    %429 = arith.negf %428 : vector<2x128xf32>
    %430 = math.exp %429 : vector<2x128xf32>
    %cst_123 = arith.constant 1.000000e+00 : f32
    %431 = vector.broadcast %cst_123 : f32 to vector<2x128xf32>
    %432 = arith.addf %431, %430 : vector<2x128xf32>
    %433 = arith.divf %431, %432 : vector<2x128xf32>
    %434 = vector.extract_strided_slice %427 {offsets = [0, 128], sizes = [2, 128], strides = [1, 1]} : vector<2x512xf32> to vector<2x128xf32>
    %435 = arith.negf %434 : vector<2x128xf32>
    %436 = math.exp %435 : vector<2x128xf32>
    %cst_124 = arith.constant 1.000000e+00 : f32
    %437 = vector.broadcast %cst_124 : f32 to vector<2x128xf32>
    %438 = arith.addf %437, %436 : vector<2x128xf32>
    %439 = arith.divf %437, %438 : vector<2x128xf32>
    %440 = vector.extract_strided_slice %427 {offsets = [0, 256], sizes = [2, 128], strides = [1, 1]} : vector<2x512xf32> to vector<2x128xf32>
    %441 = math.tanh %440 : vector<2x128xf32>
    %442 = vector.extract_strided_slice %427 {offsets = [0, 384], sizes = [2, 128], strides = [1, 1]} : vector<2x512xf32> to vector<2x128xf32>
    %443 = arith.negf %442 : vector<2x128xf32>
    %444 = math.exp %443 : vector<2x128xf32>
    %cst_125 = arith.constant 1.000000e+00 : f32
    %445 = vector.broadcast %cst_125 : f32 to vector<2x128xf32>
    %446 = arith.addf %445, %444 : vector<2x128xf32>
    %447 = arith.divf %445, %446 : vector<2x128xf32>
    %448 = arith.mulf %439, %419 : vector<2x128xf32>
    %449 = arith.mulf %433, %441 : vector<2x128xf32>
    %450 = arith.addf %448, %449 : vector<2x128xf32>
    %451 = math.tanh %450 : vector<2x128xf32>
    %452 = arith.mulf %447, %451 : vector<2x128xf32>
    %c13 = arith.constant 13 : index
    %c0_126 = arith.constant 0 : index
    %c0_127 = arith.constant 0 : index
    %453 = vector.load %arg8[%c13, %c0_126, %c0_127] : memref<24x2x128xf32, #tpu.memory_space<vmem>>, vector<1x2x128xf32>
    %454 = vector.shape_cast %453 : vector<1x2x128xf32> to vector<2x128xf32>
    %455 = vector.shape_cast %452 : vector<2x128xf32> to vector<1x2x128xf32>
    tpu.vector_store %arg8[%c13, %c0_126, %c0_127], %455 {strides = array<i32>} : memref<24x2x128xf32, #tpu.memory_space<vmem>>, vector<1x2x128xf32>,
    %c28 = arith.constant 28 : index
    %c0_128 = arith.constant 0 : index
    %456 = vector.load %arg9[%c28, %c0_128] : memref<48x512xf32, #tpu.memory_space<vmem>>, vector<2x512xf32>
    %cst_129 = arith.constant dense<0.000000e+00> : vector<2x512xf32>
    %457 = tpu.matmul %452, %19, %cst_129 {dimension_numbers = #tpu.dot_dimension_numbers<[1], [0], [0], [1], [0, 0, 1, 1], [], []>} : vector<2x128xf32>, vector<128x512xf32>, vector<2x512xf32> -> vector<2x512xf32>
    %458 = arith.addf %456, %457 : vector<2x512xf32>
    %459 = vector.extract_strided_slice %458 {offsets = [0, 0], sizes = [2, 128], strides = [1, 1]} : vector<2x512xf32> to vector<2x128xf32>
    %460 = arith.negf %459 : vector<2x128xf32>
    %461 = math.exp %460 : vector<2x128xf32>
    %cst_130 = arith.constant 1.000000e+00 : f32
    %462 = vector.broadcast %cst_130 : f32 to vector<2x128xf32>
    %463 = arith.addf %462, %461 : vector<2x128xf32>
    %464 = arith.divf %462, %463 : vector<2x128xf32>
    %465 = vector.extract_strided_slice %458 {offsets = [0, 128], sizes = [2, 128], strides = [1, 1]} : vector<2x512xf32> to vector<2x128xf32>
    %466 = arith.negf %465 : vector<2x128xf32>
    %467 = math.exp %466 : vector<2x128xf32>
    %cst_131 = arith.constant 1.000000e+00 : f32
    %468 = vector.broadcast %cst_131 : f32 to vector<2x128xf32>
    %469 = arith.addf %468, %467 : vector<2x128xf32>
    %470 = arith.divf %468, %469 : vector<2x128xf32>
    %471 = vector.extract_strided_slice %458 {offsets = [0, 256], sizes = [2, 128], strides = [1, 1]} : vector<2x512xf32> to vector<2x128xf32>
    %472 = math.tanh %471 : vector<2x128xf32>
    %473 = vector.extract_strided_slice %458 {offsets = [0, 384], sizes = [2, 128], strides = [1, 1]} : vector<2x512xf32> to vector<2x128xf32>
    %474 = arith.negf %473 : vector<2x128xf32>
    %475 = math.exp %474 : vector<2x128xf32>
    %cst_132 = arith.constant 1.000000e+00 : f32
    %476 = vector.broadcast %cst_132 : f32 to vector<2x128xf32>
    %477 = arith.addf %476, %475 : vector<2x128xf32>
    %478 = arith.divf %476, %477 : vector<2x128xf32>
    %479 = arith.mulf %470, %450 : vector<2x128xf32>
    %480 = arith.mulf %464, %472 : vector<2x128xf32>
    %481 = arith.addf %479, %480 : vector<2x128xf32>
    %482 = math.tanh %481 : vector<2x128xf32>
    %483 = arith.mulf %478, %482 : vector<2x128xf32>
    %c14_133 = arith.constant 14 : index
    %c0_134 = arith.constant 0 : index
    %c0_135 = arith.constant 0 : index
    %484 = vector.load %arg8[%c14_133, %c0_134, %c0_135] : memref<24x2x128xf32, #tpu.memory_space<vmem>>, vector<1x2x128xf32>
    %485 = vector.shape_cast %484 : vector<1x2x128xf32> to vector<2x128xf32>
    %486 = vector.shape_cast %483 : vector<2x128xf32> to vector<1x2x128xf32>
    tpu.vector_store %arg8[%c14_133, %c0_134, %c0_135], %486 {strides = array<i32>} : memref<24x2x128xf32, #tpu.memory_space<vmem>>, vector<1x2x128xf32>,
    %c30 = arith.constant 30 : index
    %c0_136 = arith.constant 0 : index
    %487 = vector.load %arg9[%c30, %c0_136] : memref<48x512xf32, #tpu.memory_space<vmem>>, vector<2x512xf32>
    %cst_137 = arith.constant dense<0.000000e+00> : vector<2x512xf32>
    %488 = tpu.matmul %483, %19, %cst_137 {dimension_numbers = #tpu.dot_dimension_numbers<[1], [0], [0], [1], [0, 0, 1, 1], [], []>} : vector<2x128xf32>, vector<128x512xf32>, vector<2x512xf32> -> vector<2x512xf32>
    %489 = arith.addf %487, %488 : vector<2x512xf32>
    %490 = vector.extract_strided_slice %489 {offsets = [0, 0], sizes = [2, 128], strides = [1, 1]} : vector<2x512xf32> to vector<2x128xf32>
    %491 = arith.negf %490 : vector<2x128xf32>
    %492 = math.exp %491 : vector<2x128xf32>
    %cst_138 = arith.constant 1.000000e+00 : f32
    %493 = vector.broadcast %cst_138 : f32 to vector<2x128xf32>
    %494 = arith.addf %493, %492 : vector<2x128xf32>
    %495 = arith.divf %493, %494 : vector<2x128xf32>
    %496 = vector.extract_strided_slice %489 {offsets = [0, 128], sizes = [2, 128], strides = [1, 1]} : vector<2x512xf32> to vector<2x128xf32>
    %497 = arith.negf %496 : vector<2x128xf32>
    %498 = math.exp %497 : vector<2x128xf32>
    %cst_139 = arith.constant 1.000000e+00 : f32
    %499 = vector.broadcast %cst_139 : f32 to vector<2x128xf32>
    %500 = arith.addf %499, %498 : vector<2x128xf32>
    %501 = arith.divf %499, %500 : vector<2x128xf32>
    %502 = vector.extract_strided_slice %489 {offsets = [0, 256], sizes = [2, 128], strides = [1, 1]} : vector<2x512xf32> to vector<2x128xf32>
    %503 = math.tanh %502 : vector<2x128xf32>
    %504 = vector.extract_strided_slice %489 {offsets = [0, 384], sizes = [2, 128], strides = [1, 1]} : vector<2x512xf32> to vector<2x128xf32>
    %505 = arith.negf %504 : vector<2x128xf32>
    %506 = math.exp %505 : vector<2x128xf32>
    %cst_140 = arith.constant 1.000000e+00 : f32
    %507 = vector.broadcast %cst_140 : f32 to vector<2x128xf32>
    %508 = arith.addf %507, %506 : vector<2x128xf32>
    %509 = arith.divf %507, %508 : vector<2x128xf32>
    %510 = arith.mulf %501, %481 : vector<2x128xf32>
    %511 = arith.mulf %495, %503 : vector<2x128xf32>
    %512 = arith.addf %510, %511 : vector<2x128xf32>
    %513 = math.tanh %512 : vector<2x128xf32>
    %514 = arith.mulf %509, %513 : vector<2x128xf32>
    %c15 = arith.constant 15 : index
    %c0_141 = arith.constant 0 : index
    %c0_142 = arith.constant 0 : index
    %515 = vector.load %arg8[%c15, %c0_141, %c0_142] : memref<24x2x128xf32, #tpu.memory_space<vmem>>, vector<1x2x128xf32>
    %516 = vector.shape_cast %515 : vector<1x2x128xf32> to vector<2x128xf32>
    %517 = vector.shape_cast %514 : vector<2x128xf32> to vector<1x2x128xf32>
    tpu.vector_store %arg8[%c15, %c0_141, %c0_142], %517 {strides = array<i32>} : memref<24x2x128xf32, #tpu.memory_space<vmem>>, vector<1x2x128xf32>,
    %c32 = arith.constant 32 : index
    %c0_143 = arith.constant 0 : index
    %518 = vector.load %arg9[%c32, %c0_143] : memref<48x512xf32, #tpu.memory_space<vmem>>, vector<2x512xf32>
    %cst_144 = arith.constant dense<0.000000e+00> : vector<2x512xf32>
    %519 = tpu.matmul %514, %19, %cst_144 {dimension_numbers = #tpu.dot_dimension_numbers<[1], [0], [0], [1], [0, 0, 1, 1], [], []>} : vector<2x128xf32>, vector<128x512xf32>, vector<2x512xf32> -> vector<2x512xf32>
    %520 = arith.addf %518, %519 : vector<2x512xf32>
    %521 = vector.extract_strided_slice %520 {offsets = [0, 0], sizes = [2, 128], strides = [1, 1]} : vector<2x512xf32> to vector<2x128xf32>
    %522 = arith.negf %521 : vector<2x128xf32>
    %523 = math.exp %522 : vector<2x128xf32>
    %cst_145 = arith.constant 1.000000e+00 : f32
    %524 = vector.broadcast %cst_145 : f32 to vector<2x128xf32>
    %525 = arith.addf %524, %523 : vector<2x128xf32>
    %526 = arith.divf %524, %525 : vector<2x128xf32>
    %527 = vector.extract_strided_slice %520 {offsets = [0, 128], sizes = [2, 128], strides = [1, 1]} : vector<2x512xf32> to vector<2x128xf32>
    %528 = arith.negf %527 : vector<2x128xf32>
    %529 = math.exp %528 : vector<2x128xf32>
    %cst_146 = arith.constant 1.000000e+00 : f32
    %530 = vector.broadcast %cst_146 : f32 to vector<2x128xf32>
    %531 = arith.addf %530, %529 : vector<2x128xf32>
    %532 = arith.divf %530, %531 : vector<2x128xf32>
    %533 = vector.extract_strided_slice %520 {offsets = [0, 256], sizes = [2, 128], strides = [1, 1]} : vector<2x512xf32> to vector<2x128xf32>
    %534 = math.tanh %533 : vector<2x128xf32>
    %535 = vector.extract_strided_slice %520 {offsets = [0, 384], sizes = [2, 128], strides = [1, 1]} : vector<2x512xf32> to vector<2x128xf32>
    %536 = arith.negf %535 : vector<2x128xf32>
    %537 = math.exp %536 : vector<2x128xf32>
    %cst_147 = arith.constant 1.000000e+00 : f32
    %538 = vector.broadcast %cst_147 : f32 to vector<2x128xf32>
    %539 = arith.addf %538, %537 : vector<2x128xf32>
    %540 = arith.divf %538, %539 : vector<2x128xf32>
    %541 = arith.mulf %532, %512 : vector<2x128xf32>
    %542 = arith.mulf %526, %534 : vector<2x128xf32>
    %543 = arith.addf %541, %542 : vector<2x128xf32>
    %544 = math.tanh %543 : vector<2x128xf32>
    %545 = arith.mulf %540, %544 : vector<2x128xf32>
    %c16_148 = arith.constant 16 : index
    %c0_149 = arith.constant 0 : index
    %c0_150 = arith.constant 0 : index
    %546 = vector.load %arg8[%c16_148, %c0_149, %c0_150] : memref<24x2x128xf32, #tpu.memory_space<vmem>>, vector<1x2x128xf32>
    %547 = vector.shape_cast %546 : vector<1x2x128xf32> to vector<2x128xf32>
    %548 = vector.shape_cast %545 : vector<2x128xf32> to vector<1x2x128xf32>
    tpu.vector_store %arg8[%c16_148, %c0_149, %c0_150], %548 {strides = array<i32>} : memref<24x2x128xf32, #tpu.memory_space<vmem>>, vector<1x2x128xf32>,
    %c34 = arith.constant 34 : index
    %c0_151 = arith.constant 0 : index
    %549 = vector.load %arg9[%c34, %c0_151] : memref<48x512xf32, #tpu.memory_space<vmem>>, vector<2x512xf32>
    %cst_152 = arith.constant dense<0.000000e+00> : vector<2x512xf32>
    %550 = tpu.matmul %545, %19, %cst_152 {dimension_numbers = #tpu.dot_dimension_numbers<[1], [0], [0], [1], [0, 0, 1, 1], [], []>} : vector<2x128xf32>, vector<128x512xf32>, vector<2x512xf32> -> vector<2x512xf32>
    %551 = arith.addf %549, %550 : vector<2x512xf32>
    %552 = vector.extract_strided_slice %551 {offsets = [0, 0], sizes = [2, 128], strides = [1, 1]} : vector<2x512xf32> to vector<2x128xf32>
    %553 = arith.negf %552 : vector<2x128xf32>
    %554 = math.exp %553 : vector<2x128xf32>
    %cst_153 = arith.constant 1.000000e+00 : f32
    %555 = vector.broadcast %cst_153 : f32 to vector<2x128xf32>
    %556 = arith.addf %555, %554 : vector<2x128xf32>
    %557 = arith.divf %555, %556 : vector<2x128xf32>
    %558 = vector.extract_strided_slice %551 {offsets = [0, 128], sizes = [2, 128], strides = [1, 1]} : vector<2x512xf32> to vector<2x128xf32>
    %559 = arith.negf %558 : vector<2x128xf32>
    %560 = math.exp %559 : vector<2x128xf32>
    %cst_154 = arith.constant 1.000000e+00 : f32
    %561 = vector.broadcast %cst_154 : f32 to vector<2x128xf32>
    %562 = arith.addf %561, %560 : vector<2x128xf32>
    %563 = arith.divf %561, %562 : vector<2x128xf32>
    %564 = vector.extract_strided_slice %551 {offsets = [0, 256], sizes = [2, 128], strides = [1, 1]} : vector<2x512xf32> to vector<2x128xf32>
    %565 = math.tanh %564 : vector<2x128xf32>
    %566 = vector.extract_strided_slice %551 {offsets = [0, 384], sizes = [2, 128], strides = [1, 1]} : vector<2x512xf32> to vector<2x128xf32>
    %567 = arith.negf %566 : vector<2x128xf32>
    %568 = math.exp %567 : vector<2x128xf32>
    %cst_155 = arith.constant 1.000000e+00 : f32
    %569 = vector.broadcast %cst_155 : f32 to vector<2x128xf32>
    %570 = arith.addf %569, %568 : vector<2x128xf32>
    %571 = arith.divf %569, %570 : vector<2x128xf32>
    %572 = arith.mulf %563, %543 : vector<2x128xf32>
    %573 = arith.mulf %557, %565 : vector<2x128xf32>
    %574 = arith.addf %572, %573 : vector<2x128xf32>
    %575 = math.tanh %574 : vector<2x128xf32>
    %576 = arith.mulf %571, %575 : vector<2x128xf32>
    %c17 = arith.constant 17 : index
    %c0_156 = arith.constant 0 : index
    %c0_157 = arith.constant 0 : index
    %577 = vector.load %arg8[%c17, %c0_156, %c0_157] : memref<24x2x128xf32, #tpu.memory_space<vmem>>, vector<1x2x128xf32>
    %578 = vector.shape_cast %577 : vector<1x2x128xf32> to vector<2x128xf32>
    %579 = vector.shape_cast %576 : vector<2x128xf32> to vector<1x2x128xf32>
    tpu.vector_store %arg8[%c17, %c0_156, %c0_157], %579 {strides = array<i32>} : memref<24x2x128xf32, #tpu.memory_space<vmem>>, vector<1x2x128xf32>,
    %c36 = arith.constant 36 : index
    %c0_158 = arith.constant 0 : index
    %580 = vector.load %arg9[%c36, %c0_158] : memref<48x512xf32, #tpu.memory_space<vmem>>, vector<2x512xf32>
    %cst_159 = arith.constant dense<0.000000e+00> : vector<2x512xf32>
    %581 = tpu.matmul %576, %19, %cst_159 {dimension_numbers = #tpu.dot_dimension_numbers<[1], [0], [0], [1], [0, 0, 1, 1], [], []>} : vector<2x128xf32>, vector<128x512xf32>, vector<2x512xf32> -> vector<2x512xf32>
    %582 = arith.addf %580, %581 : vector<2x512xf32>
    %583 = vector.extract_strided_slice %582 {offsets = [0, 0], sizes = [2, 128], strides = [1, 1]} : vector<2x512xf32> to vector<2x128xf32>
    %584 = arith.negf %583 : vector<2x128xf32>
    %585 = math.exp %584 : vector<2x128xf32>
    %cst_160 = arith.constant 1.000000e+00 : f32
    %586 = vector.broadcast %cst_160 : f32 to vector<2x128xf32>
    %587 = arith.addf %586, %585 : vector<2x128xf32>
    %588 = arith.divf %586, %587 : vector<2x128xf32>
    %589 = vector.extract_strided_slice %582 {offsets = [0, 128], sizes = [2, 128], strides = [1, 1]} : vector<2x512xf32> to vector<2x128xf32>
    %590 = arith.negf %589 : vector<2x128xf32>
    %591 = math.exp %590 : vector<2x128xf32>
    %cst_161 = arith.constant 1.000000e+00 : f32
    %592 = vector.broadcast %cst_161 : f32 to vector<2x128xf32>
    %593 = arith.addf %592, %591 : vector<2x128xf32>
    %594 = arith.divf %592, %593 : vector<2x128xf32>
    %595 = vector.extract_strided_slice %582 {offsets = [0, 256], sizes = [2, 128], strides = [1, 1]} : vector<2x512xf32> to vector<2x128xf32>
    %596 = math.tanh %595 : vector<2x128xf32>
    %597 = vector.extract_strided_slice %582 {offsets = [0, 384], sizes = [2, 128], strides = [1, 1]} : vector<2x512xf32> to vector<2x128xf32>
    %598 = arith.negf %597 : vector<2x128xf32>
    %599 = math.exp %598 : vector<2x128xf32>
    %cst_162 = arith.constant 1.000000e+00 : f32
    %600 = vector.broadcast %cst_162 : f32 to vector<2x128xf32>
    %601 = arith.addf %600, %599 : vector<2x128xf32>
    %602 = arith.divf %600, %601 : vector<2x128xf32>
    %603 = arith.mulf %594, %574 : vector<2x128xf32>
    %604 = arith.mulf %588, %596 : vector<2x128xf32>
    %605 = arith.addf %603, %604 : vector<2x128xf32>
    %606 = math.tanh %605 : vector<2x128xf32>
    %607 = arith.mulf %602, %606 : vector<2x128xf32>
    %c18_163 = arith.constant 18 : index
    %c0_164 = arith.constant 0 : index
    %c0_165 = arith.constant 0 : index
    %608 = vector.load %arg8[%c18_163, %c0_164, %c0_165] : memref<24x2x128xf32, #tpu.memory_space<vmem>>, vector<1x2x128xf32>
    %609 = vector.shape_cast %608 : vector<1x2x128xf32> to vector<2x128xf32>
    %610 = vector.shape_cast %607 : vector<2x128xf32> to vector<1x2x128xf32>
    tpu.vector_store %arg8[%c18_163, %c0_164, %c0_165], %610 {strides = array<i32>} : memref<24x2x128xf32, #tpu.memory_space<vmem>>, vector<1x2x128xf32>,
    %c38 = arith.constant 38 : index
    %c0_166 = arith.constant 0 : index
    %611 = vector.load %arg9[%c38, %c0_166] : memref<48x512xf32, #tpu.memory_space<vmem>>, vector<2x512xf32>
    %cst_167 = arith.constant dense<0.000000e+00> : vector<2x512xf32>
    %612 = tpu.matmul %607, %19, %cst_167 {dimension_numbers = #tpu.dot_dimension_numbers<[1], [0], [0], [1], [0, 0, 1, 1], [], []>} : vector<2x128xf32>, vector<128x512xf32>, vector<2x512xf32> -> vector<2x512xf32>
    %613 = arith.addf %611, %612 : vector<2x512xf32>
    %614 = vector.extract_strided_slice %613 {offsets = [0, 0], sizes = [2, 128], strides = [1, 1]} : vector<2x512xf32> to vector<2x128xf32>
    %615 = arith.negf %614 : vector<2x128xf32>
    %616 = math.exp %615 : vector<2x128xf32>
    %cst_168 = arith.constant 1.000000e+00 : f32
    %617 = vector.broadcast %cst_168 : f32 to vector<2x128xf32>
    %618 = arith.addf %617, %616 : vector<2x128xf32>
    %619 = arith.divf %617, %618 : vector<2x128xf32>
    %620 = vector.extract_strided_slice %613 {offsets = [0, 128], sizes = [2, 128], strides = [1, 1]} : vector<2x512xf32> to vector<2x128xf32>
    %621 = arith.negf %620 : vector<2x128xf32>
    %622 = math.exp %621 : vector<2x128xf32>
    %cst_169 = arith.constant 1.000000e+00 : f32
    %623 = vector.broadcast %cst_169 : f32 to vector<2x128xf32>
    %624 = arith.addf %623, %622 : vector<2x128xf32>
    %625 = arith.divf %623, %624 : vector<2x128xf32>
    %626 = vector.extract_strided_slice %613 {offsets = [0, 256], sizes = [2, 128], strides = [1, 1]} : vector<2x512xf32> to vector<2x128xf32>
    %627 = math.tanh %626 : vector<2x128xf32>
    %628 = vector.extract_strided_slice %613 {offsets = [0, 384], sizes = [2, 128], strides = [1, 1]} : vector<2x512xf32> to vector<2x128xf32>
    %629 = arith.negf %628 : vector<2x128xf32>
    %630 = math.exp %629 : vector<2x128xf32>
    %cst_170 = arith.constant 1.000000e+00 : f32
    %631 = vector.broadcast %cst_170 : f32 to vector<2x128xf32>
    %632 = arith.addf %631, %630 : vector<2x128xf32>
    %633 = arith.divf %631, %632 : vector<2x128xf32>
    %634 = arith.mulf %625, %605 : vector<2x128xf32>
    %635 = arith.mulf %619, %627 : vector<2x128xf32>
    %636 = arith.addf %634, %635 : vector<2x128xf32>
    %637 = math.tanh %636 : vector<2x128xf32>
    %638 = arith.mulf %633, %637 : vector<2x128xf32>
    %c19 = arith.constant 19 : index
    %c0_171 = arith.constant 0 : index
    %c0_172 = arith.constant 0 : index
    %639 = vector.load %arg8[%c19, %c0_171, %c0_172] : memref<24x2x128xf32, #tpu.memory_space<vmem>>, vector<1x2x128xf32>
    %640 = vector.shape_cast %639 : vector<1x2x128xf32> to vector<2x128xf32>
    %641 = vector.shape_cast %638 : vector<2x128xf32> to vector<1x2x128xf32>
    tpu.vector_store %arg8[%c19, %c0_171, %c0_172], %641 {strides = array<i32>} : memref<24x2x128xf32, #tpu.memory_space<vmem>>, vector<1x2x128xf32>,
    %c40 = arith.constant 40 : index
    %c0_173 = arith.constant 0 : index
    %642 = vector.load %arg9[%c40, %c0_173] : memref<48x512xf32, #tpu.memory_space<vmem>>, vector<2x512xf32>
    %cst_174 = arith.constant dense<0.000000e+00> : vector<2x512xf32>
    %643 = tpu.matmul %638, %19, %cst_174 {dimension_numbers = #tpu.dot_dimension_numbers<[1], [0], [0], [1], [0, 0, 1, 1], [], []>} : vector<2x128xf32>, vector<128x512xf32>, vector<2x512xf32> -> vector<2x512xf32>
    %644 = arith.addf %642, %643 : vector<2x512xf32>
    %645 = vector.extract_strided_slice %644 {offsets = [0, 0], sizes = [2, 128], strides = [1, 1]} : vector<2x512xf32> to vector<2x128xf32>
    %646 = arith.negf %645 : vector<2x128xf32>
    %647 = math.exp %646 : vector<2x128xf32>
    %cst_175 = arith.constant 1.000000e+00 : f32
    %648 = vector.broadcast %cst_175 : f32 to vector<2x128xf32>
    %649 = arith.addf %648, %647 : vector<2x128xf32>
    %650 = arith.divf %648, %649 : vector<2x128xf32>
    %651 = vector.extract_strided_slice %644 {offsets = [0, 128], sizes = [2, 128], strides = [1, 1]} : vector<2x512xf32> to vector<2x128xf32>
    %652 = arith.negf %651 : vector<2x128xf32>
    %653 = math.exp %652 : vector<2x128xf32>
    %cst_176 = arith.constant 1.000000e+00 : f32
    %654 = vector.broadcast %cst_176 : f32 to vector<2x128xf32>
    %655 = arith.addf %654, %653 : vector<2x128xf32>
    %656 = arith.divf %654, %655 : vector<2x128xf32>
    %657 = vector.extract_strided_slice %644 {offsets = [0, 256], sizes = [2, 128], strides = [1, 1]} : vector<2x512xf32> to vector<2x128xf32>
    %658 = math.tanh %657 : vector<2x128xf32>
    %659 = vector.extract_strided_slice %644 {offsets = [0, 384], sizes = [2, 128], strides = [1, 1]} : vector<2x512xf32> to vector<2x128xf32>
    %660 = arith.negf %659 : vector<2x128xf32>
    %661 = math.exp %660 : vector<2x128xf32>
    %cst_177 = arith.constant 1.000000e+00 : f32
    %662 = vector.broadcast %cst_177 : f32 to vector<2x128xf32>
    %663 = arith.addf %662, %661 : vector<2x128xf32>
    %664 = arith.divf %662, %663 : vector<2x128xf32>
    %665 = arith.mulf %656, %636 : vector<2x128xf32>
    %666 = arith.mulf %650, %658 : vector<2x128xf32>
    %667 = arith.addf %665, %666 : vector<2x128xf32>
    %668 = math.tanh %667 : vector<2x128xf32>
    %669 = arith.mulf %664, %668 : vector<2x128xf32>
    %c20_178 = arith.constant 20 : index
    %c0_179 = arith.constant 0 : index
    %c0_180 = arith.constant 0 : index
    %670 = vector.load %arg8[%c20_178, %c0_179, %c0_180] : memref<24x2x128xf32, #tpu.memory_space<vmem>>, vector<1x2x128xf32>
    %671 = vector.shape_cast %670 : vector<1x2x128xf32> to vector<2x128xf32>
    %672 = vector.shape_cast %669 : vector<2x128xf32> to vector<1x2x128xf32>
    tpu.vector_store %arg8[%c20_178, %c0_179, %c0_180], %672 {strides = array<i32>} : memref<24x2x128xf32, #tpu.memory_space<vmem>>, vector<1x2x128xf32>,
    %c42 = arith.constant 42 : index
    %c0_181 = arith.constant 0 : index
    %673 = vector.load %arg9[%c42, %c0_181] : memref<48x512xf32, #tpu.memory_space<vmem>>, vector<2x512xf32>
    %cst_182 = arith.constant dense<0.000000e+00> : vector<2x512xf32>
    %674 = tpu.matmul %669, %19, %cst_182 {dimension_numbers = #tpu.dot_dimension_numbers<[1], [0], [0], [1], [0, 0, 1, 1], [], []>} : vector<2x128xf32>, vector<128x512xf32>, vector<2x512xf32> -> vector<2x512xf32>
    %675 = arith.addf %673, %674 : vector<2x512xf32>
    %676 = vector.extract_strided_slice %675 {offsets = [0, 0], sizes = [2, 128], strides = [1, 1]} : vector<2x512xf32> to vector<2x128xf32>
    %677 = arith.negf %676 : vector<2x128xf32>
    %678 = math.exp %677 : vector<2x128xf32>
    %cst_183 = arith.constant 1.000000e+00 : f32
    %679 = vector.broadcast %cst_183 : f32 to vector<2x128xf32>
    %680 = arith.addf %679, %678 : vector<2x128xf32>
    %681 = arith.divf %679, %680 : vector<2x128xf32>
    %682 = vector.extract_strided_slice %675 {offsets = [0, 128], sizes = [2, 128], strides = [1, 1]} : vector<2x512xf32> to vector<2x128xf32>
    %683 = arith.negf %682 : vector<2x128xf32>
    %684 = math.exp %683 : vector<2x128xf32>
    %cst_184 = arith.constant 1.000000e+00 : f32
    %685 = vector.broadcast %cst_184 : f32 to vector<2x128xf32>
    %686 = arith.addf %685, %684 : vector<2x128xf32>
    %687 = arith.divf %685, %686 : vector<2x128xf32>
    %688 = vector.extract_strided_slice %675 {offsets = [0, 256], sizes = [2, 128], strides = [1, 1]} : vector<2x512xf32> to vector<2x128xf32>
    %689 = math.tanh %688 : vector<2x128xf32>
    %690 = vector.extract_strided_slice %675 {offsets = [0, 384], sizes = [2, 128], strides = [1, 1]} : vector<2x512xf32> to vector<2x128xf32>
    %691 = arith.negf %690 : vector<2x128xf32>
    %692 = math.exp %691 : vector<2x128xf32>
    %cst_185 = arith.constant 1.000000e+00 : f32
    %693 = vector.broadcast %cst_185 : f32 to vector<2x128xf32>
    %694 = arith.addf %693, %692 : vector<2x128xf32>
    %695 = arith.divf %693, %694 : vector<2x128xf32>
    %696 = arith.mulf %687, %667 : vector<2x128xf32>
    %697 = arith.mulf %681, %689 : vector<2x128xf32>
    %698 = arith.addf %696, %697 : vector<2x128xf32>
    %699 = math.tanh %698 : vector<2x128xf32>
    %700 = arith.mulf %695, %699 : vector<2x128xf32>
    %c21 = arith.constant 21 : index
    %c0_186 = arith.constant 0 : index
    %c0_187 = arith.constant 0 : index
    %701 = vector.load %arg8[%c21, %c0_186, %c0_187] : memref<24x2x128xf32, #tpu.memory_space<vmem>>, vector<1x2x128xf32>
    %702 = vector.shape_cast %701 : vector<1x2x128xf32> to vector<2x128xf32>
    %703 = vector.shape_cast %700 : vector<2x128xf32> to vector<1x2x128xf32>
    tpu.vector_store %arg8[%c21, %c0_186, %c0_187], %703 {strides = array<i32>} : memref<24x2x128xf32, #tpu.memory_space<vmem>>, vector<1x2x128xf32>,
    %c44 = arith.constant 44 : index
    %c0_188 = arith.constant 0 : index
    %704 = vector.load %arg9[%c44, %c0_188] : memref<48x512xf32, #tpu.memory_space<vmem>>, vector<2x512xf32>
    %cst_189 = arith.constant dense<0.000000e+00> : vector<2x512xf32>
    %705 = tpu.matmul %700, %19, %cst_189 {dimension_numbers = #tpu.dot_dimension_numbers<[1], [0], [0], [1], [0, 0, 1, 1], [], []>} : vector<2x128xf32>, vector<128x512xf32>, vector<2x512xf32> -> vector<2x512xf32>
    %706 = arith.addf %704, %705 : vector<2x512xf32>
    %707 = vector.extract_strided_slice %706 {offsets = [0, 0], sizes = [2, 128], strides = [1, 1]} : vector<2x512xf32> to vector<2x128xf32>
    %708 = arith.negf %707 : vector<2x128xf32>
    %709 = math.exp %708 : vector<2x128xf32>
    %cst_190 = arith.constant 1.000000e+00 : f32
    %710 = vector.broadcast %cst_190 : f32 to vector<2x128xf32>
    %711 = arith.addf %710, %709 : vector<2x128xf32>
    %712 = arith.divf %710, %711 : vector<2x128xf32>
    %713 = vector.extract_strided_slice %706 {offsets = [0, 128], sizes = [2, 128], strides = [1, 1]} : vector<2x512xf32> to vector<2x128xf32>
    %714 = arith.negf %713 : vector<2x128xf32>
    %715 = math.exp %714 : vector<2x128xf32>
    %cst_191 = arith.constant 1.000000e+00 : f32
    %716 = vector.broadcast %cst_191 : f32 to vector<2x128xf32>
    %717 = arith.addf %716, %715 : vector<2x128xf32>
    %718 = arith.divf %716, %717 : vector<2x128xf32>
    %719 = vector.extract_strided_slice %706 {offsets = [0, 256], sizes = [2, 128], strides = [1, 1]} : vector<2x512xf32> to vector<2x128xf32>
    %720 = math.tanh %719 : vector<2x128xf32>
    %721 = vector.extract_strided_slice %706 {offsets = [0, 384], sizes = [2, 128], strides = [1, 1]} : vector<2x512xf32> to vector<2x128xf32>
    %722 = arith.negf %721 : vector<2x128xf32>
    %723 = math.exp %722 : vector<2x128xf32>
    %cst_192 = arith.constant 1.000000e+00 : f32
    %724 = vector.broadcast %cst_192 : f32 to vector<2x128xf32>
    %725 = arith.addf %724, %723 : vector<2x128xf32>
    %726 = arith.divf %724, %725 : vector<2x128xf32>
    %727 = arith.mulf %718, %698 : vector<2x128xf32>
    %728 = arith.mulf %712, %720 : vector<2x128xf32>
    %729 = arith.addf %727, %728 : vector<2x128xf32>
    %730 = math.tanh %729 : vector<2x128xf32>
    %731 = arith.mulf %726, %730 : vector<2x128xf32>
    %c22_193 = arith.constant 22 : index
    %c0_194 = arith.constant 0 : index
    %c0_195 = arith.constant 0 : index
    %732 = vector.load %arg8[%c22_193, %c0_194, %c0_195] : memref<24x2x128xf32, #tpu.memory_space<vmem>>, vector<1x2x128xf32>
    %733 = vector.shape_cast %732 : vector<1x2x128xf32> to vector<2x128xf32>
    %734 = vector.shape_cast %731 : vector<2x128xf32> to vector<1x2x128xf32>
    tpu.vector_store %arg8[%c22_193, %c0_194, %c0_195], %734 {strides = array<i32>} : memref<24x2x128xf32, #tpu.memory_space<vmem>>, vector<1x2x128xf32>,
    %c46 = arith.constant 46 : index
    %c0_196 = arith.constant 0 : index
    %735 = vector.load %arg9[%c46, %c0_196] : memref<48x512xf32, #tpu.memory_space<vmem>>, vector<2x512xf32>
    %cst_197 = arith.constant dense<0.000000e+00> : vector<2x512xf32>
    %736 = tpu.matmul %731, %19, %cst_197 {dimension_numbers = #tpu.dot_dimension_numbers<[1], [0], [0], [1], [0, 0, 1, 1], [], []>} : vector<2x128xf32>, vector<128x512xf32>, vector<2x512xf32> -> vector<2x512xf32>
    %737 = arith.addf %735, %736 : vector<2x512xf32>
    %738 = vector.extract_strided_slice %737 {offsets = [0, 0], sizes = [2, 128], strides = [1, 1]} : vector<2x512xf32> to vector<2x128xf32>
    %739 = arith.negf %738 : vector<2x128xf32>
    %740 = math.exp %739 : vector<2x128xf32>
    %cst_198 = arith.constant 1.000000e+00 : f32
    %741 = vector.broadcast %cst_198 : f32 to vector<2x128xf32>
    %742 = arith.addf %741, %740 : vector<2x128xf32>
    %743 = arith.divf %741, %742 : vector<2x128xf32>
    %744 = vector.extract_strided_slice %737 {offsets = [0, 128], sizes = [2, 128], strides = [1, 1]} : vector<2x512xf32> to vector<2x128xf32>
    %745 = arith.negf %744 : vector<2x128xf32>
    %746 = math.exp %745 : vector<2x128xf32>
    %cst_199 = arith.constant 1.000000e+00 : f32
    %747 = vector.broadcast %cst_199 : f32 to vector<2x128xf32>
    %748 = arith.addf %747, %746 : vector<2x128xf32>
    %749 = arith.divf %747, %748 : vector<2x128xf32>
    %750 = vector.extract_strided_slice %737 {offsets = [0, 256], sizes = [2, 128], strides = [1, 1]} : vector<2x512xf32> to vector<2x128xf32>
    %751 = math.tanh %750 : vector<2x128xf32>
    %752 = vector.extract_strided_slice %737 {offsets = [0, 384], sizes = [2, 128], strides = [1, 1]} : vector<2x512xf32> to vector<2x128xf32>
    %753 = arith.negf %752 : vector<2x128xf32>
    %754 = math.exp %753 : vector<2x128xf32>
    %cst_200 = arith.constant 1.000000e+00 : f32
    %755 = vector.broadcast %cst_200 : f32 to vector<2x128xf32>
    %756 = arith.addf %755, %754 : vector<2x128xf32>
    %757 = arith.divf %755, %756 : vector<2x128xf32>
    %758 = arith.mulf %749, %729 : vector<2x128xf32>
    %759 = arith.mulf %743, %751 : vector<2x128xf32>
    %760 = arith.addf %758, %759 : vector<2x128xf32>
    %761 = math.tanh %760 : vector<2x128xf32>
    %762 = arith.mulf %757, %761 : vector<2x128xf32>
    %c23 = arith.constant 23 : index
    %c0_201 = arith.constant 0 : index
    %c0_202 = arith.constant 0 : index
    %763 = vector.load %arg8[%c23, %c0_201, %c0_202] : memref<24x2x128xf32, #tpu.memory_space<vmem>>, vector<1x2x128xf32>
    %764 = vector.shape_cast %763 : vector<1x2x128xf32> to vector<2x128xf32>
    %765 = vector.shape_cast %762 : vector<2x128xf32> to vector<1x2x128xf32>
    tpu.vector_store %arg8[%c23, %c0_201, %c0_202], %765 {strides = array<i32>} : memref<24x2x128xf32, #tpu.memory_space<vmem>>, vector<1x2x128xf32>,
    return
  }
}

</mosaic_0001>

<llo_original>
// kernel: get_pose_forward.1
$region0: #{get_pose_forward.1}
  #allocation0 [shape = 'u32[]', space=smem, size = 0x4, offset = 0x4, fixed_abs, tag = 'smem constant byte address 0x4 - core index']
  #allocation1 [shape = 'u32[144,128]{1,0:T(1,128)}', space=vmem, size = 0x12000, scoped, tag = 'internal scratch']
  #allocation2 [shape = 'f32[48,512]{1,0:T(8,128)}', space=vmem, size = 0x18000, scoped, tag = 'scratch operand']
  %s0 = inlined_call_operand.vmem [shape: f32[48,36], index: 0, kind: input, shape index: {}]
  %s1 = inlined_call_operand.vmem [shape: f32[36,432], index: 1, kind: input, shape index: {}]
  %s2 = inlined_call_operand.vmem [shape: f32[1,432], index: 2, kind: input, shape index: {}]
  %s3 = inlined_call_operand.vmem [shape: f32[432,36], index: 3, kind: input, shape index: {}]
  %s4 = inlined_call_operand.vmem [shape: f32[1,36], index: 4, kind: input, shape index: {}]
  %s5 = inlined_call_operand.vmem [shape: f32[36,512], index: 5, kind: input, shape index: {}]
  %s6 = inlined_call_operand.vmem [shape: f32[128,512], index: 6, kind: input, shape index: {}]
  %s7 = inlined_call_operand.vmem [shape: f32[1,512], index: 7, kind: input, shape index: {}]
  %s8 = inlined_call_operand.vmem [shape: f32[24,2,128], index: 8, kind: output, shape index: {}]
  %s9 = sld [smem:[#allocation0]]
  $region42: #{get_pose_forward.1} parent=0
    _
  %s11 = ssub.s32 1, %s9
  %s12 = scalar_select 0, %s11, %s9
  // Predicated region
  $region2: #{get_pose_forward.1} parent=0 // pred_check
    _
  $region3: #{get_pose_forward.1} parent=0 // pred_check_branch
    %14 = sbr.rel (0) target = $region5
  $region4: #{get_pose_forward.1} parent=0 // pred_region
    _
  $region5: #{get_pose_forward.1} parent=0 // pred_fallthru
    _
  // Predicated region
  $region6: #{get_pose_forward.1} parent=0 // pred_check
    _
  $region7: #{get_pose_forward.1} parent=0 // pred_check_branch
    %16 = sbr.rel (0) target = $region9
  $region8: #{get_pose_forward.1} parent=0 // pred_region
    _
  $region9: #{get_pose_forward.1} parent=0 // pred_fallthru
    _
  // Predicated region
  $region10: #{get_pose_forward.1} parent=0 // pred_check
    _
  $region11: #{get_pose_forward.1} parent=0 // pred_check_branch
    %18 = sbr.rel (0) target = $region13
  $region12: #{get_pose_forward.1} parent=0 // pred_region
    _
  $region13: #{get_pose_forward.1} parent=0 // pred_fallthru
    _
  // Predicated region
  $region14: #{get_pose_forward.1} parent=0 // pred_check
    _
  $region15: #{get_pose_forward.1} parent=0 // pred_check_branch
    %20 = sbr.rel (0) target = $region17
  $region16: #{get_pose_forward.1} parent=0 // pred_region
    _
  $region17: #{get_pose_forward.1} parent=0 // pred_fallthru
    _
  // Predicated region
  $region18: #{get_pose_forward.1} parent=0 // pred_check
    _
  $region19: #{get_pose_forward.1} parent=0 // pred_check_branch
    %22 = sbr.rel (0) target = $region21
  $region20: #{get_pose_forward.1} parent=0 // pred_region
    _
  $region21: #{get_pose_forward.1} parent=0 // pred_fallthru
    _
  // Predicated region
  $region22: #{get_pose_forward.1} parent=0 // pred_check
    _
  $region23: #{get_pose_forward.1} parent=0 // pred_check_branch
    %24 = sbr.rel (0) target = $region25
  $region24: #{get_pose_forward.1} parent=0 // pred_region
    _
  $region25: #{get_pose_forward.1} parent=0 // pred_fallthru
    _
  // Predicated region
  $region26: #{get_pose_forward.1} parent=0 // pred_check
    _
  $region27: #{get_pose_forward.1} parent=0 // pred_check_branch
    %26 = sbr.rel (0) target = $region29
  $region28: #{get_pose_forward.1} parent=0 // pred_region
    _
  $region29: #{get_pose_forward.1} parent=0 // pred_fallthru
    _
  // Predicated region
  $region30: #{get_pose_forward.1} parent=0 // pred_check
    _
  $region31: #{get_pose_forward.1} parent=0 // pred_check_branch
    %28 = sbr.rel (0) target = $region33
  $region32: #{get_pose_forward.1} parent=0 // pred_region
    _
  $region33: #{get_pose_forward.1} parent=0 // pred_fallthru
    _
  %v29 = vld [vmem:[%s0] sm:$0xff]
  %v30 = vld [vmem:[%s0 + $0x8] sm:$0xff]
  %v31 = vld [vmem:[%s0 + $0x10] sm:$0xff]
  %v32 = vld [vmem:[%s0 + $0x18] sm:$0xff]
  %v33 = vld [vmem:[%s0 + $0x20] sm:$0xff]
  %v34 = vld [vmem:[%s0 + $0x28] sm:$0xff]
  %v35 = vld [vmem:[%s1] sm:$0xff]
  %v36 = vld [vmem:[%s1 + $0x8] sm:$0xff]
  %v37 = vld [vmem:[%s1 + $0x10] sm:$0xff]
  %v38 = vld [vmem:[%s1 + $0x18] sm:$0xff]
  %v39 = vld [vmem:[%s1 + $0x20] sm:$0xff]
  %v40 = vld [vmem:[%s1 + $0x28] sm:$0xff]
  %v41 = vld [vmem:[%s1 + $0x30] sm:$0xff]
  %v42 = vld [vmem:[%s1 + $0x38] sm:$0xff]
  %v43 = vld [vmem:[%s1 + $0x40] sm:$0xff]
  %v44 = vld [vmem:[%s1 + $0x48] sm:$0xff]
  %v45 = vld [vmem:[%s1 + $0x50] sm:$0xff]
  %v46 = vld [vmem:[%s1 + $0x58] sm:$0xff]
  %v47 = vld [vmem:[%s1 + $0x60] sm:$0xff]
  %v48 = vld [vmem:[%s1 + $0x68] sm:$0xff]
  %v49 = vld [vmem:[%s1 + $0x70] sm:$0xff]
  %v50 = vld [vmem:[%s1 + $0x78] sm:$0xff]
  %v51 = vld [vmem:[%s1 + $0x80] sm:$0xf]
  %v52 = vld [vmem:[%s1 + $0x88] sm:$0xf]
  %v53 = vld [vmem:[%s1 + $0x90] sm:$0xf]
  %v54 = vld [vmem:[%s1 + $0x98] sm:$0xf]
  %v55 = vld [vmem:[%s2] sm:$0xf]
  %v57 = vlaneseq
  %v58 = vshrl.u32 %v57, 7
  %v59 = vsub.s32 0, %v58
  %v60 = vrot.slane %v55, %v59
  %v61 = vlaneseq
  %v62 = vshrl.u32 %v61, 7
  %v63 = vsub.s32 1, %v62
  %v64 = vrot.slane %v55, %v63
  %v65 = vlaneseq
  %v66 = vshrl.u32 %v65, 7
  %v67 = vsub.s32 2, %v66
  %v68 = vrot.slane %v55, %v67
  %v69 = vlaneseq
  %v70 = vshrl.u32 %v69, 7
  %v71 = vsub.s32 3, %v70
  %v72 = vrot.slane %v55, %v71
  %vm77 = vcmask 293888
  %v79 = vsel %vm77, %v29, 0
  %v82 = vsel %vm77, %v30, 0
  %v85 = vsel %vm77, %v31, 0
  %v88 = vsel %vm77, %v32, 0
  %v91 = vsel %vm77, %v33, 0
  %v94 = vsel %vm77, %v34, 0
  %vm96 = vcmask 1043456
  %v98 = vsel %vm96, %v51, 0
  %v101 = vsel %vm96, %v52, 0
  %v104 = vsel %vm96, %v53, 0
  %v107 = vsel %vm96, %v54, 0
  %109 = vmatprep.subr.mxu0 %v36
  %110 = vmatpush1.msra.mxu0 %v35
  %111 = vmatprep.subr.mxu0 %v40
  %112 = vmatpush1.msra.mxu0 %v39
  %113 = vmatprep.subr.mxu0 %v44
  %114 = vmatpush1.msra.mxu0 %v43
  %115 = vmatprep.subr.mxu0 %v48
  %116 = vmatpush1.msra.mxu0 %v47
  %117 = vmatprep.subr.mxu0 %v101
  %118 = vmatpush1.msra.mxu0 %v98
  %119 = vmatprep.subr.mxu0 0.0
  %120 = vmatpush1.msra.mxu0 0.0
  %121 = vmatprep.subr.mxu0 0.0
  %122 = vmatpush1.msra.mxu0 0.0
  %123 = vmatprep.subr.mxu0 0.0
  %124 = vmatpush1.msra.mxu0 0.0
  %125 = vmatprep.subr.mxu0 0.0
  %126 = vmatpush1.msra.mxu0 0.0
  %127 = vmatprep.subr.mxu0 0.0
  %128 = vmatpush1.msra.mxu0 0.0
  %129 = vmatprep.subr.mxu0 0.0
  %130 = vmatpush1.msra.mxu0 0.0
  %131 = vmatprep.subr.mxu0 0.0
  %132 = vmatpush1.msra.mxu0 0.0
  %133 = vmatprep.subr.mxu0 0.0
  %134 = vmatpush1.msra.mxu0 0.0
  %135 = vmatprep.subr.mxu0 0.0
  %136 = vmatpush1.msra.mxu0 0.0
  %137 = vmatprep.subr.mxu0 0.0
  %138 = vmatpush1.msra.mxu0 0.0
  %139 = vmatprep.subr.mxu0 0.0
  %140 = vmatpush1.msra.mxu0 0.0
  %141 = vmatprep.subr.mxu0 0.0
  %142 = vmatpush1.msra.mxu0 0.0
  %143 = vmatprep.subr.mxu0 0.0
  %144 = vmatpush1.msra.mxu0 0.0
  %145 = vmatprep.subr.mxu0 0.0
  %146 = vmatpush1.msra.mxu0 0.0
  %147 = vmatprep.subr.mxu0 0.0
  %148 = vmatpush1.msra.mxu0 0.0
  %149 = vmatprep.subr.mxu0 0.0
  %150 = vmatpush1.msra.mxu0 0.0
  %151 = vmatprep.subr.mxu0 0.0
  %152 = vmatpush1.msra.mxu0 0.0
  %153 = vmatprep.subr.mxu0 0.0
  %154 = vmatpush1.msra.mxu0 0.0
  %155 = vmatprep.subr.mxu0 0.0
  %156 = vmatpush1.msra.mxu0 0.0
  %157 = vmatprep.subr.mxu0 0.0
  %158 = vmatpush1.msra.mxu0 0.0
  %159 = vmatprep.subr.mxu0 0.0
  %160 = vmatpush1.msra.mxu0 0.0
  %161 = vmatprep.subr.mxu0 0.0
  %162 = vmatpush1.msra.mxu0 0.0
  %163 = vmatprep.subr.mxu0 0.0
  %164 = vmatpush1.msra.mxu0 0.0
  %165 = vmatprep.subr.mxu0 0.0
  %166 = vmatpush1.msra.mxu0 0.0
  %167 = vmatprep.subr.mxu0 0.0
  %168 = vmatpush1.msra.mxu0 0.0
  %169 = vmatprep.subr.mxu0 0.0
  %170 = vmatpush1.msra.mxu0 0.0
  %171 = vmatprep.subr.mxu0 0.0
  %172 = vmatpush1.msra.mxu0 0.0
  %173 = vmatprep.mubr.f32.mxu0 0.0
  %174 = vmatmul.mubr.f32.gmra.mrb[0].mxu0 %v79
  %v175 = vpop.f32.mrb[0].mxu0
  %v176 = vadd.f32 %v60, %v175
  %v177 = vpop.f32.mrb[0].mxu0
  %v178 = vadd.f32 %v64, %v177
  %179 = vmatprep.mubr.f32.mxu0 0.0
  %180 = vmatmul.mubr.f32.gmra.mrb[0].mxu0 %v82
  %v181 = vpop.f32.mrb[0].mxu0
  %v182 = vadd.f32 %v60, %v181
  %v183 = vpop.f32.mrb[0].mxu0
  %v184 = vadd.f32 %v64, %v183
  %185 = vmatprep.mubr.f32.mxu0 0.0
  %186 = vmatmul.mubr.f32.gmra.mrb[0].mxu0 %v85
  %v187 = vpop.f32.mrb[0].mxu0
  %v188 = vadd.f32 %v60, %v187
  %v189 = vpop.f32.mrb[0].mxu0
  %v190 = vadd.f32 %v64, %v189
  %191 = vmatprep.mubr.f32.mxu0 0.0
  %192 = vmatmul.mubr.f32.gmra.mrb[0].mxu0 %v88
  %v193 = vpop.f32.mrb[0].mxu0
  %v194 = vadd.f32 %v60, %v193
  %v195 = vpop.f32.mrb[0].mxu0
  %v196 = vadd.f32 %v64, %v195
  %197 = vmatprep.mubr.f32.mxu0 0.0
  %198 = vmatmul.mubr.f32.gmra.mrb[0].mxu0 %v91
  %v199 = vpop.f32.mrb[0].mxu0
  %v200 = vadd.f32 %v60, %v199
  %v201 = vpop.f32.mrb[0].mxu0
  %v202 = vadd.f32 %v64, %v201
  %203 = vmatprep.mubr.f32.mxu0 0.0
  %204 = vmatmul.mubr.f32.gmra.mrb[0].mxu0 %v94
  %v205 = vpop.f32.mrb[0].mxu0
  %v206 = vadd.f32 %v60, %v205
  %v207 = vpop.f32.mrb[0].mxu0
  %v208 = vadd.f32 %v64, %v207
  %209 = vdwg.mxu0
  %210 = vmatprep.subr.mxu0 %v38
  %211 = vmatpush1.msra.mxu0 %v37
  %212 = vmatprep.subr.mxu0 %v42
  %213 = vmatpush1.msra.mxu0 %v41
  %214 = vmatprep.subr.mxu0 %v46
  %215 = vmatpush1.msra.mxu0 %v45
  %216 = vmatprep.subr.mxu0 %v50
  %217 = vmatpush1.msra.mxu0 %v49
  %218 = vmatprep.subr.mxu0 %v107
  %219 = vmatpush1.msra.mxu0 %v104
  %220 = vmatprep.subr.mxu0 0.0
  %221 = vmatpush1.msra.mxu0 0.0
  %222 = vmatprep.subr.mxu0 0.0
  %223 = vmatpush1.msra.mxu0 0.0
  %224 = vmatprep.subr.mxu0 0.0
  %225 = vmatpush1.msra.mxu0 0.0
  %226 = vmatprep.subr.mxu0 0.0
  %227 = vmatpush1.msra.mxu0 0.0
  %228 = vmatprep.subr.mxu0 0.0
  %229 = vmatpush1.msra.mxu0 0.0
  %230 = vmatprep.subr.mxu0 0.0
  %231 = vmatpush1.msra.mxu0 0.0
  %232 = vmatprep.subr.mxu0 0.0
  %233 = vmatpush1.msra.mxu0 0.0
  %234 = vmatprep.subr.mxu0 0.0
  %235 = vmatpush1.msra.mxu0 0.0
  %236 = vmatprep.subr.mxu0 0.0
  %237 = vmatpush1.msra.mxu0 0.0
  %238 = vmatprep.subr.mxu0 0.0
  %239 = vmatpush1.msra.mxu0 0.0
  %240 = vmatprep.subr.mxu0 0.0
  %241 = vmatpush1.msra.mxu0 0.0
  %242 = vmatprep.subr.mxu0 0.0
  %243 = vmatpush1.msra.mxu0 0.0
  %244 = vmatprep.subr.mxu0 0.0
  %245 = vmatpush1.msra.mxu0 0.0
  %246 = vmatprep.subr.mxu0 0.0
  %247 = vmatpush1.msra.mxu0 0.0
  %248 = vmatprep.subr.mxu0 0.0
  %249 = vmatpush1.msra.mxu0 0.0
  %250 = vmatprep.subr.mxu0 0.0
  %251 = vmatpush1.msra.mxu0 0.0
  %252 = vmatprep.subr.mxu0 0.0
  %253 = vmatpush1.msra.mxu0 0.0
  %254 = vmatprep.subr.mxu0 0.0
  %255 = vmatpush1.msra.mxu0 0.0
  %256 = vmatprep.subr.mxu0 0.0
  %257 = vmatpush1.msra.mxu0 0.0
  %258 = vmatprep.subr.mxu0 0.0
  %259 = vmatpush1.msra.mxu0 0.0
  %260 = vmatprep.subr.mxu0 0.0
  %261 = vmatpush1.msra.mxu0 0.0
  %262 = vmatprep.subr.mxu0 0.0
  %263 = vmatpush1.msra.mxu0 0.0
  %264 = vmatprep.subr.mxu0 0.0
  %265 = vmatpush1.msra.mxu0 0.0
  %266 = vmatprep.subr.mxu0 0.0
  %267 = vmatpush1.msra.mxu0 0.0
  %268 = vmatprep.subr.mxu0 0.0
  %269 = vmatpush1.msra.mxu0 0.0
  %270 = vmatprep.subr.mxu0 0.0
  %271 = vmatpush1.msra.mxu0 0.0
  %272 = vmatprep.subr.mxu0 0.0
  %273 = vmatpush1.msra.mxu0 0.0
  %274 = vmatprep.mubr.f32.mxu0 0.0
  %275 = vmatmul.mubr.f32.gmra.mrb[0].mxu0 %v79
  %v276 = vpop.f32.mrb[0].mxu0
  %v277 = vadd.f32 %v68, %v276
  %v278 = vpop.f32.mrb[0].mxu0
  %v279 = vadd.f32 %v72, %v278
  %280 = vmatprep.mubr.f32.mxu0 0.0
  %281 = vmatmul.mubr.f32.gmra.mrb[0].mxu0 %v82
  %v282 = vpop.f32.mrb[0].mxu0
  %v283 = vadd.f32 %v68, %v282
  %v284 = vpop.f32.mrb[0].mxu0
  %v285 = vadd.f32 %v72, %v284
  %286 = vmatprep.mubr.f32.mxu0 0.0
  %287 = vmatmul.mubr.f32.gmra.mrb[0].mxu0 %v85
  %v288 = vpop.f32.mrb[0].mxu0
  %v289 = vadd.f32 %v68, %v288
  %v290 = vpop.f32.mrb[0].mxu0
  %v291 = vadd.f32 %v72, %v290
  %292 = vmatprep.mubr.f32.mxu0 0.0
  %293 = vmatmul.mubr.f32.gmra.mrb[0].mxu0 %v88
  %v294 = vpop.f32.mrb[0].mxu0
  %v295 = vadd.f32 %v68, %v294
  %v296 = vpop.f32.mrb[0].mxu0
  %v297 = vadd.f32 %v72, %v296
  %298 = vmatprep.mubr.f32.mxu0 0.0
  %299 = vmatmul.mubr.f32.gmra.mrb[0].mxu0 %v91
  %v300 = vpop.f32.mrb[0].mxu0
  %v301 = vadd.f32 %v68, %v300
  %v302 = vpop.f32.mrb[0].mxu0
  %v303 = vadd.f32 %v72, %v302
  %304 = vmatprep.mubr.f32.mxu0 0.0
  %305 = vmatmul.mubr.f32.gmra.mrb[0].mxu0 %v94
  %v306 = vpop.f32.mrb[0].mxu0
  %v307 = vadd.f32 %v68, %v306
  %v308 = vpop.f32.mrb[0].mxu0
  %v309 = vadd.f32 %v72, %v308
  %310 = vdwg.mxu0
  %v311 = vmax.f32 %v176, 0.0
  %v312 = vmax.f32 %v178, 0.0
  %v313 = vmax.f32 %v277, 0.0
  %v314 = vmax.f32 %v279, 0.0
  %v315 = vmax.f32 %v182, 0.0
  %v316 = vmax.f32 %v184, 0.0
  %v317 = vmax.f32 %v283, 0.0
  %v318 = vmax.f32 %v285, 0.0
  %v319 = vmax.f32 %v188, 0.0
  %v320 = vmax.f32 %v190, 0.0
  %v321 = vmax.f32 %v289, 0.0
  %v322 = vmax.f32 %v291, 0.0
  %v323 = vmax.f32 %v194, 0.0
  %v324 = vmax.f32 %v196, 0.0
  %v325 = vmax.f32 %v295, 0.0
  %v326 = vmax.f32 %v297, 0.0
  %v327 = vmax.f32 %v200, 0.0
  %v328 = vmax.f32 %v202, 0.0
  %v329 = vmax.f32 %v301, 0.0
  %v330 = vmax.f32 %v303, 0.0
  %v331 = vmax.f32 %v206, 0.0
  %v332 = vmax.f32 %v208, 0.0
  %v333 = vmax.f32 %v307, 0.0
  %v334 = vmax.f32 %v309, 0.0
  %v335 = vld [vmem:[%s3] sm:$0xff]
  %v336 = vld [vmem:[%s3 + $0x8] sm:$0xff]
  %v337 = vld [vmem:[%s3 + $0x10] sm:$0xff]
  %v338 = vld [vmem:[%s3 + $0x18] sm:$0xff]
  %v339 = vld [vmem:[%s3 + $0x20] sm:$0xff]
  %v340 = vld [vmem:[%s3 + $0x28] sm:$0xff]
  %v341 = vld [vmem:[%s3 + $0x30] sm:$0xff]
  %v342 = vld [vmem:[%s3 + $0x38] sm:$0xff]
  %v343 = vld [vmem:[%s3 + $0x40] sm:$0xff]
  %v344 = vld [vmem:[%s3 + $0x48] sm:$0xff]
  %v345 = vld [vmem:[%s3 + $0x50] sm:$0xff]
  %v346 = vld [vmem:[%s3 + $0x58] sm:$0xff]
  %v347 = vld [vmem:[%s3 + $0x60] sm:$0xff]
  %v348 = vld [vmem:[%s3 + $0x68] sm:$0xff]
  %v349 = vld [vmem:[%s3 + $0x70] sm:$0xff]
  %v350 = vld [vmem:[%s3 + $0x78] sm:$0xff]
  %v351 = vld [vmem:[%s3 + $0x80] sm:$0xff]
  %v352 = vld [vmem:[%s3 + $0x88] sm:$0xff]
  %v353 = vld [vmem:[%s3 + $0x90] sm:$0xff]
  %v354 = vld [vmem:[%s3 + $0x98] sm:$0xff]
  %v355 = vld [vmem:[%s3 + $0xa0] sm:$0xff]
  %v356 = vld [vmem:[%s3 + $0xa8] sm:$0xff]
  %v357 = vld [vmem:[%s3 + $0xb0] sm:$0xff]
  %v358 = vld [vmem:[%s3 + $0xb8] sm:$0xff]
  %v359 = vld [vmem:[%s3 + $0xc0] sm:$0xff]
  %v360 = vld [vmem:[%s3 + $0xc8] sm:$0xff]
  %v361 = vld [vmem:[%s3 + $0xd0] sm:$0xff]
  %v362 = vld [vmem:[%s3 + $0xd8] sm:$0xff]
  %v363 = vld [vmem:[%s3 + $0xe0] sm:$0xff]
  %v364 = vld [vmem:[%s3 + $0xe8] sm:$0xff]
  %v365 = vld [vmem:[%s3 + $0xf0] sm:$0xff]
  %v366 = vld [vmem:[%s3 + $0xf8] sm:$0xff]
  %v367 = vld [vmem:[%s3 + $0x100] sm:$0xff]
  %v368 = vld [vmem:[%s3 + $0x108] sm:$0xff]
  %v369 = vld [vmem:[%s3 + $0x110] sm:$0xff]
  %v370 = vld [vmem:[%s3 + $0x118] sm:$0xff]
  %v371 = vld [vmem:[%s3 + $0x120] sm:$0xff]
  %v372 = vld [vmem:[%s3 + $0x128] sm:$0xff]
  %v373 = vld [vmem:[%s3 + $0x130] sm:$0xff]
  %v374 = vld [vmem:[%s3 + $0x138] sm:$0xff]
  %v375 = vld [vmem:[%s3 + $0x140] sm:$0xff]
  %v376 = vld [vmem:[%s3 + $0x148] sm:$0xff]
  %v377 = vld [vmem:[%s3 + $0x150] sm:$0xff]
  %v378 = vld [vmem:[%s3 + $0x158] sm:$0xff]
  %v379 = vld [vmem:[%s3 + $0x160] sm:$0xff]
  %v380 = vld [vmem:[%s3 + $0x168] sm:$0xff]
  %v381 = vld [vmem:[%s3 + $0x170] sm:$0xff]
  %v382 = vld [vmem:[%s3 + $0x178] sm:$0xff]
  %v383 = vld [vmem:[%s3 + $0x180] sm:$0xff]
  %v384 = vld [vmem:[%s3 + $0x188] sm:$0xff]
  %v385 = vld [vmem:[%s3 + $0x190] sm:$0xff]
  %v386 = vld [vmem:[%s3 + $0x198] sm:$0xff]
  %v387 = vld [vmem:[%s3 + $0x1a0] sm:$0xff]
  %v388 = vld [vmem:[%s3 + $0x1a8] sm:$0xff]
  %v389 = vld [vmem:[%s4] sm:$0x1]
  %v391 = vlaneseq
  %v392 = vshrl.u32 %v391, 7
  %v393 = vsub.s32 0, %v392
  %v394 = vrot.slane %v389, %v393
  %vm396 = vcmask 392192
  %v398 = vsel %vm396, %v314, 0
  %v401 = vsel %vm396, %v318, 0
  %v404 = vsel %vm396, %v322, 0
  %v407 = vsel %vm396, %v326, 0
  %v410 = vsel %vm396, %v330, 0
  %v413 = vsel %vm396, %v334, 0
  %415 = vmatprep.subr.mxu0 0.0
  %416 = vmatpush1.msra.mxu0 %v335
  %417 = vmatprep.subr.mxu0 0.0
  %418 = vmatpush1.msra.mxu0 %v336
  %419 = vmatprep.subr.mxu0 0.0
  %420 = vmatpush1.msra.mxu0 %v337
  %421 = vmatprep.subr.mxu0 0.0
  %422 = vmatpush1.msra.mxu0 %v338
  %423 = vmatprep.subr.mxu0 0.0
  %424 = vmatpush1.msra.mxu0 %v339
  %425 = vmatprep.subr.mxu0 0.0
  %426 = vmatpush1.msra.mxu0 %v340
  %427 = vmatprep.subr.mxu0 0.0
  %428 = vmatpush1.msra.mxu0 %v341
  %429 = vmatprep.subr.mxu0 0.0
  %430 = vmatpush1.msra.mxu0 %v342
  %431 = vmatprep.subr.mxu0 0.0
  %432 = vmatpush1.msra.mxu0 %v343
  %433 = vmatprep.subr.mxu0 0.0
  %434 = vmatpush1.msra.mxu0 %v344
  %435 = vmatprep.subr.mxu0 0.0
  %436 = vmatpush1.msra.mxu0 %v345
  %437 = vmatprep.subr.mxu0 0.0
  %438 = vmatpush1.msra.mxu0 %v346
  %439 = vmatprep.subr.mxu0 0.0
  %440 = vmatpush1.msra.mxu0 %v347
  %441 = vmatprep.subr.mxu0 0.0
  %442 = vmatpush1.msra.mxu0 %v348
  %443 = vmatprep.subr.mxu0 0.0
  %444 = vmatpush1.msra.mxu0 %v349
  %445 = vmatprep.subr.mxu0 0.0
  %446 = vmatpush1.msra.mxu0 %v350
  %447 = vmatprep.subr.mxu0 0.0
  %448 = vmatpush1.msra.mxu0 %v351
  %449 = vmatprep.subr.mxu0 0.0
  %450 = vmatpush1.msra.mxu0 %v352
  %451 = vmatprep.subr.mxu0 0.0
  %452 = vmatpush1.msra.mxu0 %v353
  %453 = vmatprep.subr.mxu0 0.0
  %454 = vmatpush1.msra.mxu0 %v354
  %455 = vmatprep.subr.mxu0 0.0
  %456 = vmatpush1.msra.mxu0 %v355
  %457 = vmatprep.subr.mxu0 0.0
  %458 = vmatpush1.msra.mxu0 %v356
  %459 = vmatprep.subr.mxu0 0.0
  %460 = vmatpush1.msra.mxu0 %v357
  %461 = vmatprep.subr.mxu0 0.0
  %462 = vmatpush1.msra.mxu0 %v358
  %463 = vmatprep.subr.mxu0 0.0
  %464 = vmatpush1.msra.mxu0 %v359
  %465 = vmatprep.subr.mxu0 0.0
  %466 = vmatpush1.msra.mxu0 %v360
  %467 = vmatprep.subr.mxu0 0.0
  %468 = vmatpush1.msra.mxu0 %v361
  %469 = vmatprep.subr.mxu0 0.0
  %470 = vmatpush1.msra.mxu0 %v362
  %471 = vmatprep.subr.mxu0 0.0
  %472 = vmatpush1.msra.mxu0 %v363
  %473 = vmatprep.subr.mxu0 0.0
  %474 = vmatpush1.msra.mxu0 %v364
  %475 = vmatprep.subr.mxu0 0.0
  %476 = vmatpush1.msra.mxu0 %v365
  %477 = vmatprep.subr.mxu0 0.0
  %478 = vmatpush1.msra.mxu0 %v366
  %479 = vmatprep.mubr.f32.mxu0 %v312
  %480 = vmatmul.mubr.f32.gmra.mrb[0].mxu0 %v311
  %v481 = vpop.f32.mrb[0].mxu0
  %v482 = vadd.f32 %v394, %v481
  %v483 = vpop.f32.mrb[0].mxu0
  %484 = vmatprep.mubr.f32.mxu0 %v316
  %485 = vmatmul.mubr.f32.gmra.mrb[0].mxu0 %v315
  %v486 = vpop.f32.mrb[0].mxu0
  %v487 = vadd.f32 %v394, %v486
  %v488 = vpop.f32.mrb[0].mxu0
  %489 = vmatprep.mubr.f32.mxu0 %v320
  %490 = vmatmul.mubr.f32.gmra.mrb[0].mxu0 %v319
  %v491 = vpop.f32.mrb[0].mxu0
  %v492 = vadd.f32 %v394, %v491
  %v493 = vpop.f32.mrb[0].mxu0
  %494 = vmatprep.mubr.f32.mxu0 %v324
  %495 = vmatmul.mubr.f32.gmra.mrb[0].mxu0 %v323
  %v496 = vpop.f32.mrb[0].mxu0
  %v497 = vadd.f32 %v394, %v496
  %v498 = vpop.f32.mrb[0].mxu0
  %499 = vmatprep.mubr.f32.mxu0 %v328
  %500 = vmatmul.mubr.f32.gmra.mrb[0].mxu0 %v327
  %v501 = vpop.f32.mrb[0].mxu0
  %v502 = vadd.f32 %v394, %v501
  %v503 = vpop.f32.mrb[0].mxu0
  %504 = vmatprep.mubr.f32.mxu0 %v332
  %505 = vmatmul.mubr.f32.gmra.mrb[0].mxu0 %v331
  %v506 = vpop.f32.mrb[0].mxu0
  %v507 = vadd.f32 %v394, %v506
  %v508 = vpop.f32.mrb[0].mxu0
  %509 = vdwg.mxu0
  %510 = vmatprep.subr.mxu0 0.0
  %511 = vmatpush1.msra.mxu0 %v367
  %512 = vmatprep.subr.mxu0 0.0
  %513 = vmatpush1.msra.mxu0 %v368
  %514 = vmatprep.subr.mxu0 0.0
  %515 = vmatpush1.msra.mxu0 %v369
  %516 = vmatprep.subr.mxu0 0.0
  %517 = vmatpush1.msra.mxu0 %v370
  %518 = vmatprep.subr.mxu0 0.0
  %519 = vmatpush1.msra.mxu0 %v371
  %520 = vmatprep.subr.mxu0 0.0
  %521 = vmatpush1.msra.mxu0 %v372
  %522 = vmatprep.subr.mxu0 0.0
  %523 = vmatpush1.msra.mxu0 %v373
  %524 = vmatprep.subr.mxu0 0.0
  %525 = vmatpush1.msra.mxu0 %v374
  %526 = vmatprep.subr.mxu0 0.0
  %527 = vmatpush1.msra.mxu0 %v375
  %528 = vmatprep.subr.mxu0 0.0
  %529 = vmatpush1.msra.mxu0 %v376
  %530 = vmatprep.subr.mxu0 0.0
  %531 = vmatpush1.msra.mxu0 %v377
  %532 = vmatprep.subr.mxu0 0.0
  %533 = vmatpush1.msra.mxu0 %v378
  %534 = vmatprep.subr.mxu0 0.0
  %535 = vmatpush1.msra.mxu0 %v379
  %536 = vmatprep.subr.mxu0 0.0
  %537 = vmatpush1.msra.mxu0 %v380
  %538 = vmatprep.subr.mxu0 0.0
  %539 = vmatpush1.msra.mxu0 %v381
  %540 = vmatprep.subr.mxu0 0.0
  %541 = vmatpush1.msra.mxu0 %v382
  %542 = vmatprep.subr.mxu0 0.0
  %543 = vmatpush1.msra.mxu0 %v383
  %544 = vmatprep.subr.mxu0 0.0
  %545 = vmatpush1.msra.mxu0 %v384
  %546 = vmatprep.subr.mxu0 0.0
  %547 = vmatpush1.msra.mxu0 %v385
  %548 = vmatprep.subr.mxu0 0.0
  %549 = vmatpush1.msra.mxu0 %v386
  %550 = vmatprep.subr.mxu0 0.0
  %551 = vmatpush1.msra.mxu0 %v387
  %552 = vmatprep.subr.mxu0 0.0
  %553 = vmatpush1.msra.mxu0 %v388
  %554 = vmatprep.subr.mxu0 0.0
  %555 = vmatpush1.msra.mxu0 0.0
  %556 = vmatprep.subr.mxu0 0.0
  %557 = vmatpush1.msra.mxu0 0.0
  %558 = vmatprep.subr.mxu0 0.0
  %559 = vmatpush1.msra.mxu0 0.0
  %560 = vmatprep.subr.mxu0 0.0
  %561 = vmatpush1.msra.mxu0 0.0
  %562 = vmatprep.subr.mxu0 0.0
  %563 = vmatpush1.msra.mxu0 0.0
  %564 = vmatprep.subr.mxu0 0.0
  %565 = vmatpush1.msra.mxu0 0.0
  %566 = vmatprep.subr.mxu0 0.0
  %567 = vmatpush1.msra.mxu0 0.0
  %568 = vmatprep.subr.mxu0 0.0
  %569 = vmatpush1.msra.mxu0 0.0
  %570 = vmatprep.subr.mxu0 0.0
  %571 = vmatpush1.msra.mxu0 0.0
  %572 = vmatprep.subr.mxu0 0.0
  %573 = vmatpush1.msra.mxu0 0.0
  %574 = vmatprep.mubr.f32.mxu0 %v398
  %575 = vmatmul.mubr.f32.gmra.mrb[0].mxu0 %v313
  %v576 = vpop.f32.mrb[0].mxu0
  %v577 = vadd.f32 %v482, %v576
  %v578 = vpop.f32.mrb[0].mxu0
  %579 = vmatprep.mubr.f32.mxu0 %v401
  %580 = vmatmul.mubr.f32.gmra.mrb[0].mxu0 %v317
  %v581 = vpop.f32.mrb[0].mxu0
  %v582 = vadd.f32 %v487, %v581
  %v583 = vpop.f32.mrb[0].mxu0
  %584 = vmatprep.mubr.f32.mxu0 %v404
  %585 = vmatmul.mubr.f32.gmra.mrb[0].mxu0 %v321
  %v586 = vpop.f32.mrb[0].mxu0
  %v587 = vadd.f32 %v492, %v586
  %v588 = vpop.f32.mrb[0].mxu0
  %589 = vmatprep.mubr.f32.mxu0 %v407
  %590 = vmatmul.mubr.f32.gmra.mrb[0].mxu0 %v325
  %v591 = vpop.f32.mrb[0].mxu0
  %v592 = vadd.f32 %v497, %v591
  %v593 = vpop.f32.mrb[0].mxu0
  %594 = vmatprep.mubr.f32.mxu0 %v410
  %595 = vmatmul.mubr.f32.gmra.mrb[0].mxu0 %v329
  %v596 = vpop.f32.mrb[0].mxu0
  %v597 = vadd.f32 %v502, %v596
  %v598 = vpop.f32.mrb[0].mxu0
  %599 = vmatprep.mubr.f32.mxu0 %v413
  %600 = vmatmul.mubr.f32.gmra.mrb[0].mxu0 %v333
  %v601 = vpop.f32.mrb[0].mxu0
  %v602 = vadd.f32 %v507, %v601
  %v603 = vpop.f32.mrb[0].mxu0
  %604 = vdwg.mxu0
  %v605 = vld [vmem:[%s5] sm:$0xff]
  %v606 = vld [vmem:[%s5 + $0x8] sm:$0xff]
  %v607 = vld [vmem:[%s5 + $0x10] sm:$0xff]
  %v608 = vld [vmem:[%s5 + $0x18] sm:$0xff]
  %v609 = vld [vmem:[%s5 + $0x20] sm:$0xff]
  %v610 = vld [vmem:[%s5 + $0x28] sm:$0xff]
  %v611 = vld [vmem:[%s5 + $0x30] sm:$0xff]
  %v612 = vld [vmem:[%s5 + $0x38] sm:$0xff]
  %v613 = vld [vmem:[%s5 + $0x40] sm:$0xff]
  %v614 = vld [vmem:[%s5 + $0x48] sm:$0xff]
  %v615 = vld [vmem:[%s5 + $0x50] sm:$0xff]
  %v616 = vld [vmem:[%s5 + $0x58] sm:$0xff]
  %v617 = vld [vmem:[%s5 + $0x60] sm:$0xff]
  %v618 = vld [vmem:[%s5 + $0x68] sm:$0xff]
  %v619 = vld [vmem:[%s5 + $0x70] sm:$0xff]
  %v620 = vld [vmem:[%s5 + $0x78] sm:$0xff]
  %v621 = vld [vmem:[%s5 + $0x80] sm:$0xf]
  %v622 = vld [vmem:[%s5 + $0x88] sm:$0xf]
  %v623 = vld [vmem:[%s5 + $0x90] sm:$0xf]
  %v624 = vld [vmem:[%s5 + $0x98] sm:$0xf]
  %v625 = vld [vmem:[%s7] sm:$0xf]
  %v627 = vlaneseq
  %v628 = vshrl.u32 %v627, 7
  %v629 = vsub.s32 0, %v628
  %v630 = vrot.slane %v625, %v629
  %v631 = vlaneseq
  %v632 = vshrl.u32 %v631, 7
  %v633 = vsub.s32 1, %v632
  %v634 = vrot.slane %v625, %v633
  %v635 = vlaneseq
  %v636 = vshrl.u32 %v635, 7
  %v637 = vsub.s32 2, %v636
  %v638 = vrot.slane %v625, %v637
  %v639 = vlaneseq
  %v640 = vshrl.u32 %v639, 7
  %v641 = vsub.s32 3, %v640
  %v642 = vrot.slane %v625, %v641
  %v648 = vsel %vm77, %v577, 0
  %v651 = vsel %vm77, %v582, 0
  %v654 = vsel %vm77, %v587, 0
  %v657 = vsel %vm77, %v592, 0
  %v660 = vsel %vm77, %v597, 0
  %v663 = vsel %vm77, %v602, 0
  %v666 = vsel %vm96, %v621, 0
  %v669 = vsel %vm96, %v622, 0
  %v672 = vsel %vm96, %v623, 0
  %v675 = vsel %vm96, %v624, 0
  %677 = vmatprep.subr.mxu0 %v606
  %678 = vmatpush1.msra.mxu0 %v605
  %679 = vmatprep.subr.mxu0 %v610
  %680 = vmatpush1.msra.mxu0 %v609
  %681 = vmatprep.subr.mxu0 %v614
  %682 = vmatpush1.msra.mxu0 %v613
  %683 = vmatprep.subr.mxu0 %v618
  %684 = vmatpush1.msra.mxu0 %v617
  %685 = vmatprep.subr.mxu0 %v669
  %686 = vmatpush1.msra.mxu0 %v666
  %687 = vmatprep.subr.mxu0 0.0
  %688 = vmatpush1.msra.mxu0 0.0
  %689 = vmatprep.subr.mxu0 0.0
  %690 = vmatpush1.msra.mxu0 0.0
  %691 = vmatprep.subr.mxu0 0.0
  %692 = vmatpush1.msra.mxu0 0.0
  %693 = vmatprep.subr.mxu0 0.0
  %694 = vmatpush1.msra.mxu0 0.0
  %695 = vmatprep.subr.mxu0 0.0
  %696 = vmatpush1.msra.mxu0 0.0
  %697 = vmatprep.subr.mxu0 0.0
  %698 = vmatpush1.msra.mxu0 0.0
  %699 = vmatprep.subr.mxu0 0.0
  %700 = vmatpush1.msra.mxu0 0.0
  %701 = vmatprep.subr.mxu0 0.0
  %702 = vmatpush1.msra.mxu0 0.0
  %703 = vmatprep.subr.mxu0 0.0
  %704 = vmatpush1.msra.mxu0 0.0
  %705 = vmatprep.subr.mxu0 0.0
  %706 = vmatpush1.msra.mxu0 0.0
  %707 = vmatprep.subr.mxu0 0.0
  %708 = vmatpush1.msra.mxu0 0.0
  %709 = vmatprep.subr.mxu0 0.0
  %710 = vmatpush1.msra.mxu0 0.0
  %711 = vmatprep.subr.mxu0 0.0
  %712 = vmatpush1.msra.mxu0 0.0
  %713 = vmatprep.subr.mxu0 0.0
  %714 = vmatpush1.msra.mxu0 0.0
  %715 = vmatprep.subr.mxu0 0.0
  %716 = vmatpush1.msra.mxu0 0.0
  %717 = vmatprep.subr.mxu0 0.0
  %718 = vmatpush1.msra.mxu0 0.0
  %719 = vmatprep.subr.mxu0 0.0
  %720 = vmatpush1.msra.mxu0 0.0
  %721 = vmatprep.subr.mxu0 0.0
  %722 = vmatpush1.msra.mxu0 0.0
  %723 = vmatprep.subr.mxu0 0.0
  %724 = vmatpush1.msra.mxu0 0.0
  %725 = vmatprep.subr.mxu0 0.0
  %726 = vmatpush1.msra.mxu0 0.0
  %727 = vmatprep.subr.mxu0 0.0
  %728 = vmatpush1.msra.mxu0 0.0
  %729 = vmatprep.subr.mxu0 0.0
  %730 = vmatpush1.msra.mxu0 0.0
  %731 = vmatprep.subr.mxu0 0.0
  %732 = vmatpush1.msra.mxu0 0.0
  %733 = vmatprep.subr.mxu0 0.0
  %734 = vmatpush1.msra.mxu0 0.0
  %735 = vmatprep.subr.mxu0 0.0
  %736 = vmatpush1.msra.mxu0 0.0
  %737 = vmatprep.subr.mxu0 0.0
  %738 = vmatpush1.msra.mxu0 0.0
  %739 = vmatprep.subr.mxu0 0.0
  %740 = vmatpush1.msra.mxu0 0.0
  %741 = vmatprep.mubr.f32.mxu0 0.0
  %742 = vmatmul.mubr.f32.gmra.mrb[0].mxu0 %v648
  %v743 = vpop.f32.mrb[0].mxu0
  %v744 = vadd.f32 %v630, %v743
  %v745 = vpop.f32.mrb[0].mxu0
  %v746 = vadd.f32 %v634, %v745
  %747 = vmatprep.mubr.f32.mxu0 0.0
  %748 = vmatmul.mubr.f32.gmra.mrb[0].mxu0 %v651
  %v749 = vpop.f32.mrb[0].mxu0
  %v750 = vadd.f32 %v630, %v749
  %v751 = vpop.f32.mrb[0].mxu0
  %v752 = vadd.f32 %v634, %v751
  %753 = vmatprep.mubr.f32.mxu0 0.0
  %754 = vmatmul.mubr.f32.gmra.mrb[0].mxu0 %v654
  %v755 = vpop.f32.mrb[0].mxu0
  %v756 = vadd.f32 %v630, %v755
  %v757 = vpop.f32.mrb[0].mxu0
  %v758 = vadd.f32 %v634, %v757
  %759 = vmatprep.mubr.f32.mxu0 0.0
  %760 = vmatmul.mubr.f32.gmra.mrb[0].mxu0 %v657
  %v761 = vpop.f32.mrb[0].mxu0
  %v762 = vadd.f32 %v630, %v761
  %v763 = vpop.f32.mrb[0].mxu0
  %v764 = vadd.f32 %v634, %v763
  %765 = vmatprep.mubr.f32.mxu0 0.0
  %766 = vmatmul.mubr.f32.gmra.mrb[0].mxu0 %v660
  %v767 = vpop.f32.mrb[0].mxu0
  %v768 = vadd.f32 %v630, %v767
  %v769 = vpop.f32.mrb[0].mxu0
  %v770 = vadd.f32 %v634, %v769
  %771 = vmatprep.mubr.f32.mxu0 0.0
  %772 = vmatmul.mubr.f32.gmra.mrb[0].mxu0 %v663
  %v773 = vpop.f32.mrb[0].mxu0
  %v774 = vadd.f32 %v630, %v773
  %v775 = vpop.f32.mrb[0].mxu0
  %v776 = vadd.f32 %v634, %v775
  %777 = vdwg.mxu0
  %778 = vmatprep.subr.mxu0 %v608
  %779 = vmatpush1.msra.mxu0 %v607
  %780 = vmatprep.subr.mxu0 %v612
  %781 = vmatpush1.msra.mxu0 %v611
  %782 = vmatprep.subr.mxu0 %v616
  %783 = vmatpush1.msra.mxu0 %v615
  %784 = vmatprep.subr.mxu0 %v620
  %785 = vmatpush1.msra.mxu0 %v619
  %786 = vmatprep.subr.mxu0 %v675
  %787 = vmatpush1.msra.mxu0 %v672
  %788 = vmatprep.subr.mxu0 0.0
  %789 = vmatpush1.msra.mxu0 0.0
  %790 = vmatprep.subr.mxu0 0.0
  %791 = vmatpush1.msra.mxu0 0.0
  %792 = vmatprep.subr.mxu0 0.0
  %793 = vmatpush1.msra.mxu0 0.0
  %794 = vmatprep.subr.mxu0 0.0
  %795 = vmatpush1.msra.mxu0 0.0
  %796 = vmatprep.subr.mxu0 0.0
  %797 = vmatpush1.msra.mxu0 0.0
  %798 = vmatprep.subr.mxu0 0.0
  %799 = vmatpush1.msra.mxu0 0.0
  %800 = vmatprep.subr.mxu0 0.0
  %801 = vmatpush1.msra.mxu0 0.0
  %802 = vmatprep.subr.mxu0 0.0
  %803 = vmatpush1.msra.mxu0 0.0
  %804 = vmatprep.subr.mxu0 0.0
  %805 = vmatpush1.msra.mxu0 0.0
  %806 = vmatprep.subr.mxu0 0.0
  %807 = vmatpush1.msra.mxu0 0.0
  %808 = vmatprep.subr.mxu0 0.0
  %809 = vmatpush1.msra.mxu0 0.0
  %810 = vmatprep.subr.mxu0 0.0
  %811 = vmatpush1.msra.mxu0 0.0
  %812 = vmatprep.subr.mxu0 0.0
  %813 = vmatpush1.msra.mxu0 0.0
  %814 = vmatprep.subr.mxu0 0.0
  %815 = vmatpush1.msra.mxu0 0.0
  %816 = vmatprep.subr.mxu0 0.0
  %817 = vmatpush1.msra.mxu0 0.0
  %818 = vmatprep.subr.mxu0 0.0
  %819 = vmatpush1.msra.mxu0 0.0
  %820 = vmatprep.subr.mxu0 0.0
  %821 = vmatpush1.msra.mxu0 0.0
  %822 = vmatprep.subr.mxu0 0.0
  %823 = vmatpush1.msra.mxu0 0.0
  %824 = vmatprep.subr.mxu0 0.0
  %825 = vmatpush1.msra.mxu0 0.0
  %826 = vmatprep.subr.mxu0 0.0
  %827 = vmatpush1.msra.mxu0 0.0
  %828 = vmatprep.subr.mxu0 0.0
  %829 = vmatpush1.msra.mxu0 0.0
  %830 = vmatprep.subr.mxu0 0.0
  %831 = vmatpush1.msra.mxu0 0.0
  %832 = vmatprep.subr.mxu0 0.0
  %833 = vmatpush1.msra.mxu0 0.0
  %834 = vmatprep.subr.mxu0 0.0
  %835 = vmatpush1.msra.mxu0 0.0
  %836 = vmatprep.subr.mxu0 0.0
  %837 = vmatpush1.msra.mxu0 0.0
  %838 = vmatprep.subr.mxu0 0.0
  %839 = vmatpush1.msra.mxu0 0.0
  %840 = vmatprep.subr.mxu0 0.0
  %841 = vmatpush1.msra.mxu0 0.0
  %842 = vmatprep.mubr.f32.mxu0 0.0
  %843 = vmatmul.mubr.f32.gmra.mrb[0].mxu0 %v648
  %v844 = vpop.f32.mrb[0].mxu0
  %v845 = vadd.f32 %v638, %v844
  %v846 = vpop.f32.mrb[0].mxu0
  %v847 = vadd.f32 %v642, %v846
  %848 = vmatprep.mubr.f32.mxu0 0.0
  %849 = vmatmul.mubr.f32.gmra.mrb[0].mxu0 %v651
  %v850 = vpop.f32.mrb[0].mxu0
  %v851 = vadd.f32 %v638, %v850
  %v852 = vpop.f32.mrb[0].mxu0
  %v853 = vadd.f32 %v642, %v852
  %854 = vmatprep.mubr.f32.mxu0 0.0
  %855 = vmatmul.mubr.f32.gmra.mrb[0].mxu0 %v654
  %v856 = vpop.f32.mrb[0].mxu0
  %v857 = vadd.f32 %v638, %v856
  %v858 = vpop.f32.mrb[0].mxu0
  %v859 = vadd.f32 %v642, %v858
  %860 = vmatprep.mubr.f32.mxu0 0.0
  %861 = vmatmul.mubr.f32.gmra.mrb[0].mxu0 %v657
  %v862 = vpop.f32.mrb[0].mxu0
  %v863 = vadd.f32 %v638, %v862
  %v864 = vpop.f32.mrb[0].mxu0
  %v865 = vadd.f32 %v642, %v864
  %866 = vmatprep.mubr.f32.mxu0 0.0
  %867 = vmatmul.mubr.f32.gmra.mrb[0].mxu0 %v660
  %v868 = vpop.f32.mrb[0].mxu0
  %v869 = vadd.f32 %v638, %v868
  %v870 = vpop.f32.mrb[0].mxu0
  %v871 = vadd.f32 %v642, %v870
  %872 = vmatprep.mubr.f32.mxu0 0.0
  %873 = vmatmul.mubr.f32.gmra.mrb[0].mxu0 %v663
  %v874 = vpop.f32.mrb[0].mxu0
  %v875 = vadd.f32 %v638, %v874
  %v876 = vpop.f32.mrb[0].mxu0
  %v877 = vadd.f32 %v642, %v876
  %878 = vdwg.mxu0
  %879 = vst [vmem:[#allocation2] sm:$0xff] %v744
  %880 = vst [vmem:[#allocation2 + $0x8] sm:$0xff] %v746
  %881 = vst [vmem:[#allocation2 + $0x10] sm:$0xff] %v845
  %882 = vst [vmem:[#allocation2 + $0x18] sm:$0xff] %v847
  %883 = vst [vmem:[#allocation2 + $0x20] sm:$0xff] %v750
  %884 = vst [vmem:[#allocation2 + $0x28] sm:$0xff] %v752
  %885 = vst [vmem:[#allocation2 + $0x30] sm:$0xff] %v851
  %886 = vst [vmem:[#allocation2 + $0x38] sm:$0xff] %v853
  %887 = vst [vmem:[#allocation2 + $0x40] sm:$0xff] %v756
  %888 = vst [vmem:[#allocation2 + $0x48] sm:$0xff] %v758
  %889 = vst [vmem:[#allocation2 + $0x50] sm:$0xff] %v857
  %890 = vst [vmem:[#allocation2 + $0x58] sm:$0xff] %v859
  %891 = vst [vmem:[#allocation2 + $0x60] sm:$0xff] %v762
  %892 = vst [vmem:[#allocation2 + $0x68] sm:$0xff] %v764
  %893 = vst [vmem:[#allocation2 + $0x70] sm:$0xff] %v863
  %894 = vst [vmem:[#allocation2 + $0x78] sm:$0xff] %v865
  %895 = vst [vmem:[#allocation2 + $0x80] sm:$0xff] %v768
  %896 = vst [vmem:[#allocation2 + $0x88] sm:$0xff] %v770
  %897 = vst [vmem:[#allocation2 + $0x90] sm:$0xff] %v869
  %898 = vst [vmem:[#allocation2 + $0x98] sm:$0xff] %v871
  %899 = vst [vmem:[#allocation2 + $0xa0] sm:$0xff] %v774
  %900 = vst [vmem:[#allocation2 + $0xa8] sm:$0xff] %v776
  %901 = vst [vmem:[#allocation2 + $0xb0] sm:$0xff] %v875
  %902 = vst [vmem:[#allocation2 + $0xb8] sm:$0xff] %v877
  %v903 = vld [vmem:[%s6] sm:$0xff]
  %v904 = vld [vmem:[%s6 + $0x8] sm:$0xff]
  %v905 = vld [vmem:[%s6 + $0x10] sm:$0xff]
  %v906 = vld [vmem:[%s6 + $0x18] sm:$0xff]
  %v907 = vld [vmem:[%s6 + $0x20] sm:$0xff]
  %v908 = vld [vmem:[%s6 + $0x28] sm:$0xff]
  %v909 = vld [vmem:[%s6 + $0x30] sm:$0xff]
  %v910 = vld [vmem:[%s6 + $0x38] sm:$0xff]
  %v911 = vld [vmem:[%s6 + $0x40] sm:$0xff]
  %v912 = vld [vmem:[%s6 + $0x48] sm:$0xff]
  %v913 = vld [vmem:[%s6 + $0x50] sm:$0xff]
  %v914 = vld [vmem:[%s6 + $0x58] sm:$0xff]
  %v915 = vld [vmem:[%s6 + $0x60] sm:$0xff]
  %v916 = vld [vmem:[%s6 + $0x68] sm:$0xff]
  %v917 = vld [vmem:[%s6 + $0x70] sm:$0xff]
  %v918 = vld [vmem:[%s6 + $0x78] sm:$0xff]
  %v919 = vld [vmem:[%s6 + $0x80] sm:$0xff]
  %v920 = vld [vmem:[%s6 + $0x88] sm:$0xff]
  %v921 = vld [vmem:[%s6 + $0x90] sm:$0xff]
  %v922 = vld [vmem:[%s6 + $0x98] sm:$0xff]
  %v923 = vld [vmem:[%s6 + $0xa0] sm:$0xff]
  %v924 = vld [vmem:[%s6 + $0xa8] sm:$0xff]
  %v925 = vld [vmem:[%s6 + $0xb0] sm:$0xff]
  %v926 = vld [vmem:[%s6 + $0xb8] sm:$0xff]
  %v927 = vld [vmem:[%s6 + $0xc0] sm:$0xff]
  %v928 = vld [vmem:[%s6 + $0xc8] sm:$0xff]
  %v929 = vld [vmem:[%s6 + $0xd0] sm:$0xff]
  %v930 = vld [vmem:[%s6 + $0xd8] sm:$0xff]
  %v931 = vld [vmem:[%s6 + $0xe0] sm:$0xff]
  %v932 = vld [vmem:[%s6 + $0xe8] sm:$0xff]
  %v933 = vld [vmem:[%s6 + $0xf0] sm:$0xff]
  %v934 = vld [vmem:[%s6 + $0xf8] sm:$0xff]
  %v935 = vld [vmem:[%s6 + $0x100] sm:$0xff]
  %v936 = vld [vmem:[%s6 + $0x108] sm:$0xff]
  %v937 = vld [vmem:[%s6 + $0x110] sm:$0xff]
  %v938 = vld [vmem:[%s6 + $0x118] sm:$0xff]
  %v939 = vld [vmem:[%s6 + $0x120] sm:$0xff]
  %v940 = vld [vmem:[%s6 + $0x128] sm:$0xff]
  %v941 = vld [vmem:[%s6 + $0x130] sm:$0xff]
  %v942 = vld [vmem:[%s6 + $0x138] sm:$0xff]
  %v943 = vld [vmem:[%s6 + $0x140] sm:$0xff]
  %v944 = vld [vmem:[%s6 + $0x148] sm:$0xff]
  %v945 = vld [vmem:[%s6 + $0x150] sm:$0xff]
  %v946 = vld [vmem:[%s6 + $0x158] sm:$0xff]
  %v947 = vld [vmem:[%s6 + $0x160] sm:$0xff]
  %v948 = vld [vmem:[%s6 + $0x168] sm:$0xff]
  %v949 = vld [vmem:[%s6 + $0x170] sm:$0xff]
  %v950 = vld [vmem:[%s6 + $0x178] sm:$0xff]
  %v951 = vld [vmem:[%s6 + $0x180] sm:$0xff]
  %v952 = vld [vmem:[%s6 + $0x188] sm:$0xff]
  %v953 = vld [vmem:[%s6 + $0x190] sm:$0xff]
  %v954 = vld [vmem:[%s6 + $0x198] sm:$0xff]
  %v955 = vld [vmem:[%s6 + $0x1a0] sm:$0xff]
  %v956 = vld [vmem:[%s6 + $0x1a8] sm:$0xff]
  %v957 = vld [vmem:[%s6 + $0x1b0] sm:$0xff]
  %v958 = vld [vmem:[%s6 + $0x1b8] sm:$0xff]
  %v959 = vld [vmem:[%s6 + $0x1c0] sm:$0xff]
  %v960 = vld [vmem:[%s6 + $0x1c8] sm:$0xff]
  %v961 = vld [vmem:[%s6 + $0x1d0] sm:$0xff]
  %v962 = vld [vmem:[%s6 + $0x1d8] sm:$0xff]
  %v963 = vld [vmem:[%s6 + $0x1e0] sm:$0xff]
  %v964 = vld [vmem:[%s6 + $0x1e8] sm:$0xff]
  %v965 = vld [vmem:[%s6 + $0x1f0] sm:$0xff]
  %v966 = vld [vmem:[%s6 + $0x1f8] sm:$0xff]
  %v967 = vld [vmem:[#allocation2] sm:$0x3]
  %v968 = vld [vmem:[#allocation2 + $0x8] sm:$0x3]
  %v969 = vld [vmem:[#allocation2 + $0x10] sm:$0x3]
  %v970 = vld [vmem:[#allocation2 + $0x18] sm:$0x3]
  %971 = vmatprep.subr.mxu0 %v904
  %972 = vmatpush1.msra.mxu0 %v903
  %973 = vmatprep.subr.mxu0 %v908
  %974 = vmatpush1.msra.mxu0 %v907
  %975 = vmatprep.subr.mxu0 %v912
  %976 = vmatpush1.msra.mxu0 %v911
  %977 = vmatprep.subr.mxu0 %v916
  %978 = vmatpush1.msra.mxu0 %v915
  %979 = vmatprep.subr.mxu0 %v920
  %980 = vmatpush1.msra.mxu0 %v919
  %981 = vmatprep.subr.mxu0 %v924
  %982 = vmatpush1.msra.mxu0 %v923
  %983 = vmatprep.subr.mxu0 %v928
  %984 = vmatpush1.msra.mxu0 %v927
  %985 = vmatprep.subr.mxu0 %v932
  %986 = vmatpush1.msra.mxu0 %v931
  %987 = vmatprep.subr.mxu0 %v936
  %988 = vmatpush1.msra.mxu0 %v935
  %989 = vmatprep.subr.mxu0 %v940
  %990 = vmatpush1.msra.mxu0 %v939
  %991 = vmatprep.subr.mxu0 %v944
  %992 = vmatpush1.msra.mxu0 %v943
  %993 = vmatprep.subr.mxu0 %v948
  %994 = vmatpush1.msra.mxu0 %v947
  %995 = vmatprep.subr.mxu0 %v952
  %996 = vmatpush1.msra.mxu0 %v951
  %997 = vmatprep.subr.mxu0 %v956
  %998 = vmatpush1.msra.mxu0 %v955
  %999 = vmatprep.subr.mxu0 %v960
  %1000 = vmatpush1.msra.mxu0 %v959
  %1001 = vmatprep.subr.mxu0 %v964
  %1002 = vmatpush1.msra.mxu0 %v963
  %1003 = vmatprep.subr.mxu0 0.0
  %1004 = vmatpush1.msra.mxu0 0.0
  %1005 = vmatprep.subr.mxu0 0.0
  %1006 = vmatpush1.msra.mxu0 0.0
  %1007 = vmatprep.subr.mxu0 0.0
  %1008 = vmatpush1.msra.mxu0 0.0
  %1009 = vmatprep.subr.mxu0 0.0
  %1010 = vmatpush1.msra.mxu0 0.0
  %1011 = vmatprep.subr.mxu0 0.0
  %1012 = vmatpush1.msra.mxu0 0.0
  %1013 = vmatprep.subr.mxu0 0.0
  %1014 = vmatpush1.msra.mxu0 0.0
  %1015 = vmatprep.subr.mxu0 0.0
  %1016 = vmatpush1.msra.mxu0 0.0
  %1017 = vmatprep.subr.mxu0 0.0
  %1018 = vmatpush1.msra.mxu0 0.0
  %1019 = vmatprep.subr.mxu0 0.0
  %1020 = vmatpush1.msra.mxu0 0.0
  %1021 = vmatprep.subr.mxu0 0.0
  %1022 = vmatpush1.msra.mxu0 0.0
  %1023 = vmatprep.subr.mxu0 0.0
  %1024 = vmatpush1.msra.mxu0 0.0
  %1025 = vmatprep.subr.mxu0 0.0
  %1026 = vmatpush1.msra.mxu0 0.0
  %1027 = vmatprep.subr.mxu0 0.0
  %1028 = vmatpush1.msra.mxu0 0.0
  %1029 = vmatprep.subr.mxu0 0.0
  %1030 = vmatpush1.msra.mxu0 0.0
  %1031 = vmatprep.subr.mxu0 0.0
  %1032 = vmatpush1.msra.mxu0 0.0
  %1033 = vmatprep.subr.mxu0 0.0
  %1034 = vmatpush1.msra.mxu0 0.0
  %1035 = vmatprep.mubr.f32.mxu0 0.0
  %1036 = vmatmul.mubr.f32.gmra.mrb[0].mxu0 0.0
  %v1037 = vpop.f32.mrb[0].mxu0
  %v1038 = vadd.f32 0.0, %v1037
  %v1039 = vpop.f32.mrb[0].mxu0
  %v1040 = vadd.f32 0.0, %v1039
  %1041 = vdwg.mxu0
  %1042 = vmatprep.subr.mxu0 %v906
  %1043 = vmatpush1.msra.mxu0 %v905
  %1044 = vmatprep.subr.mxu0 %v910
  %1045 = vmatpush1.msra.mxu0 %v909
  %1046 = vmatprep.subr.mxu0 %v914
  %1047 = vmatpush1.msra.mxu0 %v913
  %1048 = vmatprep.subr.mxu0 %v918
  %1049 = vmatpush1.msra.mxu0 %v917
  %1050 = vmatprep.subr.mxu0 %v922
  %1051 = vmatpush1.msra.mxu0 %v921
  %1052 = vmatprep.subr.mxu0 %v926
  %1053 = vmatpush1.msra.mxu0 %v925
  %1054 = vmatprep.subr.mxu0 %v930
  %1055 = vmatpush1.msra.mxu0 %v929
  %1056 = vmatprep.subr.mxu0 %v934
  %1057 = vmatpush1.msra.mxu0 %v933
  %1058 = vmatprep.subr.mxu0 %v938
  %1059 = vmatpush1.msra.mxu0 %v937
  %1060 = vmatprep.subr.mxu0 %v942
  %1061 = vmatpush1.msra.mxu0 %v941
  %1062 = vmatprep.subr.mxu0 %v946
  %1063 = vmatpush1.msra.mxu0 %v945
  %1064 = vmatprep.subr.mxu0 %v950
  %1065 = vmatpush1.msra.mxu0 %v949
  %1066 = vmatprep.subr.mxu0 %v954
  %1067 = vmatpush1.msra.mxu0 %v953
  %1068 = vmatprep.subr.mxu0 %v958
  %1069 = vmatpush1.msra.mxu0 %v957
  %1070 = vmatprep.subr.mxu0 %v962
  %1071 = vmatpush1.msra.mxu0 %v961
  %1072 = vmatprep.subr.mxu0 %v966
  %1073 = vmatpush1.msra.mxu0 %v965
  %1074 = vmatprep.subr.mxu0 0.0
  %1075 = vmatpush1.msra.mxu0 0.0
  %1076 = vmatprep.subr.mxu0 0.0
  %1077 = vmatpush1.msra.mxu0 0.0
  %1078 = vmatprep.subr.mxu0 0.0
  %1079 = vmatpush1.msra.mxu0 0.0
  %1080 = vmatprep.subr.mxu0 0.0
  %1081 = vmatpush1.msra.mxu0 0.0
  %1082 = vmatprep.subr.mxu0 0.0
  %1083 = vmatpush1.msra.mxu0 0.0
  %1084 = vmatprep.subr.mxu0 0.0
  %1085 = vmatpush1.msra.mxu0 0.0
  %1086 = vmatprep.subr.mxu0 0.0
  %1087 = vmatpush1.msra.mxu0 0.0
  %1088 = vmatprep.subr.mxu0 0.0
  %1089 = vmatpush1.msra.mxu0 0.0
  %1090 = vmatprep.subr.mxu0 0.0
  %1091 = vmatpush1.msra.mxu0 0.0
  %1092 = vmatprep.subr.mxu0 0.0
  %1093 = vmatpush1.msra.mxu0 0.0
  %1094 = vmatprep.subr.mxu0 0.0
  %1095 = vmatpush1.msra.mxu0 0.0
  %1096 = vmatprep.subr.mxu0 0.0
  %1097 = vmatpush1.msra.mxu0 0.0
  %1098 = vmatprep.subr.mxu0 0.0
  %1099 = vmatpush1.msra.mxu0 0.0
  %1100 = vmatprep.subr.mxu0 0.0
  %1101 = vmatpush1.msra.mxu0 0.0
  %1102 = vmatprep.subr.mxu0 0.0
  %1103 = vmatpush1.msra.mxu0 0.0
  %1104 = vmatprep.subr.mxu0 0.0
  %1105 = vmatpush1.msra.mxu0 0.0
  %1106 = vmatprep.mubr.f32.mxu0 0.0
  %1107 = vmatmul.mubr.f32.gmra.mrb[0].mxu0 0.0
  %v1108 = vpop.f32.mrb[0].mxu0
  %v1109 = vadd.f32 0.0, %v1108
  %v1110 = vpop.f32.mrb[0].mxu0
  %v1111 = vadd.f32 0.0, %v1110
  %1112 = vdwg.mxu0
  %v1113 = vadd.f32 %v967, %v1038
  %v1114 = vadd.f32 %v968, %v1040
  %v1115 = vadd.f32 %v969, %v1109
  %v1116 = vadd.f32 %v970, %v1111
  %v1117 = vxor.u32 %v1113, 2147483648
  %v1118 = vmul.f32 %v1117, 1.442695
  %v1119 = vpow.pop %v1118
  %v1120 = vadd.f32 %v1119, 1.0
  %v1121 = vrcp.pop %v1120
  %v1122 = vmul.f32 1.0, %v1121
  %v1123 = vxor.u32 %v1114, 2147483648
  %v1124 = vmul.f32 %v1123, 1.442695
  %v1125 = vpow.pop %v1124
  %v1126 = vadd.f32 %v1125, 1.0
  %v1127 = vrcp.pop %v1126
  %v1128 = vmul.f32 1.0, %v1127
  %v1129 = vtanh.pop %v1115
  %v1130 = vxor.u32 %v1116, 2147483648
  %v1131 = vmul.f32 %v1130, 1.442695
  %v1132 = vpow.pop %v1131
  %v1133 = vadd.f32 %v1132, 1.0
  %v1134 = vrcp.pop %v1133
  %v1135 = vmul.f32 1.0, %v1134
  %v1136 = vmul.f32 %v1128, 0.0
  %v1137 = vmul.f32 %v1122, %v1129
  %v1138 = vadd.f32 %v1136, %v1137
  %v1139 = vtanh.pop %v1138
  %v1140 = vmul.f32 %v1135, %v1139
  %1141 = vst [vmem:[%s8] sm:$0x3] %v1140
  %v1142 = vld [vmem:[#allocation2] sm:$0xc]
  %v1143 = vld [vmem:[#allocation2 + $0x8] sm:$0xc]
  %v1144 = vld [vmem:[#allocation2 + $0x10] sm:$0xc]
  %v1145 = vld [vmem:[#allocation2 + $0x18] sm:$0xc]
  %1146 = vmatprep.subr.mxu0 %v904
  %1147 = vmatpush1.msra.mxu0 %v903
  %1148 = vmatprep.subr.mxu0 %v908
  %1149 = vmatpush1.msra.mxu0 %v907
  %1150 = vmatprep.subr.mxu0 %v912
  %1151 = vmatpush1.msra.mxu0 %v911
  %1152 = vmatprep.subr.mxu0 %v916
  %1153 = vmatpush1.msra.mxu0 %v915
  %1154 = vmatprep.subr.mxu0 %v920
  %1155 = vmatpush1.msra.mxu0 %v919
  %1156 = vmatprep.subr.mxu0 %v924
  %1157 = vmatpush1.msra.mxu0 %v923
  %1158 = vmatprep.subr.mxu0 %v928
  %1159 = vmatpush1.msra.mxu0 %v927
  %1160 = vmatprep.subr.mxu0 %v932
  %1161 = vmatpush1.msra.mxu0 %v931
  %1162 = vmatprep.subr.mxu0 %v936
  %1163 = vmatpush1.msra.mxu0 %v935
  %1164 = vmatprep.subr.mxu0 %v940
  %1165 = vmatpush1.msra.mxu0 %v939
  %1166 = vmatprep.subr.mxu0 %v944
  %1167 = vmatpush1.msra.mxu0 %v943
  %1168 = vmatprep.subr.mxu0 %v948
  %1169 = vmatpush1.msra.mxu0 %v947
  %1170 = vmatprep.subr.mxu0 %v952
  %1171 = vmatpush1.msra.mxu0 %v951
  %1172 = vmatprep.subr.mxu0 %v956
  %1173 = vmatpush1.msra.mxu0 %v955
  %1174 = vmatprep.subr.mxu0 %v960
  %1175 = vmatpush1.msra.mxu0 %v959
  %1176 = vmatprep.subr.mxu0 %v964
  %1177 = vmatpush1.msra.mxu0 %v963
  %1178 = vmatprep.subr.mxu0 0.0
  %1179 = vmatpush1.msra.mxu0 0.0
  %1180 = vmatprep.subr.mxu0 0.0
  %1181 = vmatpush1.msra.mxu0 0.0
  %1182 = vmatprep.subr.mxu0 0.0
  %1183 = vmatpush1.msra.mxu0 0.0
  %1184 = vmatprep.subr.mxu0 0.0
  %1185 = vmatpush1.msra.mxu0 0.0
  %1186 = vmatprep.subr.mxu0 0.0
  %1187 = vmatpush1.msra.mxu0 0.0
  %1188 = vmatprep.subr.mxu0 0.0
  %1189 = vmatpush1.msra.mxu0 0.0
  %1190 = vmatprep.subr.mxu0 0.0
  %1191 = vmatpush1.msra.mxu0 0.0
  %1192 = vmatprep.subr.mxu0 0.0
  %1193 = vmatpush1.msra.mxu0 0.0
  %1194 = vmatprep.subr.mxu0 0.0
  %1195 = vmatpush1.msra.mxu0 0.0
  %1196 = vmatprep.subr.mxu0 0.0
  %1197 = vmatpush1.msra.mxu0 0.0
  %1198 = vmatprep.subr.mxu0 0.0
  %1199 = vmatpush1.msra.mxu0 0.0
  %1200 = vmatprep.subr.mxu0 0.0
  %1201 = vmatpush1.msra.mxu0 0.0
  %1202 = vmatprep.subr.mxu0 0.0
  %1203 = vmatpush1.msra.mxu0 0.0
  %1204 = vmatprep.subr.mxu0 0.0
  %1205 = vmatpush1.msra.mxu0 0.0
  %1206 = vmatprep.subr.mxu0 0.0
  %1207 = vmatpush1.msra.mxu0 0.0
  %1208 = vmatprep.subr.mxu0 0.0
  %1209 = vmatpush1.msra.mxu0 0.0
  %1210 = vmatprep.mubr.f32.mxu0 0.0
  %1211 = vmatmul.mubr.f32.gmra.mrb[0].mxu0 %v1140
  %v1212 = vpop.f32.mrb[0].mxu0
  %v1213 = vadd.f32 0.0, %v1212
  %v1214 = vpop.f32.mrb[0].mxu0
  %v1215 = vadd.f32 0.0, %v1214
  %1216 = vdwg.mxu0
  %1217 = vmatprep.subr.mxu0 %v906
  %1218 = vmatpush1.msra.mxu0 %v905
  %1219 = vmatprep.subr.mxu0 %v910
  %1220 = vmatpush1.msra.mxu0 %v909
  %1221 = vmatprep.subr.mxu0 %v914
  %1222 = vmatpush1.msra.mxu0 %v913
  %1223 = vmatprep.subr.mxu0 %v918
  %1224 = vmatpush1.msra.mxu0 %v917
  %1225 = vmatprep.subr.mxu0 %v922
  %1226 = vmatpush1.msra.mxu0 %v921
  %1227 = vmatprep.subr.mxu0 %v926
  %1228 = vmatpush1.msra.mxu0 %v925
  %1229 = vmatprep.subr.mxu0 %v930
  %1230 = vmatpush1.msra.mxu0 %v929
  %1231 = vmatprep.subr.mxu0 %v934
  %1232 = vmatpush1.msra.mxu0 %v933
  %1233 = vmatprep.subr.mxu0 %v938
  %1234 = vmatpush1.msra.mxu0 %v937
  %1235 = vmatprep.subr.mxu0 %v942
  %1236 = vmatpush1.msra.mxu0 %v941
  %1237 = vmatprep.subr.mxu0 %v946
  %1238 = vmatpush1.msra.mxu0 %v945
  %1239 = vmatprep.subr.mxu0 %v950
  %1240 = vmatpush1.msra.mxu0 %v949
  %1241 = vmatprep.subr.mxu0 %v954
  %1242 = vmatpush1.msra.mxu0 %v953
  %1243 = vmatprep.subr.mxu0 %v958
  %1244 = vmatpush1.msra.mxu0 %v957
  %1245 = vmatprep.subr.mxu0 %v962
  %1246 = vmatpush1.msra.mxu0 %v961
  %1247 = vmatprep.subr.mxu0 %v966
  %1248 = vmatpush1.msra.mxu0 %v965
  %1249 = vmatprep.subr.mxu0 0.0
  %1250 = vmatpush1.msra.mxu0 0.0
  %1251 = vmatprep.subr.mxu0 0.0
  %1252 = vmatpush1.msra.mxu0 0.0
  %1253 = vmatprep.subr.mxu0 0.0
  %1254 = vmatpush1.msra.mxu0 0.0
  %1255 = vmatprep.subr.mxu0 0.0
  %1256 = vmatpush1.msra.mxu0 0.0
  %1257 = vmatprep.subr.mxu0 0.0
  %1258 = vmatpush1.msra.mxu0 0.0
  %1259 = vmatprep.subr.mxu0 0.0
  %1260 = vmatpush1.msra.mxu0 0.0
  %1261 = vmatprep.subr.mxu0 0.0
  %1262 = vmatpush1.msra.mxu0 0.0
  %1263 = vmatprep.subr.mxu0 0.0
  %1264 = vmatpush1.msra.mxu0 0.0
  %1265 = vmatprep.subr.mxu0 0.0
  %1266 = vmatpush1.msra.mxu0 0.0
  %1267 = vmatprep.subr.mxu0 0.0
  %1268 = vmatpush1.msra.mxu0 0.0
  %1269 = vmatprep.subr.mxu0 0.0
  %1270 = vmatpush1.msra.mxu0 0.0
  %1271 = vmatprep.subr.mxu0 0.0
  %1272 = vmatpush1.msra.mxu0 0.0
  %1273 = vmatprep.subr.mxu0 0.0
  %1274 = vmatpush1.msra.mxu0 0.0
  %1275 = vmatprep.subr.mxu0 0.0
  %1276 = vmatpush1.msra.mxu0 0.0
  %1277 = vmatprep.subr.mxu0 0.0
  %1278 = vmatpush1.msra.mxu0 0.0
  %1279 = vmatprep.subr.mxu0 0.0
  %1280 = vmatpush1.msra.mxu0 0.0
  %1281 = vmatprep.mubr.f32.mxu0 0.0
  %1282 = vmatmul.mubr.f32.gmra.mrb[0].mxu0 %v1140
  %v1283 = vpop.f32.mrb[0].mxu0
  %v1284 = vadd.f32 0.0, %v1283
  %v1285 = vpop.f32.mrb[0].mxu0
  %v1286 = vadd.f32 0.0, %v1285
  %1287 = vdwg.mxu0
  %v1292 = vrot.slane %v1213, 6
  %v1293 = vrot.slane %v1215, 6
  %v1294 = vrot.slane %v1284, 6
  %v1295 = vrot.slane %v1286, 6
  %v1300 = vadd.f32 %v1142, %v1292
  %v1301 = vadd.f32 %v1143, %v1293
  %v1302 = vadd.f32 %v1144, %v1294
  %v1303 = vadd.f32 %v1145, %v1295
  %v1304 = vxor.u32 %v1300, 2147483648
  %v1305 = vmul.f32 %v1304, 1.442695
  %v1306 = vpow.pop %v1305
  %v1307 = vadd.f32 %v1306, 1.0
  %v1308 = vrcp.pop %v1307
  %v1309 = vmul.f32 1.0, %v1308
  %v1310 = vxor.u32 %v1301, 2147483648
  %v1311 = vmul.f32 %v1310, 1.442695
  %v1312 = vpow.pop %v1311
  %v1313 = vadd.f32 %v1312, 1.0
  %v1314 = vrcp.pop %v1313
  %v1315 = vmul.f32 1.0, %v1314
  %v1316 = vtanh.pop %v1302
  %v1317 = vxor.u32 %v1303, 2147483648
  %v1318 = vmul.f32 %v1317, 1.442695
  %v1319 = vpow.pop %v1318
  %v1320 = vadd.f32 %v1319, 1.0
  %v1321 = vrcp.pop %v1320
  %v1322 = vmul.f32 1.0, %v1321
  %v1324 = vrot.slane %v1138, 6
  %v1326 = vmul.f32 %v1315, %v1324
  %v1327 = vmul.f32 %v1309, %v1316
  %v1328 = vadd.f32 %v1326, %v1327
  %v1329 = vtanh.pop %v1328
  %v1330 = vmul.f32 %v1322, %v1329
  %s1331 = scalar_lea.vmem %s8, 2
  %1332 = vst [vmem:[%s1331 - $0x2] sm:$0xc] %v1330
  %v1333 = vld [vmem:[#allocation2] sm:$0x30]
  %v1334 = vld [vmem:[#allocation2 + $0x8] sm:$0x30]
  %v1335 = vld [vmem:[#allocation2 + $0x10] sm:$0x30]
  %v1336 = vld [vmem:[#allocation2 + $0x18] sm:$0x30]
  %v1338 = vrot.slane %v1330, 2
  %1340 = vmatprep.subr.mxu0 %v904
  %1341 = vmatpush1.msra.mxu0 %v903
  %1342 = vmatprep.subr.mxu0 %v908
  %1343 = vmatpush1.msra.mxu0 %v907
  %1344 = vmatprep.subr.mxu0 %v912
  %1345 = vmatpush1.msra.mxu0 %v911
  %1346 = vmatprep.subr.mxu0 %v916
  %1347 = vmatpush1.msra.mxu0 %v915
  %1348 = vmatprep.subr.mxu0 %v920
  %1349 = vmatpush1.msra.mxu0 %v919
  %1350 = vmatprep.subr.mxu0 %v924
  %1351 = vmatpush1.msra.mxu0 %v923
  %1352 = vmatprep.subr.mxu0 %v928
  %1353 = vmatpush1.msra.mxu0 %v927
  %1354 = vmatprep.subr.mxu0 %v932
  %1355 = vmatpush1.msra.mxu0 %v931
  %1356 = vmatprep.subr.mxu0 %v936
  %1357 = vmatpush1.msra.mxu0 %v935
  %1358 = vmatprep.subr.mxu0 %v940
  %1359 = vmatpush1.msra.mxu0 %v939
  %1360 = vmatprep.subr.mxu0 %v944
  %1361 = vmatpush1.msra.mxu0 %v943
  %1362 = vmatprep.subr.mxu0 %v948
  %1363 = vmatpush1.msra.mxu0 %v947
  %1364 = vmatprep.subr.mxu0 %v952
  %1365 = vmatpush1.msra.mxu0 %v951
  %1366 = vmatprep.subr.mxu0 %v956
  %1367 = vmatpush1.msra.mxu0 %v955
  %1368 = vmatprep.subr.mxu0 %v960
  %1369 = vmatpush1.msra.mxu0 %v959
  %1370 = vmatprep.subr.mxu0 %v964
  %1371 = vmatpush1.msra.mxu0 %v963
  %1372 = vmatprep.subr.mxu0 0.0
  %1373 = vmatpush1.msra.mxu0 0.0
  %1374 = vmatprep.subr.mxu0 0.0
  %1375 = vmatpush1.msra.mxu0 0.0
  %1376 = vmatprep.subr.mxu0 0.0
  %1377 = vmatpush1.msra.mxu0 0.0
  %1378 = vmatprep.subr.mxu0 0.0
  %1379 = vmatpush1.msra.mxu0 0.0
  %1380 = vmatprep.subr.mxu0 0.0
  %1381 = vmatpush1.msra.mxu0 0.0
  %1382 = vmatprep.subr.mxu0 0.0
  %1383 = vmatpush1.msra.mxu0 0.0
  %1384 = vmatprep.subr.mxu0 0.0
  %1385 = vmatpush1.msra.mxu0 0.0
  %1386 = vmatprep.subr.mxu0 0.0
  %1387 = vmatpush1.msra.mxu0 0.0
  %1388 = vmatprep.subr.mxu0 0.0
  %1389 = vmatpush1.msra.mxu0 0.0
  %1390 = vmatprep.subr.mxu0 0.0
  %1391 = vmatpush1.msra.mxu0 0.0
  %1392 = vmatprep.subr.mxu0 0.0
  %1393 = vmatpush1.msra.mxu0 0.0
  %1394 = vmatprep.subr.mxu0 0.0
  %1395 = vmatpush1.msra.mxu0 0.0
  %1396 = vmatprep.subr.mxu0 0.0
  %1397 = vmatpush1.msra.mxu0 0.0
  %1398 = vmatprep.subr.mxu0 0.0
  %1399 = vmatpush1.msra.mxu0 0.0
  %1400 = vmatprep.subr.mxu0 0.0
  %1401 = vmatpush1.msra.mxu0 0.0
  %1402 = vmatprep.subr.mxu0 0.0
  %1403 = vmatpush1.msra.mxu0 0.0
  %1404 = vmatprep.mubr.f32.mxu0 0.0
  %1405 = vmatmul.mubr.f32.gmra.mrb[0].mxu0 %v1338
  %v1406 = vpop.f32.mrb[0].mxu0
  %v1407 = vadd.f32 0.0, %v1406
  %v1408 = vpop.f32.mrb[0].mxu0
  %v1409 = vadd.f32 0.0, %v1408
  %1410 = vdwg.mxu0
  %1411 = vmatprep.subr.mxu0 %v906
  %1412 = vmatpush1.msra.mxu0 %v905
  %1413 = vmatprep.subr.mxu0 %v910
  %1414 = vmatpush1.msra.mxu0 %v909
  %1415 = vmatprep.subr.mxu0 %v914
  %1416 = vmatpush1.msra.mxu0 %v913
  %1417 = vmatprep.subr.mxu0 %v918
  %1418 = vmatpush1.msra.mxu0 %v917
  %1419 = vmatprep.subr.mxu0 %v922
  %1420 = vmatpush1.msra.mxu0 %v921
  %1421 = vmatprep.subr.mxu0 %v926
  %1422 = vmatpush1.msra.mxu0 %v925
  %1423 = vmatprep.subr.mxu0 %v930
  %1424 = vmatpush1.msra.mxu0 %v929
  %1425 = vmatprep.subr.mxu0 %v934
  %1426 = vmatpush1.msra.mxu0 %v933
  %1427 = vmatprep.subr.mxu0 %v938
  %1428 = vmatpush1.msra.mxu0 %v937
  %1429 = vmatprep.subr.mxu0 %v942
  %1430 = vmatpush1.msra.mxu0 %v941
  %1431 = vmatprep.subr.mxu0 %v946
  %1432 = vmatpush1.msra.mxu0 %v945
  %1433 = vmatprep.subr.mxu0 %v950
  %1434 = vmatpush1.msra.mxu0 %v949
  %1435 = vmatprep.subr.mxu0 %v954
  %1436 = vmatpush1.msra.mxu0 %v953
  %1437 = vmatprep.subr.mxu0 %v958
  %1438 = vmatpush1.msra.mxu0 %v957
  %1439 = vmatprep.subr.mxu0 %v962
  %1440 = vmatpush1.msra.mxu0 %v961
  %1441 = vmatprep.subr.mxu0 %v966
  %1442 = vmatpush1.msra.mxu0 %v965
  %1443 = vmatprep.subr.mxu0 0.0
  %1444 = vmatpush1.msra.mxu0 0.0
  %1445 = vmatprep.subr.mxu0 0.0
  %1446 = vmatpush1.msra.mxu0 0.0
  %1447 = vmatprep.subr.mxu0 0.0
  %1448 = vmatpush1.msra.mxu0 0.0
  %1449 = vmatprep.subr.mxu0 0.0
  %1450 = vmatpush1.msra.mxu0 0.0
  %1451 = vmatprep.subr.mxu0 0.0
  %1452 = vmatpush1.msra.mxu0 0.0
  %1453 = vmatprep.subr.mxu0 0.0
  %1454 = vmatpush1.msra.mxu0 0.0
  %1455 = vmatprep.subr.mxu0 0.0
  %1456 = vmatpush1.msra.mxu0 0.0
  %1457 = vmatprep.subr.mxu0 0.0
  %1458 = vmatpush1.msra.mxu0 0.0
  %1459 = vmatprep.subr.mxu0 0.0
  %1460 = vmatpush1.msra.mxu0 0.0
  %1461 = vmatprep.subr.mxu0 0.0
  %1462 = vmatpush1.msra.mxu0 0.0
  %1463 = vmatprep.subr.mxu0 0.0
  %1464 = vmatpush1.msra.mxu0 0.0
  %1465 = vmatprep.subr.mxu0 0.0
  %1466 = vmatpush1.msra.mxu0 0.0
  %1467 = vmatprep.subr.mxu0 0.0
  %1468 = vmatpush1.msra.mxu0 0.0
  %1469 = vmatprep.subr.mxu0 0.0
  %1470 = vmatpush1.msra.mxu0 0.0
  %1471 = vmatprep.subr.mxu0 0.0
  %1472 = vmatpush1.msra.mxu0 0.0
  %1473 = vmatprep.subr.mxu0 0.0
  %1474 = vmatpush1.msra.mxu0 0.0
  %1475 = vmatprep.mubr.f32.mxu0 0.0
  %1476 = vmatmul.mubr.f32.gmra.mrb[0].mxu0 %v1338
  %v1477 = vpop.f32.mrb[0].mxu0
  %v1478 = vadd.f32 0.0, %v1477
  %v1479 = vpop.f32.mrb[0].mxu0
  %v1480 = vadd.f32 0.0, %v1479
  %1481 = vdwg.mxu0
  %v1486 = vrot.slane %v1407, 4
  %v1487 = vrot.slane %v1409, 4
  %v1488 = vrot.slane %v1478, 4
  %v1489 = vrot.slane %v1480, 4
  %v1494 = vadd.f32 %v1333, %v1486
  %v1495 = vadd.f32 %v1334, %v1487
  %v1496 = vadd.f32 %v1335, %v1488
  %v1497 = vadd.f32 %v1336, %v1489
  %v1498 = vxor.u32 %v1494, 2147483648
  %v1499 = vmul.f32 %v1498, 1.442695
  %v1500 = vpow.pop %v1499
  %v1501 = vadd.f32 %v1500, 1.0
  %v1502 = vrcp.pop %v1501
  %v1503 = vmul.f32 1.0, %v1502
  %v1504 = vxor.u32 %v1495, 2147483648
  %v1505 = vmul.f32 %v1504, 1.442695
  %v1506 = vpow.pop %v1505
  %v1507 = vadd.f32 %v1506, 1.0
  %v1508 = vrcp.pop %v1507
  %v1509 = vmul.f32 1.0, %v1508
  %v1510 = vtanh.pop %v1496
  %v1511 = vxor.u32 %v1497, 2147483648
  %v1512 = vmul.f32 %v1511, 1.442695
  %v1513 = vpow.pop %v1512
  %v1514 = vadd.f32 %v1513, 1.0
  %v1515 = vrcp.pop %v1514
  %v1516 = vmul.f32 1.0, %v1515
  %v1518 = vrot.slane %v1328, 6
  %v1520 = vmul.f32 %v1509, %v1518
  %v1521 = vmul.f32 %v1503, %v1510
  %v1522 = vadd.f32 %v1520, %v1521
  %v1523 = vtanh.pop %v1522
  %v1524 = vmul.f32 %v1516, %v1523
  %s1525 = scalar_lea.vmem %s8, 4
  %1526 = vst [vmem:[%s1525 - $0x4] sm:$0x30] %v1524
  %v1527 = vld [vmem:[#allocation2] sm:$0xc0]
  %v1528 = vld [vmem:[#allocation2 + $0x8] sm:$0xc0]
  %v1529 = vld [vmem:[#allocation2 + $0x10] sm:$0xc0]
  %v1530 = vld [vmem:[#allocation2 + $0x18] sm:$0xc0]
  %v1532 = vrot.slane %v1524, 4
  %1534 = vmatprep.subr.mxu0 %v904
  %1535 = vmatpush1.msra.mxu0 %v903
  %1536 = vmatprep.subr.mxu0 %v908
  %1537 = vmatpush1.msra.mxu0 %v907
  %1538 = vmatprep.subr.mxu0 %v912
  %1539 = vmatpush1.msra.mxu0 %v911
  %1540 = vmatprep.subr.mxu0 %v916
  %1541 = vmatpush1.msra.mxu0 %v915
  %1542 = vmatprep.subr.mxu0 %v920
  %1543 = vmatpush1.msra.mxu0 %v919
  %1544 = vmatprep.subr.mxu0 %v924
  %1545 = vmatpush1.msra.mxu0 %v923
  %1546 = vmatprep.subr.mxu0 %v928
  %1547 = vmatpush1.msra.mxu0 %v927
  %1548 = vmatprep.subr.mxu0 %v932
  %1549 = vmatpush1.msra.mxu0 %v931
  %1550 = vmatprep.subr.mxu0 %v936
  %1551 = vmatpush1.msra.mxu0 %v935
  %1552 = vmatprep.subr.mxu0 %v940
  %1553 = vmatpush1.msra.mxu0 %v939
  %1554 = vmatprep.subr.mxu0 %v944
  %1555 = vmatpush1.msra.mxu0 %v943
  %1556 = vmatprep.subr.mxu0 %v948
  %1557 = vmatpush1.msra.mxu0 %v947
  %1558 = vmatprep.subr.mxu0 %v952
  %1559 = vmatpush1.msra.mxu0 %v951
  %1560 = vmatprep.subr.mxu0 %v956
  %1561 = vmatpush1.msra.mxu0 %v955
  %1562 = vmatprep.subr.mxu0 %v960
  %1563 = vmatpush1.msra.mxu0 %v959
  %1564 = vmatprep.subr.mxu0 %v964
  %1565 = vmatpush1.msra.mxu0 %v963
  %1566 = vmatprep.subr.mxu0 0.0
  %1567 = vmatpush1.msra.mxu0 0.0
  %1568 = vmatprep.subr.mxu0 0.0
  %1569 = vmatpush1.msra.mxu0 0.0
  %1570 = vmatprep.subr.mxu0 0.0
  %1571 = vmatpush1.msra.mxu0 0.0
  %1572 = vmatprep.subr.mxu0 0.0
  %1573 = vmatpush1.msra.mxu0 0.0
  %1574 = vmatprep.subr.mxu0 0.0
  %1575 = vmatpush1.msra.mxu0 0.0
  %1576 = vmatprep.subr.mxu0 0.0
  %1577 = vmatpush1.msra.mxu0 0.0
  %1578 = vmatprep.subr.mxu0 0.0
  %1579 = vmatpush1.msra.mxu0 0.0
  %1580 = vmatprep.subr.mxu0 0.0
  %1581 = vmatpush1.msra.mxu0 0.0
  %1582 = vmatprep.subr.mxu0 0.0
  %1583 = vmatpush1.msra.mxu0 0.0
  %1584 = vmatprep.subr.mxu0 0.0
  %1585 = vmatpush1.msra.mxu0 0.0
  %1586 = vmatprep.subr.mxu0 0.0
  %1587 = vmatpush1.msra.mxu0 0.0
  %1588 = vmatprep.subr.mxu0 0.0
  %1589 = vmatpush1.msra.mxu0 0.0
  %1590 = vmatprep.subr.mxu0 0.0
  %1591 = vmatpush1.msra.mxu0 0.0
  %1592 = vmatprep.subr.mxu0 0.0
  %1593 = vmatpush1.msra.mxu0 0.0
  %1594 = vmatprep.subr.mxu0 0.0
  %1595 = vmatpush1.msra.mxu0 0.0
  %1596 = vmatprep.subr.mxu0 0.0
  %1597 = vmatpush1.msra.mxu0 0.0
  %1598 = vmatprep.mubr.f32.mxu0 0.0
  %1599 = vmatmul.mubr.f32.gmra.mrb[0].mxu0 %v1532
  %v1600 = vpop.f32.mrb[0].mxu0
  %v1601 = vadd.f32 0.0, %v1600
  %v1602 = vpop.f32.mrb[0].mxu0
  %v1603 = vadd.f32 0.0, %v1602
  %1604 = vdwg.mxu0
  %1605 = vmatprep.subr.mxu0 %v906
  %1606 = vmatpush1.msra.mxu0 %v905
  %1607 = vmatprep.subr.mxu0 %v910
  %1608 = vmatpush1.msra.mxu0 %v909
  %1609 = vmatprep.subr.mxu0 %v914
  %1610 = vmatpush1.msra.mxu0 %v913
  %1611 = vmatprep.subr.mxu0 %v918
  %1612 = vmatpush1.msra.mxu0 %v917
  %1613 = vmatprep.subr.mxu0 %v922
  %1614 = vmatpush1.msra.mxu0 %v921
  %1615 = vmatprep.subr.mxu0 %v926
  %1616 = vmatpush1.msra.mxu0 %v925
  %1617 = vmatprep.subr.mxu0 %v930
  %1618 = vmatpush1.msra.mxu0 %v929
  %1619 = vmatprep.subr.mxu0 %v934
  %1620 = vmatpush1.msra.mxu0 %v933
  %1621 = vmatprep.subr.mxu0 %v938
  %1622 = vmatpush1.msra.mxu0 %v937
  %1623 = vmatprep.subr.mxu0 %v942
  %1624 = vmatpush1.msra.mxu0 %v941
  %1625 = vmatprep.subr.mxu0 %v946
  %1626 = vmatpush1.msra.mxu0 %v945
  %1627 = vmatprep.subr.mxu0 %v950
  %1628 = vmatpush1.msra.mxu0 %v949
  %1629 = vmatprep.subr.mxu0 %v954
  %1630 = vmatpush1.msra.mxu0 %v953
  %1631 = vmatprep.subr.mxu0 %v958
  %1632 = vmatpush1.msra.mxu0 %v957
  %1633 = vmatprep.subr.mxu0 %v962
  %1634 = vmatpush1.msra.mxu0 %v961
  %1635 = vmatprep.subr.mxu0 %v966
  %1636 = vmatpush1.msra.mxu0 %v965
  %1637 = vmatprep.subr.mxu0 0.0
  %1638 = vmatpush1.msra.mxu0 0.0
  %1639 = vmatprep.subr.mxu0 0.0
  %1640 = vmatpush1.msra.mxu0 0.0
  %1641 = vmatprep.subr.mxu0 0.0
  %1642 = vmatpush1.msra.mxu0 0.0
  %1643 = vmatprep.subr.mxu0 0.0
  %1644 = vmatpush1.msra.mxu0 0.0
  %1645 = vmatprep.subr.mxu0 0.0
  %1646 = vmatpush1.msra.mxu0 0.0
  %1647 = vmatprep.subr.mxu0 0.0
  %1648 = vmatpush1.msra.mxu0 0.0
  %1649 = vmatprep.subr.mxu0 0.0
  %1650 = vmatpush1.msra.mxu0 0.0
  %1651 = vmatprep.subr.mxu0 0.0
  %1652 = vmatpush1.msra.mxu0 0.0
  %1653 = vmatprep.subr.mxu0 0.0
  %1654 = vmatpush1.msra.mxu0 0.0
  %1655 = vmatprep.subr.mxu0 0.0
  %1656 = vmatpush1.msra.mxu0 0.0
  %1657 = vmatprep.subr.mxu0 0.0
  %1658 = vmatpush1.msra.mxu0 0.0
  %1659 = vmatprep.subr.mxu0 0.0
  %1660 = vmatpush1.msra.mxu0 0.0
  %1661 = vmatprep.subr.mxu0 0.0
  %1662 = vmatpush1.msra.mxu0 0.0
  %1663 = vmatprep.subr.mxu0 0.0
  %1664 = vmatpush1.msra.mxu0 0.0
  %1665 = vmatprep.subr.mxu0 0.0
  %1666 = vmatpush1.msra.mxu0 0.0
  %1667 = vmatprep.subr.mxu0 0.0
  %1668 = vmatpush1.msra.mxu0 0.0
  %1669 = vmatprep.mubr.f32.mxu0 0.0
  %1670 = vmatmul.mubr.f32.gmra.mrb[0].mxu0 %v1532
  %v1671 = vpop.f32.mrb[0].mxu0
  %v1672 = vadd.f32 0.0, %v1671
  %v1673 = vpop.f32.mrb[0].mxu0
  %v1674 = vadd.f32 0.0, %v1673
  %1675 = vdwg.mxu0
  %v1680 = vrot.slane %v1601, 2
  %v1681 = vrot.slane %v1603, 2
  %v1682 = vrot.slane %v1672, 2
  %v1683 = vrot.slane %v1674, 2
  %v1688 = vadd.f32 %v1527, %v1680
  %v1689 = vadd.f32 %v1528, %v1681
  %v1690 = vadd.f32 %v1529, %v1682
  %v1691 = vadd.f32 %v1530, %v1683
  %v1692 = vxor.u32 %v1688, 2147483648
  %v1693 = vmul.f32 %v1692, 1.442695
  %v1694 = vpow.pop %v1693
  %v1695 = vadd.f32 %v1694, 1.0
  %v1696 = vrcp.pop %v1695
  %v1697 = vmul.f32 1.0, %v1696
  %v1698 = vxor.u32 %v1689, 2147483648
  %v1699 = vmul.f32 %v1698, 1.442695
  %v1700 = vpow.pop %v1699
  %v1701 = vadd.f32 %v1700, 1.0
  %v1702 = vrcp.pop %v1701
  %v1703 = vmul.f32 1.0, %v1702
  %v1704 = vtanh.pop %v1690
  %v1705 = vxor.u32 %v1691, 2147483648
  %v1706 = vmul.f32 %v1705, 1.442695
  %v1707 = vpow.pop %v1706
  %v1708 = vadd.f32 %v1707, 1.0
  %v1709 = vrcp.pop %v1708
  %v1710 = vmul.f32 1.0, %v1709
  %v1712 = vrot.slane %v1522, 6
  %v1714 = vmul.f32 %v1703, %v1712
  %v1715 = vmul.f32 %v1697, %v1704
  %v1716 = vadd.f32 %v1714, %v1715
  %v1717 = vtanh.pop %v1716
  %v1718 = vmul.f32 %v1710, %v1717
  %s1719 = scalar_lea.vmem %s8, 6
  %1720 = vst [vmem:[%s1719 - $0x6] sm:$0xc0] %v1718
  %v1721 = vld [vmem:[#allocation2 + $0x20] sm:$0x3]
  %v1722 = vld [vmem:[#allocation2 + $0x28] sm:$0x3]
  %v1723 = vld [vmem:[#allocation2 + $0x30] sm:$0x3]
  %v1724 = vld [vmem:[#allocation2 + $0x38] sm:$0x3]
  %v1726 = vrot.slane %v1718, 6
  %1728 = vmatprep.subr.mxu0 %v904
  %1729 = vmatpush1.msra.mxu0 %v903
  %1730 = vmatprep.subr.mxu0 %v908
  %1731 = vmatpush1.msra.mxu0 %v907
  %1732 = vmatprep.subr.mxu0 %v912
  %1733 = vmatpush1.msra.mxu0 %v911
  %1734 = vmatprep.subr.mxu0 %v916
  %1735 = vmatpush1.msra.mxu0 %v915
  %1736 = vmatprep.subr.mxu0 %v920
  %1737 = vmatpush1.msra.mxu0 %v919
  %1738 = vmatprep.subr.mxu0 %v924
  %1739 = vmatpush1.msra.mxu0 %v923
  %1740 = vmatprep.subr.mxu0 %v928
  %1741 = vmatpush1.msra.mxu0 %v927
  %1742 = vmatprep.subr.mxu0 %v932
  %1743 = vmatpush1.msra.mxu0 %v931
  %1744 = vmatprep.subr.mxu0 %v936
  %1745 = vmatpush1.msra.mxu0 %v935
  %1746 = vmatprep.subr.mxu0 %v940
  %1747 = vmatpush1.msra.mxu0 %v939
  %1748 = vmatprep.subr.mxu0 %v944
  %1749 = vmatpush1.msra.mxu0 %v943
  %1750 = vmatprep.subr.mxu0 %v948
  %1751 = vmatpush1.msra.mxu0 %v947
  %1752 = vmatprep.subr.mxu0 %v952
  %1753 = vmatpush1.msra.mxu0 %v951
  %1754 = vmatprep.subr.mxu0 %v956
  %1755 = vmatpush1.msra.mxu0 %v955
  %1756 = vmatprep.subr.mxu0 %v960
  %1757 = vmatpush1.msra.mxu0 %v959
  %1758 = vmatprep.subr.mxu0 %v964
  %1759 = vmatpush1.msra.mxu0 %v963
  %1760 = vmatprep.subr.mxu0 0.0
  %1761 = vmatpush1.msra.mxu0 0.0
  %1762 = vmatprep.subr.mxu0 0.0
  %1763 = vmatpush1.msra.mxu0 0.0
  %1764 = vmatprep.subr.mxu0 0.0
  %1765 = vmatpush1.msra.mxu0 0.0
  %1766 = vmatprep.subr.mxu0 0.0
  %1767 = vmatpush1.msra.mxu0 0.0
  %1768 = vmatprep.subr.mxu0 0.0
  %1769 = vmatpush1.msra.mxu0 0.0
  %1770 = vmatprep.subr.mxu0 0.0
  %1771 = vmatpush1.msra.mxu0 0.0
  %1772 = vmatprep.subr.mxu0 0.0
  %1773 = vmatpush1.msra.mxu0 0.0
  %1774 = vmatprep.subr.mxu0 0.0
  %1775 = vmatpush1.msra.mxu0 0.0
  %1776 = vmatprep.subr.mxu0 0.0
  %1777 = vmatpush1.msra.mxu0 0.0
  %1778 = vmatprep.subr.mxu0 0.0
  %1779 = vmatpush1.msra.mxu0 0.0
  %1780 = vmatprep.subr.mxu0 0.0
  %1781 = vmatpush1.msra.mxu0 0.0
  %1782 = vmatprep.subr.mxu0 0.0
  %1783 = vmatpush1.msra.mxu0 0.0
  %1784 = vmatprep.subr.mxu0 0.0
  %1785 = vmatpush1.msra.mxu0 0.0
  %1786 = vmatprep.subr.mxu0 0.0
  %1787 = vmatpush1.msra.mxu0 0.0
  %1788 = vmatprep.subr.mxu0 0.0
  %1789 = vmatpush1.msra.mxu0 0.0
  %1790 = vmatprep.subr.mxu0 0.0
  %1791 = vmatpush1.msra.mxu0 0.0
  %1792 = vmatprep.mubr.f32.mxu0 0.0
  %1793 = vmatmul.mubr.f32.gmra.mrb[0].mxu0 %v1726
  %v1794 = vpop.f32.mrb[0].mxu0
  %v1795 = vadd.f32 0.0, %v1794
  %v1796 = vpop.f32.mrb[0].mxu0
  %v1797 = vadd.f32 0.0, %v1796
  %1798 = vdwg.mxu0
  %1799 = vmatprep.subr.mxu0 %v906
  %1800 = vmatpush1.msra.mxu0 %v905
  %1801 = vmatprep.subr.mxu0 %v910
  %1802 = vmatpush1.msra.mxu0 %v909
  %1803 = vmatprep.subr.mxu0 %v914
  %1804 = vmatpush1.msra.mxu0 %v913
  %1805 = vmatprep.subr.mxu0 %v918
  %1806 = vmatpush1.msra.mxu0 %v917
  %1807 = vmatprep.subr.mxu0 %v922
  %1808 = vmatpush1.msra.mxu0 %v921
  %1809 = vmatprep.subr.mxu0 %v926
  %1810 = vmatpush1.msra.mxu0 %v925
  %1811 = vmatprep.subr.mxu0 %v930
  %1812 = vmatpush1.msra.mxu0 %v929
  %1813 = vmatprep.subr.mxu0 %v934
  %1814 = vmatpush1.msra.mxu0 %v933
  %1815 = vmatprep.subr.mxu0 %v938
  %1816 = vmatpush1.msra.mxu0 %v937
  %1817 = vmatprep.subr.mxu0 %v942
  %1818 = vmatpush1.msra.mxu0 %v941
  %1819 = vmatprep.subr.mxu0 %v946
  %1820 = vmatpush1.msra.mxu0 %v945
  %1821 = vmatprep.subr.mxu0 %v950
  %1822 = vmatpush1.msra.mxu0 %v949
  %1823 = vmatprep.subr.mxu0 %v954
  %1824 = vmatpush1.msra.mxu0 %v953
  %1825 = vmatprep.subr.mxu0 %v958
  %1826 = vmatpush1.msra.mxu0 %v957
  %1827 = vmatprep.subr.mxu0 %v962
  %1828 = vmatpush1.msra.mxu0 %v961
  %1829 = vmatprep.subr.mxu0 %v966
  %1830 = vmatpush1.msra.mxu0 %v965
  %1831 = vmatprep.subr.mxu0 0.0
  %1832 = vmatpush1.msra.mxu0 0.0
  %1833 = vmatprep.subr.mxu0 0.0
  %1834 = vmatpush1.msra.mxu0 0.0
  %1835 = vmatprep.subr.mxu0 0.0
  %1836 = vmatpush1.msra.mxu0 0.0
  %1837 = vmatprep.subr.mxu0 0.0
  %1838 = vmatpush1.msra.mxu0 0.0
  %1839 = vmatprep.subr.mxu0 0.0
  %1840 = vmatpush1.msra.mxu0 0.0
  %1841 = vmatprep.subr.mxu0 0.0
  %1842 = vmatpush1.msra.mxu0 0.0
  %1843 = vmatprep.subr.mxu0 0.0
  %1844 = vmatpush1.msra.mxu0 0.0
  %1845 = vmatprep.subr.mxu0 0.0
  %1846 = vmatpush1.msra.mxu0 0.0
  %1847 = vmatprep.subr.mxu0 0.0
  %1848 = vmatpush1.msra.mxu0 0.0
  %1849 = vmatprep.subr.mxu0 0.0
  %1850 = vmatpush1.msra.mxu0 0.0
  %1851 = vmatprep.subr.mxu0 0.0
  %1852 = vmatpush1.msra.mxu0 0.0
  %1853 = vmatprep.subr.mxu0 0.0
  %1854 = vmatpush1.msra.mxu0 0.0
  %1855 = vmatprep.subr.mxu0 0.0
  %1856 = vmatpush1.msra.mxu0 0.0
  %1857 = vmatprep.subr.mxu0 0.0
  %1858 = vmatpush1.msra.mxu0 0.0
  %1859 = vmatprep.subr.mxu0 0.0
  %1860 = vmatpush1.msra.mxu0 0.0
  %1861 = vmatprep.subr.mxu0 0.0
  %1862 = vmatpush1.msra.mxu0 0.0
  %1863 = vmatprep.mubr.f32.mxu0 0.0
  %1864 = vmatmul.mubr.f32.gmra.mrb[0].mxu0 %v1726
  %v1865 = vpop.f32.mrb[0].mxu0
  %v1866 = vadd.f32 0.0, %v1865
  %v1867 = vpop.f32.mrb[0].mxu0
  %v1868 = vadd.f32 0.0, %v1867
  %1869 = vdwg.mxu0
  %v1870 = vadd.f32 %v1721, %v1795
  %v1871 = vadd.f32 %v1722, %v1797
  %v1872 = vadd.f32 %v1723, %v1866
  %v1873 = vadd.f32 %v1724, %v1868
  %v1874 = vxor.u32 %v1870, 2147483648
  %v1875 = vmul.f32 %v1874, 1.442695
  %v1876 = vpow.pop %v1875
  %v1877 = vadd.f32 %v1876, 1.0
  %v1878 = vrcp.pop %v1877
  %v1879 = vmul.f32 1.0, %v1878
  %v1880 = vxor.u32 %v1871, 2147483648
  %v1881 = vmul.f32 %v1880, 1.442695
  %v1882 = vpow.pop %v1881
  %v1883 = vadd.f32 %v1882, 1.0
  %v1884 = vrcp.pop %v1883
  %v1885 = vmul.f32 1.0, %v1884
  %v1886 = vtanh.pop %v1872
  %v1887 = vxor.u32 %v1873, 2147483648
  %v1888 = vmul.f32 %v1887, 1.442695
  %v1889 = vpow.pop %v1888
  %v1890 = vadd.f32 %v1889, 1.0
  %v1891 = vrcp.pop %v1890
  %v1892 = vmul.f32 1.0, %v1891
  %v1894 = vrot.slane %v1716, 6
  %v1896 = vmul.f32 %v1885, %v1894
  %v1897 = vmul.f32 %v1879, %v1886
  %v1898 = vadd.f32 %v1896, %v1897
  %v1899 = vtanh.pop %v1898
  %v1900 = vmul.f32 %v1892, %v1899
  %s1901 = scalar_lea.vmem %s8, 8
  %1902 = vst [vmem:[%s1901] sm:$0x3] %v1900
  %v1903 = vld [vmem:[#allocation2 + $0x20] sm:$0xc]
  %v1904 = vld [vmem:[#allocation2 + $0x28] sm:$0xc]
  %v1905 = vld [vmem:[#allocation2 + $0x30] sm:$0xc]
  %v1906 = vld [vmem:[#allocation2 + $0x38] sm:$0xc]
  %1907 = vmatprep.subr.mxu0 %v904
  %1908 = vmatpush1.msra.mxu0 %v903
  %1909 = vmatprep.subr.mxu0 %v908
  %1910 = vmatpush1.msra.mxu0 %v907
  %1911 = vmatprep.subr.mxu0 %v912
  %1912 = vmatpush1.msra.mxu0 %v911
  %1913 = vmatprep.subr.mxu0 %v916
  %1914 = vmatpush1.msra.mxu0 %v915
  %1915 = vmatprep.subr.mxu0 %v920
  %1916 = vmatpush1.msra.mxu0 %v919
  %1917 = vmatprep.subr.mxu0 %v924
  %1918 = vmatpush1.msra.mxu0 %v923
  %1919 = vmatprep.subr.mxu0 %v928
  %1920 = vmatpush1.msra.mxu0 %v927
  %1921 = vmatprep.subr.mxu0 %v932
  %1922 = vmatpush1.msra.mxu0 %v931
  %1923 = vmatprep.subr.mxu0 %v936
  %1924 = vmatpush1.msra.mxu0 %v935
  %1925 = vmatprep.subr.mxu0 %v940
  %1926 = vmatpush1.msra.mxu0 %v939
  %1927 = vmatprep.subr.mxu0 %v944
  %1928 = vmatpush1.msra.mxu0 %v943
  %1929 = vmatprep.subr.mxu0 %v948
  %1930 = vmatpush1.msra.mxu0 %v947
  %1931 = vmatprep.subr.mxu0 %v952
  %1932 = vmatpush1.msra.mxu0 %v951
  %1933 = vmatprep.subr.mxu0 %v956
  %1934 = vmatpush1.msra.mxu0 %v955
  %1935 = vmatprep.subr.mxu0 %v960
  %1936 = vmatpush1.msra.mxu0 %v959
  %1937 = vmatprep.subr.mxu0 %v964
  %1938 = vmatpush1.msra.mxu0 %v963
  %1939 = vmatprep.subr.mxu0 0.0
  %1940 = vmatpush1.msra.mxu0 0.0
  %1941 = vmatprep.subr.mxu0 0.0
  %1942 = vmatpush1.msra.mxu0 0.0
  %1943 = vmatprep.subr.mxu0 0.0
  %1944 = vmatpush1.msra.mxu0 0.0
  %1945 = vmatprep.subr.mxu0 0.0
  %1946 = vmatpush1.msra.mxu0 0.0
  %1947 = vmatprep.subr.mxu0 0.0
  %1948 = vmatpush1.msra.mxu0 0.0
  %1949 = vmatprep.subr.mxu0 0.0
  %1950 = vmatpush1.msra.mxu0 0.0
  %1951 = vmatprep.subr.mxu0 0.0
  %1952 = vmatpush1.msra.mxu0 0.0
  %1953 = vmatprep.subr.mxu0 0.0
  %1954 = vmatpush1.msra.mxu0 0.0
  %1955 = vmatprep.subr.mxu0 0.0
  %1956 = vmatpush1.msra.mxu0 0.0
  %1957 = vmatprep.subr.mxu0 0.0
  %1958 = vmatpush1.msra.mxu0 0.0
  %1959 = vmatprep.subr.mxu0 0.0
  %1960 = vmatpush1.msra.mxu0 0.0
  %1961 = vmatprep.subr.mxu0 0.0
  %1962 = vmatpush1.msra.mxu0 0.0
  %1963 = vmatprep.subr.mxu0 0.0
  %1964 = vmatpush1.msra.mxu0 0.0
  %1965 = vmatprep.subr.mxu0 0.0
  %1966 = vmatpush1.msra.mxu0 0.0
  %1967 = vmatprep.subr.mxu0 0.0
  %1968 = vmatpush1.msra.mxu0 0.0
  %1969 = vmatprep.subr.mxu0 0.0
  %1970 = vmatpush1.msra.mxu0 0.0
  %1971 = vmatprep.mubr.f32.mxu0 0.0
  %1972 = vmatmul.mubr.f32.gmra.mrb[0].mxu0 %v1900
  %v1973 = vpop.f32.mrb[0].mxu0
  %v1974 = vadd.f32 0.0, %v1973
  %v1975 = vpop.f32.mrb[0].mxu0
  %v1976 = vadd.f32 0.0, %v1975
  %1977 = vdwg.mxu0
  %1978 = vmatprep.subr.mxu0 %v906
  %1979 = vmatpush1.msra.mxu0 %v905
  %1980 = vmatprep.subr.mxu0 %v910
  %1981 = vmatpush1.msra.mxu0 %v909
  %1982 = vmatprep.subr.mxu0 %v914
  %1983 = vmatpush1.msra.mxu0 %v913
  %1984 = vmatprep.subr.mxu0 %v918
  %1985 = vmatpush1.msra.mxu0 %v917
  %1986 = vmatprep.subr.mxu0 %v922
  %1987 = vmatpush1.msra.mxu0 %v921
  %1988 = vmatprep.subr.mxu0 %v926
  %1989 = vmatpush1.msra.mxu0 %v925
  %1990 = vmatprep.subr.mxu0 %v930
  %1991 = vmatpush1.msra.mxu0 %v929
  %1992 = vmatprep.subr.mxu0 %v934
  %1993 = vmatpush1.msra.mxu0 %v933
  %1994 = vmatprep.subr.mxu0 %v938
  %1995 = vmatpush1.msra.mxu0 %v937
  %1996 = vmatprep.subr.mxu0 %v942
  %1997 = vmatpush1.msra.mxu0 %v941
  %1998 = vmatprep.subr.mxu0 %v946
  %1999 = vmatpush1.msra.mxu0 %v945
  %2000 = vmatprep.subr.mxu0 %v950
  %2001 = vmatpush1.msra.mxu0 %v949
  %2002 = vmatprep.subr.mxu0 %v954
  %2003 = vmatpush1.msra.mxu0 %v953
  %2004 = vmatprep.subr.mxu0 %v958
  %2005 = vmatpush1.msra.mxu0 %v957
  %2006 = vmatprep.subr.mxu0 %v962
  %2007 = vmatpush1.msra.mxu0 %v961
  %2008 = vmatprep.subr.mxu0 %v966
  %2009 = vmatpush1.msra.mxu0 %v965
  %2010 = vmatprep.subr.mxu0 0.0
  %2011 = vmatpush1.msra.mxu0 0.0
  %2012 = vmatprep.subr.mxu0 0.0
  %2013 = vmatpush1.msra.mxu0 0.0
  %2014 = vmatprep.subr.mxu0 0.0
  %2015 = vmatpush1.msra.mxu0 0.0
  %2016 = vmatprep.subr.mxu0 0.0
  %2017 = vmatpush1.msra.mxu0 0.0
  %2018 = vmatprep.subr.mxu0 0.0
  %2019 = vmatpush1.msra.mxu0 0.0
  %2020 = vmatprep.subr.mxu0 0.0
  %2021 = vmatpush1.msra.mxu0 0.0
  %2022 = vmatprep.subr.mxu0 0.0
  %2023 = vmatpush1.msra.mxu0 0.0
  %2024 = vmatprep.subr.mxu0 0.0
  %2025 = vmatpush1.msra.mxu0 0.0
  %2026 = vmatprep.subr.mxu0 0.0
  %2027 = vmatpush1.msra.mxu0 0.0
  %2028 = vmatprep.subr.mxu0 0.0
  %2029 = vmatpush1.msra.mxu0 0.0
  %2030 = vmatprep.subr.mxu0 0.0
  %2031 = vmatpush1.msra.mxu0 0.0
  %2032 = vmatprep.subr.mxu0 0.0
  %2033 = vmatpush1.msra.mxu0 0.0
  %2034 = vmatprep.subr.mxu0 0.0
  %2035 = vmatpush1.msra.mxu0 0.0
  %2036 = vmatprep.subr.mxu0 0.0
  %2037 = vmatpush1.msra.mxu0 0.0
  %2038 = vmatprep.subr.mxu0 0.0
  %2039 = vmatpush1.msra.mxu0 0.0
  %2040 = vmatprep.subr.mxu0 0.0
  %2041 = vmatpush1.msra.mxu0 0.0
  %2042 = vmatprep.mubr.f32.mxu0 0.0
  %2043 = vmatmul.mubr.f32.gmra.mrb[0].mxu0 %v1900
  %v2044 = vpop.f32.mrb[0].mxu0
  %v2045 = vadd.f32 0.0, %v2044
  %v2046 = vpop.f32.mrb[0].mxu0
  %v2047 = vadd.f32 0.0, %v2046
  %2048 = vdwg.mxu0
  %v2053 = vrot.slane %v1974, 6
  %v2054 = vrot.slane %v1976, 6
  %v2055 = vrot.slane %v2045, 6
  %v2056 = vrot.slane %v2047, 6
  %v2061 = vadd.f32 %v1903, %v2053
  %v2062 = vadd.f32 %v1904, %v2054
  %v2063 = vadd.f32 %v1905, %v2055
  %v2064 = vadd.f32 %v1906, %v2056
  %v2065 = vxor.u32 %v2061, 2147483648
  %v2066 = vmul.f32 %v2065, 1.442695
  %v2067 = vpow.pop %v2066
  %v2068 = vadd.f32 %v2067, 1.0
  %v2069 = vrcp.pop %v2068
  %v2070 = vmul.f32 1.0, %v2069
  %v2071 = vxor.u32 %v2062, 2147483648
  %v2072 = vmul.f32 %v2071, 1.442695
  %v2073 = vpow.pop %v2072
  %v2074 = vadd.f32 %v2073, 1.0
  %v2075 = vrcp.pop %v2074
  %v2076 = vmul.f32 1.0, %v2075
  %v2077 = vtanh.pop %v2063
  %v2078 = vxor.u32 %v2064, 2147483648
  %v2079 = vmul.f32 %v2078, 1.442695
  %v2080 = vpow.pop %v2079
  %v2081 = vadd.f32 %v2080, 1.0
  %v2082 = vrcp.pop %v2081
  %v2083 = vmul.f32 1.0, %v2082
  %v2085 = vrot.slane %v1898, 6
  %v2087 = vmul.f32 %v2076, %v2085
  %v2088 = vmul.f32 %v2070, %v2077
  %v2089 = vadd.f32 %v2087, %v2088
  %v2090 = vtanh.pop %v2089
  %v2091 = vmul.f32 %v2083, %v2090
  %s2092 = scalar_lea.vmem %s8, 10
  %2093 = vst [vmem:[%s2092 - $0x2] sm:$0xc] %v2091
  %v2094 = vld [vmem:[#allocation2 + $0x20] sm:$0x30]
  %v2095 = vld [vmem:[#allocation2 + $0x28] sm:$0x30]
  %v2096 = vld [vmem:[#allocation2 + $0x30] sm:$0x30]
  %v2097 = vld [vmem:[#allocation2 + $0x38] sm:$0x30]
  %v2099 = vrot.slane %v2091, 2
  %2101 = vmatprep.subr.mxu0 %v904
  %2102 = vmatpush1.msra.mxu0 %v903
  %2103 = vmatprep.subr.mxu0 %v908
  %2104 = vmatpush1.msra.mxu0 %v907
  %2105 = vmatprep.subr.mxu0 %v912
  %2106 = vmatpush1.msra.mxu0 %v911
  %2107 = vmatprep.subr.mxu0 %v916
  %2108 = vmatpush1.msra.mxu0 %v915
  %2109 = vmatprep.subr.mxu0 %v920
  %2110 = vmatpush1.msra.mxu0 %v919
  %2111 = vmatprep.subr.mxu0 %v924
  %2112 = vmatpush1.msra.mxu0 %v923
  %2113 = vmatprep.subr.mxu0 %v928
  %2114 = vmatpush1.msra.mxu0 %v927
  %2115 = vmatprep.subr.mxu0 %v932
  %2116 = vmatpush1.msra.mxu0 %v931
  %2117 = vmatprep.subr.mxu0 %v936
  %2118 = vmatpush1.msra.mxu0 %v935
  %2119 = vmatprep.subr.mxu0 %v940
  %2120 = vmatpush1.msra.mxu0 %v939
  %2121 = vmatprep.subr.mxu0 %v944
  %2122 = vmatpush1.msra.mxu0 %v943
  %2123 = vmatprep.subr.mxu0 %v948
  %2124 = vmatpush1.msra.mxu0 %v947
  %2125 = vmatprep.subr.mxu0 %v952
  %2126 = vmatpush1.msra.mxu0 %v951
  %2127 = vmatprep.subr.mxu0 %v956
  %2128 = vmatpush1.msra.mxu0 %v955
  %2129 = vmatprep.subr.mxu0 %v960
  %2130 = vmatpush1.msra.mxu0 %v959
  %2131 = vmatprep.subr.mxu0 %v964
  %2132 = vmatpush1.msra.mxu0 %v963
  %2133 = vmatprep.subr.mxu0 0.0
  %2134 = vmatpush1.msra.mxu0 0.0
  %2135 = vmatprep.subr.mxu0 0.0
  %2136 = vmatpush1.msra.mxu0 0.0
  %2137 = vmatprep.subr.mxu0 0.0
  %2138 = vmatpush1.msra.mxu0 0.0
  %2139 = vmatprep.subr.mxu0 0.0
  %2140 = vmatpush1.msra.mxu0 0.0
  %2141 = vmatprep.subr.mxu0 0.0
  %2142 = vmatpush1.msra.mxu0 0.0
  %2143 = vmatprep.subr.mxu0 0.0
  %2144 = vmatpush1.msra.mxu0 0.0
  %2145 = vmatprep.subr.mxu0 0.0
  %2146 = vmatpush1.msra.mxu0 0.0
  %2147 = vmatprep.subr.mxu0 0.0
  %2148 = vmatpush1.msra.mxu0 0.0
  %2149 = vmatprep.subr.mxu0 0.0
  %2150 = vmatpush1.msra.mxu0 0.0
  %2151 = vmatprep.subr.mxu0 0.0
  %2152 = vmatpush1.msra.mxu0 0.0
  %2153 = vmatprep.subr.mxu0 0.0
  %2154 = vmatpush1.msra.mxu0 0.0
  %2155 = vmatprep.subr.mxu0 0.0
  %2156 = vmatpush1.msra.mxu0 0.0
  %2157 = vmatprep.subr.mxu0 0.0
  %2158 = vmatpush1.msra.mxu0 0.0
  %2159 = vmatprep.subr.mxu0 0.0
  %2160 = vmatpush1.msra.mxu0 0.0
  %2161 = vmatprep.subr.mxu0 0.0
  %2162 = vmatpush1.msra.mxu0 0.0
  %2163 = vmatprep.subr.mxu0 0.0
  %2164 = vmatpush1.msra.mxu0 0.0
  %2165 = vmatprep.mubr.f32.mxu0 0.0
  %2166 = vmatmul.mubr.f32.gmra.mrb[0].mxu0 %v2099
  %v2167 = vpop.f32.mrb[0].mxu0
  %v2168 = vadd.f32 0.0, %v2167
  %v2169 = vpop.f32.mrb[0].mxu0
  %v2170 = vadd.f32 0.0, %v2169
  %2171 = vdwg.mxu0
  %2172 = vmatprep.subr.mxu0 %v906
  %2173 = vmatpush1.msra.mxu0 %v905
  %2174 = vmatprep.subr.mxu0 %v910
  %2175 = vmatpush1.msra.mxu0 %v909
  %2176 = vmatprep.subr.mxu0 %v914
  %2177 = vmatpush1.msra.mxu0 %v913
  %2178 = vmatprep.subr.mxu0 %v918
  %2179 = vmatpush1.msra.mxu0 %v917
  %2180 = vmatprep.subr.mxu0 %v922
  %2181 = vmatpush1.msra.mxu0 %v921
  %2182 = vmatprep.subr.mxu0 %v926
  %2183 = vmatpush1.msra.mxu0 %v925
  %2184 = vmatprep.subr.mxu0 %v930
  %2185 = vmatpush1.msra.mxu0 %v929
  %2186 = vmatprep.subr.mxu0 %v934
  %2187 = vmatpush1.msra.mxu0 %v933
  %2188 = vmatprep.subr.mxu0 %v938
  %2189 = vmatpush1.msra.mxu0 %v937
  %2190 = vmatprep.subr.mxu0 %v942
  %2191 = vmatpush1.msra.mxu0 %v941
  %2192 = vmatprep.subr.mxu0 %v946
  %2193 = vmatpush1.msra.mxu0 %v945
  %2194 = vmatprep.subr.mxu0 %v950
  %2195 = vmatpush1.msra.mxu0 %v949
  %2196 = vmatprep.subr.mxu0 %v954
  %2197 = vmatpush1.msra.mxu0 %v953
  %2198 = vmatprep.subr.mxu0 %v958
  %2199 = vmatpush1.msra.mxu0 %v957
  %2200 = vmatprep.subr.mxu0 %v962
  %2201 = vmatpush1.msra.mxu0 %v961
  %2202 = vmatprep.subr.mxu0 %v966
  %2203 = vmatpush1.msra.mxu0 %v965
  %2204 = vmatprep.subr.mxu0 0.0
  %2205 = vmatpush1.msra.mxu0 0.0
  %2206 = vmatprep.subr.mxu0 0.0
  %2207 = vmatpush1.msra.mxu0 0.0
  %2208 = vmatprep.subr.mxu0 0.0
  %2209 = vmatpush1.msra.mxu0 0.0
  %2210 = vmatprep.subr.mxu0 0.0
  %2211 = vmatpush1.msra.mxu0 0.0
  %2212 = vmatprep.subr.mxu0 0.0
  %2213 = vmatpush1.msra.mxu0 0.0
  %2214 = vmatprep.subr.mxu0 0.0
  %2215 = vmatpush1.msra.mxu0 0.0
  %2216 = vmatprep.subr.mxu0 0.0
  %2217 = vmatpush1.msra.mxu0 0.0
  %2218 = vmatprep.subr.mxu0 0.0
  %2219 = vmatpush1.msra.mxu0 0.0
  %2220 = vmatprep.subr.mxu0 0.0
  %2221 = vmatpush1.msra.mxu0 0.0
  %2222 = vmatprep.subr.mxu0 0.0
  %2223 = vmatpush1.msra.mxu0 0.0
  %2224 = vmatprep.subr.mxu0 0.0
  %2225 = vmatpush1.msra.mxu0 0.0
  %2226 = vmatprep.subr.mxu0 0.0
  %2227 = vmatpush1.msra.mxu0 0.0
  %2228 = vmatprep.subr.mxu0 0.0
  %2229 = vmatpush1.msra.mxu0 0.0
  %2230 = vmatprep.subr.mxu0 0.0
  %2231 = vmatpush1.msra.mxu0 0.0
  %2232 = vmatprep.subr.mxu0 0.0
  %2233 = vmatpush1.msra.mxu0 0.0
  %2234 = vmatprep.subr.mxu0 0.0
  %2235 = vmatpush1.msra.mxu0 0.0
  %2236 = vmatprep.mubr.f32.mxu0 0.0
  %2237 = vmatmul.mubr.f32.gmra.mrb[0].mxu0 %v2099
  %v2238 = vpop.f32.mrb[0].mxu0
  %v2239 = vadd.f32 0.0, %v2238
  %v2240 = vpop.f32.mrb[0].mxu0
  %v2241 = vadd.f32 0.0, %v2240
  %2242 = vdwg.mxu0
  %v2247 = vrot.slane %v2168, 4
  %v2248 = vrot.slane %v2170, 4
  %v2249 = vrot.slane %v2239, 4
  %v2250 = vrot.slane %v2241, 4
  %v2255 = vadd.f32 %v2094, %v2247
  %v2256 = vadd.f32 %v2095, %v2248
  %v2257 = vadd.f32 %v2096, %v2249
  %v2258 = vadd.f32 %v2097, %v2250
  %v2259 = vxor.u32 %v2255, 2147483648
  %v2260 = vmul.f32 %v2259, 1.442695
  %v2261 = vpow.pop %v2260
  %v2262 = vadd.f32 %v2261, 1.0
  %v2263 = vrcp.pop %v2262
  %v2264 = vmul.f32 1.0, %v2263
  %v2265 = vxor.u32 %v2256, 2147483648
  %v2266 = vmul.f32 %v2265, 1.442695
  %v2267 = vpow.pop %v2266
  %v2268 = vadd.f32 %v2267, 1.0
  %v2269 = vrcp.pop %v2268
  %v2270 = vmul.f32 1.0, %v2269
  %v2271 = vtanh.pop %v2257
  %v2272 = vxor.u32 %v2258, 2147483648
  %v2273 = vmul.f32 %v2272, 1.442695
  %v2274 = vpow.pop %v2273
  %v2275 = vadd.f32 %v2274, 1.0
  %v2276 = vrcp.pop %v2275
  %v2277 = vmul.f32 1.0, %v2276
  %v2279 = vrot.slane %v2089, 6
  %v2281 = vmul.f32 %v2270, %v2279
  %v2282 = vmul.f32 %v2264, %v2271
  %v2283 = vadd.f32 %v2281, %v2282
  %v2284 = vtanh.pop %v2283
  %v2285 = vmul.f32 %v2277, %v2284
  %s2286 = scalar_lea.vmem %s8, 12
  %2287 = vst [vmem:[%s2286 - $0x4] sm:$0x30] %v2285
  %v2288 = vld [vmem:[#allocation2 + $0x20] sm:$0xc0]
  %v2289 = vld [vmem:[#allocation2 + $0x28] sm:$0xc0]
  %v2290 = vld [vmem:[#allocation2 + $0x30] sm:$0xc0]
  %v2291 = vld [vmem:[#allocation2 + $0x38] sm:$0xc0]
  %v2293 = vrot.slane %v2285, 4
  %2295 = vmatprep.subr.mxu0 %v904
  %2296 = vmatpush1.msra.mxu0 %v903
  %2297 = vmatprep.subr.mxu0 %v908
  %2298 = vmatpush1.msra.mxu0 %v907
  %2299 = vmatprep.subr.mxu0 %v912
  %2300 = vmatpush1.msra.mxu0 %v911
  %2301 = vmatprep.subr.mxu0 %v916
  %2302 = vmatpush1.msra.mxu0 %v915
  %2303 = vmatprep.subr.mxu0 %v920
  %2304 = vmatpush1.msra.mxu0 %v919
  %2305 = vmatprep.subr.mxu0 %v924
  %2306 = vmatpush1.msra.mxu0 %v923
  %2307 = vmatprep.subr.mxu0 %v928
  %2308 = vmatpush1.msra.mxu0 %v927
  %2309 = vmatprep.subr.mxu0 %v932
  %2310 = vmatpush1.msra.mxu0 %v931
  %2311 = vmatprep.subr.mxu0 %v936
  %2312 = vmatpush1.msra.mxu0 %v935
  %2313 = vmatprep.subr.mxu0 %v940
  %2314 = vmatpush1.msra.mxu0 %v939
  %2315 = vmatprep.subr.mxu0 %v944
  %2316 = vmatpush1.msra.mxu0 %v943
  %2317 = vmatprep.subr.mxu0 %v948
  %2318 = vmatpush1.msra.mxu0 %v947
  %2319 = vmatprep.subr.mxu0 %v952
  %2320 = vmatpush1.msra.mxu0 %v951
  %2321 = vmatprep.subr.mxu0 %v956
  %2322 = vmatpush1.msra.mxu0 %v955
  %2323 = vmatprep.subr.mxu0 %v960
  %2324 = vmatpush1.msra.mxu0 %v959
  %2325 = vmatprep.subr.mxu0 %v964
  %2326 = vmatpush1.msra.mxu0 %v963
  %2327 = vmatprep.subr.mxu0 0.0
  %2328 = vmatpush1.msra.mxu0 0.0
  %2329 = vmatprep.subr.mxu0 0.0
  %2330 = vmatpush1.msra.mxu0 0.0
  %2331 = vmatprep.subr.mxu0 0.0
  %2332 = vmatpush1.msra.mxu0 0.0
  %2333 = vmatprep.subr.mxu0 0.0
  %2334 = vmatpush1.msra.mxu0 0.0
  %2335 = vmatprep.subr.mxu0 0.0
  %2336 = vmatpush1.msra.mxu0 0.0
  %2337 = vmatprep.subr.mxu0 0.0
  %2338 = vmatpush1.msra.mxu0 0.0
  %2339 = vmatprep.subr.mxu0 0.0
  %2340 = vmatpush1.msra.mxu0 0.0
  %2341 = vmatprep.subr.mxu0 0.0
  %2342 = vmatpush1.msra.mxu0 0.0
  %2343 = vmatprep.subr.mxu0 0.0
  %2344 = vmatpush1.msra.mxu0 0.0
  %2345 = vmatprep.subr.mxu0 0.0
  %2346 = vmatpush1.msra.mxu0 0.0
  %2347 = vmatprep.subr.mxu0 0.0
  %2348 = vmatpush1.msra.mxu0 0.0
  %2349 = vmatprep.subr.mxu0 0.0
  %2350 = vmatpush1.msra.mxu0 0.0
  %2351 = vmatprep.subr.mxu0 0.0
  %2352 = vmatpush1.msra.mxu0 0.0
  %2353 = vmatprep.subr.mxu0 0.0
  %2354 = vmatpush1.msra.mxu0 0.0
  %2355 = vmatprep.subr.mxu0 0.0
  %2356 = vmatpush1.msra.mxu0 0.0
  %2357 = vmatprep.subr.mxu0 0.0
  %2358 = vmatpush1.msra.mxu0 0.0
  %2359 = vmatprep.mubr.f32.mxu0 0.0
  %2360 = vmatmul.mubr.f32.gmra.mrb[0].mxu0 %v2293
  %v2361 = vpop.f32.mrb[0].mxu0
  %v2362 = vadd.f32 0.0, %v2361
  %v2363 = vpop.f32.mrb[0].mxu0
  %v2364 = vadd.f32 0.0, %v2363
  %2365 = vdwg.mxu0
  %2366 = vmatprep.subr.mxu0 %v906
  %2367 = vmatpush1.msra.mxu0 %v905
  %2368 = vmatprep.subr.mxu0 %v910
  %2369 = vmatpush1.msra.mxu0 %v909
  %2370 = vmatprep.subr.mxu0 %v914
  %2371 = vmatpush1.msra.mxu0 %v913
  %2372 = vmatprep.subr.mxu0 %v918
  %2373 = vmatpush1.msra.mxu0 %v917
  %2374 = vmatprep.subr.mxu0 %v922
  %2375 = vmatpush1.msra.mxu0 %v921
  %2376 = vmatprep.subr.mxu0 %v926
  %2377 = vmatpush1.msra.mxu0 %v925
  %2378 = vmatprep.subr.mxu0 %v930
  %2379 = vmatpush1.msra.mxu0 %v929
  %2380 = vmatprep.subr.mxu0 %v934
  %2381 = vmatpush1.msra.mxu0 %v933
  %2382 = vmatprep.subr.mxu0 %v938
  %2383 = vmatpush1.msra.mxu0 %v937
  %2384 = vmatprep.subr.mxu0 %v942
  %2385 = vmatpush1.msra.mxu0 %v941
  %2386 = vmatprep.subr.mxu0 %v946
  %2387 = vmatpush1.msra.mxu0 %v945
  %2388 = vmatprep.subr.mxu0 %v950
  %2389 = vmatpush1.msra.mxu0 %v949
  %2390 = vmatprep.subr.mxu0 %v954
  %2391 = vmatpush1.msra.mxu0 %v953
  %2392 = vmatprep.subr.mxu0 %v958
  %2393 = vmatpush1.msra.mxu0 %v957
  %2394 = vmatprep.subr.mxu0 %v962
  %2395 = vmatpush1.msra.mxu0 %v961
  %2396 = vmatprep.subr.mxu0 %v966
  %2397 = vmatpush1.msra.mxu0 %v965
  %2398 = vmatprep.subr.mxu0 0.0
  %2399 = vmatpush1.msra.mxu0 0.0
  %2400 = vmatprep.subr.mxu0 0.0
  %2401 = vmatpush1.msra.mxu0 0.0
  %2402 = vmatprep.subr.mxu0 0.0
  %2403 = vmatpush1.msra.mxu0 0.0
  %2404 = vmatprep.subr.mxu0 0.0
  %2405 = vmatpush1.msra.mxu0 0.0
  %2406 = vmatprep.subr.mxu0 0.0
  %2407 = vmatpush1.msra.mxu0 0.0
  %2408 = vmatprep.subr.mxu0 0.0
  %2409 = vmatpush1.msra.mxu0 0.0
  %2410 = vmatprep.subr.mxu0 0.0
  %2411 = vmatpush1.msra.mxu0 0.0
  %2412 = vmatprep.subr.mxu0 0.0
  %2413 = vmatpush1.msra.mxu0 0.0
  %2414 = vmatprep.subr.mxu0 0.0
  %2415 = vmatpush1.msra.mxu0 0.0
  %2416 = vmatprep.subr.mxu0 0.0
  %2417 = vmatpush1.msra.mxu0 0.0
  %2418 = vmatprep.subr.mxu0 0.0
  %2419 = vmatpush1.msra.mxu0 0.0
  %2420 = vmatprep.subr.mxu0 0.0
  %2421 = vmatpush1.msra.mxu0 0.0
  %2422 = vmatprep.subr.mxu0 0.0
  %2423 = vmatpush1.msra.mxu0 0.0
  %2424 = vmatprep.subr.mxu0 0.0
  %2425 = vmatpush1.msra.mxu0 0.0
  %2426 = vmatprep.subr.mxu0 0.0
  %2427 = vmatpush1.msra.mxu0 0.0
  %2428 = vmatprep.subr.mxu0 0.0
  %2429 = vmatpush1.msra.mxu0 0.0
  %2430 = vmatprep.mubr.f32.mxu0 0.0
  %2431 = vmatmul.mubr.f32.gmra.mrb[0].mxu0 %v2293
  %v2432 = vpop.f32.mrb[0].mxu0
  %v2433 = vadd.f32 0.0, %v2432
  %v2434 = vpop.f32.mrb[0].mxu0
  %v2435 = vadd.f32 0.0, %v2434
  %2436 = vdwg.mxu0
  %v2441 = vrot.slane %v2362, 2
  %v2442 = vrot.slane %v2364, 2
  %v2443 = vrot.slane %v2433, 2
  %v2444 = vrot.slane %v2435, 2
  %v2449 = vadd.f32 %v2288, %v2441
  %v2450 = vadd.f32 %v2289, %v2442
  %v2451 = vadd.f32 %v2290, %v2443
  %v2452 = vadd.f32 %v2291, %v2444
  %v2453 = vxor.u32 %v2449, 2147483648
  %v2454 = vmul.f32 %v2453, 1.442695
  %v2455 = vpow.pop %v2454
  %v2456 = vadd.f32 %v2455, 1.0
  %v2457 = vrcp.pop %v2456
  %v2458 = vmul.f32 1.0, %v2457
  %v2459 = vxor.u32 %v2450, 2147483648
  %v2460 = vmul.f32 %v2459, 1.442695
  %v2461 = vpow.pop %v2460
  %v2462 = vadd.f32 %v2461, 1.0
  %v2463 = vrcp.pop %v2462
  %v2464 = vmul.f32 1.0, %v2463
  %v2465 = vtanh.pop %v2451
  %v2466 = vxor.u32 %v2452, 2147483648
  %v2467 = vmul.f32 %v2466, 1.442695
  %v2468 = vpow.pop %v2467
  %v2469 = vadd.f32 %v2468, 1.0
  %v2470 = vrcp.pop %v2469
  %v2471 = vmul.f32 1.0, %v2470
  %v2473 = vrot.slane %v2283, 6
  %v2475 = vmul.f32 %v2464, %v2473
  %v2476 = vmul.f32 %v2458, %v2465
  %v2477 = vadd.f32 %v2475, %v2476
  %v2478 = vtanh.pop %v2477
  %v2479 = vmul.f32 %v2471, %v2478
  %s2480 = scalar_lea.vmem %s8, 14
  %2481 = vst [vmem:[%s2480 - $0x6] sm:$0xc0] %v2479
  %v2482 = vld [vmem:[#allocation2 + $0x40] sm:$0x3]
  %v2483 = vld [vmem:[#allocation2 + $0x48] sm:$0x3]
  %v2484 = vld [vmem:[#allocation2 + $0x50] sm:$0x3]
  %v2485 = vld [vmem:[#allocation2 + $0x58] sm:$0x3]
  %v2487 = vrot.slane %v2479, 6
  %2489 = vmatprep.subr.mxu0 %v904
  %2490 = vmatpush1.msra.mxu0 %v903
  %2491 = vmatprep.subr.mxu0 %v908
  %2492 = vmatpush1.msra.mxu0 %v907
  %2493 = vmatprep.subr.mxu0 %v912
  %2494 = vmatpush1.msra.mxu0 %v911
  %2495 = vmatprep.subr.mxu0 %v916
  %2496 = vmatpush1.msra.mxu0 %v915
  %2497 = vmatprep.subr.mxu0 %v920
  %2498 = vmatpush1.msra.mxu0 %v919
  %2499 = vmatprep.subr.mxu0 %v924
  %2500 = vmatpush1.msra.mxu0 %v923
  %2501 = vmatprep.subr.mxu0 %v928
  %2502 = vmatpush1.msra.mxu0 %v927
  %2503 = vmatprep.subr.mxu0 %v932
  %2504 = vmatpush1.msra.mxu0 %v931
  %2505 = vmatprep.subr.mxu0 %v936
  %2506 = vmatpush1.msra.mxu0 %v935
  %2507 = vmatprep.subr.mxu0 %v940
  %2508 = vmatpush1.msra.mxu0 %v939
  %2509 = vmatprep.subr.mxu0 %v944
  %2510 = vmatpush1.msra.mxu0 %v943
  %2511 = vmatprep.subr.mxu0 %v948
  %2512 = vmatpush1.msra.mxu0 %v947
  %2513 = vmatprep.subr.mxu0 %v952
  %2514 = vmatpush1.msra.mxu0 %v951
  %2515 = vmatprep.subr.mxu0 %v956
  %2516 = vmatpush1.msra.mxu0 %v955
  %2517 = vmatprep.subr.mxu0 %v960
  %2518 = vmatpush1.msra.mxu0 %v959
  %2519 = vmatprep.subr.mxu0 %v964
  %2520 = vmatpush1.msra.mxu0 %v963
  %2521 = vmatprep.subr.mxu0 0.0
  %2522 = vmatpush1.msra.mxu0 0.0
  %2523 = vmatprep.subr.mxu0 0.0
  %2524 = vmatpush1.msra.mxu0 0.0
  %2525 = vmatprep.subr.mxu0 0.0
  %2526 = vmatpush1.msra.mxu0 0.0
  %2527 = vmatprep.subr.mxu0 0.0
  %2528 = vmatpush1.msra.mxu0 0.0
  %2529 = vmatprep.subr.mxu0 0.0
  %2530 = vmatpush1.msra.mxu0 0.0
  %2531 = vmatprep.subr.mxu0 0.0
  %2532 = vmatpush1.msra.mxu0 0.0
  %2533 = vmatprep.subr.mxu0 0.0
  %2534 = vmatpush1.msra.mxu0 0.0
  %2535 = vmatprep.subr.mxu0 0.0
  %2536 = vmatpush1.msra.mxu0 0.0
  %2537 = vmatprep.subr.mxu0 0.0
  %2538 = vmatpush1.msra.mxu0 0.0
  %2539 = vmatprep.subr.mxu0 0.0
  %2540 = vmatpush1.msra.mxu0 0.0
  %2541 = vmatprep.subr.mxu0 0.0
  %2542 = vmatpush1.msra.mxu0 0.0
  %2543 = vmatprep.subr.mxu0 0.0
  %2544 = vmatpush1.msra.mxu0 0.0
  %2545 = vmatprep.subr.mxu0 0.0
  %2546 = vmatpush1.msra.mxu0 0.0
  %2547 = vmatprep.subr.mxu0 0.0
  %2548 = vmatpush1.msra.mxu0 0.0
  %2549 = vmatprep.subr.mxu0 0.0
  %2550 = vmatpush1.msra.mxu0 0.0
  %2551 = vmatprep.subr.mxu0 0.0
  %2552 = vmatpush1.msra.mxu0 0.0
  %2553 = vmatprep.mubr.f32.mxu0 0.0
  %2554 = vmatmul.mubr.f32.gmra.mrb[0].mxu0 %v2487
  %v2555 = vpop.f32.mrb[0].mxu0
  %v2556 = vadd.f32 0.0, %v2555
  %v2557 = vpop.f32.mrb[0].mxu0
  %v2558 = vadd.f32 0.0, %v2557
  %2559 = vdwg.mxu0
  %2560 = vmatprep.subr.mxu0 %v906
  %2561 = vmatpush1.msra.mxu0 %v905
  %2562 = vmatprep.subr.mxu0 %v910
  %2563 = vmatpush1.msra.mxu0 %v909
  %2564 = vmatprep.subr.mxu0 %v914
  %2565 = vmatpush1.msra.mxu0 %v913
  %2566 = vmatprep.subr.mxu0 %v918
  %2567 = vmatpush1.msra.mxu0 %v917
  %2568 = vmatprep.subr.mxu0 %v922
  %2569 = vmatpush1.msra.mxu0 %v921
  %2570 = vmatprep.subr.mxu0 %v926
  %2571 = vmatpush1.msra.mxu0 %v925
  %2572 = vmatprep.subr.mxu0 %v930
  %2573 = vmatpush1.msra.mxu0 %v929
  %2574 = vmatprep.subr.mxu0 %v934
  %2575 = vmatpush1.msra.mxu0 %v933
  %2576 = vmatprep.subr.mxu0 %v938
  %2577 = vmatpush1.msra.mxu0 %v937
  %2578 = vmatprep.subr.mxu0 %v942
  %2579 = vmatpush1.msra.mxu0 %v941
  %2580 = vmatprep.subr.mxu0 %v946
  %2581 = vmatpush1.msra.mxu0 %v945
  %2582 = vmatprep.subr.mxu0 %v950
  %2583 = vmatpush1.msra.mxu0 %v949
  %2584 = vmatprep.subr.mxu0 %v954
  %2585 = vmatpush1.msra.mxu0 %v953
  %2586 = vmatprep.subr.mxu0 %v958
  %2587 = vmatpush1.msra.mxu0 %v957
  %2588 = vmatprep.subr.mxu0 %v962
  %2589 = vmatpush1.msra.mxu0 %v961
  %2590 = vmatprep.subr.mxu0 %v966
  %2591 = vmatpush1.msra.mxu0 %v965
  %2592 = vmatprep.subr.mxu0 0.0
  %2593 = vmatpush1.msra.mxu0 0.0
  %2594 = vmatprep.subr.mxu0 0.0
  %2595 = vmatpush1.msra.mxu0 0.0
  %2596 = vmatprep.subr.mxu0 0.0
  %2597 = vmatpush1.msra.mxu0 0.0
  %2598 = vmatprep.subr.mxu0 0.0
  %2599 = vmatpush1.msra.mxu0 0.0
  %2600 = vmatprep.subr.mxu0 0.0
  %2601 = vmatpush1.msra.mxu0 0.0
  %2602 = vmatprep.subr.mxu0 0.0
  %2603 = vmatpush1.msra.mxu0 0.0
  %2604 = vmatprep.subr.mxu0 0.0
  %2605 = vmatpush1.msra.mxu0 0.0
  %2606 = vmatprep.subr.mxu0 0.0
  %2607 = vmatpush1.msra.mxu0 0.0
  %2608 = vmatprep.subr.mxu0 0.0
  %2609 = vmatpush1.msra.mxu0 0.0
  %2610 = vmatprep.subr.mxu0 0.0
  %2611 = vmatpush1.msra.mxu0 0.0
  %2612 = vmatprep.subr.mxu0 0.0
  %2613 = vmatpush1.msra.mxu0 0.0
  %2614 = vmatprep.subr.mxu0 0.0
  %2615 = vmatpush1.msra.mxu0 0.0
  %2616 = vmatprep.subr.mxu0 0.0
  %2617 = vmatpush1.msra.mxu0 0.0
  %2618 = vmatprep.subr.mxu0 0.0
  %2619 = vmatpush1.msra.mxu0 0.0
  %2620 = vmatprep.subr.mxu0 0.0
  %2621 = vmatpush1.msra.mxu0 0.0
  %2622 = vmatprep.subr.mxu0 0.0
  %2623 = vmatpush1.msra.mxu0 0.0
  %2624 = vmatprep.mubr.f32.mxu0 0.0
  %2625 = vmatmul.mubr.f32.gmra.mrb[0].mxu0 %v2487
  %v2626 = vpop.f32.mrb[0].mxu0
  %v2627 = vadd.f32 0.0, %v2626
  %v2628 = vpop.f32.mrb[0].mxu0
  %v2629 = vadd.f32 0.0, %v2628
  %2630 = vdwg.mxu0
  %v2631 = vadd.f32 %v2482, %v2556
  %v2632 = vadd.f32 %v2483, %v2558
  %v2633 = vadd.f32 %v2484, %v2627
  %v2634 = vadd.f32 %v2485, %v2629
  %v2635 = vxor.u32 %v2631, 2147483648
  %v2636 = vmul.f32 %v2635, 1.442695
  %v2637 = vpow.pop %v2636
  %v2638 = vadd.f32 %v2637, 1.0
  %v2639 = vrcp.pop %v2638
  %v2640 = vmul.f32 1.0, %v2639
  %v2641 = vxor.u32 %v2632, 2147483648
  %v2642 = vmul.f32 %v2641, 1.442695
  %v2643 = vpow.pop %v2642
  %v2644 = vadd.f32 %v2643, 1.0
  %v2645 = vrcp.pop %v2644
  %v2646 = vmul.f32 1.0, %v2645
  %v2647 = vtanh.pop %v2633
  %v2648 = vxor.u32 %v2634, 2147483648
  %v2649 = vmul.f32 %v2648, 1.442695
  %v2650 = vpow.pop %v2649
  %v2651 = vadd.f32 %v2650, 1.0
  %v2652 = vrcp.pop %v2651
  %v2653 = vmul.f32 1.0, %v2652
  %v2655 = vrot.slane %v2477, 6
  %v2657 = vmul.f32 %v2646, %v2655
  %v2658 = vmul.f32 %v2640, %v2647
  %v2659 = vadd.f32 %v2657, %v2658
  %v2660 = vtanh.pop %v2659
  %v2661 = vmul.f32 %v2653, %v2660
  %s2662 = scalar_lea.vmem %s8, 16
  %2663 = vst [vmem:[%s2662] sm:$0x3] %v2661
  %v2664 = vld [vmem:[#allocation2 + $0x40] sm:$0xc]
  %v2665 = vld [vmem:[#allocation2 + $0x48] sm:$0xc]
  %v2666 = vld [vmem:[#allocation2 + $0x50] sm:$0xc]
  %v2667 = vld [vmem:[#allocation2 + $0x58] sm:$0xc]
  %2668 = vmatprep.subr.mxu0 %v904
  %2669 = vmatpush1.msra.mxu0 %v903
  %2670 = vmatprep.subr.mxu0 %v908
  %2671 = vmatpush1.msra.mxu0 %v907
  %2672 = vmatprep.subr.mxu0 %v912
  %2673 = vmatpush1.msra.mxu0 %v911
  %2674 = vmatprep.subr.mxu0 %v916
  %2675 = vmatpush1.msra.mxu0 %v915
  %2676 = vmatprep.subr.mxu0 %v920
  %2677 = vmatpush1.msra.mxu0 %v919
  %2678 = vmatprep.subr.mxu0 %v924
  %2679 = vmatpush1.msra.mxu0 %v923
  %2680 = vmatprep.subr.mxu0 %v928
  %2681 = vmatpush1.msra.mxu0 %v927
  %2682 = vmatprep.subr.mxu0 %v932
  %2683 = vmatpush1.msra.mxu0 %v931
  %2684 = vmatprep.subr.mxu0 %v936
  %2685 = vmatpush1.msra.mxu0 %v935
  %2686 = vmatprep.subr.mxu0 %v940
  %2687 = vmatpush1.msra.mxu0 %v939
  %2688 = vmatprep.subr.mxu0 %v944
  %2689 = vmatpush1.msra.mxu0 %v943
  %2690 = vmatprep.subr.mxu0 %v948
  %2691 = vmatpush1.msra.mxu0 %v947
  %2692 = vmatprep.subr.mxu0 %v952
  %2693 = vmatpush1.msra.mxu0 %v951
  %2694 = vmatprep.subr.mxu0 %v956
  %2695 = vmatpush1.msra.mxu0 %v955
  %2696 = vmatprep.subr.mxu0 %v960
  %2697 = vmatpush1.msra.mxu0 %v959
  %2698 = vmatprep.subr.mxu0 %v964
  %2699 = vmatpush1.msra.mxu0 %v963
  %2700 = vmatprep.subr.mxu0 0.0
  %2701 = vmatpush1.msra.mxu0 0.0
  %2702 = vmatprep.subr.mxu0 0.0
  %2703 = vmatpush1.msra.mxu0 0.0
  %2704 = vmatprep.subr.mxu0 0.0
  %2705 = vmatpush1.msra.mxu0 0.0
  %2706 = vmatprep.subr.mxu0 0.0
  %2707 = vmatpush1.msra.mxu0 0.0
  %2708 = vmatprep.subr.mxu0 0.0
  %2709 = vmatpush1.msra.mxu0 0.0
  %2710 = vmatprep.subr.mxu0 0.0
  %2711 = vmatpush1.msra.mxu0 0.0
  %2712 = vmatprep.subr.mxu0 0.0
  %2713 = vmatpush1.msra.mxu0 0.0
  %2714 = vmatprep.subr.mxu0 0.0
  %2715 = vmatpush1.msra.mxu0 0.0
  %2716 = vmatprep.subr.mxu0 0.0
  %2717 = vmatpush1.msra.mxu0 0.0
  %2718 = vmatprep.subr.mxu0 0.0
  %2719 = vmatpush1.msra.mxu0 0.0
  %2720 = vmatprep.subr.mxu0 0.0
  %2721 = vmatpush1.msra.mxu0 0.0
  %2722 = vmatprep.subr.mxu0 0.0
  %2723 = vmatpush1.msra.mxu0 0.0
  %2724 = vmatprep.subr.mxu0 0.0
  %2725 = vmatpush1.msra.mxu0 0.0
  %2726 = vmatprep.subr.mxu0 0.0
  %2727 = vmatpush1.msra.mxu0 0.0
  %2728 = vmatprep.subr.mxu0 0.0
  %2729 = vmatpush1.msra.mxu0 0.0
  %2730 = vmatprep.subr.mxu0 0.0
  %2731 = vmatpush1.msra.mxu0 0.0
  %2732 = vmatprep.mubr.f32.mxu0 0.0
  %2733 = vmatmul.mubr.f32.gmra.mrb[0].mxu0 %v2661
  %v2734 = vpop.f32.mrb[0].mxu0
  %v2735 = vadd.f32 0.0, %v2734
  %v2736 = vpop.f32.mrb[0].mxu0
  %v2737 = vadd.f32 0.0, %v2736
  %2738 = vdwg.mxu0
  %2739 = vmatprep.subr.mxu0 %v906
  %2740 = vmatpush1.msra.mxu0 %v905
  %2741 = vmatprep.subr.mxu0 %v910
  %2742 = vmatpush1.msra.mxu0 %v909
  %2743 = vmatprep.subr.mxu0 %v914
  %2744 = vmatpush1.msra.mxu0 %v913
  %2745 = vmatprep.subr.mxu0 %v918
  %2746 = vmatpush1.msra.mxu0 %v917
  %2747 = vmatprep.subr.mxu0 %v922
  %2748 = vmatpush1.msra.mxu0 %v921
  %2749 = vmatprep.subr.mxu0 %v926
  %2750 = vmatpush1.msra.mxu0 %v925
  %2751 = vmatprep.subr.mxu0 %v930
  %2752 = vmatpush1.msra.mxu0 %v929
  %2753 = vmatprep.subr.mxu0 %v934
  %2754 = vmatpush1.msra.mxu0 %v933
  %2755 = vmatprep.subr.mxu0 %v938
  %2756 = vmatpush1.msra.mxu0 %v937
  %2757 = vmatprep.subr.mxu0 %v942
  %2758 = vmatpush1.msra.mxu0 %v941
  %2759 = vmatprep.subr.mxu0 %v946
  %2760 = vmatpush1.msra.mxu0 %v945
  %2761 = vmatprep.subr.mxu0 %v950
  %2762 = vmatpush1.msra.mxu0 %v949
  %2763 = vmatprep.subr.mxu0 %v954
  %2764 = vmatpush1.msra.mxu0 %v953
  %2765 = vmatprep.subr.mxu0 %v958
  %2766 = vmatpush1.msra.mxu0 %v957
  %2767 = vmatprep.subr.mxu0 %v962
  %2768 = vmatpush1.msra.mxu0 %v961
  %2769 = vmatprep.subr.mxu0 %v966
  %2770 = vmatpush1.msra.mxu0 %v965
  %2771 = vmatprep.subr.mxu0 0.0
  %2772 = vmatpush1.msra.mxu0 0.0
  %2773 = vmatprep.subr.mxu0 0.0
  %2774 = vmatpush1.msra.mxu0 0.0
  %2775 = vmatprep.subr.mxu0 0.0
  %2776 = vmatpush1.msra.mxu0 0.0
  %2777 = vmatprep.subr.mxu0 0.0
  %2778 = vmatpush1.msra.mxu0 0.0
  %2779 = vmatprep.subr.mxu0 0.0
  %2780 = vmatpush1.msra.mxu0 0.0
  %2781 = vmatprep.subr.mxu0 0.0
  %2782 = vmatpush1.msra.mxu0 0.0
  %2783 = vmatprep.subr.mxu0 0.0
  %2784 = vmatpush1.msra.mxu0 0.0
  %2785 = vmatprep.subr.mxu0 0.0
  %2786 = vmatpush1.msra.mxu0 0.0
  %2787 = vmatprep.subr.mxu0 0.0
  %2788 = vmatpush1.msra.mxu0 0.0
  %2789 = vmatprep.subr.mxu0 0.0
  %2790 = vmatpush1.msra.mxu0 0.0
  %2791 = vmatprep.subr.mxu0 0.0
  %2792 = vmatpush1.msra.mxu0 0.0
  %2793 = vmatprep.subr.mxu0 0.0
  %2794 = vmatpush1.msra.mxu0 0.0
  %2795 = vmatprep.subr.mxu0 0.0
  %2796 = vmatpush1.msra.mxu0 0.0
  %2797 = vmatprep.subr.mxu0 0.0
  %2798 = vmatpush1.msra.mxu0 0.0
  %2799 = vmatprep.subr.mxu0 0.0
  %2800 = vmatpush1.msra.mxu0 0.0
  %2801 = vmatprep.subr.mxu0 0.0
  %2802 = vmatpush1.msra.mxu0 0.0
  %2803 = vmatprep.mubr.f32.mxu0 0.0
  %2804 = vmatmul.mubr.f32.gmra.mrb[0].mxu0 %v2661
  %v2805 = vpop.f32.mrb[0].mxu0
  %v2806 = vadd.f32 0.0, %v2805
  %v2807 = vpop.f32.mrb[0].mxu0
  %v2808 = vadd.f32 0.0, %v2807
  %2809 = vdwg.mxu0
  %v2814 = vrot.slane %v2735, 6
  %v2815 = vrot.slane %v2737, 6
  %v2816 = vrot.slane %v2806, 6
  %v2817 = vrot.slane %v2808, 6
  %v2822 = vadd.f32 %v2664, %v2814
  %v2823 = vadd.f32 %v2665, %v2815
  %v2824 = vadd.f32 %v2666, %v2816
  %v2825 = vadd.f32 %v2667, %v2817
  %v2826 = vxor.u32 %v2822, 2147483648
  %v2827 = vmul.f32 %v2826, 1.442695
  %v2828 = vpow.pop %v2827
  %v2829 = vadd.f32 %v2828, 1.0
  %v2830 = vrcp.pop %v2829
  %v2831 = vmul.f32 1.0, %v2830
  %v2832 = vxor.u32 %v2823, 2147483648
  %v2833 = vmul.f32 %v2832, 1.442695
  %v2834 = vpow.pop %v2833
  %v2835 = vadd.f32 %v2834, 1.0
  %v2836 = vrcp.pop %v2835
  %v2837 = vmul.f32 1.0, %v2836
  %v2838 = vtanh.pop %v2824
  %v2839 = vxor.u32 %v2825, 2147483648
  %v2840 = vmul.f32 %v2839, 1.442695
  %v2841 = vpow.pop %v2840
  %v2842 = vadd.f32 %v2841, 1.0
  %v2843 = vrcp.pop %v2842
  %v2844 = vmul.f32 1.0, %v2843
  %v2846 = vrot.slane %v2659, 6
  %v2848 = vmul.f32 %v2837, %v2846
  %v2849 = vmul.f32 %v2831, %v2838
  %v2850 = vadd.f32 %v2848, %v2849
  %v2851 = vtanh.pop %v2850
  %v2852 = vmul.f32 %v2844, %v2851
  %s2853 = scalar_lea.vmem %s8, 18
  %2854 = vst [vmem:[%s2853 - $0x2] sm:$0xc] %v2852
  %v2855 = vld [vmem:[#allocation2 + $0x40] sm:$0x30]
  %v2856 = vld [vmem:[#allocation2 + $0x48] sm:$0x30]
  %v2857 = vld [vmem:[#allocation2 + $0x50] sm:$0x30]
  %v2858 = vld [vmem:[#allocation2 + $0x58] sm:$0x30]
  %v2860 = vrot.slane %v2852, 2
  %2862 = vmatprep.subr.mxu0 %v904
  %2863 = vmatpush1.msra.mxu0 %v903
  %2864 = vmatprep.subr.mxu0 %v908
  %2865 = vmatpush1.msra.mxu0 %v907
  %2866 = vmatprep.subr.mxu0 %v912
  %2867 = vmatpush1.msra.mxu0 %v911
  %2868 = vmatprep.subr.mxu0 %v916
  %2869 = vmatpush1.msra.mxu0 %v915
  %2870 = vmatprep.subr.mxu0 %v920
  %2871 = vmatpush1.msra.mxu0 %v919
  %2872 = vmatprep.subr.mxu0 %v924
  %2873 = vmatpush1.msra.mxu0 %v923
  %2874 = vmatprep.subr.mxu0 %v928
  %2875 = vmatpush1.msra.mxu0 %v927
  %2876 = vmatprep.subr.mxu0 %v932
  %2877 = vmatpush1.msra.mxu0 %v931
  %2878 = vmatprep.subr.mxu0 %v936
  %2879 = vmatpush1.msra.mxu0 %v935
  %2880 = vmatprep.subr.mxu0 %v940
  %2881 = vmatpush1.msra.mxu0 %v939
  %2882 = vmatprep.subr.mxu0 %v944
  %2883 = vmatpush1.msra.mxu0 %v943
  %2884 = vmatprep.subr.mxu0 %v948
  %2885 = vmatpush1.msra.mxu0 %v947
  %2886 = vmatprep.subr.mxu0 %v952
  %2887 = vmatpush1.msra.mxu0 %v951
  %2888 = vmatprep.subr.mxu0 %v956
  %2889 = vmatpush1.msra.mxu0 %v955
  %2890 = vmatprep.subr.mxu0 %v960
  %2891 = vmatpush1.msra.mxu0 %v959
  %2892 = vmatprep.subr.mxu0 %v964
  %2893 = vmatpush1.msra.mxu0 %v963
  %2894 = vmatprep.subr.mxu0 0.0
  %2895 = vmatpush1.msra.mxu0 0.0
  %2896 = vmatprep.subr.mxu0 0.0
  %2897 = vmatpush1.msra.mxu0 0.0
  %2898 = vmatprep.subr.mxu0 0.0
  %2899 = vmatpush1.msra.mxu0 0.0
  %2900 = vmatprep.subr.mxu0 0.0
  %2901 = vmatpush1.msra.mxu0 0.0
  %2902 = vmatprep.subr.mxu0 0.0
  %2903 = vmatpush1.msra.mxu0 0.0
  %2904 = vmatprep.subr.mxu0 0.0
  %2905 = vmatpush1.msra.mxu0 0.0
  %2906 = vmatprep.subr.mxu0 0.0
  %2907 = vmatpush1.msra.mxu0 0.0
  %2908 = vmatprep.subr.mxu0 0.0
  %2909 = vmatpush1.msra.mxu0 0.0
  %2910 = vmatprep.subr.mxu0 0.0
  %2911 = vmatpush1.msra.mxu0 0.0
  %2912 = vmatprep.subr.mxu0 0.0
  %2913 = vmatpush1.msra.mxu0 0.0
  %2914 = vmatprep.subr.mxu0 0.0
  %2915 = vmatpush1.msra.mxu0 0.0
  %2916 = vmatprep.subr.mxu0 0.0
  %2917 = vmatpush1.msra.mxu0 0.0
  %2918 = vmatprep.subr.mxu0 0.0
  %2919 = vmatpush1.msra.mxu0 0.0
  %2920 = vmatprep.subr.mxu0 0.0
  %2921 = vmatpush1.msra.mxu0 0.0
  %2922 = vmatprep.subr.mxu0 0.0
  %2923 = vmatpush1.msra.mxu0 0.0
  %2924 = vmatprep.subr.mxu0 0.0
  %2925 = vmatpush1.msra.mxu0 0.0
  %2926 = vmatprep.mubr.f32.mxu0 0.0
  %2927 = vmatmul.mubr.f32.gmra.mrb[0].mxu0 %v2860
  %v2928 = vpop.f32.mrb[0].mxu0
  %v2929 = vadd.f32 0.0, %v2928
  %v2930 = vpop.f32.mrb[0].mxu0
  %v2931 = vadd.f32 0.0, %v2930
  %2932 = vdwg.mxu0
  %2933 = vmatprep.subr.mxu0 %v906
  %2934 = vmatpush1.msra.mxu0 %v905
  %2935 = vmatprep.subr.mxu0 %v910
  %2936 = vmatpush1.msra.mxu0 %v909
  %2937 = vmatprep.subr.mxu0 %v914
  %2938 = vmatpush1.msra.mxu0 %v913
  %2939 = vmatprep.subr.mxu0 %v918
  %2940 = vmatpush1.msra.mxu0 %v917
  %2941 = vmatprep.subr.mxu0 %v922
  %2942 = vmatpush1.msra.mxu0 %v921
  %2943 = vmatprep.subr.mxu0 %v926
  %2944 = vmatpush1.msra.mxu0 %v925
  %2945 = vmatprep.subr.mxu0 %v930
  %2946 = vmatpush1.msra.mxu0 %v929
  %2947 = vmatprep.subr.mxu0 %v934
  %2948 = vmatpush1.msra.mxu0 %v933
  %2949 = vmatprep.subr.mxu0 %v938
  %2950 = vmatpush1.msra.mxu0 %v937
  %2951 = vmatprep.subr.mxu0 %v942
  %2952 = vmatpush1.msra.mxu0 %v941
  %2953 = vmatprep.subr.mxu0 %v946
  %2954 = vmatpush1.msra.mxu0 %v945
  %2955 = vmatprep.subr.mxu0 %v950
  %2956 = vmatpush1.msra.mxu0 %v949
  %2957 = vmatprep.subr.mxu0 %v954
  %2958 = vmatpush1.msra.mxu0 %v953
  %2959 = vmatprep.subr.mxu0 %v958
  %2960 = vmatpush1.msra.mxu0 %v957
  %2961 = vmatprep.subr.mxu0 %v962
  %2962 = vmatpush1.msra.mxu0 %v961
  %2963 = vmatprep.subr.mxu0 %v966
  %2964 = vmatpush1.msra.mxu0 %v965
  %2965 = vmatprep.subr.mxu0 0.0
  %2966 = vmatpush1.msra.mxu0 0.0
  %2967 = vmatprep.subr.mxu0 0.0
  %2968 = vmatpush1.msra.mxu0 0.0
  %2969 = vmatprep.subr.mxu0 0.0
  %2970 = vmatpush1.msra.mxu0 0.0
  %2971 = vmatprep.subr.mxu0 0.0
  %2972 = vmatpush1.msra.mxu0 0.0
  %2973 = vmatprep.subr.mxu0 0.0
  %2974 = vmatpush1.msra.mxu0 0.0
  %2975 = vmatprep.subr.mxu0 0.0
  %2976 = vmatpush1.msra.mxu0 0.0
  %2977 = vmatprep.subr.mxu0 0.0
  %2978 = vmatpush1.msra.mxu0 0.0
  %2979 = vmatprep.subr.mxu0 0.0
  %2980 = vmatpush1.msra.mxu0 0.0
  %2981 = vmatprep.subr.mxu0 0.0
  %2982 = vmatpush1.msra.mxu0 0.0
  %2983 = vmatprep.subr.mxu0 0.0
  %2984 = vmatpush1.msra.mxu0 0.0
  %2985 = vmatprep.subr.mxu0 0.0
  %2986 = vmatpush1.msra.mxu0 0.0
  %2987 = vmatprep.subr.mxu0 0.0
  %2988 = vmatpush1.msra.mxu0 0.0
  %2989 = vmatprep.subr.mxu0 0.0
  %2990 = vmatpush1.msra.mxu0 0.0
  %2991 = vmatprep.subr.mxu0 0.0
  %2992 = vmatpush1.msra.mxu0 0.0
  %2993 = vmatprep.subr.mxu0 0.0
  %2994 = vmatpush1.msra.mxu0 0.0
  %2995 = vmatprep.subr.mxu0 0.0
  %2996 = vmatpush1.msra.mxu0 0.0
  %2997 = vmatprep.mubr.f32.mxu0 0.0
  %2998 = vmatmul.mubr.f32.gmra.mrb[0].mxu0 %v2860
  %v2999 = vpop.f32.mrb[0].mxu0
  %v3000 = vadd.f32 0.0, %v2999
  %v3001 = vpop.f32.mrb[0].mxu0
  %v3002 = vadd.f32 0.0, %v3001
  %3003 = vdwg.mxu0
  %v3008 = vrot.slane %v2929, 4
  %v3009 = vrot.slane %v2931, 4
  %v3010 = vrot.slane %v3000, 4
  %v3011 = vrot.slane %v3002, 4
  %v3016 = vadd.f32 %v2855, %v3008
  %v3017 = vadd.f32 %v2856, %v3009
  %v3018 = vadd.f32 %v2857, %v3010
  %v3019 = vadd.f32 %v2858, %v3011
  %v3020 = vxor.u32 %v3016, 2147483648
  %v3021 = vmul.f32 %v3020, 1.442695
  %v3022 = vpow.pop %v3021
  %v3023 = vadd.f32 %v3022, 1.0
  %v3024 = vrcp.pop %v3023
  %v3025 = vmul.f32 1.0, %v3024
  %v3026 = vxor.u32 %v3017, 2147483648
  %v3027 = vmul.f32 %v3026, 1.442695
  %v3028 = vpow.pop %v3027
  %v3029 = vadd.f32 %v3028, 1.0
  %v3030 = vrcp.pop %v3029
  %v3031 = vmul.f32 1.0, %v3030
  %v3032 = vtanh.pop %v3018
  %v3033 = vxor.u32 %v3019, 2147483648
  %v3034 = vmul.f32 %v3033, 1.442695
  %v3035 = vpow.pop %v3034
  %v3036 = vadd.f32 %v3035, 1.0
  %v3037 = vrcp.pop %v3036
  %v3038 = vmul.f32 1.0, %v3037
  %v3040 = vrot.slane %v2850, 6
  %v3042 = vmul.f32 %v3031, %v3040
  %v3043 = vmul.f32 %v3025, %v3032
  %v3044 = vadd.f32 %v3042, %v3043
  %v3045 = vtanh.pop %v3044
  %v3046 = vmul.f32 %v3038, %v3045
  %s3047 = scalar_lea.vmem %s8, 20
  %3048 = vst [vmem:[%s3047 - $0x4] sm:$0x30] %v3046
  %v3049 = vld [vmem:[#allocation2 + $0x40] sm:$0xc0]
  %v3050 = vld [vmem:[#allocation2 + $0x48] sm:$0xc0]
  %v3051 = vld [vmem:[#allocation2 + $0x50] sm:$0xc0]
  %v3052 = vld [vmem:[#allocation2 + $0x58] sm:$0xc0]
  %v3054 = vrot.slane %v3046, 4
  %3056 = vmatprep.subr.mxu0 %v904
  %3057 = vmatpush1.msra.mxu0 %v903
  %3058 = vmatprep.subr.mxu0 %v908
  %3059 = vmatpush1.msra.mxu0 %v907
  %3060 = vmatprep.subr.mxu0 %v912
  %3061 = vmatpush1.msra.mxu0 %v911
  %3062 = vmatprep.subr.mxu0 %v916
  %3063 = vmatpush1.msra.mxu0 %v915
  %3064 = vmatprep.subr.mxu0 %v920
  %3065 = vmatpush1.msra.mxu0 %v919
  %3066 = vmatprep.subr.mxu0 %v924
  %3067 = vmatpush1.msra.mxu0 %v923
  %3068 = vmatprep.subr.mxu0 %v928
  %3069 = vmatpush1.msra.mxu0 %v927
  %3070 = vmatprep.subr.mxu0 %v932
  %3071 = vmatpush1.msra.mxu0 %v931
  %3072 = vmatprep.subr.mxu0 %v936
  %3073 = vmatpush1.msra.mxu0 %v935
  %3074 = vmatprep.subr.mxu0 %v940
  %3075 = vmatpush1.msra.mxu0 %v939
  %3076 = vmatprep.subr.mxu0 %v944
  %3077 = vmatpush1.msra.mxu0 %v943
  %3078 = vmatprep.subr.mxu0 %v948
  %3079 = vmatpush1.msra.mxu0 %v947
  %3080 = vmatprep.subr.mxu0 %v952
  %3081 = vmatpush1.msra.mxu0 %v951
  %3082 = vmatprep.subr.mxu0 %v956
  %3083 = vmatpush1.msra.mxu0 %v955
  %3084 = vmatprep.subr.mxu0 %v960
  %3085 = vmatpush1.msra.mxu0 %v959
  %3086 = vmatprep.subr.mxu0 %v964
  %3087 = vmatpush1.msra.mxu0 %v963
  %3088 = vmatprep.subr.mxu0 0.0
  %3089 = vmatpush1.msra.mxu0 0.0
  %3090 = vmatprep.subr.mxu0 0.0
  %3091 = vmatpush1.msra.mxu0 0.0
  %3092 = vmatprep.subr.mxu0 0.0
  %3093 = vmatpush1.msra.mxu0 0.0
  %3094 = vmatprep.subr.mxu0 0.0
  %3095 = vmatpush1.msra.mxu0 0.0
  %3096 = vmatprep.subr.mxu0 0.0
  %3097 = vmatpush1.msra.mxu0 0.0
  %3098 = vmatprep.subr.mxu0 0.0
  %3099 = vmatpush1.msra.mxu0 0.0
  %3100 = vmatprep.subr.mxu0 0.0
  %3101 = vmatpush1.msra.mxu0 0.0
  %3102 = vmatprep.subr.mxu0 0.0
  %3103 = vmatpush1.msra.mxu0 0.0
  %3104 = vmatprep.subr.mxu0 0.0
  %3105 = vmatpush1.msra.mxu0 0.0
  %3106 = vmatprep.subr.mxu0 0.0
  %3107 = vmatpush1.msra.mxu0 0.0
  %3108 = vmatprep.subr.mxu0 0.0
  %3109 = vmatpush1.msra.mxu0 0.0
  %3110 = vmatprep.subr.mxu0 0.0
  %3111 = vmatpush1.msra.mxu0 0.0
  %3112 = vmatprep.subr.mxu0 0.0
  %3113 = vmatpush1.msra.mxu0 0.0
  %3114 = vmatprep.subr.mxu0 0.0
  %3115 = vmatpush1.msra.mxu0 0.0
  %3116 = vmatprep.subr.mxu0 0.0
  %3117 = vmatpush1.msra.mxu0 0.0
  %3118 = vmatprep.subr.mxu0 0.0
  %3119 = vmatpush1.msra.mxu0 0.0
  %3120 = vmatprep.mubr.f32.mxu0 0.0
  %3121 = vmatmul.mubr.f32.gmra.mrb[0].mxu0 %v3054
  %v3122 = vpop.f32.mrb[0].mxu0
  %v3123 = vadd.f32 0.0, %v3122
  %v3124 = vpop.f32.mrb[0].mxu0
  %v3125 = vadd.f32 0.0, %v3124
  %3126 = vdwg.mxu0
  %3127 = vmatprep.subr.mxu0 %v906
  %3128 = vmatpush1.msra.mxu0 %v905
  %3129 = vmatprep.subr.mxu0 %v910
  %3130 = vmatpush1.msra.mxu0 %v909
  %3131 = vmatprep.subr.mxu0 %v914
  %3132 = vmatpush1.msra.mxu0 %v913
  %3133 = vmatprep.subr.mxu0 %v918
  %3134 = vmatpush1.msra.mxu0 %v917
  %3135 = vmatprep.subr.mxu0 %v922
  %3136 = vmatpush1.msra.mxu0 %v921
  %3137 = vmatprep.subr.mxu0 %v926
  %3138 = vmatpush1.msra.mxu0 %v925
  %3139 = vmatprep.subr.mxu0 %v930
  %3140 = vmatpush1.msra.mxu0 %v929
  %3141 = vmatprep.subr.mxu0 %v934
  %3142 = vmatpush1.msra.mxu0 %v933
  %3143 = vmatprep.subr.mxu0 %v938
  %3144 = vmatpush1.msra.mxu0 %v937
  %3145 = vmatprep.subr.mxu0 %v942
  %3146 = vmatpush1.msra.mxu0 %v941
  %3147 = vmatprep.subr.mxu0 %v946
  %3148 = vmatpush1.msra.mxu0 %v945
  %3149 = vmatprep.subr.mxu0 %v950
  %3150 = vmatpush1.msra.mxu0 %v949
  %3151 = vmatprep.subr.mxu0 %v954
  %3152 = vmatpush1.msra.mxu0 %v953
  %3153 = vmatprep.subr.mxu0 %v958
  %3154 = vmatpush1.msra.mxu0 %v957
  %3155 = vmatprep.subr.mxu0 %v962
  %3156 = vmatpush1.msra.mxu0 %v961
  %3157 = vmatprep.subr.mxu0 %v966
  %3158 = vmatpush1.msra.mxu0 %v965
  %3159 = vmatprep.subr.mxu0 0.0
  %3160 = vmatpush1.msra.mxu0 0.0
  %3161 = vmatprep.subr.mxu0 0.0
  %3162 = vmatpush1.msra.mxu0 0.0
  %3163 = vmatprep.subr.mxu0 0.0
  %3164 = vmatpush1.msra.mxu0 0.0
  %3165 = vmatprep.subr.mxu0 0.0
  %3166 = vmatpush1.msra.mxu0 0.0
  %3167 = vmatprep.subr.mxu0 0.0
  %3168 = vmatpush1.msra.mxu0 0.0
  %3169 = vmatprep.subr.mxu0 0.0
  %3170 = vmatpush1.msra.mxu0 0.0
  %3171 = vmatprep.subr.mxu0 0.0
  %3172 = vmatpush1.msra.mxu0 0.0
  %3173 = vmatprep.subr.mxu0 0.0
  %3174 = vmatpush1.msra.mxu0 0.0
  %3175 = vmatprep.subr.mxu0 0.0
  %3176 = vmatpush1.msra.mxu0 0.0
  %3177 = vmatprep.subr.mxu0 0.0
  %3178 = vmatpush1.msra.mxu0 0.0
  %3179 = vmatprep.subr.mxu0 0.0
  %3180 = vmatpush1.msra.mxu0 0.0
  %3181 = vmatprep.subr.mxu0 0.0
  %3182 = vmatpush1.msra.mxu0 0.0
  %3183 = vmatprep.subr.mxu0 0.0
  %3184 = vmatpush1.msra.mxu0 0.0
  %3185 = vmatprep.subr.mxu0 0.0
  %3186 = vmatpush1.msra.mxu0 0.0
  %3187 = vmatprep.subr.mxu0 0.0
  %3188 = vmatpush1.msra.mxu0 0.0
  %3189 = vmatprep.subr.mxu0 0.0
  %3190 = vmatpush1.msra.mxu0 0.0
  %3191 = vmatprep.mubr.f32.mxu0 0.0
  %3192 = vmatmul.mubr.f32.gmra.mrb[0].mxu0 %v3054
  %v3193 = vpop.f32.mrb[0].mxu0
  %v3194 = vadd.f32 0.0, %v3193
  %v3195 = vpop.f32.mrb[0].mxu0
  %v3196 = vadd.f32 0.0, %v3195
  %3197 = vdwg.mxu0
  %v3202 = vrot.slane %v3123, 2
  %v3203 = vrot.slane %v3125, 2
  %v3204 = vrot.slane %v3194, 2
  %v3205 = vrot.slane %v3196, 2
  %v3210 = vadd.f32 %v3049, %v3202
  %v3211 = vadd.f32 %v3050, %v3203
  %v3212 = vadd.f32 %v3051, %v3204
  %v3213 = vadd.f32 %v3052, %v3205
  %v3214 = vxor.u32 %v3210, 2147483648
  %v3215 = vmul.f32 %v3214, 1.442695
  %v3216 = vpow.pop %v3215
  %v3217 = vadd.f32 %v3216, 1.0
  %v3218 = vrcp.pop %v3217
  %v3219 = vmul.f32 1.0, %v3218
  %v3220 = vxor.u32 %v3211, 2147483648
  %v3221 = vmul.f32 %v3220, 1.442695
  %v3222 = vpow.pop %v3221
  %v3223 = vadd.f32 %v3222, 1.0
  %v3224 = vrcp.pop %v3223
  %v3225 = vmul.f32 1.0, %v3224
  %v3226 = vtanh.pop %v3212
  %v3227 = vxor.u32 %v3213, 2147483648
  %v3228 = vmul.f32 %v3227, 1.442695
  %v3229 = vpow.pop %v3228
  %v3230 = vadd.f32 %v3229, 1.0
  %v3231 = vrcp.pop %v3230
  %v3232 = vmul.f32 1.0, %v3231
  %v3234 = vrot.slane %v3044, 6
  %v3236 = vmul.f32 %v3225, %v3234
  %v3237 = vmul.f32 %v3219, %v3226
  %v3238 = vadd.f32 %v3236, %v3237
  %v3239 = vtanh.pop %v3238
  %v3240 = vmul.f32 %v3232, %v3239
  %s3241 = scalar_lea.vmem %s8, 22
  %3242 = vst [vmem:[%s3241 - $0x6] sm:$0xc0] %v3240
  %v3243 = vld [vmem:[#allocation2 + $0x60] sm:$0x3]
  %v3244 = vld [vmem:[#allocation2 + $0x68] sm:$0x3]
  %v3245 = vld [vmem:[#allocation2 + $0x70] sm:$0x3]
  %v3246 = vld [vmem:[#allocation2 + $0x78] sm:$0x3]
  %v3248 = vrot.slane %v3240, 6
  %3250 = vmatprep.subr.mxu0 %v904
  %3251 = vmatpush1.msra.mxu0 %v903
  %3252 = vmatprep.subr.mxu0 %v908
  %3253 = vmatpush1.msra.mxu0 %v907
  %3254 = vmatprep.subr.mxu0 %v912
  %3255 = vmatpush1.msra.mxu0 %v911
  %3256 = vmatprep.subr.mxu0 %v916
  %3257 = vmatpush1.msra.mxu0 %v915
  %3258 = vmatprep.subr.mxu0 %v920
  %3259 = vmatpush1.msra.mxu0 %v919
  %3260 = vmatprep.subr.mxu0 %v924
  %3261 = vmatpush1.msra.mxu0 %v923
  %3262 = vmatprep.subr.mxu0 %v928
  %3263 = vmatpush1.msra.mxu0 %v927
  %3264 = vmatprep.subr.mxu0 %v932
  %3265 = vmatpush1.msra.mxu0 %v931
  %3266 = vmatprep.subr.mxu0 %v936
  %3267 = vmatpush1.msra.mxu0 %v935
  %3268 = vmatprep.subr.mxu0 %v940
  %3269 = vmatpush1.msra.mxu0 %v939
  %3270 = vmatprep.subr.mxu0 %v944
  %3271 = vmatpush1.msra.mxu0 %v943
  %3272 = vmatprep.subr.mxu0 %v948
  %3273 = vmatpush1.msra.mxu0 %v947
  %3274 = vmatprep.subr.mxu0 %v952
  %3275 = vmatpush1.msra.mxu0 %v951
  %3276 = vmatprep.subr.mxu0 %v956
  %3277 = vmatpush1.msra.mxu0 %v955
  %3278 = vmatprep.subr.mxu0 %v960
  %3279 = vmatpush1.msra.mxu0 %v959
  %3280 = vmatprep.subr.mxu0 %v964
  %3281 = vmatpush1.msra.mxu0 %v963
  %3282 = vmatprep.subr.mxu0 0.0
  %3283 = vmatpush1.msra.mxu0 0.0
  %3284 = vmatprep.subr.mxu0 0.0
  %3285 = vmatpush1.msra.mxu0 0.0
  %3286 = vmatprep.subr.mxu0 0.0
  %3287 = vmatpush1.msra.mxu0 0.0
  %3288 = vmatprep.subr.mxu0 0.0
  %3289 = vmatpush1.msra.mxu0 0.0
  %3290 = vmatprep.subr.mxu0 0.0
  %3291 = vmatpush1.msra.mxu0 0.0
  %3292 = vmatprep.subr.mxu0 0.0
  %3293 = vmatpush1.msra.mxu0 0.0
  %3294 = vmatprep.subr.mxu0 0.0
  %3295 = vmatpush1.msra.mxu0 0.0
  %3296 = vmatprep.subr.mxu0 0.0
  %3297 = vmatpush1.msra.mxu0 0.0
  %3298 = vmatprep.subr.mxu0 0.0
  %3299 = vmatpush1.msra.mxu0 0.0
  %3300 = vmatprep.subr.mxu0 0.0
  %3301 = vmatpush1.msra.mxu0 0.0
  %3302 = vmatprep.subr.mxu0 0.0
  %3303 = vmatpush1.msra.mxu0 0.0
  %3304 = vmatprep.subr.mxu0 0.0
  %3305 = vmatpush1.msra.mxu0 0.0
  %3306 = vmatprep.subr.mxu0 0.0
  %3307 = vmatpush1.msra.mxu0 0.0
  %3308 = vmatprep.subr.mxu0 0.0
  %3309 = vmatpush1.msra.mxu0 0.0
  %3310 = vmatprep.subr.mxu0 0.0
  %3311 = vmatpush1.msra.mxu0 0.0
  %3312 = vmatprep.subr.mxu0 0.0
  %3313 = vmatpush1.msra.mxu0 0.0
  %3314 = vmatprep.mubr.f32.mxu0 0.0
  %3315 = vmatmul.mubr.f32.gmra.mrb[0].mxu0 %v3248
  %v3316 = vpop.f32.mrb[0].mxu0
  %v3317 = vadd.f32 0.0, %v3316
  %v3318 = vpop.f32.mrb[0].mxu0
  %v3319 = vadd.f32 0.0, %v3318
  %3320 = vdwg.mxu0
  %3321 = vmatprep.subr.mxu0 %v906
  %3322 = vmatpush1.msra.mxu0 %v905
  %3323 = vmatprep.subr.mxu0 %v910
  %3324 = vmatpush1.msra.mxu0 %v909
  %3325 = vmatprep.subr.mxu0 %v914
  %3326 = vmatpush1.msra.mxu0 %v913
  %3327 = vmatprep.subr.mxu0 %v918
  %3328 = vmatpush1.msra.mxu0 %v917
  %3329 = vmatprep.subr.mxu0 %v922
  %3330 = vmatpush1.msra.mxu0 %v921
  %3331 = vmatprep.subr.mxu0 %v926
  %3332 = vmatpush1.msra.mxu0 %v925
  %3333 = vmatprep.subr.mxu0 %v930
  %3334 = vmatpush1.msra.mxu0 %v929
  %3335 = vmatprep.subr.mxu0 %v934
  %3336 = vmatpush1.msra.mxu0 %v933
  %3337 = vmatprep.subr.mxu0 %v938
  %3338 = vmatpush1.msra.mxu0 %v937
  %3339 = vmatprep.subr.mxu0 %v942
  %3340 = vmatpush1.msra.mxu0 %v941
  %3341 = vmatprep.subr.mxu0 %v946
  %3342 = vmatpush1.msra.mxu0 %v945
  %3343 = vmatprep.subr.mxu0 %v950
  %3344 = vmatpush1.msra.mxu0 %v949
  %3345 = vmatprep.subr.mxu0 %v954
  %3346 = vmatpush1.msra.mxu0 %v953
  %3347 = vmatprep.subr.mxu0 %v958
  %3348 = vmatpush1.msra.mxu0 %v957
  %3349 = vmatprep.subr.mxu0 %v962
  %3350 = vmatpush1.msra.mxu0 %v961
  %3351 = vmatprep.subr.mxu0 %v966
  %3352 = vmatpush1.msra.mxu0 %v965
  %3353 = vmatprep.subr.mxu0 0.0
  %3354 = vmatpush1.msra.mxu0 0.0
  %3355 = vmatprep.subr.mxu0 0.0
  %3356 = vmatpush1.msra.mxu0 0.0
  %3357 = vmatprep.subr.mxu0 0.0
  %3358 = vmatpush1.msra.mxu0 0.0
  %3359 = vmatprep.subr.mxu0 0.0
  %3360 = vmatpush1.msra.mxu0 0.0
  %3361 = vmatprep.subr.mxu0 0.0
  %3362 = vmatpush1.msra.mxu0 0.0
  %3363 = vmatprep.subr.mxu0 0.0
  %3364 = vmatpush1.msra.mxu0 0.0
  %3365 = vmatprep.subr.mxu0 0.0
  %3366 = vmatpush1.msra.mxu0 0.0
  %3367 = vmatprep.subr.mxu0 0.0
  %3368 = vmatpush1.msra.mxu0 0.0
  %3369 = vmatprep.subr.mxu0 0.0
  %3370 = vmatpush1.msra.mxu0 0.0
  %3371 = vmatprep.subr.mxu0 0.0
  %3372 = vmatpush1.msra.mxu0 0.0
  %3373 = vmatprep.subr.mxu0 0.0
  %3374 = vmatpush1.msra.mxu0 0.0
  %3375 = vmatprep.subr.mxu0 0.0
  %3376 = vmatpush1.msra.mxu0 0.0
  %3377 = vmatprep.subr.mxu0 0.0
  %3378 = vmatpush1.msra.mxu0 0.0
  %3379 = vmatprep.subr.mxu0 0.0
  %3380 = vmatpush1.msra.mxu0 0.0
  %3381 = vmatprep.subr.mxu0 0.0
  %3382 = vmatpush1.msra.mxu0 0.0
  %3383 = vmatprep.subr.mxu0 0.0
  %3384 = vmatpush1.msra.mxu0 0.0
  %3385 = vmatprep.mubr.f32.mxu0 0.0
  %3386 = vmatmul.mubr.f32.gmra.mrb[0].mxu0 %v3248
  %v3387 = vpop.f32.mrb[0].mxu0
  %v3388 = vadd.f32 0.0, %v3387
  %v3389 = vpop.f32.mrb[0].mxu0
  %v3390 = vadd.f32 0.0, %v3389
  %3391 = vdwg.mxu0
  %v3392 = vadd.f32 %v3243, %v3317
  %v3393 = vadd.f32 %v3244, %v3319
  %v3394 = vadd.f32 %v3245, %v3388
  %v3395 = vadd.f32 %v3246, %v3390
  %v3396 = vxor.u32 %v3392, 2147483648
  %v3397 = vmul.f32 %v3396, 1.442695
  %v3398 = vpow.pop %v3397
  %v3399 = vadd.f32 %v3398, 1.0
  %v3400 = vrcp.pop %v3399
  %v3401 = vmul.f32 1.0, %v3400
  %v3402 = vxor.u32 %v3393, 2147483648
  %v3403 = vmul.f32 %v3402, 1.442695
  %v3404 = vpow.pop %v3403
  %v3405 = vadd.f32 %v3404, 1.0
  %v3406 = vrcp.pop %v3405
  %v3407 = vmul.f32 1.0, %v3406
  %v3408 = vtanh.pop %v3394
  %v3409 = vxor.u32 %v3395, 2147483648
  %v3410 = vmul.f32 %v3409, 1.442695
  %v3411 = vpow.pop %v3410
  %v3412 = vadd.f32 %v3411, 1.0
  %v3413 = vrcp.pop %v3412
  %v3414 = vmul.f32 1.0, %v3413
  %v3416 = vrot.slane %v3238, 6
  %v3418 = vmul.f32 %v3407, %v3416
  %v3419 = vmul.f32 %v3401, %v3408
  %v3420 = vadd.f32 %v3418, %v3419
  %v3421 = vtanh.pop %v3420
  %v3422 = vmul.f32 %v3414, %v3421
  %s3423 = scalar_lea.vmem %s8, 24
  %3424 = vst [vmem:[%s3423] sm:$0x3] %v3422
  %v3425 = vld [vmem:[#allocation2 + $0x60] sm:$0xc]
  %v3426 = vld [vmem:[#allocation2 + $0x68] sm:$0xc]
  %v3427 = vld [vmem:[#allocation2 + $0x70] sm:$0xc]
  %v3428 = vld [vmem:[#allocation2 + $0x78] sm:$0xc]
  %3429 = vmatprep.subr.mxu0 %v904
  %3430 = vmatpush1.msra.mxu0 %v903
  %3431 = vmatprep.subr.mxu0 %v908
  %3432 = vmatpush1.msra.mxu0 %v907
  %3433 = vmatprep.subr.mxu0 %v912
  %3434 = vmatpush1.msra.mxu0 %v911
  %3435 = vmatprep.subr.mxu0 %v916
  %3436 = vmatpush1.msra.mxu0 %v915
  %3437 = vmatprep.subr.mxu0 %v920
  %3438 = vmatpush1.msra.mxu0 %v919
  %3439 = vmatprep.subr.mxu0 %v924
  %3440 = vmatpush1.msra.mxu0 %v923
  %3441 = vmatprep.subr.mxu0 %v928
  %3442 = vmatpush1.msra.mxu0 %v927
  %3443 = vmatprep.subr.mxu0 %v932
  %3444 = vmatpush1.msra.mxu0 %v931
  %3445 = vmatprep.subr.mxu0 %v936
  %3446 = vmatpush1.msra.mxu0 %v935
  %3447 = vmatprep.subr.mxu0 %v940
  %3448 = vmatpush1.msra.mxu0 %v939
  %3449 = vmatprep.subr.mxu0 %v944
  %3450 = vmatpush1.msra.mxu0 %v943
  %3451 = vmatprep.subr.mxu0 %v948
  %3452 = vmatpush1.msra.mxu0 %v947
  %3453 = vmatprep.subr.mxu0 %v952
  %3454 = vmatpush1.msra.mxu0 %v951
  %3455 = vmatprep.subr.mxu0 %v956
  %3456 = vmatpush1.msra.mxu0 %v955
  %3457 = vmatprep.subr.mxu0 %v960
  %3458 = vmatpush1.msra.mxu0 %v959
  %3459 = vmatprep.subr.mxu0 %v964
  %3460 = vmatpush1.msra.mxu0 %v963
  %3461 = vmatprep.subr.mxu0 0.0
  %3462 = vmatpush1.msra.mxu0 0.0
  %3463 = vmatprep.subr.mxu0 0.0
  %3464 = vmatpush1.msra.mxu0 0.0
  %3465 = vmatprep.subr.mxu0 0.0
  %3466 = vmatpush1.msra.mxu0 0.0
  %3467 = vmatprep.subr.mxu0 0.0
  %3468 = vmatpush1.msra.mxu0 0.0
  %3469 = vmatprep.subr.mxu0 0.0
  %3470 = vmatpush1.msra.mxu0 0.0
  %3471 = vmatprep.subr.mxu0 0.0
  %3472 = vmatpush1.msra.mxu0 0.0
  %3473 = vmatprep.subr.mxu0 0.0
  %3474 = vmatpush1.msra.mxu0 0.0
  %3475 = vmatprep.subr.mxu0 0.0
  %3476 = vmatpush1.msra.mxu0 0.0
  %3477 = vmatprep.subr.mxu0 0.0
  %3478 = vmatpush1.msra.mxu0 0.0
  %3479 = vmatprep.subr.mxu0 0.0
  %3480 = vmatpush1.msra.mxu0 0.0
  %3481 = vmatprep.subr.mxu0 0.0
  %3482 = vmatpush1.msra.mxu0 0.0
  %3483 = vmatprep.subr.mxu0 0.0
  %3484 = vmatpush1.msra.mxu0 0.0
  %3485 = vmatprep.subr.mxu0 0.0
  %3486 = vmatpush1.msra.mxu0 0.0
  %3487 = vmatprep.subr.mxu0 0.0
  %3488 = vmatpush1.msra.mxu0 0.0
  %3489 = vmatprep.subr.mxu0 0.0
  %3490 = vmatpush1.msra.mxu0 0.0
  %3491 = vmatprep.subr.mxu0 0.0
  %3492 = vmatpush1.msra.mxu0 0.0
  %3493 = vmatprep.mubr.f32.mxu0 0.0
  %3494 = vmatmul.mubr.f32.gmra.mrb[0].mxu0 %v3422
  %v3495 = vpop.f32.mrb[0].mxu0
  %v3496 = vadd.f32 0.0, %v3495
  %v3497 = vpop.f32.mrb[0].mxu0
  %v3498 = vadd.f32 0.0, %v3497
  %3499 = vdwg.mxu0
  %3500 = vmatprep.subr.mxu0 %v906
  %3501 = vmatpush1.msra.mxu0 %v905
  %3502 = vmatprep.subr.mxu0 %v910
  %3503 = vmatpush1.msra.mxu0 %v909
  %3504 = vmatprep.subr.mxu0 %v914
  %3505 = vmatpush1.msra.mxu0 %v913
  %3506 = vmatprep.subr.mxu0 %v918
  %3507 = vmatpush1.msra.mxu0 %v917
  %3508 = vmatprep.subr.mxu0 %v922
  %3509 = vmatpush1.msra.mxu0 %v921
  %3510 = vmatprep.subr.mxu0 %v926
  %3511 = vmatpush1.msra.mxu0 %v925
  %3512 = vmatprep.subr.mxu0 %v930
  %3513 = vmatpush1.msra.mxu0 %v929
  %3514 = vmatprep.subr.mxu0 %v934
  %3515 = vmatpush1.msra.mxu0 %v933
  %3516 = vmatprep.subr.mxu0 %v938
  %3517 = vmatpush1.msra.mxu0 %v937
  %3518 = vmatprep.subr.mxu0 %v942
  %3519 = vmatpush1.msra.mxu0 %v941
  %3520 = vmatprep.subr.mxu0 %v946
  %3521 = vmatpush1.msra.mxu0 %v945
  %3522 = vmatprep.subr.mxu0 %v950
  %3523 = vmatpush1.msra.mxu0 %v949
  %3524 = vmatprep.subr.mxu0 %v954
  %3525 = vmatpush1.msra.mxu0 %v953
  %3526 = vmatprep.subr.mxu0 %v958
  %3527 = vmatpush1.msra.mxu0 %v957
  %3528 = vmatprep.subr.mxu0 %v962
  %3529 = vmatpush1.msra.mxu0 %v961
  %3530 = vmatprep.subr.mxu0 %v966
  %3531 = vmatpush1.msra.mxu0 %v965
  %3532 = vmatprep.subr.mxu0 0.0
  %3533 = vmatpush1.msra.mxu0 0.0
  %3534 = vmatprep.subr.mxu0 0.0
  %3535 = vmatpush1.msra.mxu0 0.0
  %3536 = vmatprep.subr.mxu0 0.0
  %3537 = vmatpush1.msra.mxu0 0.0
  %3538 = vmatprep.subr.mxu0 0.0
  %3539 = vmatpush1.msra.mxu0 0.0
  %3540 = vmatprep.subr.mxu0 0.0
  %3541 = vmatpush1.msra.mxu0 0.0
  %3542 = vmatprep.subr.mxu0 0.0
  %3543 = vmatpush1.msra.mxu0 0.0
  %3544 = vmatprep.subr.mxu0 0.0
  %3545 = vmatpush1.msra.mxu0 0.0
  %3546 = vmatprep.subr.mxu0 0.0
  %3547 = vmatpush1.msra.mxu0 0.0
  %3548 = vmatprep.subr.mxu0 0.0
  %3549 = vmatpush1.msra.mxu0 0.0
  %3550 = vmatprep.subr.mxu0 0.0
  %3551 = vmatpush1.msra.mxu0 0.0
  %3552 = vmatprep.subr.mxu0 0.0
  %3553 = vmatpush1.msra.mxu0 0.0
  %3554 = vmatprep.subr.mxu0 0.0
  %3555 = vmatpush1.msra.mxu0 0.0
  %3556 = vmatprep.subr.mxu0 0.0
  %3557 = vmatpush1.msra.mxu0 0.0
  %3558 = vmatprep.subr.mxu0 0.0
  %3559 = vmatpush1.msra.mxu0 0.0
  %3560 = vmatprep.subr.mxu0 0.0
  %3561 = vmatpush1.msra.mxu0 0.0
  %3562 = vmatprep.subr.mxu0 0.0
  %3563 = vmatpush1.msra.mxu0 0.0
  %3564 = vmatprep.mubr.f32.mxu0 0.0
  %3565 = vmatmul.mubr.f32.gmra.mrb[0].mxu0 %v3422
  %v3566 = vpop.f32.mrb[0].mxu0
  %v3567 = vadd.f32 0.0, %v3566
  %v3568 = vpop.f32.mrb[0].mxu0
  %v3569 = vadd.f32 0.0, %v3568
  %3570 = vdwg.mxu0
  %v3575 = vrot.slane %v3496, 6
  %v3576 = vrot.slane %v3498, 6
  %v3577 = vrot.slane %v3567, 6
  %v3578 = vrot.slane %v3569, 6
  %v3583 = vadd.f32 %v3425, %v3575
  %v3584 = vadd.f32 %v3426, %v3576
  %v3585 = vadd.f32 %v3427, %v3577
  %v3586 = vadd.f32 %v3428, %v3578
  %v3587 = vxor.u32 %v3583, 2147483648
  %v3588 = vmul.f32 %v3587, 1.442695
  %v3589 = vpow.pop %v3588
  %v3590 = vadd.f32 %v3589, 1.0
  %v3591 = vrcp.pop %v3590
  %v3592 = vmul.f32 1.0, %v3591
  %v3593 = vxor.u32 %v3584, 2147483648
  %v3594 = vmul.f32 %v3593, 1.442695
  %v3595 = vpow.pop %v3594
  %v3596 = vadd.f32 %v3595, 1.0
  %v3597 = vrcp.pop %v3596
  %v3598 = vmul.f32 1.0, %v3597
  %v3599 = vtanh.pop %v3585
  %v3600 = vxor.u32 %v3586, 2147483648
  %v3601 = vmul.f32 %v3600, 1.442695
  %v3602 = vpow.pop %v3601
  %v3603 = vadd.f32 %v3602, 1.0
  %v3604 = vrcp.pop %v3603
  %v3605 = vmul.f32 1.0, %v3604
  %v3607 = vrot.slane %v3420, 6
  %v3609 = vmul.f32 %v3598, %v3607
  %v3610 = vmul.f32 %v3592, %v3599
  %v3611 = vadd.f32 %v3609, %v3610
  %v3612 = vtanh.pop %v3611
  %v3613 = vmul.f32 %v3605, %v3612
  %s3614 = scalar_lea.vmem %s8, 26
  %3615 = vst [vmem:[%s3614 - $0x2] sm:$0xc] %v3613
  %v3616 = vld [vmem:[#allocation2 + $0x60] sm:$0x30]
  %v3617 = vld [vmem:[#allocation2 + $0x68] sm:$0x30]
  %v3618 = vld [vmem:[#allocation2 + $0x70] sm:$0x30]
  %v3619 = vld [vmem:[#allocation2 + $0x78] sm:$0x30]
  %v3621 = vrot.slane %v3613, 2
  %3623 = vmatprep.subr.mxu0 %v904
  %3624 = vmatpush1.msra.mxu0 %v903
  %3625 = vmatprep.subr.mxu0 %v908
  %3626 = vmatpush1.msra.mxu0 %v907
  %3627 = vmatprep.subr.mxu0 %v912
  %3628 = vmatpush1.msra.mxu0 %v911
  %3629 = vmatprep.subr.mxu0 %v916
  %3630 = vmatpush1.msra.mxu0 %v915
  %3631 = vmatprep.subr.mxu0 %v920
  %3632 = vmatpush1.msra.mxu0 %v919
  %3633 = vmatprep.subr.mxu0 %v924
  %3634 = vmatpush1.msra.mxu0 %v923
  %3635 = vmatprep.subr.mxu0 %v928
  %3636 = vmatpush1.msra.mxu0 %v927
  %3637 = vmatprep.subr.mxu0 %v932
  %3638 = vmatpush1.msra.mxu0 %v931
  %3639 = vmatprep.subr.mxu0 %v936
  %3640 = vmatpush1.msra.mxu0 %v935
  %3641 = vmatprep.subr.mxu0 %v940
  %3642 = vmatpush1.msra.mxu0 %v939
  %3643 = vmatprep.subr.mxu0 %v944
  %3644 = vmatpush1.msra.mxu0 %v943
  %3645 = vmatprep.subr.mxu0 %v948
  %3646 = vmatpush1.msra.mxu0 %v947
  %3647 = vmatprep.subr.mxu0 %v952
  %3648 = vmatpush1.msra.mxu0 %v951
  %3649 = vmatprep.subr.mxu0 %v956
  %3650 = vmatpush1.msra.mxu0 %v955
  %3651 = vmatprep.subr.mxu0 %v960
  %3652 = vmatpush1.msra.mxu0 %v959
  %3653 = vmatprep.subr.mxu0 %v964
  %3654 = vmatpush1.msra.mxu0 %v963
  %3655 = vmatprep.subr.mxu0 0.0
  %3656 = vmatpush1.msra.mxu0 0.0
  %3657 = vmatprep.subr.mxu0 0.0
  %3658 = vmatpush1.msra.mxu0 0.0
  %3659 = vmatprep.subr.mxu0 0.0
  %3660 = vmatpush1.msra.mxu0 0.0
  %3661 = vmatprep.subr.mxu0 0.0
  %3662 = vmatpush1.msra.mxu0 0.0
  %3663 = vmatprep.subr.mxu0 0.0
  %3664 = vmatpush1.msra.mxu0 0.0
  %3665 = vmatprep.subr.mxu0 0.0
  %3666 = vmatpush1.msra.mxu0 0.0
  %3667 = vmatprep.subr.mxu0 0.0
  %3668 = vmatpush1.msra.mxu0 0.0
  %3669 = vmatprep.subr.mxu0 0.0
  %3670 = vmatpush1.msra.mxu0 0.0
  %3671 = vmatprep.subr.mxu0 0.0
  %3672 = vmatpush1.msra.mxu0 0.0
  %3673 = vmatprep.subr.mxu0 0.0
  %3674 = vmatpush1.msra.mxu0 0.0
  %3675 = vmatprep.subr.mxu0 0.0
  %3676 = vmatpush1.msra.mxu0 0.0
  %3677 = vmatprep.subr.mxu0 0.0
  %3678 = vmatpush1.msra.mxu0 0.0
  %3679 = vmatprep.subr.mxu0 0.0
  %3680 = vmatpush1.msra.mxu0 0.0
  %3681 = vmatprep.subr.mxu0 0.0
  %3682 = vmatpush1.msra.mxu0 0.0
  %3683 = vmatprep.subr.mxu0 0.0
  %3684 = vmatpush1.msra.mxu0 0.0
  %3685 = vmatprep.subr.mxu0 0.0
  %3686 = vmatpush1.msra.mxu0 0.0
  %3687 = vmatprep.mubr.f32.mxu0 0.0
  %3688 = vmatmul.mubr.f32.gmra.mrb[0].mxu0 %v3621
  %v3689 = vpop.f32.mrb[0].mxu0
  %v3690 = vadd.f32 0.0, %v3689
  %v3691 = vpop.f32.mrb[0].mxu0
  %v3692 = vadd.f32 0.0, %v3691
  %3693 = vdwg.mxu0
  %3694 = vmatprep.subr.mxu0 %v906
  %3695 = vmatpush1.msra.mxu0 %v905
  %3696 = vmatprep.subr.mxu0 %v910
  %3697 = vmatpush1.msra.mxu0 %v909
  %3698 = vmatprep.subr.mxu0 %v914
  %3699 = vmatpush1.msra.mxu0 %v913
  %3700 = vmatprep.subr.mxu0 %v918
  %3701 = vmatpush1.msra.mxu0 %v917
  %3702 = vmatprep.subr.mxu0 %v922
  %3703 = vmatpush1.msra.mxu0 %v921
  %3704 = vmatprep.subr.mxu0 %v926
  %3705 = vmatpush1.msra.mxu0 %v925
  %3706 = vmatprep.subr.mxu0 %v930
  %3707 = vmatpush1.msra.mxu0 %v929
  %3708 = vmatprep.subr.mxu0 %v934
  %3709 = vmatpush1.msra.mxu0 %v933
  %3710 = vmatprep.subr.mxu0 %v938
  %3711 = vmatpush1.msra.mxu0 %v937
  %3712 = vmatprep.subr.mxu0 %v942
  %3713 = vmatpush1.msra.mxu0 %v941
  %3714 = vmatprep.subr.mxu0 %v946
  %3715 = vmatpush1.msra.mxu0 %v945
  %3716 = vmatprep.subr.mxu0 %v950
  %3717 = vmatpush1.msra.mxu0 %v949
  %3718 = vmatprep.subr.mxu0 %v954
  %3719 = vmatpush1.msra.mxu0 %v953
  %3720 = vmatprep.subr.mxu0 %v958
  %3721 = vmatpush1.msra.mxu0 %v957
  %3722 = vmatprep.subr.mxu0 %v962
  %3723 = vmatpush1.msra.mxu0 %v961
  %3724 = vmatprep.subr.mxu0 %v966
  %3725 = vmatpush1.msra.mxu0 %v965
  %3726 = vmatprep.subr.mxu0 0.0
  %3727 = vmatpush1.msra.mxu0 0.0
  %3728 = vmatprep.subr.mxu0 0.0
  %3729 = vmatpush1.msra.mxu0 0.0
  %3730 = vmatprep.subr.mxu0 0.0
  %3731 = vmatpush1.msra.mxu0 0.0
  %3732 = vmatprep.subr.mxu0 0.0
  %3733 = vmatpush1.msra.mxu0 0.0
  %3734 = vmatprep.subr.mxu0 0.0
  %3735 = vmatpush1.msra.mxu0 0.0
  %3736 = vmatprep.subr.mxu0 0.0
  %3737 = vmatpush1.msra.mxu0 0.0
  %3738 = vmatprep.subr.mxu0 0.0
  %3739 = vmatpush1.msra.mxu0 0.0
  %3740 = vmatprep.subr.mxu0 0.0
  %3741 = vmatpush1.msra.mxu0 0.0
  %3742 = vmatprep.subr.mxu0 0.0
  %3743 = vmatpush1.msra.mxu0 0.0
  %3744 = vmatprep.subr.mxu0 0.0
  %3745 = vmatpush1.msra.mxu0 0.0
  %3746 = vmatprep.subr.mxu0 0.0
  %3747 = vmatpush1.msra.mxu0 0.0
  %3748 = vmatprep.subr.mxu0 0.0
  %3749 = vmatpush1.msra.mxu0 0.0
  %3750 = vmatprep.subr.mxu0 0.0
  %3751 = vmatpush1.msra.mxu0 0.0
  %3752 = vmatprep.subr.mxu0 0.0
  %3753 = vmatpush1.msra.mxu0 0.0
  %3754 = vmatprep.subr.mxu0 0.0
  %3755 = vmatpush1.msra.mxu0 0.0
  %3756 = vmatprep.subr.mxu0 0.0
  %3757 = vmatpush1.msra.mxu0 0.0
  %3758 = vmatprep.mubr.f32.mxu0 0.0
  %3759 = vmatmul.mubr.f32.gmra.mrb[0].mxu0 %v3621
  %v3760 = vpop.f32.mrb[0].mxu0
  %v3761 = vadd.f32 0.0, %v3760
  %v3762 = vpop.f32.mrb[0].mxu0
  %v3763 = vadd.f32 0.0, %v3762
  %3764 = vdwg.mxu0
  %v3769 = vrot.slane %v3690, 4
  %v3770 = vrot.slane %v3692, 4
  %v3771 = vrot.slane %v3761, 4
  %v3772 = vrot.slane %v3763, 4
  %v3777 = vadd.f32 %v3616, %v3769
  %v3778 = vadd.f32 %v3617, %v3770
  %v3779 = vadd.f32 %v3618, %v3771
  %v3780 = vadd.f32 %v3619, %v3772
  %v3781 = vxor.u32 %v3777, 2147483648
  %v3782 = vmul.f32 %v3781, 1.442695
  %v3783 = vpow.pop %v3782
  %v3784 = vadd.f32 %v3783, 1.0
  %v3785 = vrcp.pop %v3784
  %v3786 = vmul.f32 1.0, %v3785
  %v3787 = vxor.u32 %v3778, 2147483648
  %v3788 = vmul.f32 %v3787, 1.442695
  %v3789 = vpow.pop %v3788
  %v3790 = vadd.f32 %v3789, 1.0
  %v3791 = vrcp.pop %v3790
  %v3792 = vmul.f32 1.0, %v3791
  %v3793 = vtanh.pop %v3779
  %v3794 = vxor.u32 %v3780, 2147483648
  %v3795 = vmul.f32 %v3794, 1.442695
  %v3796 = vpow.pop %v3795
  %v3797 = vadd.f32 %v3796, 1.0
  %v3798 = vrcp.pop %v3797
  %v3799 = vmul.f32 1.0, %v3798
  %v3801 = vrot.slane %v3611, 6
  %v3803 = vmul.f32 %v3792, %v3801
  %v3804 = vmul.f32 %v3786, %v3793
  %v3805 = vadd.f32 %v3803, %v3804
  %v3806 = vtanh.pop %v3805
  %v3807 = vmul.f32 %v3799, %v3806
  %s3808 = scalar_lea.vmem %s8, 28
  %3809 = vst [vmem:[%s3808 - $0x4] sm:$0x30] %v3807
  %v3810 = vld [vmem:[#allocation2 + $0x60] sm:$0xc0]
  %v3811 = vld [vmem:[#allocation2 + $0x68] sm:$0xc0]
  %v3812 = vld [vmem:[#allocation2 + $0x70] sm:$0xc0]
  %v3813 = vld [vmem:[#allocation2 + $0x78] sm:$0xc0]
  %v3815 = vrot.slane %v3807, 4
  %3817 = vmatprep.subr.mxu0 %v904
  %3818 = vmatpush1.msra.mxu0 %v903
  %3819 = vmatprep.subr.mxu0 %v908
  %3820 = vmatpush1.msra.mxu0 %v907
  %3821 = vmatprep.subr.mxu0 %v912
  %3822 = vmatpush1.msra.mxu0 %v911
  %3823 = vmatprep.subr.mxu0 %v916
  %3824 = vmatpush1.msra.mxu0 %v915
  %3825 = vmatprep.subr.mxu0 %v920
  %3826 = vmatpush1.msra.mxu0 %v919
  %3827 = vmatprep.subr.mxu0 %v924
  %3828 = vmatpush1.msra.mxu0 %v923
  %3829 = vmatprep.subr.mxu0 %v928
  %3830 = vmatpush1.msra.mxu0 %v927
  %3831 = vmatprep.subr.mxu0 %v932
  %3832 = vmatpush1.msra.mxu0 %v931
  %3833 = vmatprep.subr.mxu0 %v936
  %3834 = vmatpush1.msra.mxu0 %v935
  %3835 = vmatprep.subr.mxu0 %v940
  %3836 = vmatpush1.msra.mxu0 %v939
  %3837 = vmatprep.subr.mxu0 %v944
  %3838 = vmatpush1.msra.mxu0 %v943
  %3839 = vmatprep.subr.mxu0 %v948
  %3840 = vmatpush1.msra.mxu0 %v947
  %3841 = vmatprep.subr.mxu0 %v952
  %3842 = vmatpush1.msra.mxu0 %v951
  %3843 = vmatprep.subr.mxu0 %v956
  %3844 = vmatpush1.msra.mxu0 %v955
  %3845 = vmatprep.subr.mxu0 %v960
  %3846 = vmatpush1.msra.mxu0 %v959
  %3847 = vmatprep.subr.mxu0 %v964
  %3848 = vmatpush1.msra.mxu0 %v963
  %3849 = vmatprep.subr.mxu0 0.0
  %3850 = vmatpush1.msra.mxu0 0.0
  %3851 = vmatprep.subr.mxu0 0.0
  %3852 = vmatpush1.msra.mxu0 0.0
  %3853 = vmatprep.subr.mxu0 0.0
  %3854 = vmatpush1.msra.mxu0 0.0
  %3855 = vmatprep.subr.mxu0 0.0
  %3856 = vmatpush1.msra.mxu0 0.0
  %3857 = vmatprep.subr.mxu0 0.0
  %3858 = vmatpush1.msra.mxu0 0.0
  %3859 = vmatprep.subr.mxu0 0.0
  %3860 = vmatpush1.msra.mxu0 0.0
  %3861 = vmatprep.subr.mxu0 0.0
  %3862 = vmatpush1.msra.mxu0 0.0
  %3863 = vmatprep.subr.mxu0 0.0
  %3864 = vmatpush1.msra.mxu0 0.0
  %3865 = vmatprep.subr.mxu0 0.0
  %3866 = vmatpush1.msra.mxu0 0.0
  %3867 = vmatprep.subr.mxu0 0.0
  %3868 = vmatpush1.msra.mxu0 0.0
  %3869 = vmatprep.subr.mxu0 0.0
  %3870 = vmatpush1.msra.mxu0 0.0
  %3871 = vmatprep.subr.mxu0 0.0
  %3872 = vmatpush1.msra.mxu0 0.0
  %3873 = vmatprep.subr.mxu0 0.0
  %3874 = vmatpush1.msra.mxu0 0.0
  %3875 = vmatprep.subr.mxu0 0.0
  %3876 = vmatpush1.msra.mxu0 0.0
  %3877 = vmatprep.subr.mxu0 0.0
  %3878 = vmatpush1.msra.mxu0 0.0
  %3879 = vmatprep.subr.mxu0 0.0
  %3880 = vmatpush1.msra.mxu0 0.0
  %3881 = vmatprep.mubr.f32.mxu0 0.0
  %3882 = vmatmul.mubr.f32.gmra.mrb[0].mxu0 %v3815
  %v3883 = vpop.f32.mrb[0].mxu0
  %v3884 = vadd.f32 0.0, %v3883
  %v3885 = vpop.f32.mrb[0].mxu0
  %v3886 = vadd.f32 0.0, %v3885
  %3887 = vdwg.mxu0
  %3888 = vmatprep.subr.mxu0 %v906
  %3889 = vmatpush1.msra.mxu0 %v905
  %3890 = vmatprep.subr.mxu0 %v910
  %3891 = vmatpush1.msra.mxu0 %v909
  %3892 = vmatprep.subr.mxu0 %v914
  %3893 = vmatpush1.msra.mxu0 %v913
  %3894 = vmatprep.subr.mxu0 %v918
  %3895 = vmatpush1.msra.mxu0 %v917
  %3896 = vmatprep.subr.mxu0 %v922
  %3897 = vmatpush1.msra.mxu0 %v921
  %3898 = vmatprep.subr.mxu0 %v926
  %3899 = vmatpush1.msra.mxu0 %v925
  %3900 = vmatprep.subr.mxu0 %v930
  %3901 = vmatpush1.msra.mxu0 %v929
  %3902 = vmatprep.subr.mxu0 %v934
  %3903 = vmatpush1.msra.mxu0 %v933
  %3904 = vmatprep.subr.mxu0 %v938
  %3905 = vmatpush1.msra.mxu0 %v937
  %3906 = vmatprep.subr.mxu0 %v942
  %3907 = vmatpush1.msra.mxu0 %v941
  %3908 = vmatprep.subr.mxu0 %v946
  %3909 = vmatpush1.msra.mxu0 %v945
  %3910 = vmatprep.subr.mxu0 %v950
  %3911 = vmatpush1.msra.mxu0 %v949
  %3912 = vmatprep.subr.mxu0 %v954
  %3913 = vmatpush1.msra.mxu0 %v953
  %3914 = vmatprep.subr.mxu0 %v958
  %3915 = vmatpush1.msra.mxu0 %v957
  %3916 = vmatprep.subr.mxu0 %v962
  %3917 = vmatpush1.msra.mxu0 %v961
  %3918 = vmatprep.subr.mxu0 %v966
  %3919 = vmatpush1.msra.mxu0 %v965
  %3920 = vmatprep.subr.mxu0 0.0
  %3921 = vmatpush1.msra.mxu0 0.0
  %3922 = vmatprep.subr.mxu0 0.0
  %3923 = vmatpush1.msra.mxu0 0.0
  %3924 = vmatprep.subr.mxu0 0.0
  %3925 = vmatpush1.msra.mxu0 0.0
  %3926 = vmatprep.subr.mxu0 0.0
  %3927 = vmatpush1.msra.mxu0 0.0
  %3928 = vmatprep.subr.mxu0 0.0
  %3929 = vmatpush1.msra.mxu0 0.0
  %3930 = vmatprep.subr.mxu0 0.0
  %3931 = vmatpush1.msra.mxu0 0.0
  %3932 = vmatprep.subr.mxu0 0.0
  %3933 = vmatpush1.msra.mxu0 0.0
  %3934 = vmatprep.subr.mxu0 0.0
  %3935 = vmatpush1.msra.mxu0 0.0
  %3936 = vmatprep.subr.mxu0 0.0
  %3937 = vmatpush1.msra.mxu0 0.0
  %3938 = vmatprep.subr.mxu0 0.0
  %3939 = vmatpush1.msra.mxu0 0.0
  %3940 = vmatprep.subr.mxu0 0.0
  %3941 = vmatpush1.msra.mxu0 0.0
  %3942 = vmatprep.subr.mxu0 0.0
  %3943 = vmatpush1.msra.mxu0 0.0
  %3944 = vmatprep.subr.mxu0 0.0
  %3945 = vmatpush1.msra.mxu0 0.0
  %3946 = vmatprep.subr.mxu0 0.0
  %3947 = vmatpush1.msra.mxu0 0.0
  %3948 = vmatprep.subr.mxu0 0.0
  %3949 = vmatpush1.msra.mxu0 0.0
  %3950 = vmatprep.subr.mxu0 0.0
  %3951 = vmatpush1.msra.mxu0 0.0
  %3952 = vmatprep.mubr.f32.mxu0 0.0
  %3953 = vmatmul.mubr.f32.gmra.mrb[0].mxu0 %v3815
  %v3954 = vpop.f32.mrb[0].mxu0
  %v3955 = vadd.f32 0.0, %v3954
  %v3956 = vpop.f32.mrb[0].mxu0
  %v3957 = vadd.f32 0.0, %v3956
  %3958 = vdwg.mxu0
  %v3963 = vrot.slane %v3884, 2
  %v3964 = vrot.slane %v3886, 2
  %v3965 = vrot.slane %v3955, 2
  %v3966 = vrot.slane %v3957, 2
  %v3971 = vadd.f32 %v3810, %v3963
  %v3972 = vadd.f32 %v3811, %v3964
  %v3973 = vadd.f32 %v3812, %v3965
  %v3974 = vadd.f32 %v3813, %v3966
  %v3975 = vxor.u32 %v3971, 2147483648
  %v3976 = vmul.f32 %v3975, 1.442695
  %v3977 = vpow.pop %v3976
  %v3978 = vadd.f32 %v3977, 1.0
  %v3979 = vrcp.pop %v3978
  %v3980 = vmul.f32 1.0, %v3979
  %v3981 = vxor.u32 %v3972, 2147483648
  %v3982 = vmul.f32 %v3981, 1.442695
  %v3983 = vpow.pop %v3982
  %v3984 = vadd.f32 %v3983, 1.0
  %v3985 = vrcp.pop %v3984
  %v3986 = vmul.f32 1.0, %v3985
  %v3987 = vtanh.pop %v3973
  %v3988 = vxor.u32 %v3974, 2147483648
  %v3989 = vmul.f32 %v3988, 1.442695
  %v3990 = vpow.pop %v3989
  %v3991 = vadd.f32 %v3990, 1.0
  %v3992 = vrcp.pop %v3991
  %v3993 = vmul.f32 1.0, %v3992
  %v3995 = vrot.slane %v3805, 6
  %v3997 = vmul.f32 %v3986, %v3995
  %v3998 = vmul.f32 %v3980, %v3987
  %v3999 = vadd.f32 %v3997, %v3998
  %v4000 = vtanh.pop %v3999
  %v4001 = vmul.f32 %v3993, %v4000
  %s4002 = scalar_lea.vmem %s8, 30
  %4003 = vst [vmem:[%s4002 - $0x6] sm:$0xc0] %v4001
  %v4004 = vld [vmem:[#allocation2 + $0x80] sm:$0x3]
  %v4005 = vld [vmem:[#allocation2 + $0x88] sm:$0x3]
  %v4006 = vld [vmem:[#allocation2 + $0x90] sm:$0x3]
  %v4007 = vld [vmem:[#allocation2 + $0x98] sm:$0x3]
  %v4009 = vrot.slane %v4001, 6
  %4011 = vmatprep.subr.mxu0 %v904
  %4012 = vmatpush1.msra.mxu0 %v903
  %4013 = vmatprep.subr.mxu0 %v908
  %4014 = vmatpush1.msra.mxu0 %v907
  %4015 = vmatprep.subr.mxu0 %v912
  %4016 = vmatpush1.msra.mxu0 %v911
  %4017 = vmatprep.subr.mxu0 %v916
  %4018 = vmatpush1.msra.mxu0 %v915
  %4019 = vmatprep.subr.mxu0 %v920
  %4020 = vmatpush1.msra.mxu0 %v919
  %4021 = vmatprep.subr.mxu0 %v924
  %4022 = vmatpush1.msra.mxu0 %v923
  %4023 = vmatprep.subr.mxu0 %v928
  %4024 = vmatpush1.msra.mxu0 %v927
  %4025 = vmatprep.subr.mxu0 %v932
  %4026 = vmatpush1.msra.mxu0 %v931
  %4027 = vmatprep.subr.mxu0 %v936
  %4028 = vmatpush1.msra.mxu0 %v935
  %4029 = vmatprep.subr.mxu0 %v940
  %4030 = vmatpush1.msra.mxu0 %v939
  %4031 = vmatprep.subr.mxu0 %v944
  %4032 = vmatpush1.msra.mxu0 %v943
  %4033 = vmatprep.subr.mxu0 %v948
  %4034 = vmatpush1.msra.mxu0 %v947
  %4035 = vmatprep.subr.mxu0 %v952
  %4036 = vmatpush1.msra.mxu0 %v951
  %4037 = vmatprep.subr.mxu0 %v956
  %4038 = vmatpush1.msra.mxu0 %v955
  %4039 = vmatprep.subr.mxu0 %v960
  %4040 = vmatpush1.msra.mxu0 %v959
  %4041 = vmatprep.subr.mxu0 %v964
  %4042 = vmatpush1.msra.mxu0 %v963
  %4043 = vmatprep.subr.mxu0 0.0
  %4044 = vmatpush1.msra.mxu0 0.0
  %4045 = vmatprep.subr.mxu0 0.0
  %4046 = vmatpush1.msra.mxu0 0.0
  %4047 = vmatprep.subr.mxu0 0.0
  %4048 = vmatpush1.msra.mxu0 0.0
  %4049 = vmatprep.subr.mxu0 0.0
  %4050 = vmatpush1.msra.mxu0 0.0
  %4051 = vmatprep.subr.mxu0 0.0
  %4052 = vmatpush1.msra.mxu0 0.0
  %4053 = vmatprep.subr.mxu0 0.0
  %4054 = vmatpush1.msra.mxu0 0.0
  %4055 = vmatprep.subr.mxu0 0.0
  %4056 = vmatpush1.msra.mxu0 0.0
  %4057 = vmatprep.subr.mxu0 0.0
  %4058 = vmatpush1.msra.mxu0 0.0
  %4059 = vmatprep.subr.mxu0 0.0
  %4060 = vmatpush1.msra.mxu0 0.0
  %4061 = vmatprep.subr.mxu0 0.0
  %4062 = vmatpush1.msra.mxu0 0.0
  %4063 = vmatprep.subr.mxu0 0.0
  %4064 = vmatpush1.msra.mxu0 0.0
  %4065 = vmatprep.subr.mxu0 0.0
  %4066 = vmatpush1.msra.mxu0 0.0
  %4067 = vmatprep.subr.mxu0 0.0
  %4068 = vmatpush1.msra.mxu0 0.0
  %4069 = vmatprep.subr.mxu0 0.0
  %4070 = vmatpush1.msra.mxu0 0.0
  %4071 = vmatprep.subr.mxu0 0.0
  %4072 = vmatpush1.msra.mxu0 0.0
  %4073 = vmatprep.subr.mxu0 0.0
  %4074 = vmatpush1.msra.mxu0 0.0
  %4075 = vmatprep.mubr.f32.mxu0 0.0
  %4076 = vmatmul.mubr.f32.gmra.mrb[0].mxu0 %v4009
  %v4077 = vpop.f32.mrb[0].mxu0
  %v4078 = vadd.f32 0.0, %v4077
  %v4079 = vpop.f32.mrb[0].mxu0
  %v4080 = vadd.f32 0.0, %v4079
  %4081 = vdwg.mxu0
  %4082 = vmatprep.subr.mxu0 %v906
  %4083 = vmatpush1.msra.mxu0 %v905
  %4084 = vmatprep.subr.mxu0 %v910
  %4085 = vmatpush1.msra.mxu0 %v909
  %4086 = vmatprep.subr.mxu0 %v914
  %4087 = vmatpush1.msra.mxu0 %v913
  %4088 = vmatprep.subr.mxu0 %v918
  %4089 = vmatpush1.msra.mxu0 %v917
  %4090 = vmatprep.subr.mxu0 %v922
  %4091 = vmatpush1.msra.mxu0 %v921
  %4092 = vmatprep.subr.mxu0 %v926
  %4093 = vmatpush1.msra.mxu0 %v925
  %4094 = vmatprep.subr.mxu0 %v930
  %4095 = vmatpush1.msra.mxu0 %v929
  %4096 = vmatprep.subr.mxu0 %v934
  %4097 = vmatpush1.msra.mxu0 %v933
  %4098 = vmatprep.subr.mxu0 %v938
  %4099 = vmatpush1.msra.mxu0 %v937
  %4100 = vmatprep.subr.mxu0 %v942
  %4101 = vmatpush1.msra.mxu0 %v941
  %4102 = vmatprep.subr.mxu0 %v946
  %4103 = vmatpush1.msra.mxu0 %v945
  %4104 = vmatprep.subr.mxu0 %v950
  %4105 = vmatpush1.msra.mxu0 %v949
  %4106 = vmatprep.subr.mxu0 %v954
  %4107 = vmatpush1.msra.mxu0 %v953
  %4108 = vmatprep.subr.mxu0 %v958
  %4109 = vmatpush1.msra.mxu0 %v957
  %4110 = vmatprep.subr.mxu0 %v962
  %4111 = vmatpush1.msra.mxu0 %v961
  %4112 = vmatprep.subr.mxu0 %v966
  %4113 = vmatpush1.msra.mxu0 %v965
  %4114 = vmatprep.subr.mxu0 0.0
  %4115 = vmatpush1.msra.mxu0 0.0
  %4116 = vmatprep.subr.mxu0 0.0
  %4117 = vmatpush1.msra.mxu0 0.0
  %4118 = vmatprep.subr.mxu0 0.0
  %4119 = vmatpush1.msra.mxu0 0.0
  %4120 = vmatprep.subr.mxu0 0.0
  %4121 = vmatpush1.msra.mxu0 0.0
  %4122 = vmatprep.subr.mxu0 0.0
  %4123 = vmatpush1.msra.mxu0 0.0
  %4124 = vmatprep.subr.mxu0 0.0
  %4125 = vmatpush1.msra.mxu0 0.0
  %4126 = vmatprep.subr.mxu0 0.0
  %4127 = vmatpush1.msra.mxu0 0.0
  %4128 = vmatprep.subr.mxu0 0.0
  %4129 = vmatpush1.msra.mxu0 0.0
  %4130 = vmatprep.subr.mxu0 0.0
  %4131 = vmatpush1.msra.mxu0 0.0
  %4132 = vmatprep.subr.mxu0 0.0
  %4133 = vmatpush1.msra.mxu0 0.0
  %4134 = vmatprep.subr.mxu0 0.0
  %4135 = vmatpush1.msra.mxu0 0.0
  %4136 = vmatprep.subr.mxu0 0.0
  %4137 = vmatpush1.msra.mxu0 0.0
  %4138 = vmatprep.subr.mxu0 0.0
  %4139 = vmatpush1.msra.mxu0 0.0
  %4140 = vmatprep.subr.mxu0 0.0
  %4141 = vmatpush1.msra.mxu0 0.0
  %4142 = vmatprep.subr.mxu0 0.0
  %4143 = vmatpush1.msra.mxu0 0.0
  %4144 = vmatprep.subr.mxu0 0.0
  %4145 = vmatpush1.msra.mxu0 0.0
  %4146 = vmatprep.mubr.f32.mxu0 0.0
  %4147 = vmatmul.mubr.f32.gmra.mrb[0].mxu0 %v4009
  %v4148 = vpop.f32.mrb[0].mxu0
  %v4149 = vadd.f32 0.0, %v4148
  %v4150 = vpop.f32.mrb[0].mxu0
  %v4151 = vadd.f32 0.0, %v4150
  %4152 = vdwg.mxu0
  %v4153 = vadd.f32 %v4004, %v4078
  %v4154 = vadd.f32 %v4005, %v4080
  %v4155 = vadd.f32 %v4006, %v4149
  %v4156 = vadd.f32 %v4007, %v4151
  %v4157 = vxor.u32 %v4153, 2147483648
  %v4158 = vmul.f32 %v4157, 1.442695
  %v4159 = vpow.pop %v4158
  %v4160 = vadd.f32 %v4159, 1.0
  %v4161 = vrcp.pop %v4160
  %v4162 = vmul.f32 1.0, %v4161
  %v4163 = vxor.u32 %v4154, 2147483648
  %v4164 = vmul.f32 %v4163, 1.442695
  %v4165 = vpow.pop %v4164
  %v4166 = vadd.f32 %v4165, 1.0
  %v4167 = vrcp.pop %v4166
  %v4168 = vmul.f32 1.0, %v4167
  %v4169 = vtanh.pop %v4155
  %v4170 = vxor.u32 %v4156, 2147483648
  %v4171 = vmul.f32 %v4170, 1.442695
  %v4172 = vpow.pop %v4171
  %v4173 = vadd.f32 %v4172, 1.0
  %v4174 = vrcp.pop %v4173
  %v4175 = vmul.f32 1.0, %v4174
  %v4177 = vrot.slane %v3999, 6
  %v4179 = vmul.f32 %v4168, %v4177
  %v4180 = vmul.f32 %v4162, %v4169
  %v4181 = vadd.f32 %v4179, %v4180
  %v4182 = vtanh.pop %v4181
  %v4183 = vmul.f32 %v4175, %v4182
  %s4184 = scalar_lea.vmem %s8, 32
  %4185 = vst [vmem:[%s4184] sm:$0x3] %v4183
  %v4186 = vld [vmem:[#allocation2 + $0x80] sm:$0xc]
  %v4187 = vld [vmem:[#allocation2 + $0x88] sm:$0xc]
  %v4188 = vld [vmem:[#allocation2 + $0x90] sm:$0xc]
  %v4189 = vld [vmem:[#allocation2 + $0x98] sm:$0xc]
  %4190 = vmatprep.subr.mxu0 %v904
  %4191 = vmatpush1.msra.mxu0 %v903
  %4192 = vmatprep.subr.mxu0 %v908
  %4193 = vmatpush1.msra.mxu0 %v907
  %4194 = vmatprep.subr.mxu0 %v912
  %4195 = vmatpush1.msra.mxu0 %v911
  %4196 = vmatprep.subr.mxu0 %v916
  %4197 = vmatpush1.msra.mxu0 %v915
  %4198 = vmatprep.subr.mxu0 %v920
  %4199 = vmatpush1.msra.mxu0 %v919
  %4200 = vmatprep.subr.mxu0 %v924
  %4201 = vmatpush1.msra.mxu0 %v923
  %4202 = vmatprep.subr.mxu0 %v928
  %4203 = vmatpush1.msra.mxu0 %v927
  %4204 = vmatprep.subr.mxu0 %v932
  %4205 = vmatpush1.msra.mxu0 %v931
  %4206 = vmatprep.subr.mxu0 %v936
  %4207 = vmatpush1.msra.mxu0 %v935
  %4208 = vmatprep.subr.mxu0 %v940
  %4209 = vmatpush1.msra.mxu0 %v939
  %4210 = vmatprep.subr.mxu0 %v944
  %4211 = vmatpush1.msra.mxu0 %v943
  %4212 = vmatprep.subr.mxu0 %v948
  %4213 = vmatpush1.msra.mxu0 %v947
  %4214 = vmatprep.subr.mxu0 %v952
  %4215 = vmatpush1.msra.mxu0 %v951
  %4216 = vmatprep.subr.mxu0 %v956
  %4217 = vmatpush1.msra.mxu0 %v955
  %4218 = vmatprep.subr.mxu0 %v960
  %4219 = vmatpush1.msra.mxu0 %v959
  %4220 = vmatprep.subr.mxu0 %v964
  %4221 = vmatpush1.msra.mxu0 %v963
  %4222 = vmatprep.subr.mxu0 0.0
  %4223 = vmatpush1.msra.mxu0 0.0
  %4224 = vmatprep.subr.mxu0 0.0
  %4225 = vmatpush1.msra.mxu0 0.0
  %4226 = vmatprep.subr.mxu0 0.0
  %4227 = vmatpush1.msra.mxu0 0.0
  %4228 = vmatprep.subr.mxu0 0.0
  %4229 = vmatpush1.msra.mxu0 0.0
  %4230 = vmatprep.subr.mxu0 0.0
  %4231 = vmatpush1.msra.mxu0 0.0
  %4232 = vmatprep.subr.mxu0 0.0
  %4233 = vmatpush1.msra.mxu0 0.0
  %4234 = vmatprep.subr.mxu0 0.0
  %4235 = vmatpush1.msra.mxu0 0.0
  %4236 = vmatprep.subr.mxu0 0.0
  %4237 = vmatpush1.msra.mxu0 0.0
  %4238 = vmatprep.subr.mxu0 0.0
  %4239 = vmatpush1.msra.mxu0 0.0
  %4240 = vmatprep.subr.mxu0 0.0
  %4241 = vmatpush1.msra.mxu0 0.0
  %4242 = vmatprep.subr.mxu0 0.0
  %4243 = vmatpush1.msra.mxu0 0.0
  %4244 = vmatprep.subr.mxu0 0.0
  %4245 = vmatpush1.msra.mxu0 0.0
  %4246 = vmatprep.subr.mxu0 0.0
  %4247 = vmatpush1.msra.mxu0 0.0
  %4248 = vmatprep.subr.mxu0 0.0
  %4249 = vmatpush1.msra.mxu0 0.0
  %4250 = vmatprep.subr.mxu0 0.0
  %4251 = vmatpush1.msra.mxu0 0.0
  %4252 = vmatprep.subr.mxu0 0.0
  %4253 = vmatpush1.msra.mxu0 0.0
  %4254 = vmatprep.mubr.f32.mxu0 0.0
  %4255 = vmatmul.mubr.f32.gmra.mrb[0].mxu0 %v4183
  %v4256 = vpop.f32.mrb[0].mxu0
  %v4257 = vadd.f32 0.0, %v4256
  %v4258 = vpop.f32.mrb[0].mxu0
  %v4259 = vadd.f32 0.0, %v4258
  %4260 = vdwg.mxu0
  %4261 = vmatprep.subr.mxu0 %v906
  %4262 = vmatpush1.msra.mxu0 %v905
  %4263 = vmatprep.subr.mxu0 %v910
  %4264 = vmatpush1.msra.mxu0 %v909
  %4265 = vmatprep.subr.mxu0 %v914
  %4266 = vmatpush1.msra.mxu0 %v913
  %4267 = vmatprep.subr.mxu0 %v918
  %4268 = vmatpush1.msra.mxu0 %v917
  %4269 = vmatprep.subr.mxu0 %v922
  %4270 = vmatpush1.msra.mxu0 %v921
  %4271 = vmatprep.subr.mxu0 %v926
  %4272 = vmatpush1.msra.mxu0 %v925
  %4273 = vmatprep.subr.mxu0 %v930
  %4274 = vmatpush1.msra.mxu0 %v929
  %4275 = vmatprep.subr.mxu0 %v934
  %4276 = vmatpush1.msra.mxu0 %v933
  %4277 = vmatprep.subr.mxu0 %v938
  %4278 = vmatpush1.msra.mxu0 %v937
  %4279 = vmatprep.subr.mxu0 %v942
  %4280 = vmatpush1.msra.mxu0 %v941
  %4281 = vmatprep.subr.mxu0 %v946
  %4282 = vmatpush1.msra.mxu0 %v945
  %4283 = vmatprep.subr.mxu0 %v950
  %4284 = vmatpush1.msra.mxu0 %v949
  %4285 = vmatprep.subr.mxu0 %v954
  %4286 = vmatpush1.msra.mxu0 %v953
  %4287 = vmatprep.subr.mxu0 %v958
  %4288 = vmatpush1.msra.mxu0 %v957
  %4289 = vmatprep.subr.mxu0 %v962
  %4290 = vmatpush1.msra.mxu0 %v961
  %4291 = vmatprep.subr.mxu0 %v966
  %4292 = vmatpush1.msra.mxu0 %v965
  %4293 = vmatprep.subr.mxu0 0.0
  %4294 = vmatpush1.msra.mxu0 0.0
  %4295 = vmatprep.subr.mxu0 0.0
  %4296 = vmatpush1.msra.mxu0 0.0
  %4297 = vmatprep.subr.mxu0 0.0
  %4298 = vmatpush1.msra.mxu0 0.0
  %4299 = vmatprep.subr.mxu0 0.0
  %4300 = vmatpush1.msra.mxu0 0.0
  %4301 = vmatprep.subr.mxu0 0.0
  %4302 = vmatpush1.msra.mxu0 0.0
  %4303 = vmatprep.subr.mxu0 0.0
  %4304 = vmatpush1.msra.mxu0 0.0
  %4305 = vmatprep.subr.mxu0 0.0
  %4306 = vmatpush1.msra.mxu0 0.0
  %4307 = vmatprep.subr.mxu0 0.0
  %4308 = vmatpush1.msra.mxu0 0.0
  %4309 = vmatprep.subr.mxu0 0.0
  %4310 = vmatpush1.msra.mxu0 0.0
  %4311 = vmatprep.subr.mxu0 0.0
  %4312 = vmatpush1.msra.mxu0 0.0
  %4313 = vmatprep.subr.mxu0 0.0
  %4314 = vmatpush1.msra.mxu0 0.0
  %4315 = vmatprep.subr.mxu0 0.0
  %4316 = vmatpush1.msra.mxu0 0.0
  %4317 = vmatprep.subr.mxu0 0.0
  %4318 = vmatpush1.msra.mxu0 0.0
  %4319 = vmatprep.subr.mxu0 0.0
  %4320 = vmatpush1.msra.mxu0 0.0
  %4321 = vmatprep.subr.mxu0 0.0
  %4322 = vmatpush1.msra.mxu0 0.0
  %4323 = vmatprep.subr.mxu0 0.0
  %4324 = vmatpush1.msra.mxu0 0.0
  %4325 = vmatprep.mubr.f32.mxu0 0.0
  %4326 = vmatmul.mubr.f32.gmra.mrb[0].mxu0 %v4183
  %v4327 = vpop.f32.mrb[0].mxu0
  %v4328 = vadd.f32 0.0, %v4327
  %v4329 = vpop.f32.mrb[0].mxu0
  %v4330 = vadd.f32 0.0, %v4329
  %4331 = vdwg.mxu0
  %v4336 = vrot.slane %v4257, 6
  %v4337 = vrot.slane %v4259, 6
  %v4338 = vrot.slane %v4328, 6
  %v4339 = vrot.slane %v4330, 6
  %v4344 = vadd.f32 %v4186, %v4336
  %v4345 = vadd.f32 %v4187, %v4337
  %v4346 = vadd.f32 %v4188, %v4338
  %v4347 = vadd.f32 %v4189, %v4339
  %v4348 = vxor.u32 %v4344, 2147483648
  %v4349 = vmul.f32 %v4348, 1.442695
  %v4350 = vpow.pop %v4349
  %v4351 = vadd.f32 %v4350, 1.0
  %v4352 = vrcp.pop %v4351
  %v4353 = vmul.f32 1.0, %v4352
  %v4354 = vxor.u32 %v4345, 2147483648
  %v4355 = vmul.f32 %v4354, 1.442695
  %v4356 = vpow.pop %v4355
  %v4357 = vadd.f32 %v4356, 1.0
  %v4358 = vrcp.pop %v4357
  %v4359 = vmul.f32 1.0, %v4358
  %v4360 = vtanh.pop %v4346
  %v4361 = vxor.u32 %v4347, 2147483648
  %v4362 = vmul.f32 %v4361, 1.442695
  %v4363 = vpow.pop %v4362
  %v4364 = vadd.f32 %v4363, 1.0
  %v4365 = vrcp.pop %v4364
  %v4366 = vmul.f32 1.0, %v4365
  %v4368 = vrot.slane %v4181, 6
  %v4370 = vmul.f32 %v4359, %v4368
  %v4371 = vmul.f32 %v4353, %v4360
  %v4372 = vadd.f32 %v4370, %v4371
  %v4373 = vtanh.pop %v4372
  %v4374 = vmul.f32 %v4366, %v4373
  %s4375 = scalar_lea.vmem %s8, 34
  %4376 = vst [vmem:[%s4375 - $0x2] sm:$0xc] %v4374
  %v4377 = vld [vmem:[#allocation2 + $0x80] sm:$0x30]
  %v4378 = vld [vmem:[#allocation2 + $0x88] sm:$0x30]
  %v4379 = vld [vmem:[#allocation2 + $0x90] sm:$0x30]
  %v4380 = vld [vmem:[#allocation2 + $0x98] sm:$0x30]
  %v4382 = vrot.slane %v4374, 2
  %4384 = vmatprep.subr.mxu0 %v904
  %4385 = vmatpush1.msra.mxu0 %v903
  %4386 = vmatprep.subr.mxu0 %v908
  %4387 = vmatpush1.msra.mxu0 %v907
  %4388 = vmatprep.subr.mxu0 %v912
  %4389 = vmatpush1.msra.mxu0 %v911
  %4390 = vmatprep.subr.mxu0 %v916
  %4391 = vmatpush1.msra.mxu0 %v915
  %4392 = vmatprep.subr.mxu0 %v920
  %4393 = vmatpush1.msra.mxu0 %v919
  %4394 = vmatprep.subr.mxu0 %v924
  %4395 = vmatpush1.msra.mxu0 %v923
  %4396 = vmatprep.subr.mxu0 %v928
  %4397 = vmatpush1.msra.mxu0 %v927
  %4398 = vmatprep.subr.mxu0 %v932
  %4399 = vmatpush1.msra.mxu0 %v931
  %4400 = vmatprep.subr.mxu0 %v936
  %4401 = vmatpush1.msra.mxu0 %v935
  %4402 = vmatprep.subr.mxu0 %v940
  %4403 = vmatpush1.msra.mxu0 %v939
  %4404 = vmatprep.subr.mxu0 %v944
  %4405 = vmatpush1.msra.mxu0 %v943
  %4406 = vmatprep.subr.mxu0 %v948
  %4407 = vmatpush1.msra.mxu0 %v947
  %4408 = vmatprep.subr.mxu0 %v952
  %4409 = vmatpush1.msra.mxu0 %v951
  %4410 = vmatprep.subr.mxu0 %v956
  %4411 = vmatpush1.msra.mxu0 %v955
  %4412 = vmatprep.subr.mxu0 %v960
  %4413 = vmatpush1.msra.mxu0 %v959
  %4414 = vmatprep.subr.mxu0 %v964
  %4415 = vmatpush1.msra.mxu0 %v963
  %4416 = vmatprep.subr.mxu0 0.0
  %4417 = vmatpush1.msra.mxu0 0.0
  %4418 = vmatprep.subr.mxu0 0.0
  %4419 = vmatpush1.msra.mxu0 0.0
  %4420 = vmatprep.subr.mxu0 0.0
  %4421 = vmatpush1.msra.mxu0 0.0
  %4422 = vmatprep.subr.mxu0 0.0
  %4423 = vmatpush1.msra.mxu0 0.0
  %4424 = vmatprep.subr.mxu0 0.0
  %4425 = vmatpush1.msra.mxu0 0.0
  %4426 = vmatprep.subr.mxu0 0.0
  %4427 = vmatpush1.msra.mxu0 0.0
  %4428 = vmatprep.subr.mxu0 0.0
  %4429 = vmatpush1.msra.mxu0 0.0
  %4430 = vmatprep.subr.mxu0 0.0
  %4431 = vmatpush1.msra.mxu0 0.0
  %4432 = vmatprep.subr.mxu0 0.0
  %4433 = vmatpush1.msra.mxu0 0.0
  %4434 = vmatprep.subr.mxu0 0.0
  %4435 = vmatpush1.msra.mxu0 0.0
  %4436 = vmatprep.subr.mxu0 0.0
  %4437 = vmatpush1.msra.mxu0 0.0
  %4438 = vmatprep.subr.mxu0 0.0
  %4439 = vmatpush1.msra.mxu0 0.0
  %4440 = vmatprep.subr.mxu0 0.0
  %4441 = vmatpush1.msra.mxu0 0.0
  %4442 = vmatprep.subr.mxu0 0.0
  %4443 = vmatpush1.msra.mxu0 0.0
  %4444 = vmatprep.subr.mxu0 0.0
  %4445 = vmatpush1.msra.mxu0 0.0
  %4446 = vmatprep.subr.mxu0 0.0
  %4447 = vmatpush1.msra.mxu0 0.0
  %4448 = vmatprep.mubr.f32.mxu0 0.0
  %4449 = vmatmul.mubr.f32.gmra.mrb[0].mxu0 %v4382
  %v4450 = vpop.f32.mrb[0].mxu0
  %v4451 = vadd.f32 0.0, %v4450
  %v4452 = vpop.f32.mrb[0].mxu0
  %v4453 = vadd.f32 0.0, %v4452
  %4454 = vdwg.mxu0
  %4455 = vmatprep.subr.mxu0 %v906
  %4456 = vmatpush1.msra.mxu0 %v905
  %4457 = vmatprep.subr.mxu0 %v910
  %4458 = vmatpush1.msra.mxu0 %v909
  %4459 = vmatprep.subr.mxu0 %v914
  %4460 = vmatpush1.msra.mxu0 %v913
  %4461 = vmatprep.subr.mxu0 %v918
  %4462 = vmatpush1.msra.mxu0 %v917
  %4463 = vmatprep.subr.mxu0 %v922
  %4464 = vmatpush1.msra.mxu0 %v921
  %4465 = vmatprep.subr.mxu0 %v926
  %4466 = vmatpush1.msra.mxu0 %v925
  %4467 = vmatprep.subr.mxu0 %v930
  %4468 = vmatpush1.msra.mxu0 %v929
  %4469 = vmatprep.subr.mxu0 %v934
  %4470 = vmatpush1.msra.mxu0 %v933
  %4471 = vmatprep.subr.mxu0 %v938
  %4472 = vmatpush1.msra.mxu0 %v937
  %4473 = vmatprep.subr.mxu0 %v942
  %4474 = vmatpush1.msra.mxu0 %v941
  %4475 = vmatprep.subr.mxu0 %v946
  %4476 = vmatpush1.msra.mxu0 %v945
  %4477 = vmatprep.subr.mxu0 %v950
  %4478 = vmatpush1.msra.mxu0 %v949
  %4479 = vmatprep.subr.mxu0 %v954
  %4480 = vmatpush1.msra.mxu0 %v953
  %4481 = vmatprep.subr.mxu0 %v958
  %4482 = vmatpush1.msra.mxu0 %v957
  %4483 = vmatprep.subr.mxu0 %v962
  %4484 = vmatpush1.msra.mxu0 %v961
  %4485 = vmatprep.subr.mxu0 %v966
  %4486 = vmatpush1.msra.mxu0 %v965
  %4487 = vmatprep.subr.mxu0 0.0
  %4488 = vmatpush1.msra.mxu0 0.0
  %4489 = vmatprep.subr.mxu0 0.0
  %4490 = vmatpush1.msra.mxu0 0.0
  %4491 = vmatprep.subr.mxu0 0.0
  %4492 = vmatpush1.msra.mxu0 0.0
  %4493 = vmatprep.subr.mxu0 0.0
  %4494 = vmatpush1.msra.mxu0 0.0
  %4495 = vmatprep.subr.mxu0 0.0
  %4496 = vmatpush1.msra.mxu0 0.0
  %4497 = vmatprep.subr.mxu0 0.0
  %4498 = vmatpush1.msra.mxu0 0.0
  %4499 = vmatprep.subr.mxu0 0.0
  %4500 = vmatpush1.msra.mxu0 0.0
  %4501 = vmatprep.subr.mxu0 0.0
  %4502 = vmatpush1.msra.mxu0 0.0
  %4503 = vmatprep.subr.mxu0 0.0
  %4504 = vmatpush1.msra.mxu0 0.0
  %4505 = vmatprep.subr.mxu0 0.0
  %4506 = vmatpush1.msra.mxu0 0.0
  %4507 = vmatprep.subr.mxu0 0.0
  %4508 = vmatpush1.msra.mxu0 0.0
  %4509 = vmatprep.subr.mxu0 0.0
  %4510 = vmatpush1.msra.mxu0 0.0
  %4511 = vmatprep.subr.mxu0 0.0
  %4512 = vmatpush1.msra.mxu0 0.0
  %4513 = vmatprep.subr.mxu0 0.0
  %4514 = vmatpush1.msra.mxu0 0.0
  %4515 = vmatprep.subr.mxu0 0.0
  %4516 = vmatpush1.msra.mxu0 0.0
  %4517 = vmatprep.subr.mxu0 0.0
  %4518 = vmatpush1.msra.mxu0 0.0
  %4519 = vmatprep.mubr.f32.mxu0 0.0
  %4520 = vmatmul.mubr.f32.gmra.mrb[0].mxu0 %v4382
  %v4521 = vpop.f32.mrb[0].mxu0
  %v4522 = vadd.f32 0.0, %v4521
  %v4523 = vpop.f32.mrb[0].mxu0
  %v4524 = vadd.f32 0.0, %v4523
  %4525 = vdwg.mxu0
  %v4530 = vrot.slane %v4451, 4
  %v4531 = vrot.slane %v4453, 4
  %v4532 = vrot.slane %v4522, 4
  %v4533 = vrot.slane %v4524, 4
  %v4538 = vadd.f32 %v4377, %v4530
  %v4539 = vadd.f32 %v4378, %v4531
  %v4540 = vadd.f32 %v4379, %v4532
  %v4541 = vadd.f32 %v4380, %v4533
  %v4542 = vxor.u32 %v4538, 2147483648
  %v4543 = vmul.f32 %v4542, 1.442695
  %v4544 = vpow.pop %v4543
  %v4545 = vadd.f32 %v4544, 1.0
  %v4546 = vrcp.pop %v4545
  %v4547 = vmul.f32 1.0, %v4546
  %v4548 = vxor.u32 %v4539, 2147483648
  %v4549 = vmul.f32 %v4548, 1.442695
  %v4550 = vpow.pop %v4549
  %v4551 = vadd.f32 %v4550, 1.0
  %v4552 = vrcp.pop %v4551
  %v4553 = vmul.f32 1.0, %v4552
  %v4554 = vtanh.pop %v4540
  %v4555 = vxor.u32 %v4541, 2147483648
  %v4556 = vmul.f32 %v4555, 1.442695
  %v4557 = vpow.pop %v4556
  %v4558 = vadd.f32 %v4557, 1.0
  %v4559 = vrcp.pop %v4558
  %v4560 = vmul.f32 1.0, %v4559
  %v4562 = vrot.slane %v4372, 6
  %v4564 = vmul.f32 %v4553, %v4562
  %v4565 = vmul.f32 %v4547, %v4554
  %v4566 = vadd.f32 %v4564, %v4565
  %v4567 = vtanh.pop %v4566
  %v4568 = vmul.f32 %v4560, %v4567
  %s4569 = scalar_lea.vmem %s8, 36
  %4570 = vst [vmem:[%s4569 - $0x4] sm:$0x30] %v4568
  %v4571 = vld [vmem:[#allocation2 + $0x80] sm:$0xc0]
  %v4572 = vld [vmem:[#allocation2 + $0x88] sm:$0xc0]
  %v4573 = vld [vmem:[#allocation2 + $0x90] sm:$0xc0]
  %v4574 = vld [vmem:[#allocation2 + $0x98] sm:$0xc0]
  %v4576 = vrot.slane %v4568, 4
  %4578 = vmatprep.subr.mxu0 %v904
  %4579 = vmatpush1.msra.mxu0 %v903
  %4580 = vmatprep.subr.mxu0 %v908
  %4581 = vmatpush1.msra.mxu0 %v907
  %4582 = vmatprep.subr.mxu0 %v912
  %4583 = vmatpush1.msra.mxu0 %v911
  %4584 = vmatprep.subr.mxu0 %v916
  %4585 = vmatpush1.msra.mxu0 %v915
  %4586 = vmatprep.subr.mxu0 %v920
  %4587 = vmatpush1.msra.mxu0 %v919
  %4588 = vmatprep.subr.mxu0 %v924
  %4589 = vmatpush1.msra.mxu0 %v923
  %4590 = vmatprep.subr.mxu0 %v928
  %4591 = vmatpush1.msra.mxu0 %v927
  %4592 = vmatprep.subr.mxu0 %v932
  %4593 = vmatpush1.msra.mxu0 %v931
  %4594 = vmatprep.subr.mxu0 %v936
  %4595 = vmatpush1.msra.mxu0 %v935
  %4596 = vmatprep.subr.mxu0 %v940
  %4597 = vmatpush1.msra.mxu0 %v939
  %4598 = vmatprep.subr.mxu0 %v944
  %4599 = vmatpush1.msra.mxu0 %v943
  %4600 = vmatprep.subr.mxu0 %v948
  %4601 = vmatpush1.msra.mxu0 %v947
  %4602 = vmatprep.subr.mxu0 %v952
  %4603 = vmatpush1.msra.mxu0 %v951
  %4604 = vmatprep.subr.mxu0 %v956
  %4605 = vmatpush1.msra.mxu0 %v955
  %4606 = vmatprep.subr.mxu0 %v960
  %4607 = vmatpush1.msra.mxu0 %v959
  %4608 = vmatprep.subr.mxu0 %v964
  %4609 = vmatpush1.msra.mxu0 %v963
  %4610 = vmatprep.subr.mxu0 0.0
  %4611 = vmatpush1.msra.mxu0 0.0
  %4612 = vmatprep.subr.mxu0 0.0
  %4613 = vmatpush1.msra.mxu0 0.0
  %4614 = vmatprep.subr.mxu0 0.0
  %4615 = vmatpush1.msra.mxu0 0.0
  %4616 = vmatprep.subr.mxu0 0.0
  %4617 = vmatpush1.msra.mxu0 0.0
  %4618 = vmatprep.subr.mxu0 0.0
  %4619 = vmatpush1.msra.mxu0 0.0
  %4620 = vmatprep.subr.mxu0 0.0
  %4621 = vmatpush1.msra.mxu0 0.0
  %4622 = vmatprep.subr.mxu0 0.0
  %4623 = vmatpush1.msra.mxu0 0.0
  %4624 = vmatprep.subr.mxu0 0.0
  %4625 = vmatpush1.msra.mxu0 0.0
  %4626 = vmatprep.subr.mxu0 0.0
  %4627 = vmatpush1.msra.mxu0 0.0
  %4628 = vmatprep.subr.mxu0 0.0
  %4629 = vmatpush1.msra.mxu0 0.0
  %4630 = vmatprep.subr.mxu0 0.0
  %4631 = vmatpush1.msra.mxu0 0.0
  %4632 = vmatprep.subr.mxu0 0.0
  %4633 = vmatpush1.msra.mxu0 0.0
  %4634 = vmatprep.subr.mxu0 0.0
  %4635 = vmatpush1.msra.mxu0 0.0
  %4636 = vmatprep.subr.mxu0 0.0
  %4637 = vmatpush1.msra.mxu0 0.0
  %4638 = vmatprep.subr.mxu0 0.0
  %4639 = vmatpush1.msra.mxu0 0.0
  %4640 = vmatprep.subr.mxu0 0.0
  %4641 = vmatpush1.msra.mxu0 0.0
  %4642 = vmatprep.mubr.f32.mxu0 0.0
  %4643 = vmatmul.mubr.f32.gmra.mrb[0].mxu0 %v4576
  %v4644 = vpop.f32.mrb[0].mxu0
  %v4645 = vadd.f32 0.0, %v4644
  %v4646 = vpop.f32.mrb[0].mxu0
  %v4647 = vadd.f32 0.0, %v4646
  %4648 = vdwg.mxu0
  %4649 = vmatprep.subr.mxu0 %v906
  %4650 = vmatpush1.msra.mxu0 %v905
  %4651 = vmatprep.subr.mxu0 %v910
  %4652 = vmatpush1.msra.mxu0 %v909
  %4653 = vmatprep.subr.mxu0 %v914
  %4654 = vmatpush1.msra.mxu0 %v913
  %4655 = vmatprep.subr.mxu0 %v918
  %4656 = vmatpush1.msra.mxu0 %v917
  %4657 = vmatprep.subr.mxu0 %v922
  %4658 = vmatpush1.msra.mxu0 %v921
  %4659 = vmatprep.subr.mxu0 %v926
  %4660 = vmatpush1.msra.mxu0 %v925
  %4661 = vmatprep.subr.mxu0 %v930
  %4662 = vmatpush1.msra.mxu0 %v929
  %4663 = vmatprep.subr.mxu0 %v934
  %4664 = vmatpush1.msra.mxu0 %v933
  %4665 = vmatprep.subr.mxu0 %v938
  %4666 = vmatpush1.msra.mxu0 %v937
  %4667 = vmatprep.subr.mxu0 %v942
  %4668 = vmatpush1.msra.mxu0 %v941
  %4669 = vmatprep.subr.mxu0 %v946
  %4670 = vmatpush1.msra.mxu0 %v945
  %4671 = vmatprep.subr.mxu0 %v950
  %4672 = vmatpush1.msra.mxu0 %v949
  %4673 = vmatprep.subr.mxu0 %v954
  %4674 = vmatpush1.msra.mxu0 %v953
  %4675 = vmatprep.subr.mxu0 %v958
  %4676 = vmatpush1.msra.mxu0 %v957
  %4677 = vmatprep.subr.mxu0 %v962
  %4678 = vmatpush1.msra.mxu0 %v961
  %4679 = vmatprep.subr.mxu0 %v966
  %4680 = vmatpush1.msra.mxu0 %v965
  %4681 = vmatprep.subr.mxu0 0.0
  %4682 = vmatpush1.msra.mxu0 0.0
  %4683 = vmatprep.subr.mxu0 0.0
  %4684 = vmatpush1.msra.mxu0 0.0
  %4685 = vmatprep.subr.mxu0 0.0
  %4686 = vmatpush1.msra.mxu0 0.0
  %4687 = vmatprep.subr.mxu0 0.0
  %4688 = vmatpush1.msra.mxu0 0.0
  %4689 = vmatprep.subr.mxu0 0.0
  %4690 = vmatpush1.msra.mxu0 0.0
  %4691 = vmatprep.subr.mxu0 0.0
  %4692 = vmatpush1.msra.mxu0 0.0
  %4693 = vmatprep.subr.mxu0 0.0
  %4694 = vmatpush1.msra.mxu0 0.0
  %4695 = vmatprep.subr.mxu0 0.0
  %4696 = vmatpush1.msra.mxu0 0.0
  %4697 = vmatprep.subr.mxu0 0.0
  %4698 = vmatpush1.msra.mxu0 0.0
  %4699 = vmatprep.subr.mxu0 0.0
  %4700 = vmatpush1.msra.mxu0 0.0
  %4701 = vmatprep.subr.mxu0 0.0
  %4702 = vmatpush1.msra.mxu0 0.0
  %4703 = vmatprep.subr.mxu0 0.0
  %4704 = vmatpush1.msra.mxu0 0.0
  %4705 = vmatprep.subr.mxu0 0.0
  %4706 = vmatpush1.msra.mxu0 0.0
  %4707 = vmatprep.subr.mxu0 0.0
  %4708 = vmatpush1.msra.mxu0 0.0
  %4709 = vmatprep.subr.mxu0 0.0
  %4710 = vmatpush1.msra.mxu0 0.0
  %4711 = vmatprep.subr.mxu0 0.0
  %4712 = vmatpush1.msra.mxu0 0.0
  %4713 = vmatprep.mubr.f32.mxu0 0.0
  %4714 = vmatmul.mubr.f32.gmra.mrb[0].mxu0 %v4576
  %v4715 = vpop.f32.mrb[0].mxu0
  %v4716 = vadd.f32 0.0, %v4715
  %v4717 = vpop.f32.mrb[0].mxu0
  %v4718 = vadd.f32 0.0, %v4717
  %4719 = vdwg.mxu0
  %v4724 = vrot.slane %v4645, 2
  %v4725 = vrot.slane %v4647, 2
  %v4726 = vrot.slane %v4716, 2
  %v4727 = vrot.slane %v4718, 2
  %v4732 = vadd.f32 %v4571, %v4724
  %v4733 = vadd.f32 %v4572, %v4725
  %v4734 = vadd.f32 %v4573, %v4726
  %v4735 = vadd.f32 %v4574, %v4727
  %v4736 = vxor.u32 %v4732, 2147483648
  %v4737 = vmul.f32 %v4736, 1.442695
  %v4738 = vpow.pop %v4737
  %v4739 = vadd.f32 %v4738, 1.0
  %v4740 = vrcp.pop %v4739
  %v4741 = vmul.f32 1.0, %v4740
  %v4742 = vxor.u32 %v4733, 2147483648
  %v4743 = vmul.f32 %v4742, 1.442695
  %v4744 = vpow.pop %v4743
  %v4745 = vadd.f32 %v4744, 1.0
  %v4746 = vrcp.pop %v4745
  %v4747 = vmul.f32 1.0, %v4746
  %v4748 = vtanh.pop %v4734
  %v4749 = vxor.u32 %v4735, 2147483648
  %v4750 = vmul.f32 %v4749, 1.442695
  %v4751 = vpow.pop %v4750
  %v4752 = vadd.f32 %v4751, 1.0
  %v4753 = vrcp.pop %v4752
  %v4754 = vmul.f32 1.0, %v4753
  %v4756 = vrot.slane %v4566, 6
  %v4758 = vmul.f32 %v4747, %v4756
  %v4759 = vmul.f32 %v4741, %v4748
  %v4760 = vadd.f32 %v4758, %v4759
  %v4761 = vtanh.pop %v4760
  %v4762 = vmul.f32 %v4754, %v4761
  %s4763 = scalar_lea.vmem %s8, 38
  %4764 = vst [vmem:[%s4763 - $0x6] sm:$0xc0] %v4762
  %v4765 = vld [vmem:[#allocation2 + $0xa0] sm:$0x3]
  %v4766 = vld [vmem:[#allocation2 + $0xa8] sm:$0x3]
  %v4767 = vld [vmem:[#allocation2 + $0xb0] sm:$0x3]
  %v4768 = vld [vmem:[#allocation2 + $0xb8] sm:$0x3]
  %v4770 = vrot.slane %v4762, 6
  %4772 = vmatprep.subr.mxu0 %v904
  %4773 = vmatpush1.msra.mxu0 %v903
  %4774 = vmatprep.subr.mxu0 %v908
  %4775 = vmatpush1.msra.mxu0 %v907
  %4776 = vmatprep.subr.mxu0 %v912
  %4777 = vmatpush1.msra.mxu0 %v911
  %4778 = vmatprep.subr.mxu0 %v916
  %4779 = vmatpush1.msra.mxu0 %v915
  %4780 = vmatprep.subr.mxu0 %v920
  %4781 = vmatpush1.msra.mxu0 %v919
  %4782 = vmatprep.subr.mxu0 %v924
  %4783 = vmatpush1.msra.mxu0 %v923
  %4784 = vmatprep.subr.mxu0 %v928
  %4785 = vmatpush1.msra.mxu0 %v927
  %4786 = vmatprep.subr.mxu0 %v932
  %4787 = vmatpush1.msra.mxu0 %v931
  %4788 = vmatprep.subr.mxu0 %v936
  %4789 = vmatpush1.msra.mxu0 %v935
  %4790 = vmatprep.subr.mxu0 %v940
  %4791 = vmatpush1.msra.mxu0 %v939
  %4792 = vmatprep.subr.mxu0 %v944
  %4793 = vmatpush1.msra.mxu0 %v943
  %4794 = vmatprep.subr.mxu0 %v948
  %4795 = vmatpush1.msra.mxu0 %v947
  %4796 = vmatprep.subr.mxu0 %v952
  %4797 = vmatpush1.msra.mxu0 %v951
  %4798 = vmatprep.subr.mxu0 %v956
  %4799 = vmatpush1.msra.mxu0 %v955
  %4800 = vmatprep.subr.mxu0 %v960
  %4801 = vmatpush1.msra.mxu0 %v959
  %4802 = vmatprep.subr.mxu0 %v964
  %4803 = vmatpush1.msra.mxu0 %v963
  %4804 = vmatprep.subr.mxu0 0.0
  %4805 = vmatpush1.msra.mxu0 0.0
  %4806 = vmatprep.subr.mxu0 0.0
  %4807 = vmatpush1.msra.mxu0 0.0
  %4808 = vmatprep.subr.mxu0 0.0
  %4809 = vmatpush1.msra.mxu0 0.0
  %4810 = vmatprep.subr.mxu0 0.0
  %4811 = vmatpush1.msra.mxu0 0.0
  %4812 = vmatprep.subr.mxu0 0.0
  %4813 = vmatpush1.msra.mxu0 0.0
  %4814 = vmatprep.subr.mxu0 0.0
  %4815 = vmatpush1.msra.mxu0 0.0
  %4816 = vmatprep.subr.mxu0 0.0
  %4817 = vmatpush1.msra.mxu0 0.0
  %4818 = vmatprep.subr.mxu0 0.0
  %4819 = vmatpush1.msra.mxu0 0.0
  %4820 = vmatprep.subr.mxu0 0.0
  %4821 = vmatpush1.msra.mxu0 0.0
  %4822 = vmatprep.subr.mxu0 0.0
  %4823 = vmatpush1.msra.mxu0 0.0
  %4824 = vmatprep.subr.mxu0 0.0
  %4825 = vmatpush1.msra.mxu0 0.0
  %4826 = vmatprep.subr.mxu0 0.0
  %4827 = vmatpush1.msra.mxu0 0.0
  %4828 = vmatprep.subr.mxu0 0.0
  %4829 = vmatpush1.msra.mxu0 0.0
  %4830 = vmatprep.subr.mxu0 0.0
  %4831 = vmatpush1.msra.mxu0 0.0
  %4832 = vmatprep.subr.mxu0 0.0
  %4833 = vmatpush1.msra.mxu0 0.0
  %4834 = vmatprep.subr.mxu0 0.0
  %4835 = vmatpush1.msra.mxu0 0.0
  %4836 = vmatprep.mubr.f32.mxu0 0.0
  %4837 = vmatmul.mubr.f32.gmra.mrb[0].mxu0 %v4770
  %v4838 = vpop.f32.mrb[0].mxu0
  %v4839 = vadd.f32 0.0, %v4838
  %v4840 = vpop.f32.mrb[0].mxu0
  %v4841 = vadd.f32 0.0, %v4840
  %4842 = vdwg.mxu0
  %4843 = vmatprep.subr.mxu0 %v906
  %4844 = vmatpush1.msra.mxu0 %v905
  %4845 = vmatprep.subr.mxu0 %v910
  %4846 = vmatpush1.msra.mxu0 %v909
  %4847 = vmatprep.subr.mxu0 %v914
  %4848 = vmatpush1.msra.mxu0 %v913
  %4849 = vmatprep.subr.mxu0 %v918
  %4850 = vmatpush1.msra.mxu0 %v917
  %4851 = vmatprep.subr.mxu0 %v922
  %4852 = vmatpush1.msra.mxu0 %v921
  %4853 = vmatprep.subr.mxu0 %v926
  %4854 = vmatpush1.msra.mxu0 %v925
  %4855 = vmatprep.subr.mxu0 %v930
  %4856 = vmatpush1.msra.mxu0 %v929
  %4857 = vmatprep.subr.mxu0 %v934
  %4858 = vmatpush1.msra.mxu0 %v933
  %4859 = vmatprep.subr.mxu0 %v938
  %4860 = vmatpush1.msra.mxu0 %v937
  %4861 = vmatprep.subr.mxu0 %v942
  %4862 = vmatpush1.msra.mxu0 %v941
  %4863 = vmatprep.subr.mxu0 %v946
  %4864 = vmatpush1.msra.mxu0 %v945
  %4865 = vmatprep.subr.mxu0 %v950
  %4866 = vmatpush1.msra.mxu0 %v949
  %4867 = vmatprep.subr.mxu0 %v954
  %4868 = vmatpush1.msra.mxu0 %v953
  %4869 = vmatprep.subr.mxu0 %v958
  %4870 = vmatpush1.msra.mxu0 %v957
  %4871 = vmatprep.subr.mxu0 %v962
  %4872 = vmatpush1.msra.mxu0 %v961
  %4873 = vmatprep.subr.mxu0 %v966
  %4874 = vmatpush1.msra.mxu0 %v965
  %4875 = vmatprep.subr.mxu0 0.0
  %4876 = vmatpush1.msra.mxu0 0.0
  %4877 = vmatprep.subr.mxu0 0.0
  %4878 = vmatpush1.msra.mxu0 0.0
  %4879 = vmatprep.subr.mxu0 0.0
  %4880 = vmatpush1.msra.mxu0 0.0
  %4881 = vmatprep.subr.mxu0 0.0
  %4882 = vmatpush1.msra.mxu0 0.0
  %4883 = vmatprep.subr.mxu0 0.0
  %4884 = vmatpush1.msra.mxu0 0.0
  %4885 = vmatprep.subr.mxu0 0.0
  %4886 = vmatpush1.msra.mxu0 0.0
  %4887 = vmatprep.subr.mxu0 0.0
  %4888 = vmatpush1.msra.mxu0 0.0
  %4889 = vmatprep.subr.mxu0 0.0
  %4890 = vmatpush1.msra.mxu0 0.0
  %4891 = vmatprep.subr.mxu0 0.0
  %4892 = vmatpush1.msra.mxu0 0.0
  %4893 = vmatprep.subr.mxu0 0.0
  %4894 = vmatpush1.msra.mxu0 0.0
  %4895 = vmatprep.subr.mxu0 0.0
  %4896 = vmatpush1.msra.mxu0 0.0
  %4897 = vmatprep.subr.mxu0 0.0
  %4898 = vmatpush1.msra.mxu0 0.0
  %4899 = vmatprep.subr.mxu0 0.0
  %4900 = vmatpush1.msra.mxu0 0.0
  %4901 = vmatprep.subr.mxu0 0.0
  %4902 = vmatpush1.msra.mxu0 0.0
  %4903 = vmatprep.subr.mxu0 0.0
  %4904 = vmatpush1.msra.mxu0 0.0
  %4905 = vmatprep.subr.mxu0 0.0
  %4906 = vmatpush1.msra.mxu0 0.0
  %4907 = vmatprep.mubr.f32.mxu0 0.0
  %4908 = vmatmul.mubr.f32.gmra.mrb[0].mxu0 %v4770
  %v4909 = vpop.f32.mrb[0].mxu0
  %v4910 = vadd.f32 0.0, %v4909
  %v4911 = vpop.f32.mrb[0].mxu0
  %v4912 = vadd.f32 0.0, %v4911
  %4913 = vdwg.mxu0
  %v4914 = vadd.f32 %v4765, %v4839
  %v4915 = vadd.f32 %v4766, %v4841
  %v4916 = vadd.f32 %v4767, %v4910
  %v4917 = vadd.f32 %v4768, %v4912
  %v4918 = vxor.u32 %v4914, 2147483648
  %v4919 = vmul.f32 %v4918, 1.442695
  %v4920 = vpow.pop %v4919
  %v4921 = vadd.f32 %v4920, 1.0
  %v4922 = vrcp.pop %v4921
  %v4923 = vmul.f32 1.0, %v4922
  %v4924 = vxor.u32 %v4915, 2147483648
  %v4925 = vmul.f32 %v4924, 1.442695
  %v4926 = vpow.pop %v4925
  %v4927 = vadd.f32 %v4926, 1.0
  %v4928 = vrcp.pop %v4927
  %v4929 = vmul.f32 1.0, %v4928
  %v4930 = vtanh.pop %v4916
  %v4931 = vxor.u32 %v4917, 2147483648
  %v4932 = vmul.f32 %v4931, 1.442695
  %v4933 = vpow.pop %v4932
  %v4934 = vadd.f32 %v4933, 1.0
  %v4935 = vrcp.pop %v4934
  %v4936 = vmul.f32 1.0, %v4935
  %v4938 = vrot.slane %v4760, 6
  %v4940 = vmul.f32 %v4929, %v4938
  %v4941 = vmul.f32 %v4923, %v4930
  %v4942 = vadd.f32 %v4940, %v4941
  %v4943 = vtanh.pop %v4942
  %v4944 = vmul.f32 %v4936, %v4943
  %s4945 = scalar_lea.vmem %s8, 40
  %4946 = vst [vmem:[%s4945] sm:$0x3] %v4944
  %v4947 = vld [vmem:[#allocation2 + $0xa0] sm:$0xc]
  %v4948 = vld [vmem:[#allocation2 + $0xa8] sm:$0xc]
  %v4949 = vld [vmem:[#allocation2 + $0xb0] sm:$0xc]
  %v4950 = vld [vmem:[#allocation2 + $0xb8] sm:$0xc]
  %4951 = vmatprep.subr.mxu0 %v904
  %4952 = vmatpush1.msra.mxu0 %v903
  %4953 = vmatprep.subr.mxu0 %v908
  %4954 = vmatpush1.msra.mxu0 %v907
  %4955 = vmatprep.subr.mxu0 %v912
  %4956 = vmatpush1.msra.mxu0 %v911
  %4957 = vmatprep.subr.mxu0 %v916
  %4958 = vmatpush1.msra.mxu0 %v915
  %4959 = vmatprep.subr.mxu0 %v920
  %4960 = vmatpush1.msra.mxu0 %v919
  %4961 = vmatprep.subr.mxu0 %v924
  %4962 = vmatpush1.msra.mxu0 %v923
  %4963 = vmatprep.subr.mxu0 %v928
  %4964 = vmatpush1.msra.mxu0 %v927
  %4965 = vmatprep.subr.mxu0 %v932
  %4966 = vmatpush1.msra.mxu0 %v931
  %4967 = vmatprep.subr.mxu0 %v936
  %4968 = vmatpush1.msra.mxu0 %v935
  %4969 = vmatprep.subr.mxu0 %v940
  %4970 = vmatpush1.msra.mxu0 %v939
  %4971 = vmatprep.subr.mxu0 %v944
  %4972 = vmatpush1.msra.mxu0 %v943
  %4973 = vmatprep.subr.mxu0 %v948
  %4974 = vmatpush1.msra.mxu0 %v947
  %4975 = vmatprep.subr.mxu0 %v952
  %4976 = vmatpush1.msra.mxu0 %v951
  %4977 = vmatprep.subr.mxu0 %v956
  %4978 = vmatpush1.msra.mxu0 %v955
  %4979 = vmatprep.subr.mxu0 %v960
  %4980 = vmatpush1.msra.mxu0 %v959
  %4981 = vmatprep.subr.mxu0 %v964
  %4982 = vmatpush1.msra.mxu0 %v963
  %4983 = vmatprep.subr.mxu0 0.0
  %4984 = vmatpush1.msra.mxu0 0.0
  %4985 = vmatprep.subr.mxu0 0.0
  %4986 = vmatpush1.msra.mxu0 0.0
  %4987 = vmatprep.subr.mxu0 0.0
  %4988 = vmatpush1.msra.mxu0 0.0
  %4989 = vmatprep.subr.mxu0 0.0
  %4990 = vmatpush1.msra.mxu0 0.0
  %4991 = vmatprep.subr.mxu0 0.0
  %4992 = vmatpush1.msra.mxu0 0.0
  %4993 = vmatprep.subr.mxu0 0.0
  %4994 = vmatpush1.msra.mxu0 0.0
  %4995 = vmatprep.subr.mxu0 0.0
  %4996 = vmatpush1.msra.mxu0 0.0
  %4997 = vmatprep.subr.mxu0 0.0
  %4998 = vmatpush1.msra.mxu0 0.0
  %4999 = vmatprep.subr.mxu0 0.0
  %5000 = vmatpush1.msra.mxu0 0.0
  %5001 = vmatprep.subr.mxu0 0.0
  %5002 = vmatpush1.msra.mxu0 0.0
  %5003 = vmatprep.subr.mxu0 0.0
  %5004 = vmatpush1.msra.mxu0 0.0
  %5005 = vmatprep.subr.mxu0 0.0
  %5006 = vmatpush1.msra.mxu0 0.0
  %5007 = vmatprep.subr.mxu0 0.0
  %5008 = vmatpush1.msra.mxu0 0.0
  %5009 = vmatprep.subr.mxu0 0.0
  %5010 = vmatpush1.msra.mxu0 0.0
  %5011 = vmatprep.subr.mxu0 0.0
  %5012 = vmatpush1.msra.mxu0 0.0
  %5013 = vmatprep.subr.mxu0 0.0
  %5014 = vmatpush1.msra.mxu0 0.0
  %5015 = vmatprep.mubr.f32.mxu0 0.0
  %5016 = vmatmul.mubr.f32.gmra.mrb[0].mxu0 %v4944
  %v5017 = vpop.f32.mrb[0].mxu0
  %v5018 = vadd.f32 0.0, %v5017
  %v5019 = vpop.f32.mrb[0].mxu0
  %v5020 = vadd.f32 0.0, %v5019
  %5021 = vdwg.mxu0
  %5022 = vmatprep.subr.mxu0 %v906
  %5023 = vmatpush1.msra.mxu0 %v905
  %5024 = vmatprep.subr.mxu0 %v910
  %5025 = vmatpush1.msra.mxu0 %v909
  %5026 = vmatprep.subr.mxu0 %v914
  %5027 = vmatpush1.msra.mxu0 %v913
  %5028 = vmatprep.subr.mxu0 %v918
  %5029 = vmatpush1.msra.mxu0 %v917
  %5030 = vmatprep.subr.mxu0 %v922
  %5031 = vmatpush1.msra.mxu0 %v921
  %5032 = vmatprep.subr.mxu0 %v926
  %5033 = vmatpush1.msra.mxu0 %v925
  %5034 = vmatprep.subr.mxu0 %v930
  %5035 = vmatpush1.msra.mxu0 %v929
  %5036 = vmatprep.subr.mxu0 %v934
  %5037 = vmatpush1.msra.mxu0 %v933
  %5038 = vmatprep.subr.mxu0 %v938
  %5039 = vmatpush1.msra.mxu0 %v937
  %5040 = vmatprep.subr.mxu0 %v942
  %5041 = vmatpush1.msra.mxu0 %v941
  %5042 = vmatprep.subr.mxu0 %v946
  %5043 = vmatpush1.msra.mxu0 %v945
  %5044 = vmatprep.subr.mxu0 %v950
  %5045 = vmatpush1.msra.mxu0 %v949
  %5046 = vmatprep.subr.mxu0 %v954
  %5047 = vmatpush1.msra.mxu0 %v953
  %5048 = vmatprep.subr.mxu0 %v958
  %5049 = vmatpush1.msra.mxu0 %v957
  %5050 = vmatprep.subr.mxu0 %v962
  %5051 = vmatpush1.msra.mxu0 %v961
  %5052 = vmatprep.subr.mxu0 %v966
  %5053 = vmatpush1.msra.mxu0 %v965
  %5054 = vmatprep.subr.mxu0 0.0
  %5055 = vmatpush1.msra.mxu0 0.0
  %5056 = vmatprep.subr.mxu0 0.0
  %5057 = vmatpush1.msra.mxu0 0.0
  %5058 = vmatprep.subr.mxu0 0.0
  %5059 = vmatpush1.msra.mxu0 0.0
  %5060 = vmatprep.subr.mxu0 0.0
  %5061 = vmatpush1.msra.mxu0 0.0
  %5062 = vmatprep.subr.mxu0 0.0
  %5063 = vmatpush1.msra.mxu0 0.0
  %5064 = vmatprep.subr.mxu0 0.0
  %5065 = vmatpush1.msra.mxu0 0.0
  %5066 = vmatprep.subr.mxu0 0.0
  %5067 = vmatpush1.msra.mxu0 0.0
  %5068 = vmatprep.subr.mxu0 0.0
  %5069 = vmatpush1.msra.mxu0 0.0
  %5070 = vmatprep.subr.mxu0 0.0
  %5071 = vmatpush1.msra.mxu0 0.0
  %5072 = vmatprep.subr.mxu0 0.0
  %5073 = vmatpush1.msra.mxu0 0.0
  %5074 = vmatprep.subr.mxu0 0.0
  %5075 = vmatpush1.msra.mxu0 0.0
  %5076 = vmatprep.subr.mxu0 0.0
  %5077 = vmatpush1.msra.mxu0 0.0
  %5078 = vmatprep.subr.mxu0 0.0
  %5079 = vmatpush1.msra.mxu0 0.0
  %5080 = vmatprep.subr.mxu0 0.0
  %5081 = vmatpush1.msra.mxu0 0.0
  %5082 = vmatprep.subr.mxu0 0.0
  %5083 = vmatpush1.msra.mxu0 0.0
  %5084 = vmatprep.subr.mxu0 0.0
  %5085 = vmatpush1.msra.mxu0 0.0
  %5086 = vmatprep.mubr.f32.mxu0 0.0
  %5087 = vmatmul.mubr.f32.gmra.mrb[0].mxu0 %v4944
  %v5088 = vpop.f32.mrb[0].mxu0
  %v5089 = vadd.f32 0.0, %v5088
  %v5090 = vpop.f32.mrb[0].mxu0
  %v5091 = vadd.f32 0.0, %v5090
  %5092 = vdwg.mxu0
  %v5097 = vrot.slane %v5018, 6
  %v5098 = vrot.slane %v5020, 6
  %v5099 = vrot.slane %v5089, 6
  %v5100 = vrot.slane %v5091, 6
  %v5105 = vadd.f32 %v4947, %v5097
  %v5106 = vadd.f32 %v4948, %v5098
  %v5107 = vadd.f32 %v4949, %v5099
  %v5108 = vadd.f32 %v4950, %v5100
  %v5109 = vxor.u32 %v5105, 2147483648
  %v5110 = vmul.f32 %v5109, 1.442695
  %v5111 = vpow.pop %v5110
  %v5112 = vadd.f32 %v5111, 1.0
  %v5113 = vrcp.pop %v5112
  %v5114 = vmul.f32 1.0, %v5113
  %v5115 = vxor.u32 %v5106, 2147483648
  %v5116 = vmul.f32 %v5115, 1.442695
  %v5117 = vpow.pop %v5116
  %v5118 = vadd.f32 %v5117, 1.0
  %v5119 = vrcp.pop %v5118
  %v5120 = vmul.f32 1.0, %v5119
  %v5121 = vtanh.pop %v5107
  %v5122 = vxor.u32 %v5108, 2147483648
  %v5123 = vmul.f32 %v5122, 1.442695
  %v5124 = vpow.pop %v5123
  %v5125 = vadd.f32 %v5124, 1.0
  %v5126 = vrcp.pop %v5125
  %v5127 = vmul.f32 1.0, %v5126
  %v5129 = vrot.slane %v4942, 6
  %v5131 = vmul.f32 %v5120, %v5129
  %v5132 = vmul.f32 %v5114, %v5121
  %v5133 = vadd.f32 %v5131, %v5132
  %v5134 = vtanh.pop %v5133
  %v5135 = vmul.f32 %v5127, %v5134
  %s5136 = scalar_lea.vmem %s8, 42
  %5137 = vst [vmem:[%s5136 - $0x2] sm:$0xc] %v5135
  %v5138 = vld [vmem:[#allocation2 + $0xa0] sm:$0x30]
  %v5139 = vld [vmem:[#allocation2 + $0xa8] sm:$0x30]
  %v5140 = vld [vmem:[#allocation2 + $0xb0] sm:$0x30]
  %v5141 = vld [vmem:[#allocation2 + $0xb8] sm:$0x30]
  %v5143 = vrot.slane %v5135, 2
  %5145 = vmatprep.subr.mxu0 %v904
  %5146 = vmatpush1.msra.mxu0 %v903
  %5147 = vmatprep.subr.mxu0 %v908
  %5148 = vmatpush1.msra.mxu0 %v907
  %5149 = vmatprep.subr.mxu0 %v912
  %5150 = vmatpush1.msra.mxu0 %v911
  %5151 = vmatprep.subr.mxu0 %v916
  %5152 = vmatpush1.msra.mxu0 %v915
  %5153 = vmatprep.subr.mxu0 %v920
  %5154 = vmatpush1.msra.mxu0 %v919
  %5155 = vmatprep.subr.mxu0 %v924
  %5156 = vmatpush1.msra.mxu0 %v923
  %5157 = vmatprep.subr.mxu0 %v928
  %5158 = vmatpush1.msra.mxu0 %v927
  %5159 = vmatprep.subr.mxu0 %v932
  %5160 = vmatpush1.msra.mxu0 %v931
  %5161 = vmatprep.subr.mxu0 %v936
  %5162 = vmatpush1.msra.mxu0 %v935
  %5163 = vmatprep.subr.mxu0 %v940
  %5164 = vmatpush1.msra.mxu0 %v939
  %5165 = vmatprep.subr.mxu0 %v944
  %5166 = vmatpush1.msra.mxu0 %v943
  %5167 = vmatprep.subr.mxu0 %v948
  %5168 = vmatpush1.msra.mxu0 %v947
  %5169 = vmatprep.subr.mxu0 %v952
  %5170 = vmatpush1.msra.mxu0 %v951
  %5171 = vmatprep.subr.mxu0 %v956
  %5172 = vmatpush1.msra.mxu0 %v955
  %5173 = vmatprep.subr.mxu0 %v960
  %5174 = vmatpush1.msra.mxu0 %v959
  %5175 = vmatprep.subr.mxu0 %v964
  %5176 = vmatpush1.msra.mxu0 %v963
  %5177 = vmatprep.subr.mxu0 0.0
  %5178 = vmatpush1.msra.mxu0 0.0
  %5179 = vmatprep.subr.mxu0 0.0
  %5180 = vmatpush1.msra.mxu0 0.0
  %5181 = vmatprep.subr.mxu0 0.0
  %5182 = vmatpush1.msra.mxu0 0.0
  %5183 = vmatprep.subr.mxu0 0.0
  %5184 = vmatpush1.msra.mxu0 0.0
  %5185 = vmatprep.subr.mxu0 0.0
  %5186 = vmatpush1.msra.mxu0 0.0
  %5187 = vmatprep.subr.mxu0 0.0
  %5188 = vmatpush1.msra.mxu0 0.0
  %5189 = vmatprep.subr.mxu0 0.0
  %5190 = vmatpush1.msra.mxu0 0.0
  %5191 = vmatprep.subr.mxu0 0.0
  %5192 = vmatpush1.msra.mxu0 0.0
  %5193 = vmatprep.subr.mxu0 0.0
  %5194 = vmatpush1.msra.mxu0 0.0
  %5195 = vmatprep.subr.mxu0 0.0
  %5196 = vmatpush1.msra.mxu0 0.0
  %5197 = vmatprep.subr.mxu0 0.0
  %5198 = vmatpush1.msra.mxu0 0.0
  %5199 = vmatprep.subr.mxu0 0.0
  %5200 = vmatpush1.msra.mxu0 0.0
  %5201 = vmatprep.subr.mxu0 0.0
  %5202 = vmatpush1.msra.mxu0 0.0
  %5203 = vmatprep.subr.mxu0 0.0
  %5204 = vmatpush1.msra.mxu0 0.0
  %5205 = vmatprep.subr.mxu0 0.0
  %5206 = vmatpush1.msra.mxu0 0.0
  %5207 = vmatprep.subr.mxu0 0.0
  %5208 = vmatpush1.msra.mxu0 0.0
  %5209 = vmatprep.mubr.f32.mxu0 0.0
  %5210 = vmatmul.mubr.f32.gmra.mrb[0].mxu0 %v5143
  %v5211 = vpop.f32.mrb[0].mxu0
  %v5212 = vadd.f32 0.0, %v5211
  %v5213 = vpop.f32.mrb[0].mxu0
  %v5214 = vadd.f32 0.0, %v5213
  %5215 = vdwg.mxu0
  %5216 = vmatprep.subr.mxu0 %v906
  %5217 = vmatpush1.msra.mxu0 %v905
  %5218 = vmatprep.subr.mxu0 %v910
  %5219 = vmatpush1.msra.mxu0 %v909
  %5220 = vmatprep.subr.mxu0 %v914
  %5221 = vmatpush1.msra.mxu0 %v913
  %5222 = vmatprep.subr.mxu0 %v918
  %5223 = vmatpush1.msra.mxu0 %v917
  %5224 = vmatprep.subr.mxu0 %v922
  %5225 = vmatpush1.msra.mxu0 %v921
  %5226 = vmatprep.subr.mxu0 %v926
  %5227 = vmatpush1.msra.mxu0 %v925
  %5228 = vmatprep.subr.mxu0 %v930
  %5229 = vmatpush1.msra.mxu0 %v929
  %5230 = vmatprep.subr.mxu0 %v934
  %5231 = vmatpush1.msra.mxu0 %v933
  %5232 = vmatprep.subr.mxu0 %v938
  %5233 = vmatpush1.msra.mxu0 %v937
  %5234 = vmatprep.subr.mxu0 %v942
  %5235 = vmatpush1.msra.mxu0 %v941
  %5236 = vmatprep.subr.mxu0 %v946
  %5237 = vmatpush1.msra.mxu0 %v945
  %5238 = vmatprep.subr.mxu0 %v950
  %5239 = vmatpush1.msra.mxu0 %v949
  %5240 = vmatprep.subr.mxu0 %v954
  %5241 = vmatpush1.msra.mxu0 %v953
  %5242 = vmatprep.subr.mxu0 %v958
  %5243 = vmatpush1.msra.mxu0 %v957
  %5244 = vmatprep.subr.mxu0 %v962
  %5245 = vmatpush1.msra.mxu0 %v961
  %5246 = vmatprep.subr.mxu0 %v966
  %5247 = vmatpush1.msra.mxu0 %v965
  %5248 = vmatprep.subr.mxu0 0.0
  %5249 = vmatpush1.msra.mxu0 0.0
  %5250 = vmatprep.subr.mxu0 0.0
  %5251 = vmatpush1.msra.mxu0 0.0
  %5252 = vmatprep.subr.mxu0 0.0
  %5253 = vmatpush1.msra.mxu0 0.0
  %5254 = vmatprep.subr.mxu0 0.0
  %5255 = vmatpush1.msra.mxu0 0.0
  %5256 = vmatprep.subr.mxu0 0.0
  %5257 = vmatpush1.msra.mxu0 0.0
  %5258 = vmatprep.subr.mxu0 0.0
  %5259 = vmatpush1.msra.mxu0 0.0
  %5260 = vmatprep.subr.mxu0 0.0
  %5261 = vmatpush1.msra.mxu0 0.0
  %5262 = vmatprep.subr.mxu0 0.0
  %5263 = vmatpush1.msra.mxu0 0.0
  %5264 = vmatprep.subr.mxu0 0.0
  %5265 = vmatpush1.msra.mxu0 0.0
  %5266 = vmatprep.subr.mxu0 0.0
  %5267 = vmatpush1.msra.mxu0 0.0
  %5268 = vmatprep.subr.mxu0 0.0
  %5269 = vmatpush1.msra.mxu0 0.0
  %5270 = vmatprep.subr.mxu0 0.0
  %5271 = vmatpush1.msra.mxu0 0.0
  %5272 = vmatprep.subr.mxu0 0.0
  %5273 = vmatpush1.msra.mxu0 0.0
  %5274 = vmatprep.subr.mxu0 0.0
  %5275 = vmatpush1.msra.mxu0 0.0
  %5276 = vmatprep.subr.mxu0 0.0
  %5277 = vmatpush1.msra.mxu0 0.0
  %5278 = vmatprep.subr.mxu0 0.0
  %5279 = vmatpush1.msra.mxu0 0.0
  %5280 = vmatprep.mubr.f32.mxu0 0.0
  %5281 = vmatmul.mubr.f32.gmra.mrb[0].mxu0 %v5143
  %v5282 = vpop.f32.mrb[0].mxu0
  %v5283 = vadd.f32 0.0, %v5282
  %v5284 = vpop.f32.mrb[0].mxu0
  %v5285 = vadd.f32 0.0, %v5284
  %5286 = vdwg.mxu0
  %v5291 = vrot.slane %v5212, 4
  %v5292 = vrot.slane %v5214, 4
  %v5293 = vrot.slane %v5283, 4
  %v5294 = vrot.slane %v5285, 4
  %v5299 = vadd.f32 %v5138, %v5291
  %v5300 = vadd.f32 %v5139, %v5292
  %v5301 = vadd.f32 %v5140, %v5293
  %v5302 = vadd.f32 %v5141, %v5294
  %v5303 = vxor.u32 %v5299, 2147483648
  %v5304 = vmul.f32 %v5303, 1.442695
  %v5305 = vpow.pop %v5304
  %v5306 = vadd.f32 %v5305, 1.0
  %v5307 = vrcp.pop %v5306
  %v5308 = vmul.f32 1.0, %v5307
  %v5309 = vxor.u32 %v5300, 2147483648
  %v5310 = vmul.f32 %v5309, 1.442695
  %v5311 = vpow.pop %v5310
  %v5312 = vadd.f32 %v5311, 1.0
  %v5313 = vrcp.pop %v5312
  %v5314 = vmul.f32 1.0, %v5313
  %v5315 = vtanh.pop %v5301
  %v5316 = vxor.u32 %v5302, 2147483648
  %v5317 = vmul.f32 %v5316, 1.442695
  %v5318 = vpow.pop %v5317
  %v5319 = vadd.f32 %v5318, 1.0
  %v5320 = vrcp.pop %v5319
  %v5321 = vmul.f32 1.0, %v5320
  %v5323 = vrot.slane %v5133, 6
  %v5325 = vmul.f32 %v5314, %v5323
  %v5326 = vmul.f32 %v5308, %v5315
  %v5327 = vadd.f32 %v5325, %v5326
  %v5328 = vtanh.pop %v5327
  %v5329 = vmul.f32 %v5321, %v5328
  %s5330 = scalar_lea.vmem %s8, 44
  %5331 = vst [vmem:[%s5330 - $0x4] sm:$0x30] %v5329
  %v5332 = vld [vmem:[#allocation2 + $0xa0] sm:$0xc0]
  %v5333 = vld [vmem:[#allocation2 + $0xa8] sm:$0xc0]
  %v5334 = vld [vmem:[#allocation2 + $0xb0] sm:$0xc0]
  %v5335 = vld [vmem:[#allocation2 + $0xb8] sm:$0xc0]
  %v5337 = vrot.slane %v5329, 4
  %5339 = vmatprep.subr.mxu0 %v904
  %5340 = vmatpush1.msra.mxu0 %v903
  %5341 = vmatprep.subr.mxu0 %v908
  %5342 = vmatpush1.msra.mxu0 %v907
  %5343 = vmatprep.subr.mxu0 %v912
  %5344 = vmatpush1.msra.mxu0 %v911
  %5345 = vmatprep.subr.mxu0 %v916
  %5346 = vmatpush1.msra.mxu0 %v915
  %5347 = vmatprep.subr.mxu0 %v920
  %5348 = vmatpush1.msra.mxu0 %v919
  %5349 = vmatprep.subr.mxu0 %v924
  %5350 = vmatpush1.msra.mxu0 %v923
  %5351 = vmatprep.subr.mxu0 %v928
  %5352 = vmatpush1.msra.mxu0 %v927
  %5353 = vmatprep.subr.mxu0 %v932
  %5354 = vmatpush1.msra.mxu0 %v931
  %5355 = vmatprep.subr.mxu0 %v936
  %5356 = vmatpush1.msra.mxu0 %v935
  %5357 = vmatprep.subr.mxu0 %v940
  %5358 = vmatpush1.msra.mxu0 %v939
  %5359 = vmatprep.subr.mxu0 %v944
  %5360 = vmatpush1.msra.mxu0 %v943
  %5361 = vmatprep.subr.mxu0 %v948
  %5362 = vmatpush1.msra.mxu0 %v947
  %5363 = vmatprep.subr.mxu0 %v952
  %5364 = vmatpush1.msra.mxu0 %v951
  %5365 = vmatprep.subr.mxu0 %v956
  %5366 = vmatpush1.msra.mxu0 %v955
  %5367 = vmatprep.subr.mxu0 %v960
  %5368 = vmatpush1.msra.mxu0 %v959
  %5369 = vmatprep.subr.mxu0 %v964
  %5370 = vmatpush1.msra.mxu0 %v963
  %5371 = vmatprep.subr.mxu0 0.0
  %5372 = vmatpush1.msra.mxu0 0.0
  %5373 = vmatprep.subr.mxu0 0.0
  %5374 = vmatpush1.msra.mxu0 0.0
  %5375 = vmatprep.subr.mxu0 0.0
  %5376 = vmatpush1.msra.mxu0 0.0
  %5377 = vmatprep.subr.mxu0 0.0
  %5378 = vmatpush1.msra.mxu0 0.0
  %5379 = vmatprep.subr.mxu0 0.0
  %5380 = vmatpush1.msra.mxu0 0.0
  %5381 = vmatprep.subr.mxu0 0.0
  %5382 = vmatpush1.msra.mxu0 0.0
  %5383 = vmatprep.subr.mxu0 0.0
  %5384 = vmatpush1.msra.mxu0 0.0
  %5385 = vmatprep.subr.mxu0 0.0
  %5386 = vmatpush1.msra.mxu0 0.0
  %5387 = vmatprep.subr.mxu0 0.0
  %5388 = vmatpush1.msra.mxu0 0.0
  %5389 = vmatprep.subr.mxu0 0.0
  %5390 = vmatpush1.msra.mxu0 0.0
  %5391 = vmatprep.subr.mxu0 0.0
  %5392 = vmatpush1.msra.mxu0 0.0
  %5393 = vmatprep.subr.mxu0 0.0
  %5394 = vmatpush1.msra.mxu0 0.0
  %5395 = vmatprep.subr.mxu0 0.0
  %5396 = vmatpush1.msra.mxu0 0.0
  %5397 = vmatprep.subr.mxu0 0.0
  %5398 = vmatpush1.msra.mxu0 0.0
  %5399 = vmatprep.subr.mxu0 0.0
  %5400 = vmatpush1.msra.mxu0 0.0
  %5401 = vmatprep.subr.mxu0 0.0
  %5402 = vmatpush1.msra.mxu0 0.0
  %5403 = vmatprep.mubr.f32.mxu0 0.0
  %5404 = vmatmul.mubr.f32.gmra.mrb[0].mxu0 %v5337
  %v5405 = vpop.f32.mrb[0].mxu0
  %v5406 = vadd.f32 0.0, %v5405
  %v5407 = vpop.f32.mrb[0].mxu0
  %v5408 = vadd.f32 0.0, %v5407
  %5409 = vdwg.mxu0
  %5410 = vmatprep.subr.mxu0 %v906
  %5411 = vmatpush1.msra.mxu0 %v905
  %5412 = vmatprep.subr.mxu0 %v910
  %5413 = vmatpush1.msra.mxu0 %v909
  %5414 = vmatprep.subr.mxu0 %v914
  %5415 = vmatpush1.msra.mxu0 %v913
  %5416 = vmatprep.subr.mxu0 %v918
  %5417 = vmatpush1.msra.mxu0 %v917
  %5418 = vmatprep.subr.mxu0 %v922
  %5419 = vmatpush1.msra.mxu0 %v921
  %5420 = vmatprep.subr.mxu0 %v926
  %5421 = vmatpush1.msra.mxu0 %v925
  %5422 = vmatprep.subr.mxu0 %v930
  %5423 = vmatpush1.msra.mxu0 %v929
  %5424 = vmatprep.subr.mxu0 %v934
  %5425 = vmatpush1.msra.mxu0 %v933
  %5426 = vmatprep.subr.mxu0 %v938
  %5427 = vmatpush1.msra.mxu0 %v937
  %5428 = vmatprep.subr.mxu0 %v942
  %5429 = vmatpush1.msra.mxu0 %v941
  %5430 = vmatprep.subr.mxu0 %v946
  %5431 = vmatpush1.msra.mxu0 %v945
  %5432 = vmatprep.subr.mxu0 %v950
  %5433 = vmatpush1.msra.mxu0 %v949
  %5434 = vmatprep.subr.mxu0 %v954
  %5435 = vmatpush1.msra.mxu0 %v953
  %5436 = vmatprep.subr.mxu0 %v958
  %5437 = vmatpush1.msra.mxu0 %v957
  %5438 = vmatprep.subr.mxu0 %v962
  %5439 = vmatpush1.msra.mxu0 %v961
  %5440 = vmatprep.subr.mxu0 %v966
  %5441 = vmatpush1.msra.mxu0 %v965
  %5442 = vmatprep.subr.mxu0 0.0
  %5443 = vmatpush1.msra.mxu0 0.0
  %5444 = vmatprep.subr.mxu0 0.0
  %5445 = vmatpush1.msra.mxu0 0.0
  %5446 = vmatprep.subr.mxu0 0.0
  %5447 = vmatpush1.msra.mxu0 0.0
  %5448 = vmatprep.subr.mxu0 0.0
  %5449 = vmatpush1.msra.mxu0 0.0
  %5450 = vmatprep.subr.mxu0 0.0
  %5451 = vmatpush1.msra.mxu0 0.0
  %5452 = vmatprep.subr.mxu0 0.0
  %5453 = vmatpush1.msra.mxu0 0.0
  %5454 = vmatprep.subr.mxu0 0.0
  %5455 = vmatpush1.msra.mxu0 0.0
  %5456 = vmatprep.subr.mxu0 0.0
  %5457 = vmatpush1.msra.mxu0 0.0
  %5458 = vmatprep.subr.mxu0 0.0
  %5459 = vmatpush1.msra.mxu0 0.0
  %5460 = vmatprep.subr.mxu0 0.0
  %5461 = vmatpush1.msra.mxu0 0.0
  %5462 = vmatprep.subr.mxu0 0.0
  %5463 = vmatpush1.msra.mxu0 0.0
  %5464 = vmatprep.subr.mxu0 0.0
  %5465 = vmatpush1.msra.mxu0 0.0
  %5466 = vmatprep.subr.mxu0 0.0
  %5467 = vmatpush1.msra.mxu0 0.0
  %5468 = vmatprep.subr.mxu0 0.0
  %5469 = vmatpush1.msra.mxu0 0.0
  %5470 = vmatprep.subr.mxu0 0.0
  %5471 = vmatpush1.msra.mxu0 0.0
  %5472 = vmatprep.subr.mxu0 0.0
  %5473 = vmatpush1.msra.mxu0 0.0
  %5474 = vmatprep.mubr.f32.mxu0 0.0
  %5475 = vmatmul.mubr.f32.gmra.mrb[0].mxu0 %v5337
  %v5476 = vpop.f32.mrb[0].mxu0
  %v5477 = vadd.f32 0.0, %v5476
  %v5478 = vpop.f32.mrb[0].mxu0
  %v5479 = vadd.f32 0.0, %v5478
  %5480 = vdwg.mxu0
  %v5485 = vrot.slane %v5406, 2
  %v5486 = vrot.slane %v5408, 2
  %v5487 = vrot.slane %v5477, 2
  %v5488 = vrot.slane %v5479, 2
  %v5493 = vadd.f32 %v5332, %v5485
  %v5494 = vadd.f32 %v5333, %v5486
  %v5495 = vadd.f32 %v5334, %v5487
  %v5496 = vadd.f32 %v5335, %v5488
  %v5497 = vxor.u32 %v5493, 2147483648
  %v5498 = vmul.f32 %v5497, 1.442695
  %v5499 = vpow.pop %v5498
  %v5500 = vadd.f32 %v5499, 1.0
  %v5501 = vrcp.pop %v5500
  %v5502 = vmul.f32 1.0, %v5501
  %v5503 = vxor.u32 %v5494, 2147483648
  %v5504 = vmul.f32 %v5503, 1.442695
  %v5505 = vpow.pop %v5504
  %v5506 = vadd.f32 %v5505, 1.0
  %v5507 = vrcp.pop %v5506
  %v5508 = vmul.f32 1.0, %v5507
  %v5509 = vtanh.pop %v5495
  %v5510 = vxor.u32 %v5496, 2147483648
  %v5511 = vmul.f32 %v5510, 1.442695
  %v5512 = vpow.pop %v5511
  %v5513 = vadd.f32 %v5512, 1.0
  %v5514 = vrcp.pop %v5513
  %v5515 = vmul.f32 1.0, %v5514
  %v5517 = vrot.slane %v5327, 6
  %v5519 = vmul.f32 %v5508, %v5517
  %v5520 = vmul.f32 %v5502, %v5509
  %v5521 = vadd.f32 %v5519, %v5520
  %v5522 = vtanh.pop %v5521
  %v5523 = vmul.f32 %v5515, %v5522
  %s5524 = scalar_lea.vmem %s8, 46
  %5525 = vst [vmem:[%s5524 - $0x6] sm:$0xc0] %v5523
  // Predicated region
  $region34: #{get_pose_forward.1} parent=0 // pred_check
    _
  $region35: #{get_pose_forward.1} parent=0 // pred_check_branch
    %5527 = sbr.rel (0) target = $region37
  $region36: #{get_pose_forward.1} parent=0 // pred_region
    _
  $region37: #{get_pose_forward.1} parent=0 // pred_fallthru
    _
  // Predicated region
  $region38: #{get_pose_forward.1} parent=0 // pred_check
    _
  $region39: #{get_pose_forward.1} parent=0 // pred_check_branch
    %5529 = sbr.rel (0) target = $region41
  $region40: #{get_pose_forward.1} parent=0 // pred_region
    _
  $region41: #{get_pose_forward.1} parent=0 // pred_fallthru
    _

</llo_original>
